<compile_context>
chip_gen: v7x
topology: tpu7x:2x2x1
jax: 0.10.0
libtpu: 0.0.40
codegen_flags: <defaults>
</compile_context>

<pallas_src>
import jax
import jax.numpy as jnp
from jax.experimental import pallas as pl
from jax.experimental.pallas import tpu as pltpu

IMAGE_SIZE = 30
CHANNELS = 2
CH_PIX = IMAGE_SIZE * IMAGE_SIZE          # 900
TOT_PIX = CHANNELS * CH_PIX               # 1800
HIDDEN = 2000
EPS = 1e-5

# Lane-padded sizes (multiples of 128) and hidden tiling.
HIDDEN_PAD = 2048
CPIX_PAD = 1024
TK = 1024                                 # hidden-tile width -> 2 grid steps


def _net_fused_kernel(x_ref, w1_ref, g1_ref, be1_ref, w2_ref, g2_ref, be2_ref,
                      out_ref):
    """One hidden tile: lin1 + BN1 + ReLU + partial lin2; BN2 on the last tile."""
    k = pl.program_id(0)

    @pl.when(k == 0)
    def _():
        out_ref[...] = jnp.zeros_like(out_ref)

    # ---- Linear(1800 -> TK) on the MXU, bf16 inputs, f32 accumulation ----
    # (b1 omitted: exactly cancelled by the BatchNorm mean subtraction below.)
    h = jnp.dot(x_ref[...], w1_ref[...], preferred_element_type=jnp.float32)

    # ---- BatchNorm1d (training-mode batch stats, biased variance) ----
    mean1 = jnp.mean(h, axis=0, keepdims=True)
    hc = h - mean1
    var1 = jnp.mean(hc * hc, axis=0, keepdims=True)
    h = hc * jax.lax.rsqrt(var1 + EPS)
    h = h * g1_ref[...] + be1_ref[...]

    # ---- ReLU ----
    h = jnp.maximum(h, 0.0)

    # ---- Linear(TK -> 1024) partial: accumulate into the resident output ----
    # (b2 omitted: cancelled by the BN2 mean subtraction.)
    out_ref[...] += jnp.dot(h.astype(jnp.bfloat16), w2_ref[...],
                            preferred_element_type=jnp.float32)

    # ---- On the last hidden tile: BatchNorm1d(900) over the full sum ----
    @pl.when(k == pl.num_programs(0) - 1)
    def _():
        y = out_ref[...]
        mean2 = jnp.mean(y, axis=0, keepdims=True)
        yc = y - mean2
        var2 = jnp.mean(yc * yc, axis=0, keepdims=True)
        out_ref[...] = yc * jax.lax.rsqrt(var2 + EPS) * g2_ref[...] + be2_ref[...]


def net_forward(x, params):
    """x: (B, 2, 30, 30) float32 -> (B, 30, 30) float32."""
    b = x.shape[0]
    x2d = x.reshape(b, TOT_PIX).astype(jnp.bfloat16)        # same as torch .view

    kt = HIDDEN_PAD // TK                                    # 2 hidden tiles

    bytes_accessed = (
        TOT_PIX * HIDDEN_PAD * 2                             # w1 (bf16)
        + HIDDEN_PAD * CPIX_PAD * 2                          # w2 (bf16)
        + b * TOT_PIX * 2                                    # x  (bf16)
        + b * CPIX_PAD * 4                                   # output (f32)
        + 2 * (HIDDEN_PAD + CPIX_PAD) * 4                    # BN scale/shift (f32)
    )

    y_pad = pl.pallas_call(
        _net_fused_kernel,
        out_shape=jax.ShapeDtypeStruct((b, CPIX_PAD), jnp.float32),
        grid_spec=pltpu.PrefetchScalarGridSpec(
            num_scalar_prefetch=0,
            grid=(kt,),
            in_specs=[
                pl.BlockSpec((b, TOT_PIX), lambda k: (0, 0)),        # x (resident)
                pl.BlockSpec((TOT_PIX, TK), lambda k: (0, k)),       # w1 tile
                pl.BlockSpec((1, TK), lambda k: (0, k)),             # gamma1 tile
                pl.BlockSpec((1, TK), lambda k: (0, k)),             # beta1 tile
                pl.BlockSpec((TK, CPIX_PAD), lambda k: (k, 0)),      # w2 tile
                pl.BlockSpec((1, CPIX_PAD), lambda k: (0, 0)),       # gamma2
                pl.BlockSpec((1, CPIX_PAD), lambda k: (0, 0)),       # beta2
            ],
            out_specs=pl.BlockSpec((b, CPIX_PAD), lambda k: (0, 0)),  # resident acc
        ),
        compiler_params=pltpu.CompilerParams(
            dimension_semantics=("arbitrary",),
            vmem_limit_bytes=24 << 20,
        ),
        cost_estimate=pl.CostEstimate(
            flops=2 * b * (TOT_PIX * HIDDEN_PAD + HIDDEN_PAD * CPIX_PAD),
            transcendentals=HIDDEN_PAD + CPIX_PAD,
            bytes_accessed=bytes_accessed,
        ),
    )(x2d, params["w1"], params["g1"], params["be1"],
      params["w2"], params["g2"], params["be2"])

    return y_pad[:, :CH_PIX].reshape(b, IMAGE_SIZE, IMAGE_SIZE)


def init_params(key):
    """PyTorch-default-style init (uniform +-1/sqrt(fan_in)), lane-padded, bf16 weights."""
    k1, k2 = jax.random.split(key)
    lim1 = 1.0 / (TOT_PIX ** 0.5)
    lim2 = 1.0 / (HIDDEN ** 0.5)

    w1 = jax.random.uniform(k1, (TOT_PIX, HIDDEN), jnp.float32, -lim1, lim1)
    w2 = jax.random.uniform(k2, (HIDDEN, CH_PIX), jnp.float32, -lim2, lim2)

    # Zero-pad to lane-dense shapes: padded hidden features stay exactly 0
    # through BN1/ReLU, w2's padded rows/columns are 0, so padded lanes of the
    # output stay 0 and are sliced off in net_forward. The same zero-padding
    # must be applied when importing real trained weights.
    w1p = jnp.zeros((TOT_PIX, HIDDEN_PAD), jnp.float32).at[:, :HIDDEN].set(w1)
    w2p = jnp.zeros((HIDDEN_PAD, CPIX_PAD), jnp.float32).at[:HIDDEN, :CH_PIX].set(w2)

    # Linear biases intentionally omitted: each Linear is immediately followed
    # by training-mode BatchNorm, whose mean subtraction cancels them.
    # TODO(synk): BatchNorm running_mean/running_var are not tracked/updated;
    # only the training-mode forward output is reproduced.
    return {
        "w1": w1p.astype(jnp.bfloat16),
        "g1": jnp.ones((1, HIDDEN_PAD), jnp.float32),    # BatchNorm1d(2000) weight
        "be1": jnp.zeros((1, HIDDEN_PAD), jnp.float32),  # BatchNorm1d(2000) bias
        "w2": w2p.astype(jnp.bfloat16),
        "g2": jnp.ones((1, CPIX_PAD), jnp.float32),      # BatchNorm1d(900) weight
        "be2": jnp.zeros((1, CPIX_PAD), jnp.float32),    # BatchNorm1d(900) bias
    }


if __name__ == "__main__":
    key = jax.random.PRNGKey(0)
    kp, kx = jax.random.split(key)
    params = init_params(kp)

    B = 4   # BatchNorm in training mode needs B > 1
    x = jax.random.normal(kx, (B, CHANNELS, IMAGE_SIZE, IMAGE_SIZE), jnp.float32)

    out = jax.jit(net_forward)(x, params)
    out = jax.block_until_ready(out)

    assert out.shape == (B, IMAGE_SIZE, IMAGE_SIZE)
    assert out.dtype == jnp.float32
    assert bool(jnp.isfinite(out).all())
    print("KERNEL_OK")
</pallas_src>

<mosaic_0001>
module attributes {stable_mosaic.version = 11 : i64} {
  func.func @_net_fused_kernel(%arg0: i32, %arg1: memref<4x1800xbf16, #tpu.memory_space<vmem>>, %arg2: memref<1800x1024xbf16, #tpu.memory_space<vmem>>, %arg3: memref<1x1024xf32, #tpu.memory_space<vmem>>, %arg4: memref<1x1024xf32, #tpu.memory_space<vmem>>, %arg5: memref<1024x1024xbf16, #tpu.memory_space<vmem>>, %arg6: memref<1x1024xf32, #tpu.memory_space<vmem>>, %arg7: memref<1x1024xf32, #tpu.memory_space<vmem>>, %arg8: memref<4x1024xf32, #tpu.memory_space<vmem>>) attributes {dimension_semantics = [#tpu.dimension_semantics<arbitrary>], iteration_bounds = array<i64: 2>, scalar_prefetch = 0 : i64, scratch_operands = 0 : i64, tpu.core_type = #tpu.core_type<tc>, window_params = [{pipeline_mode = #tpu.pipeline_mode<synchronous>, transform_indices = @transform_0, window_bounds = array<i64: 4, 1800>}, {transform_indices = @transform_1, window_bounds = array<i64: 1800, 1024>}, {transform_indices = @transform_2, window_bounds = array<i64: 1, 1024>}, {transform_indices = @transform_3, window_bounds = array<i64: 1, 1024>}, {transform_indices = @transform_4, window_bounds = array<i64: 1024, 1024>}, {pipeline_mode = #tpu.pipeline_mode<synchronous>, transform_indices = @transform_5, window_bounds = array<i64: 1, 1024>}, {pipeline_mode = #tpu.pipeline_mode<synchronous>, transform_indices = @transform_6, window_bounds = array<i64: 1, 1024>}, {pipeline_mode = #tpu.pipeline_mode<synchronous>, transform_indices = @transform_7, window_bounds = array<i64: 4, 1024>}]} {
    %c0_i32 = arith.constant 0 : i32
    %0 = arith.cmpi eq, %arg0, %c0_i32 : i32
    %1 = arith.extui %0 : i1 to i32
    %c0_i32_0 = arith.constant 0 : i32
    %2 = arith.cmpi ne, %1, %c0_i32_0 : i32
    scf.if %2 {
      %cst_22 = arith.constant 0.000000e+00 : f32
      %39 = vector.broadcast %cst_22 : f32 to vector<4x1024xf32>
      %c0_23 = arith.constant 0 : index
      %c0_24 = arith.constant 0 : index
      %40 = vector.load %arg8[%c0_23, %c0_24] : memref<4x1024xf32, #tpu.memory_space<vmem>>, vector<4x1024xf32>
      tpu.vector_store %arg8[%c0_23, %c0_24], %39 {strides = array<i32>} : memref<4x1024xf32, #tpu.memory_space<vmem>>, vector<4x1024xf32>,
    } else {
    }
    %c0 = arith.constant 0 : index
    %c0_1 = arith.constant 0 : index
    %3 = vector.load %arg1[%c0, %c0_1] : memref<4x1800xbf16, #tpu.memory_space<vmem>>, vector<4x1800xbf16>
    %c0_2 = arith.constant 0 : index
    %c0_3 = arith.constant 0 : index
    %4 = vector.load %arg2[%c0_2, %c0_3] : memref<1800x1024xbf16, #tpu.memory_space<vmem>>, vector<1800x1024xbf16>
    %cst = arith.constant dense<0.000000e+00> : vector<4x1024xf32>
    %5 = tpu.matmul %3, %4, %cst {dimension_numbers = #tpu.dot_dimension_numbers<[1], [0], [0], [1], [0, 0, 1, 1], [], []>} : vector<4x1800xbf16>, vector<1800x1024xbf16>, vector<4x1024xf32> -> vector<4x1024xf32>
    %cst_4 = arith.constant dense<0.000000e+00> : vector<1024xf32>
    %6 = vector.multi_reduction <add>, %5, %cst_4 [0] : vector<4x1024xf32> to vector<1024xf32>
    %7 = vector.shape_cast %6 : vector<1024xf32> to vector<1x1024xf32>
    %cst_5 = arith.constant 4.000000e+00 : f32
    %8 = vector.broadcast %cst_5 : f32 to vector<1x1024xf32>
    %9 = arith.divf %7, %8 : vector<1x1024xf32>
    %10 = vector.broadcast %9 : vector<1x1024xf32> to vector<4x1024xf32>
    %11 = arith.subf %5, %10 : vector<4x1024xf32>
    %12 = arith.mulf %11, %11 : vector<4x1024xf32>
    %cst_6 = arith.constant dense<0.000000e+00> : vector<1024xf32>
    %13 = vector.multi_reduction <add>, %12, %cst_6 [0] : vector<4x1024xf32> to vector<1024xf32>
    %14 = vector.shape_cast %13 : vector<1024xf32> to vector<1x1024xf32>
    %cst_7 = arith.constant 4.000000e+00 : f32
    %15 = vector.broadcast %cst_7 : f32 to vector<1x1024xf32>
    %16 = arith.divf %14, %15 : vector<1x1024xf32>
    %cst_8 = arith.constant 9.99999974E-6 : f32
    %17 = vector.broadcast %cst_8 : f32 to vector<1x1024xf32>
    %18 = arith.addf %16, %17 : vector<1x1024xf32>
    %19 = math.rsqrt %18 : vector<1x1024xf32>
    %20 = vector.broadcast %19 : vector<1x1024xf32> to vector<4x1024xf32>
    %21 = arith.mulf %11, %20 : vector<4x1024xf32>
    %c0_9 = arith.constant 0 : index
    %c0_10 = arith.constant 0 : index
    %22 = vector.load %arg3[%c0_9, %c0_10] : memref<1x1024xf32, #tpu.memory_space<vmem>>, vector<1x1024xf32>
    %23 = vector.broadcast %22 : vector<1x1024xf32> to vector<4x1024xf32>
    %24 = arith.mulf %21, %23 : vector<4x1024xf32>
    %c0_11 = arith.constant 0 : index
    %c0_12 = arith.constant 0 : index
    %25 = vector.load %arg4[%c0_11, %c0_12] : memref<1x1024xf32, #tpu.memory_space<vmem>>, vector<1x1024xf32>
    %26 = vector.broadcast %25 : vector<1x1024xf32> to vector<4x1024xf32>
    %27 = arith.addf %24, %26 : vector<4x1024xf32>
    %cst_13 = arith.constant 0.000000e+00 : f32
    %28 = vector.broadcast %cst_13 : f32 to vector<4x1024xf32>
    %29 = arith.maximumf %27, %28 : vector<4x1024xf32>
    %c0_14 = arith.constant 0 : index
    %c0_15 = arith.constant 0 : index
    %30 = vector.load %arg8[%c0_14, %c0_15] : memref<4x1024xf32, #tpu.memory_space<vmem>>, vector<4x1024xf32>
    %31 = arith.truncf %29 : vector<4x1024xf32> to vector<4x1024xbf16>
    %c0_16 = arith.constant 0 : index
    %c0_17 = arith.constant 0 : index
    %32 = vector.load %arg5[%c0_16, %c0_17] : memref<1024x1024xbf16, #tpu.memory_space<vmem>>, vector<1024x1024xbf16>
    %cst_18 = arith.constant dense<0.000000e+00> : vector<4x1024xf32>
    %33 = tpu.matmul %31, %32, %cst_18 {dimension_numbers = #tpu.dot_dimension_numbers<[1], [0], [0], [1], [0, 0, 1, 1], [], []>} : vector<4x1024xbf16>, vector<1024x1024xbf16>, vector<4x1024xf32> -> vector<4x1024xf32>
    %34 = arith.addf %30, %33 : vector<4x1024xf32>
    %c0_19 = arith.constant 0 : index
    %c0_20 = arith.constant 0 : index
    %35 = vector.load %arg8[%c0_19, %c0_20] : memref<4x1024xf32, #tpu.memory_space<vmem>>, vector<4x1024xf32>
    tpu.vector_store %arg8[%c0_19, %c0_20], %34 {strides = array<i32>} : memref<4x1024xf32, #tpu.memory_space<vmem>>, vector<4x1024xf32>,
    %c1_i32 = arith.constant 1 : i32
    %36 = arith.cmpi eq, %arg0, %c1_i32 : i32
    %37 = arith.extui %36 : i1 to i32
    %c0_i32_21 = arith.constant 0 : i32
    %38 = arith.cmpi ne, %37, %c0_i32_21 : i32
    scf.if %38 {
      %c0_22 = arith.constant 0 : index
      %c0_23 = arith.constant 0 : index
      %39 = vector.load %arg8[%c0_22, %c0_23] : memref<4x1024xf32, #tpu.memory_space<vmem>>, vector<4x1024xf32>
      %cst_24 = arith.constant dense<0.000000e+00> : vector<1024xf32>
      %40 = vector.multi_reduction <add>, %39, %cst_24 [0] : vector<4x1024xf32> to vector<1024xf32>
      %41 = vector.shape_cast %40 : vector<1024xf32> to vector<1x1024xf32>
      %cst_25 = arith.constant 4.000000e+00 : f32
      %42 = vector.broadcast %cst_25 : f32 to vector<1x1024xf32>
      %43 = arith.divf %41, %42 : vector<1x1024xf32>
      %44 = vector.broadcast %43 : vector<1x1024xf32> to vector<4x1024xf32>
      %45 = arith.subf %39, %44 : vector<4x1024xf32>
      %46 = arith.mulf %45, %45 : vector<4x1024xf32>
      %cst_26 = arith.constant dense<0.000000e+00> : vector<1024xf32>
      %47 = vector.multi_reduction <add>, %46, %cst_26 [0] : vector<4x1024xf32> to vector<1024xf32>
      %48 = vector.shape_cast %47 : vector<1024xf32> to vector<1x1024xf32>
      %cst_27 = arith.constant 4.000000e+00 : f32
      %49 = vector.broadcast %cst_27 : f32 to vector<1x1024xf32>
      %50 = arith.divf %48, %49 : vector<1x1024xf32>
      %cst_28 = arith.constant 9.99999974E-6 : f32
      %51 = vector.broadcast %cst_28 : f32 to vector<1x1024xf32>
      %52 = arith.addf %50, %51 : vector<1x1024xf32>
      %53 = math.rsqrt %52 : vector<1x1024xf32>
      %54 = vector.broadcast %53 : vector<1x1024xf32> to vector<4x1024xf32>
      %55 = arith.mulf %45, %54 : vector<4x1024xf32>
      %c0_29 = arith.constant 0 : index
      %c0_30 = arith.constant 0 : index
      %56 = vector.load %arg6[%c0_29, %c0_30] : memref<1x1024xf32, #tpu.memory_space<vmem>>, vector<1x1024xf32>
      %57 = vector.broadcast %56 : vector<1x1024xf32> to vector<4x1024xf32>
      %58 = arith.mulf %55, %57 : vector<4x1024xf32>
      %c0_31 = arith.constant 0 : index
      %c0_32 = arith.constant 0 : index
      %59 = vector.load %arg7[%c0_31, %c0_32] : memref<1x1024xf32, #tpu.memory_space<vmem>>, vector<1x1024xf32>
      %60 = vector.broadcast %59 : vector<1x1024xf32> to vector<4x1024xf32>
      %61 = arith.addf %58, %60 : vector<4x1024xf32>
      %c0_33 = arith.constant 0 : index
      %c0_34 = arith.constant 0 : index
      %62 = vector.load %arg8[%c0_33, %c0_34] : memref<4x1024xf32, #tpu.memory_space<vmem>>, vector<4x1024xf32>
      tpu.vector_store %arg8[%c0_33, %c0_34], %61 {strides = array<i32>} : memref<4x1024xf32, #tpu.memory_space<vmem>>, vector<4x1024xf32>,
    } else {
    }
    return
  }
  func.func @transform_0(%arg0: i32) -> (i32, i32) {
    %c0_i32 = arith.constant 0 : i32
    %c0_i32_0 = arith.constant 0 : i32
    %c0_i32_1 = arith.constant 0 : i32
    return %c0_i32, %c0_i32_0 : i32, i32
  }
  func.func @transform_1(%arg0: i32) -> (i32, i32) {
    %c0_i32 = arith.constant 0 : i32
    %c0_i32_0 = arith.constant 0 : i32
    return %c0_i32, %arg0 : i32, i32
  }
  func.func @transform_2(%arg0: i32) -> (i32, i32) {
    %c0_i32 = arith.constant 0 : i32
    %c0_i32_0 = arith.constant 0 : i32
    return %c0_i32, %arg0 : i32, i32
  }
  func.func @transform_3(%arg0: i32) -> (i32, i32) {
    %c0_i32 = arith.constant 0 : i32
    %c0_i32_0 = arith.constant 0 : i32
    return %c0_i32, %arg0 : i32, i32
  }
  func.func @transform_4(%arg0: i32) -> (i32, i32) {
    %c0_i32 = arith.constant 0 : i32
    %c0_i32_0 = arith.constant 0 : i32
    return %arg0, %c0_i32 : i32, i32
  }
  func.func @transform_5(%arg0: i32) -> (i32, i32) {
    %c0_i32 = arith.constant 0 : i32
    %c0_i32_0 = arith.constant 0 : i32
    %c0_i32_1 = arith.constant 0 : i32
    return %c0_i32, %c0_i32_0 : i32, i32
  }
  func.func @transform_6(%arg0: i32) -> (i32, i32) {
    %c0_i32 = arith.constant 0 : i32
    %c0_i32_0 = arith.constant 0 : i32
    %c0_i32_1 = arith.constant 0 : i32
    return %c0_i32, %c0_i32_0 : i32, i32
  }
  func.func @transform_7(%arg0: i32) -> (i32, i32) {
    %c0_i32 = arith.constant 0 : i32
    %c0_i32_0 = arith.constant 0 : i32
    %c0_i32_1 = arith.constant 0 : i32
    return %c0_i32, %c0_i32_0 : i32, i32
  }
}

</mosaic_0001>

<llo_original>
// kernel: net_forward.1
$region0: #{net_forward.1}
  #allocation0 [shape = 'u32[]', space=smem, size = 0x4, offset = 0x4, fixed_abs, tag = 'smem constant byte address 0x4 - core index']
  #allocation1 [shape = 'u32[144,128]{1,0:T(1,128)}', space=vmem, size = 0x12000, scoped, tag = 'internal scratch']
  %s0 = inlined_call_operand.vmem [shape: bf16[4,1800], index: 0, kind: input, shape index: {}]
  %s1 = inlined_call_operand.hbm [shape: bf16[1800,2048], index: 1, kind: input, shape index: {}]
  %s2 = inlined_call_operand.hbm [shape: f32[1,2048], index: 2, kind: input, shape index: {}]
  %s3 = inlined_call_operand.hbm [shape: f32[1,2048], index: 3, kind: input, shape index: {}]
  %s4 = inlined_call_operand.hbm [shape: bf16[2048,1024], index: 4, kind: input, shape index: {}]
  %s5 = inlined_call_operand.hbm [shape: f32[1,1024], index: 5, kind: input, shape index: {}]
  %s6 = inlined_call_operand.hbm [shape: f32[1,1024], index: 6, kind: input, shape index: {}]
  %s7 = inlined_call_operand.vmem [shape: f32[4,1024], index: 7, kind: output, shape index: {}]
  %s8 = sld [smem:[#allocation0]]
  $region93: #{net_forward.1} parent=0
    _
  %s10 = ssub.s32 1, %s8
  %s11 = scalar_select 0, %s10, %s8
  $region1: #{net_forward.1} parent=0
    #allocation2 [shape = 'u8[7372800]{0}', space=vmem, size = 0x708000, scoped, tag = 'input window, operand 1']
    #allocation3 [shape = 's32[2]{0}', space=sflag, size = 0x8, scoped, tag = 'scoped memory for net_forward.1']
    #allocation4 [shape = 'u8[8192]{0}', space=vmem, size = 0x2000, scoped, tag = 'input window, operand 2']
    #allocation5 [shape = 's32[2]{0}', space=sflag, size = 0x8, scoped, tag = 'scoped memory for net_forward.1']
    #allocation6 [shape = 'u8[8192]{0}', space=vmem, size = 0x2000, scoped, tag = 'input window, operand 3']
    #allocation7 [shape = 'u8[4194304]{0}', space=vmem, size = 0x400000, scoped, tag = 'input window, operand 4']
    #allocation8 [shape = 's32[2]{0}', space=sflag, size = 0x8, scoped, tag = 'scoped memory for net_forward.1']
    #allocation9 [shape = 'u8[4096]{0}', space=vmem, size = 0x1000, scoped, tag = 'input window, operand 5, single buffered']
    #allocation10 [shape = 'u8[4096]{0}', space=vmem, size = 0x1000, scoped, tag = 'input window, operand 6, single buffered']
    #allocation11 [shape = 's32[1]{0}', space=sflag, size = 0x4, scoped, tag = 'scoped memory for net_forward.1']
    %12 = vsyncpa [#allocation3], 0
    %s13 = scalar_lea.sflag [#allocation3], 1
    %14 = vsyncpa %s13, 0
    %15 = vsyncpa [#allocation5], 0
    %s16 = scalar_lea.sflag [#allocation5], 1
    %17 = vsyncpa %s16, 0
    %18 = vsyncpa [#allocation8], 0
    %s19 = scalar_lea.sflag [#allocation8], 1
    %20 = vsyncpa %s19, 0
    %21 = vsyncpa [#allocation11], 0
    loop: start=0, step=1, limit=4
    $region2: #{net_forward.1} parent=1 // loop_pre_header
      _
    $region3: #{net_forward.1} parent=1 // loop_header
      %s23 = sphi 0, %s27
      %p24 = scmp.ge.s32.totalorder %s23, 4
      %s31 = sphi 0, %s31
      %s33 = sphi 0, %s31
      %s34 = sphi 0, %s33
      %s48 = sphi 0, %s34
      %s54 = sphi 0, %s56
      %s57 = sphi 0, %s54
      %s58 = sphi 0, %s57
      %s74 = sphi 0, %s58
      %s80 = sphi 0, %s82
      %s83 = sphi 0, %s80
      %s84 = sphi 0, %s83
      %s100 = sphi 0, %s84
      %s106 = sphi 0, %s108
      %s109 = sphi 0, %s106
      %s110 = sphi 0, %s109
      %s126 = sphi 0, %s110
      %s132 = sphi 0, %s134
      %s135 = sphi 0, %s132
      %s136 = sphi 0, %s135
      %s152 = sphi 0, %s136
      %s156 = sphi 0, %s156
      %s158 = sphi 0, %s156
      %s159 = sphi 0, %s158
      %s173 = sphi 0, %s159
      %s177 = sphi 0, %s177
      %s179 = sphi 0, %s177
      %s180 = sphi 0, %s179
      %s194 = sphi 0, %s180
      %s198 = sphi 0, %s198
      %s200 = sphi 0, %s198
      %s201 = sphi 0, %s200
      %s215 = sphi 0, %s201
    $region4: #{net_forward.1} parent=1 // loop_header_branch
      %26 = sbr.rel (%p24) target = $region8
    $region5: #{net_forward.1} parent=1 // loop_body
      %s28 = ssub.s32 %s23, 1
      %s29 = ssub.s32 %s23, 2
      %s30 = sadd.s32 %s23, 1
      %s32 = sadd.s32 %s31, 1
      %p35 = scmp.eq.s32.totalorder %s23, 1
      %p36 = scmp.ne.s32.totalorder %s31, %s33
      %p37 = scmp.eq.s32.totalorder %s23, 0
      %p38 = por %p36, %p37
      %p39 = scmp.ne.s32.totalorder %s31, %s33
      %p40 = scmp.eq.s32.totalorder %s28, 1
      %p41 = por %p39, %p40
      %p42 = scmp.ne.s32.totalorder %s33, %s34
      %p43 = scmp.eq.s32.totalorder %s28, 0
      %p44 = por %p42, %p43
      %p45 = scmp.ne.s32.totalorder %s33, %s34
      %p46 = scmp.eq.s32.totalorder %s29, 1
      %p47 = por %p45, %p46
      %p49 = scmp.ne.s32.totalorder %s34, %s48
      %p50 = scmp.eq.s32.totalorder %s29, 0
      %p51 = por %p49, %p50
      %s52 = ssub.s32 %s23, %s30
      %p53 = scmp.eq.s32.totalorder %s52, 0
      %s55 = sadd.s32 %s54, 1
      %s56 = scalar_select %p53, %s54, %s55
      %p59 = pneg %p53
      %p60 = scmp.eq.s32.totalorder %s23, 1
      %p61 = por %p59, %p60
      %p62 = scmp.ne.s32.totalorder %s54, %s57
      %p63 = scmp.eq.s32.totalorder %s23, 0
      %p64 = por %p62, %p63
      %p65 = scmp.ne.s32.totalorder %s54, %s57
      %p66 = scmp.eq.s32.totalorder %s28, 1
      %p67 = por %p65, %p66
      %p68 = scmp.ne.s32.totalorder %s57, %s58
      %p69 = scmp.eq.s32.totalorder %s28, 0
      %p70 = por %p68, %p69
      %p71 = scmp.ne.s32.totalorder %s57, %s58
      %p72 = scmp.eq.s32.totalorder %s29, 1
      %p73 = por %p71, %p72
      %p75 = scmp.ne.s32.totalorder %s58, %s74
      %p76 = scmp.eq.s32.totalorder %s29, 0
      %p77 = por %p75, %p76
      %s78 = ssub.s32 %s23, %s30
      %p79 = scmp.eq.s32.totalorder %s78, 0
      %s81 = sadd.s32 %s80, 1
      %s82 = scalar_select %p79, %s80, %s81
      %p85 = pneg %p79
      %p86 = scmp.eq.s32.totalorder %s23, 1
      %p87 = por %p85, %p86
      %p88 = scmp.ne.s32.totalorder %s80, %s83
      %p89 = scmp.eq.s32.totalorder %s23, 0
      %p90 = por %p88, %p89
      %p91 = scmp.ne.s32.totalorder %s80, %s83
      %p92 = scmp.eq.s32.totalorder %s28, 1
      %p93 = por %p91, %p92
      %p94 = scmp.ne.s32.totalorder %s83, %s84
      %p95 = scmp.eq.s32.totalorder %s28, 0
      %p96 = por %p94, %p95
      %p97 = scmp.ne.s32.totalorder %s83, %s84
      %p98 = scmp.eq.s32.totalorder %s29, 1
      %p99 = por %p97, %p98
      %p101 = scmp.ne.s32.totalorder %s84, %s100
      %p102 = scmp.eq.s32.totalorder %s29, 0
      %p103 = por %p101, %p102
      %s104 = ssub.s32 %s23, %s30
      %p105 = scmp.eq.s32.totalorder %s104, 0
      %s107 = sadd.s32 %s106, 1
      %s108 = scalar_select %p105, %s106, %s107
      %p111 = pneg %p105
      %p112 = scmp.eq.s32.totalorder %s23, 1
      %p113 = por %p111, %p112
      %p114 = scmp.ne.s32.totalorder %s106, %s109
      %p115 = scmp.eq.s32.totalorder %s23, 0
      %p116 = por %p114, %p115
      %p117 = scmp.ne.s32.totalorder %s106, %s109
      %p118 = scmp.eq.s32.totalorder %s28, 1
      %p119 = por %p117, %p118
      %p120 = scmp.ne.s32.totalorder %s109, %s110
      %p121 = scmp.eq.s32.totalorder %s28, 0
      %p122 = por %p120, %p121
      %p123 = scmp.ne.s32.totalorder %s109, %s110
      %p124 = scmp.eq.s32.totalorder %s29, 1
      %p125 = por %p123, %p124
      %p127 = scmp.ne.s32.totalorder %s110, %s126
      %p128 = scmp.eq.s32.totalorder %s29, 0
      %p129 = por %p127, %p128
      %s130 = ssub.s32 %s23, %s30
      %p131 = scmp.eq.s32.totalorder %s130, 0
      %s133 = sadd.s32 %s132, 1
      %s134 = scalar_select %p131, %s132, %s133
      %p137 = pneg %p131
      %p138 = scmp.eq.s32.totalorder %s23, 1
      %p139 = por %p137, %p138
      %p140 = scmp.ne.s32.totalorder %s132, %s135
      %p141 = scmp.eq.s32.totalorder %s23, 0
      %p142 = por %p140, %p141
      %p143 = scmp.ne.s32.totalorder %s132, %s135
      %p144 = scmp.eq.s32.totalorder %s28, 1
      %p145 = por %p143, %p144
      %p146 = scmp.ne.s32.totalorder %s135, %s136
      %p147 = scmp.eq.s32.totalorder %s28, 0
      %p148 = por %p146, %p147
      %p149 = scmp.ne.s32.totalorder %s135, %s136
      %p150 = scmp.eq.s32.totalorder %s29, 1
      %p151 = por %p149, %p150
      %p153 = scmp.ne.s32.totalorder %s136, %s152
      %p154 = scmp.eq.s32.totalorder %s29, 0
      %p155 = por %p153, %p154
      %s157 = sadd.s32 %s156, 1
      %p160 = scmp.eq.s32.totalorder %s23, 1
      %p161 = scmp.ne.s32.totalorder %s156, %s158
      %p162 = scmp.eq.s32.totalorder %s23, 0
      %p163 = por %p161, %p162
      %p164 = scmp.ne.s32.totalorder %s156, %s158
      %p165 = scmp.eq.s32.totalorder %s28, 1
      %p166 = por %p164, %p165
      %p167 = scmp.ne.s32.totalorder %s158, %s159
      %p168 = scmp.eq.s32.totalorder %s28, 0
      %p169 = por %p167, %p168
      %p170 = scmp.ne.s32.totalorder %s158, %s159
      %p171 = scmp.eq.s32.totalorder %s29, 1
      %p172 = por %p170, %p171
      %p174 = scmp.ne.s32.totalorder %s159, %s173
      %p175 = scmp.eq.s32.totalorder %s29, 0
      %p176 = por %p174, %p175
      %s178 = sadd.s32 %s177, 1
      %p181 = scmp.eq.s32.totalorder %s23, 1
      %p182 = scmp.ne.s32.totalorder %s177, %s179
      %p183 = scmp.eq.s32.totalorder %s23, 0
      %p184 = por %p182, %p183
      %p185 = scmp.ne.s32.totalorder %s177, %s179
      %p186 = scmp.eq.s32.totalorder %s28, 1
      %p187 = por %p185, %p186
      %p188 = scmp.ne.s32.totalorder %s179, %s180
      %p189 = scmp.eq.s32.totalorder %s28, 0
      %p190 = por %p188, %p189
      %p191 = scmp.ne.s32.totalorder %s179, %s180
      %p192 = scmp.eq.s32.totalorder %s29, 1
      %p193 = por %p191, %p192
      %p195 = scmp.ne.s32.totalorder %s180, %s194
      %p196 = scmp.eq.s32.totalorder %s29, 0
      %p197 = por %p195, %p196
      %s199 = sadd.s32 %s198, 1
      %p202 = scmp.eq.s32.totalorder %s23, 1
      %p203 = scmp.ne.s32.totalorder %s198, %s200
      %p204 = scmp.eq.s32.totalorder %s23, 0
      %p205 = por %p203, %p204
      %p206 = scmp.ne.s32.totalorder %s198, %s200
      %p207 = scmp.eq.s32.totalorder %s28, 1
      %p208 = por %p206, %p207
      %p209 = scmp.ne.s32.totalorder %s200, %s201
      %p210 = scmp.eq.s32.totalorder %s28, 0
      %p211 = por %p209, %p210
      %p212 = scmp.ne.s32.totalorder %s200, %s201
      %p213 = scmp.eq.s32.totalorder %s29, 1
      %p214 = por %p212, %p213
      %p216 = scmp.ne.s32.totalorder %s201, %s215
      %p217 = scmp.eq.s32.totalorder %s29, 0
      %p218 = por %p216, %p217
      %p219 = scmp.le.s32.totalorder 1, %s23
      %p220 = scmp.lt.s32.totalorder %s23, 3
      %p221 = pnand %p219, %p220
      %p222 = pneg %p221
      // Predicated region
      $region9: #{net_forward.1} parent=5 // pred_check
        _
      $region10: #{net_forward.1} parent=5 // pred_check_branch
        %224 = sbr.rel (%p221) target = $region12
      $region11: #{net_forward.1} parent=5 // pred_region
        %s225 = ssub.s32 %s23, 1
        // Predicated region
        $region13: #{net_forward.1} parent=11 // pred_check
          %p226 = pneg %p44
        $region14: #{net_forward.1} parent=11 // pred_check_branch
          %228 = sbr.rel (%p226) target = $region16
        $region15: #{net_forward.1} parent=11 // pred_region
          _
        $region16: #{net_forward.1} parent=11 // pred_fallthru
          _
        // Predicated region
        $region17: #{net_forward.1} parent=11 // pred_check
          %p229 = pneg %p169
        $region18: #{net_forward.1} parent=11 // pred_check_branch
          %231 = sbr.rel (%p229) target = $region20
        $region19: #{net_forward.1} parent=11 // pred_region
          %s233 = ssub.s32 128, 128
          %234 = vsyncadd [#allocation8], %s233
          %s236 = sshll.u32 [#allocation9], 4
          %s237 = int_to_ptr.vmem [resolvable:$true] %s236
          %239 = dma.hbm_to_vmem [thread:$0]  %s5, 128, %s237, [#allocation8]
        $region20: #{net_forward.1} parent=11 // pred_fallthru
          _
        // Predicated region
        $region21: #{net_forward.1} parent=11 // pred_check
          %p240 = pneg %p190
        $region22: #{net_forward.1} parent=11 // pred_check_branch
          %242 = sbr.rel (%p240) target = $region24
        $region23: #{net_forward.1} parent=11 // pred_region
          %s244 = ssub.s32 128, 128
          %245 = vsyncadd [#allocation11], %s244
          %s247 = sshll.u32 [#allocation10], 4
          %s248 = int_to_ptr.vmem [resolvable:$true] %s247
          %250 = dma.hbm_to_vmem [thread:$0]  %s6, 128, %s248, [#allocation11]
        $region24: #{net_forward.1} parent=11 // pred_fallthru
          _
      $region12: #{net_forward.1} parent=5 // pred_fallthru
        _
      %p251 = scmp.lt.s32.totalorder %s23, 2
      // Predicated region
      $region25: #{net_forward.1} parent=5 // pred_check
        %p252 = pneg %p251
      $region26: #{net_forward.1} parent=5 // pred_check_branch
        %254 = sbr.rel (%p252) target = $region28
      $region27: #{net_forward.1} parent=5 // pred_region
        // Predicated region
        $region29: #{net_forward.1} parent=27 // pred_check
          %p255 = pneg %p64
        $region30: #{net_forward.1} parent=27 // pred_check_branch
          %257 = sbr.rel (%p255) target = $region32
        $region31: #{net_forward.1} parent=27 // pred_region
          %s258 = sand.u32 %s54, 1
          %s259 = scalar_lea.sflag [#allocation3], %s258
          %s260 = sand.u32 %s54, 1
          %s261 = smul.addr %s260, 7200
          %s262 = scalar_lea.vmem [#allocation2], %s261
          %s263 = smul.u32 8, %s23
          %s265 = ssub.s32 115200, 115200
          %266 = vsyncadd %s259, %s265
          %s267 = smul.addr %s263, 64
          %s268 = scalar_lea.hbm %s1, %s267
          %s269 = sshll.u32 %s262, 4
          %s270 = int_to_ptr.vmem [resolvable:$true] %s269
          %275 = dma.hbm_to_vmem [thread:$0]  %s268, 115200, %s270, %s259, 1024, 512, 32
        $region32: #{net_forward.1} parent=27 // pred_fallthru
          _
        // Predicated region
        $region33: #{net_forward.1} parent=27 // pred_check
          %p276 = pneg %p90
        $region34: #{net_forward.1} parent=27 // pred_check_branch
          %278 = sbr.rel (%p276) target = $region36
        $region35: #{net_forward.1} parent=27 // pred_region
          %s279 = sand.u32 %s23, 1
          %s280 = scalar_lea.sflag [#allocation5], %s279
          %s281 = sand.u32 %s80, 1
          %s282 = smul.addr %s281, 8
          %s283 = scalar_lea.vmem [#allocation4], %s282
          %s284 = smul.u32 8, %s23
          %s286 = ssub.s32 128, 128
          %287 = vsyncadd %s280, %s286
          %s288 = smul.addr %s284, 16
          %s289 = scalar_lea.hbm %s2, %s288
          %s291 = sshll.u32 %s283, 4
          %s292 = int_to_ptr.vmem [resolvable:$true] %s291
          %294 = dma.hbm_to_vmem [thread:$0]  %s289, 128, %s292, %s280
        $region36: #{net_forward.1} parent=27 // pred_fallthru
          _
        // Predicated region
        $region37: #{net_forward.1} parent=27 // pred_check
          %p295 = pneg %p116
        $region38: #{net_forward.1} parent=27 // pred_check_branch
          %297 = sbr.rel (%p295) target = $region40
        $region39: #{net_forward.1} parent=27 // pred_region
          %s298 = sand.u32 %s23, 1
          %s299 = scalar_lea.sflag [#allocation5], %s298
          %s300 = sand.u32 %s106, 1
          %s301 = smul.addr %s300, 8
          %s302 = scalar_lea.vmem [#allocation6], %s301
          %s303 = smul.u32 8, %s23
          %s305 = ssub.s32 128, 128
          %306 = vsyncadd %s299, %s305
          %s307 = smul.addr %s303, 16
          %s308 = scalar_lea.hbm %s3, %s307
          %s310 = sshll.u32 %s302, 4
          %s311 = int_to_ptr.vmem [resolvable:$true] %s310
          %313 = dma.hbm_to_vmem [thread:$0]  %s308, 128, %s311, %s299
        $region40: #{net_forward.1} parent=27 // pred_fallthru
          _
        // Predicated region
        $region41: #{net_forward.1} parent=27 // pred_check
          %p314 = pneg %p142
        $region42: #{net_forward.1} parent=27 // pred_check_branch
          %316 = sbr.rel (%p314) target = $region44
        $region43: #{net_forward.1} parent=27 // pred_region
          %s317 = sand.u32 %s23, 1
          %s318 = scalar_lea.sflag [#allocation8], %s317
          %s319 = sand.u32 %s132, 1
          %s320 = smul.addr %s319, 4096
          %s321 = scalar_lea.vmem [#allocation7], %s320
          %s322 = smul.u32 128, %s23
          %s324 = ssub.s32 65536, 65536
          %325 = vsyncadd %s318, %s324
          %s326 = smul.addr %s322, 8
          %s327 = smul.addr %s326, 64
          %s328 = scalar_lea.hbm %s4, %s327
          %s329 = sshll.u32 %s321, 4
          %s330 = int_to_ptr.vmem [resolvable:$true] %s329
          %335 = dma.hbm_to_vmem [thread:$0]  %s328, 65536, %s330, %s318, 512, 512, 32
        $region44: #{net_forward.1} parent=27 // pred_fallthru
          _
      $region28: #{net_forward.1} parent=5 // pred_fallthru
        _
      %p336 = scmp.le.s32.totalorder 1, %s23
      %p337 = scmp.lt.s32.totalorder %s23, 3
      %p338 = pnand %p336, %p337
      %p339 = pneg %p338
      // Predicated region
      $region45: #{net_forward.1} parent=5 // pred_check
        _
      $region46: #{net_forward.1} parent=5 // pred_check_branch
        %341 = sbr.rel (%p338) target = $region48
      $region47: #{net_forward.1} parent=5 // pred_region
        %s342 = ssub.s32 %s23, 1
        %s343 = sand.u32 %s57, 1
        %s344 = scalar_lea.sflag [#allocation3], %s343
        %s345 = sand.u32 %s57, 1
        %s346 = smul.addr %s345, 7200
        %s347 = scalar_lea.vmem [#allocation2], %s346
        // Predicated region
        $region49: #{net_forward.1} parent=47 // pred_check
          %p348 = pneg %p70
        $region50: #{net_forward.1} parent=47 // pred_check_branch
          %350 = sbr.rel (%p348) target = $region52
        $region51: #{net_forward.1} parent=47 // pred_region
          %351 = dma.done %s344, 115200
        $region52: #{net_forward.1} parent=47 // pred_fallthru
          _
        %s352 = sand.u32 %s28, 1
        %s353 = scalar_lea.sflag [#allocation5], %s352
        %s354 = sand.u32 %s83, 1
        %s355 = smul.addr %s354, 8
        %s356 = scalar_lea.vmem [#allocation4], %s355
        // Predicated region
        $region53: #{net_forward.1} parent=47 // pred_check
          %p357 = pneg %p96
        $region54: #{net_forward.1} parent=47 // pred_check_branch
          %359 = sbr.rel (%p357) target = $region56
        $region55: #{net_forward.1} parent=47 // pred_region
          %360 = dma.done %s353, 128
        $region56: #{net_forward.1} parent=47 // pred_fallthru
          _
        %s361 = sand.u32 %s28, 1
        %s362 = scalar_lea.sflag [#allocation5], %s361
        %s363 = sand.u32 %s109, 1
        %s364 = smul.addr %s363, 8
        %s365 = scalar_lea.vmem [#allocation6], %s364
        // Predicated region
        $region57: #{net_forward.1} parent=47 // pred_check
          %p366 = pneg %p122
        $region58: #{net_forward.1} parent=47 // pred_check_branch
          %368 = sbr.rel (%p366) target = $region60
        $region59: #{net_forward.1} parent=47 // pred_region
          %369 = dma.done %s362, 128
        $region60: #{net_forward.1} parent=47 // pred_fallthru
          _
        %s370 = sand.u32 %s28, 1
        %s371 = scalar_lea.sflag [#allocation8], %s370
        %s372 = sand.u32 %s135, 1
        %s373 = smul.addr %s372, 4096
        %s374 = scalar_lea.vmem [#allocation7], %s373
        // Predicated region
        $region61: #{net_forward.1} parent=47 // pred_check
          %p375 = pneg %p148
        $region62: #{net_forward.1} parent=47 // pred_check_branch
          %377 = sbr.rel (%p375) target = $region64
        $region63: #{net_forward.1} parent=47 // pred_region
          %378 = dma.done %s371, 65536
        $region64: #{net_forward.1} parent=47 // pred_fallthru
          _
        // Predicated region
        $region65: #{net_forward.1} parent=47 // pred_check
          %p379 = pneg %p169
        $region66: #{net_forward.1} parent=47 // pred_check_branch
          %381 = sbr.rel (%p379) target = $region68
        $region67: #{net_forward.1} parent=47 // pred_region
          %382 = dma.done [#allocation8], 128
        $region68: #{net_forward.1} parent=47 // pred_fallthru
          _
        // Predicated region
        $region69: #{net_forward.1} parent=47 // pred_check
          %p383 = pneg %p190
        $region70: #{net_forward.1} parent=47 // pred_check_branch
          %385 = sbr.rel (%p383) target = $region72
        $region71: #{net_forward.1} parent=47 // pred_region
          %386 = dma.done [#allocation11], 128
        $region72: #{net_forward.1} parent=47 // pred_fallthru
          _
        %p387 = pneg %p44
        %p388 = pneg %p41
        %s389 = sand.u32 %s57, 1
        %s390 = scalar_lea.sflag [#allocation3], %s389
        %s391 = sand.u32 %s57, 1
        %s392 = smul.addr %s391, 7200
        %s393 = scalar_lea.vmem [#allocation2], %s392
        %p394 = pneg %p70
        %p395 = pneg %p67
        %s396 = sand.u32 %s28, 1
        %s397 = scalar_lea.sflag [#allocation5], %s396
        %s398 = sand.u32 %s83, 1
        %s399 = smul.addr %s398, 8
        %s400 = scalar_lea.vmem [#allocation4], %s399
        %p401 = pneg %p96
        %p402 = pneg %p93
        %s403 = sand.u32 %s28, 1
        %s404 = scalar_lea.sflag [#allocation5], %s403
        %s405 = sand.u32 %s109, 1
        %s406 = smul.addr %s405, 8
        %s407 = scalar_lea.vmem [#allocation6], %s406
        %p408 = pneg %p122
        %p409 = pneg %p119
        %s410 = sand.u32 %s28, 1
        %s411 = scalar_lea.sflag [#allocation8], %s410
        %s412 = sand.u32 %s135, 1
        %s413 = smul.addr %s412, 4096
        %s414 = scalar_lea.vmem [#allocation7], %s413
        %p415 = pneg %p148
        %p416 = pneg %p145
        %p417 = pneg %p169
        %p418 = pneg %p166
        %p419 = pneg %p190
        %p420 = pneg %p187
        %p421 = pneg %p211
        %p422 = pneg %p208
        %s423 = smul.u32 8, %s28
        %s424 = smul.u32 8, %s28
        %s425 = smul.u32 8, %s28
        %s426 = smul.u32 128, %s28
        %p428 = scmp.eq.s32.totalorder %s28, 0
        // Predicated region
        $region73: #{net_forward.1} parent=47 // pred_check
          %p429 = pneg %p428
        $region74: #{net_forward.1} parent=47 // pred_check_branch
          %431 = sbr.rel (%p429) target = $region76
        $region75: #{net_forward.1} parent=47 // pred_region
          %432 = vst [vmem:[%s7] sm:$0xff] 0.0
          %433 = vst [vmem:[%s7 + $0x8] sm:$0xff] 0.0
          %434 = vst [vmem:[%s7 + $0x10] sm:$0xff] 0.0
          %435 = vst [vmem:[%s7 + $0x18] sm:$0xff] 0.0
        $region76: #{net_forward.1} parent=47 // pred_fallthru
          _
        %v436 = vld [vmem:[%s0] sm:$0xff]
        %v437 = vld [vmem:[%s0 + $0x8] sm:$0xff]
        %v438 = vld [vmem:[%s0 + $0x10] sm:$0xff]
        %v439 = vld [vmem:[%s0 + $0x18] sm:$0x3f]
        %v440 = vld [vmem:[%s347] sm:$0xff]
        %v441 = vld [vmem:[%s347 + $0x8] sm:$0xff]
        %v442 = vld [vmem:[%s347 + $0x10] sm:$0xff]
        %v443 = vld [vmem:[%s347 + $0x18] sm:$0xff]
        %v444 = vld [vmem:[%s347 + $0x20] sm:$0xff]
        %v445 = vld [vmem:[%s347 + $0x28] sm:$0xff]
        %v446 = vld [vmem:[%s347 + $0x30] sm:$0xff]
        %v447 = vld [vmem:[%s347 + $0x38] sm:$0xff]
        %v448 = vld [vmem:[%s347 + $0x40] sm:$0xff]
        %v449 = vld [vmem:[%s347 + $0x48] sm:$0xff]
        %v450 = vld [vmem:[%s347 + $0x50] sm:$0xff]
        %v451 = vld [vmem:[%s347 + $0x58] sm:$0xff]
        %v452 = vld [vmem:[%s347 + $0x60] sm:$0xff]
        %v453 = vld [vmem:[%s347 + $0x68] sm:$0xff]
        %v454 = vld [vmem:[%s347 + $0x70] sm:$0xff]
        %v455 = vld [vmem:[%s347 + $0x78] sm:$0xff]
        %v456 = vld [vmem:[%s347 + $0x80] sm:$0xff]
        %v457 = vld [vmem:[%s347 + $0x88] sm:$0xff]
        %v458 = vld [vmem:[%s347 + $0x90] sm:$0xff]
        %v459 = vld [vmem:[%s347 + $0x98] sm:$0xff]
        %v460 = vld [vmem:[%s347 + $0xa0] sm:$0xff]
        %v461 = vld [vmem:[%s347 + $0xa8] sm:$0xff]
        %v462 = vld [vmem:[%s347 + $0xb0] sm:$0xff]
        %v463 = vld [vmem:[%s347 + $0xb8] sm:$0xff]
        %v464 = vld [vmem:[%s347 + $0xc0] sm:$0xff]
        %v465 = vld [vmem:[%s347 + $0xc8] sm:$0xff]
        %v466 = vld [vmem:[%s347 + $0xd0] sm:$0xff]
        %v467 = vld [vmem:[%s347 + $0xd8] sm:$0xff]
        %v468 = vld [vmem:[%s347 + $0xe0] sm:$0xff]
        %v469 = vld [vmem:[%s347 + $0xe8] sm:$0xff]
        %v470 = vld [vmem:[%s347 + $0xf0] sm:$0xff]
        %v471 = vld [vmem:[%s347 + $0xf8] sm:$0xff]
        %v472 = vld [vmem:[%s347 + $0x100] sm:$0xff]
        %v473 = vld [vmem:[%s347 + $0x108] sm:$0xff]
        %v474 = vld [vmem:[%s347 + $0x110] sm:$0xff]
        %v475 = vld [vmem:[%s347 + $0x118] sm:$0xff]
        %v476 = vld [vmem:[%s347 + $0x120] sm:$0xff]
        %v477 = vld [vmem:[%s347 + $0x128] sm:$0xff]
        %v478 = vld [vmem:[%s347 + $0x130] sm:$0xff]
        %v479 = vld [vmem:[%s347 + $0x138] sm:$0xff]
        %v480 = vld [vmem:[%s347 + $0x140] sm:$0xff]
        %v481 = vld [vmem:[%s347 + $0x148] sm:$0xff]
        %v482 = vld [vmem:[%s347 + $0x150] sm:$0xff]
        %v483 = vld [vmem:[%s347 + $0x158] sm:$0xff]
        %v484 = vld [vmem:[%s347 + $0x160] sm:$0xff]
        %v485 = vld [vmem:[%s347 + $0x168] sm:$0xff]
        %v486 = vld [vmem:[%s347 + $0x170] sm:$0xff]
        %v487 = vld [vmem:[%s347 + $0x178] sm:$0xff]
        %v488 = vld [vmem:[%s347 + $0x180] sm:$0xff]
        %v489 = vld [vmem:[%s347 + $0x188] sm:$0xff]
        %v490 = vld [vmem:[%s347 + $0x190] sm:$0xff]
        %v491 = vld [vmem:[%s347 + $0x198] sm:$0xff]
        %v492 = vld [vmem:[%s347 + $0x1a0] sm:$0xff]
        %v493 = vld [vmem:[%s347 + $0x1a8] sm:$0xff]
        %v494 = vld [vmem:[%s347 + $0x1b0] sm:$0xff]
        %v495 = vld [vmem:[%s347 + $0x1b8] sm:$0xff]
        %v496 = vld [vmem:[%s347 + $0x1c0] sm:$0xff]
        %v497 = vld [vmem:[%s347 + $0x1c8] sm:$0xff]
        %v498 = vld [vmem:[%s347 + $0x1d0] sm:$0xff]
        %v499 = vld [vmem:[%s347 + $0x1d8] sm:$0xff]
        %v500 = vld [vmem:[%s347 + $0x1e0] sm:$0xff]
        %v501 = vld [vmem:[%s347 + $0x1e8] sm:$0xff]
        %v502 = vld [vmem:[%s347 + $0x1f0] sm:$0xff]
        %v503 = vld [vmem:[%s347 + $0x1f8] sm:$0xff]
        %v504 = vld [vmem:[%s347 + $0x200] sm:$0xff]
        %v505 = vld [vmem:[%s347 + $0x208] sm:$0xff]
        %v506 = vld [vmem:[%s347 + $0x210] sm:$0xff]
        %v507 = vld [vmem:[%s347 + $0x218] sm:$0xff]
        %v508 = vld [vmem:[%s347 + $0x220] sm:$0xff]
        %v509 = vld [vmem:[%s347 + $0x228] sm:$0xff]
        %v510 = vld [vmem:[%s347 + $0x230] sm:$0xff]
        %v511 = vld [vmem:[%s347 + $0x238] sm:$0xff]
        %v512 = vld [vmem:[%s347 + $0x240] sm:$0xff]
        %v513 = vld [vmem:[%s347 + $0x248] sm:$0xff]
        %v514 = vld [vmem:[%s347 + $0x250] sm:$0xff]
        %v515 = vld [vmem:[%s347 + $0x258] sm:$0xff]
        %v516 = vld [vmem:[%s347 + $0x260] sm:$0xff]
        %v517 = vld [vmem:[%s347 + $0x268] sm:$0xff]
        %v518 = vld [vmem:[%s347 + $0x270] sm:$0xff]
        %v519 = vld [vmem:[%s347 + $0x278] sm:$0xff]
        %v520 = vld [vmem:[%s347 + $0x280] sm:$0xff]
        %v521 = vld [vmem:[%s347 + $0x288] sm:$0xff]
        %v522 = vld [vmem:[%s347 + $0x290] sm:$0xff]
        %v523 = vld [vmem:[%s347 + $0x298] sm:$0xff]
        %v524 = vld [vmem:[%s347 + $0x2a0] sm:$0xff]
        %v525 = vld [vmem:[%s347 + $0x2a8] sm:$0xff]
        %v526 = vld [vmem:[%s347 + $0x2b0] sm:$0xff]
        %v527 = vld [vmem:[%s347 + $0x2b8] sm:$0xff]
        %v528 = vld [vmem:[%s347 + $0x2c0] sm:$0xff]
        %v529 = vld [vmem:[%s347 + $0x2c8] sm:$0xff]
        %v530 = vld [vmem:[%s347 + $0x2d0] sm:$0xff]
        %v531 = vld [vmem:[%s347 + $0x2d8] sm:$0xff]
        %v532 = vld [vmem:[%s347 + $0x2e0] sm:$0xff]
        %v533 = vld [vmem:[%s347 + $0x2e8] sm:$0xff]
        %v534 = vld [vmem:[%s347 + $0x2f0] sm:$0xff]
        %v535 = vld [vmem:[%s347 + $0x2f8] sm:$0xff]
        %v536 = vld [vmem:[%s347 + $0x300] sm:$0xff]
        %v537 = vld [vmem:[%s347 + $0x308] sm:$0xff]
        %v538 = vld [vmem:[%s347 + $0x310] sm:$0xff]
        %v539 = vld [vmem:[%s347 + $0x318] sm:$0xff]
        %v540 = vld [vmem:[%s347 + $0x320] sm:$0xff]
        %v541 = vld [vmem:[%s347 + $0x328] sm:$0xff]
        %v542 = vld [vmem:[%s347 + $0x330] sm:$0xff]
        %v543 = vld [vmem:[%s347 + $0x338] sm:$0xff]
        %v544 = vld [vmem:[%s347 + $0x340] sm:$0xff]
        %v545 = vld [vmem:[%s347 + $0x348] sm:$0xff]
        %v546 = vld [vmem:[%s347 + $0x350] sm:$0xff]
        %v547 = vld [vmem:[%s347 + $0x358] sm:$0xff]
        %v548 = vld [vmem:[%s347 + $0x360] sm:$0xff]
        %v549 = vld [vmem:[%s347 + $0x368] sm:$0xff]
        %v550 = vld [vmem:[%s347 + $0x370] sm:$0xff]
        %v551 = vld [vmem:[%s347 + $0x378] sm:$0xff]
        %v552 = vld [vmem:[%s347 + $0x380] sm:$0xff]
        %v553 = vld [vmem:[%s347 + $0x388] sm:$0xff]
        %v554 = vld [vmem:[%s347 + $0x390] sm:$0xff]
        %v555 = vld [vmem:[%s347 + $0x398] sm:$0xff]
        %v556 = vld [vmem:[%s347 + $0x3a0] sm:$0xff]
        %v557 = vld [vmem:[%s347 + $0x3a8] sm:$0xff]
        %v558 = vld [vmem:[%s347 + $0x3b0] sm:$0xff]
        %v559 = vld [vmem:[%s347 + $0x3b8] sm:$0xff]
        %v560 = vld [vmem:[%s347 + $0x3c0] sm:$0xff]
        %v561 = vld [vmem:[%s347 + $0x3c8] sm:$0xff]
        %v562 = vld [vmem:[%s347 + $0x3d0] sm:$0xff]
        %v563 = vld [vmem:[%s347 + $0x3d8] sm:$0xff]
        %v564 = vld [vmem:[%s347 + $0x3e0] sm:$0xff]
        %v565 = vld [vmem:[%s347 + $0x3e8] sm:$0xff]
        %v566 = vld [vmem:[%s347 + $0x3f0] sm:$0xff]
        %v567 = vld [vmem:[%s347 + $0x3f8] sm:$0xff]
        %v568 = vld [vmem:[%s347 + $0x400] sm:$0xff]
        %v569 = vld [vmem:[%s347 + $0x408] sm:$0xff]
        %v570 = vld [vmem:[%s347 + $0x410] sm:$0xff]
        %v571 = vld [vmem:[%s347 + $0x418] sm:$0xff]
        %v572 = vld [vmem:[%s347 + $0x420] sm:$0xff]
        %v573 = vld [vmem:[%s347 + $0x428] sm:$0xff]
        %v574 = vld [vmem:[%s347 + $0x430] sm:$0xff]
        %v575 = vld [vmem:[%s347 + $0x438] sm:$0xff]
        %v576 = vld [vmem:[%s347 + $0x440] sm:$0xff]
        %v577 = vld [vmem:[%s347 + $0x448] sm:$0xff]
        %v578 = vld [vmem:[%s347 + $0x450] sm:$0xff]
        %v579 = vld [vmem:[%s347 + $0x458] sm:$0xff]
        %v580 = vld [vmem:[%s347 + $0x460] sm:$0xff]
        %v581 = vld [vmem:[%s347 + $0x468] sm:$0xff]
        %v582 = vld [vmem:[%s347 + $0x470] sm:$0xff]
        %v583 = vld [vmem:[%s347 + $0x478] sm:$0xff]
        %v584 = vld [vmem:[%s347 + $0x480] sm:$0xff]
        %v585 = vld [vmem:[%s347 + $0x488] sm:$0xff]
        %v586 = vld [vmem:[%s347 + $0x490] sm:$0xff]
        %v587 = vld [vmem:[%s347 + $0x498] sm:$0xff]
        %v588 = vld [vmem:[%s347 + $0x4a0] sm:$0xff]
        %v589 = vld [vmem:[%s347 + $0x4a8] sm:$0xff]
        %v590 = vld [vmem:[%s347 + $0x4b0] sm:$0xff]
        %v591 = vld [vmem:[%s347 + $0x4b8] sm:$0xff]
        %v592 = vld [vmem:[%s347 + $0x4c0] sm:$0xff]
        %v593 = vld [vmem:[%s347 + $0x4c8] sm:$0xff]
        %v594 = vld [vmem:[%s347 + $0x4d0] sm:$0xff]
        %v595 = vld [vmem:[%s347 + $0x4d8] sm:$0xff]
        %v596 = vld [vmem:[%s347 + $0x4e0] sm:$0xff]
        %v597 = vld [vmem:[%s347 + $0x4e8] sm:$0xff]
        %v598 = vld [vmem:[%s347 + $0x4f0] sm:$0xff]
        %v599 = vld [vmem:[%s347 + $0x4f8] sm:$0xff]
        %v600 = vld [vmem:[%s347 + $0x500] sm:$0xff]
        %v601 = vld [vmem:[%s347 + $0x508] sm:$0xff]
        %v602 = vld [vmem:[%s347 + $0x510] sm:$0xff]
        %v603 = vld [vmem:[%s347 + $0x518] sm:$0xff]
        %v604 = vld [vmem:[%s347 + $0x520] sm:$0xff]
        %v605 = vld [vmem:[%s347 + $0x528] sm:$0xff]
        %v606 = vld [vmem:[%s347 + $0x530] sm:$0xff]
        %v607 = vld [vmem:[%s347 + $0x538] sm:$0xff]
        %v608 = vld [vmem:[%s347 + $0x540] sm:$0xff]
        %v609 = vld [vmem:[%s347 + $0x548] sm:$0xff]
        %v610 = vld [vmem:[%s347 + $0x550] sm:$0xff]
        %v611 = vld [vmem:[%s347 + $0x558] sm:$0xff]
        %v612 = vld [vmem:[%s347 + $0x560] sm:$0xff]
        %v613 = vld [vmem:[%s347 + $0x568] sm:$0xff]
        %v614 = vld [vmem:[%s347 + $0x570] sm:$0xff]
        %v615 = vld [vmem:[%s347 + $0x578] sm:$0xff]
        %v616 = vld [vmem:[%s347 + $0x580] sm:$0xff]
        %v617 = vld [vmem:[%s347 + $0x588] sm:$0xff]
        %v618 = vld [vmem:[%s347 + $0x590] sm:$0xff]
        %v619 = vld [vmem:[%s347 + $0x598] sm:$0xff]
        %v620 = vld [vmem:[%s347 + $0x5a0] sm:$0xff]
        %v621 = vld [vmem:[%s347 + $0x5a8] sm:$0xff]
        %v622 = vld [vmem:[%s347 + $0x5b0] sm:$0xff]
        %v623 = vld [vmem:[%s347 + $0x5b8] sm:$0xff]
        %v624 = vld [vmem:[%s347 + $0x5c0] sm:$0xff]
        %v625 = vld [vmem:[%s347 + $0x5c8] sm:$0xff]
        %v626 = vld [vmem:[%s347 + $0x5d0] sm:$0xff]
        %v627 = vld [vmem:[%s347 + $0x5d8] sm:$0xff]
        %v628 = vld [vmem:[%s347 + $0x5e0] sm:$0xff]
        %v629 = vld [vmem:[%s347 + $0x5e8] sm:$0xff]
        %v630 = vld [vmem:[%s347 + $0x5f0] sm:$0xff]
        %v631 = vld [vmem:[%s347 + $0x5f8] sm:$0xff]
        %v632 = vld [vmem:[%s347 + $0x600] sm:$0xff]
        %v633 = vld [vmem:[%s347 + $0x608] sm:$0xff]
        %v634 = vld [vmem:[%s347 + $0x610] sm:$0xff]
        %v635 = vld [vmem:[%s347 + $0x618] sm:$0xff]
        %v636 = vld [vmem:[%s347 + $0x620] sm:$0xff]
        %v637 = vld [vmem:[%s347 + $0x628] sm:$0xff]
        %v638 = vld [vmem:[%s347 + $0x630] sm:$0xff]
        %v639 = vld [vmem:[%s347 + $0x638] sm:$0xff]
        %v640 = vld [vmem:[%s347 + $0x640] sm:$0xff]
        %v641 = vld [vmem:[%s347 + $0x648] sm:$0xff]
        %v642 = vld [vmem:[%s347 + $0x650] sm:$0xff]
        %v643 = vld [vmem:[%s347 + $0x658] sm:$0xff]
        %v644 = vld [vmem:[%s347 + $0x660] sm:$0xff]
        %v645 = vld [vmem:[%s347 + $0x668] sm:$0xff]
        %v646 = vld [vmem:[%s347 + $0x670] sm:$0xff]
        %v647 = vld [vmem:[%s347 + $0x678] sm:$0xff]
        %v648 = vld [vmem:[%s347 + $0x680] sm:$0xff]
        %v649 = vld [vmem:[%s347 + $0x688] sm:$0xff]
        %v650 = vld [vmem:[%s347 + $0x690] sm:$0xff]
        %v651 = vld [vmem:[%s347 + $0x698] sm:$0xff]
        %v652 = vld [vmem:[%s347 + $0x6a0] sm:$0xff]
        %v653 = vld [vmem:[%s347 + $0x6a8] sm:$0xff]
        %v654 = vld [vmem:[%s347 + $0x6b0] sm:$0xff]
        %v655 = vld [vmem:[%s347 + $0x6b8] sm:$0xff]
        %v656 = vld [vmem:[%s347 + $0x6c0] sm:$0xff]
        %v657 = vld [vmem:[%s347 + $0x6c8] sm:$0xff]
        %v658 = vld [vmem:[%s347 + $0x6d0] sm:$0xff]
        %v659 = vld [vmem:[%s347 + $0x6d8] sm:$0xff]
        %v660 = vld [vmem:[%s347 + $0x6e0] sm:$0xff]
        %v661 = vld [vmem:[%s347 + $0x6e8] sm:$0xff]
        %v662 = vld [vmem:[%s347 + $0x6f0] sm:$0xff]
        %v663 = vld [vmem:[%s347 + $0x6f8] sm:$0xff]
        %v664 = vld [vmem:[%s347 + $0x700] sm:$0xff]
        %v665 = vld [vmem:[%s347 + $0x708] sm:$0xff]
        %v666 = vld [vmem:[%s347 + $0x710] sm:$0xff]
        %v667 = vld [vmem:[%s347 + $0x718] sm:$0xff]
        %v668 = vld [vmem:[%s347 + $0x720] sm:$0xff]
        %v669 = vld [vmem:[%s347 + $0x728] sm:$0xff]
        %v670 = vld [vmem:[%s347 + $0x730] sm:$0xff]
        %v671 = vld [vmem:[%s347 + $0x738] sm:$0xff]
        %v672 = vld [vmem:[%s347 + $0x740] sm:$0xff]
        %v673 = vld [vmem:[%s347 + $0x748] sm:$0xff]
        %v674 = vld [vmem:[%s347 + $0x750] sm:$0xff]
        %v675 = vld [vmem:[%s347 + $0x758] sm:$0xff]
        %v676 = vld [vmem:[%s347 + $0x760] sm:$0xff]
        %v677 = vld [vmem:[%s347 + $0x768] sm:$0xff]
        %v678 = vld [vmem:[%s347 + $0x770] sm:$0xff]
        %v679 = vld [vmem:[%s347 + $0x778] sm:$0xff]
        %v680 = vld [vmem:[%s347 + $0x780] sm:$0xff]
        %v681 = vld [vmem:[%s347 + $0x788] sm:$0xff]
        %v682 = vld [vmem:[%s347 + $0x790] sm:$0xff]
        %v683 = vld [vmem:[%s347 + $0x798] sm:$0xff]
        %v684 = vld [vmem:[%s347 + $0x7a0] sm:$0xff]
        %v685 = vld [vmem:[%s347 + $0x7a8] sm:$0xff]
        %v686 = vld [vmem:[%s347 + $0x7b0] sm:$0xff]
        %v687 = vld [vmem:[%s347 + $0x7b8] sm:$0xff]
        %v688 = vld [vmem:[%s347 + $0x7c0] sm:$0xff]
        %v689 = vld [vmem:[%s347 + $0x7c8] sm:$0xff]
        %v690 = vld [vmem:[%s347 + $0x7d0] sm:$0xff]
        %v691 = vld [vmem:[%s347 + $0x7d8] sm:$0xff]
        %v692 = vld [vmem:[%s347 + $0x7e0] sm:$0xff]
        %v693 = vld [vmem:[%s347 + $0x7e8] sm:$0xff]
        %v694 = vld [vmem:[%s347 + $0x7f0] sm:$0xff]
        %v695 = vld [vmem:[%s347 + $0x7f8] sm:$0xff]
        %v696 = vld [vmem:[%s347 + $0x800] sm:$0xff]
        %v697 = vld [vmem:[%s347 + $0x808] sm:$0xff]
        %v698 = vld [vmem:[%s347 + $0x810] sm:$0xff]
        %v699 = vld [vmem:[%s347 + $0x818] sm:$0xff]
        %v700 = vld [vmem:[%s347 + $0x820] sm:$0xff]
        %v701 = vld [vmem:[%s347 + $0x828] sm:$0xff]
        %v702 = vld [vmem:[%s347 + $0x830] sm:$0xff]
        %v703 = vld [vmem:[%s347 + $0x838] sm:$0xff]
        %v704 = vld [vmem:[%s347 + $0x840] sm:$0xff]
        %v705 = vld [vmem:[%s347 + $0x848] sm:$0xff]
        %v706 = vld [vmem:[%s347 + $0x850] sm:$0xff]
        %v707 = vld [vmem:[%s347 + $0x858] sm:$0xff]
        %v708 = vld [vmem:[%s347 + $0x860] sm:$0xff]
        %v709 = vld [vmem:[%s347 + $0x868] sm:$0xff]
        %v710 = vld [vmem:[%s347 + $0x870] sm:$0xff]
        %v711 = vld [vmem:[%s347 + $0x878] sm:$0xff]
        %v712 = vld [vmem:[%s347 + $0x880] sm:$0xff]
        %v713 = vld [vmem:[%s347 + $0x888] sm:$0xff]
        %v714 = vld [vmem:[%s347 + $0x890] sm:$0xff]
        %v715 = vld [vmem:[%s347 + $0x898] sm:$0xff]
        %v716 = vld [vmem:[%s347 + $0x8a0] sm:$0xff]
        %v717 = vld [vmem:[%s347 + $0x8a8] sm:$0xff]
        %v718 = vld [vmem:[%s347 + $0x8b0] sm:$0xff]
        %v719 = vld [vmem:[%s347 + $0x8b8] sm:$0xff]
        %v720 = vld [vmem:[%s347 + $0x8c0] sm:$0xff]
        %v721 = vld [vmem:[%s347 + $0x8c8] sm:$0xff]
        %v722 = vld [vmem:[%s347 + $0x8d0] sm:$0xff]
        %v723 = vld [vmem:[%s347 + $0x8d8] sm:$0xff]
        %v724 = vld [vmem:[%s347 + $0x8e0] sm:$0xff]
        %v725 = vld [vmem:[%s347 + $0x8e8] sm:$0xff]
        %v726 = vld [vmem:[%s347 + $0x8f0] sm:$0xff]
        %v727 = vld [vmem:[%s347 + $0x8f8] sm:$0xff]
        %v728 = vld [vmem:[%s347 + $0x900] sm:$0xff]
        %v729 = vld [vmem:[%s347 + $0x908] sm:$0xff]
        %v730 = vld [vmem:[%s347 + $0x910] sm:$0xff]
        %v731 = vld [vmem:[%s347 + $0x918] sm:$0xff]
        %v732 = vld [vmem:[%s347 + $0x920] sm:$0xff]
        %v733 = vld [vmem:[%s347 + $0x928] sm:$0xff]
        %v734 = vld [vmem:[%s347 + $0x930] sm:$0xff]
        %v735 = vld [vmem:[%s347 + $0x938] sm:$0xff]
        %v736 = vld [vmem:[%s347 + $0x940] sm:$0xff]
        %v737 = vld [vmem:[%s347 + $0x948] sm:$0xff]
        %v738 = vld [vmem:[%s347 + $0x950] sm:$0xff]
        %v739 = vld [vmem:[%s347 + $0x958] sm:$0xff]
        %v740 = vld [vmem:[%s347 + $0x960] sm:$0xff]
        %v741 = vld [vmem:[%s347 + $0x968] sm:$0xff]
        %v742 = vld [vmem:[%s347 + $0x970] sm:$0xff]
        %v743 = vld [vmem:[%s347 + $0x978] sm:$0xff]
        %v744 = vld [vmem:[%s347 + $0x980] sm:$0xff]
        %v745 = vld [vmem:[%s347 + $0x988] sm:$0xff]
        %v746 = vld [vmem:[%s347 + $0x990] sm:$0xff]
        %v747 = vld [vmem:[%s347 + $0x998] sm:$0xff]
        %v748 = vld [vmem:[%s347 + $0x9a0] sm:$0xff]
        %v749 = vld [vmem:[%s347 + $0x9a8] sm:$0xff]
        %v750 = vld [vmem:[%s347 + $0x9b0] sm:$0xff]
        %v751 = vld [vmem:[%s347 + $0x9b8] sm:$0xff]
        %v752 = vld [vmem:[%s347 + $0x9c0] sm:$0xff]
        %v753 = vld [vmem:[%s347 + $0x9c8] sm:$0xff]
        %v754 = vld [vmem:[%s347 + $0x9d0] sm:$0xff]
        %v755 = vld [vmem:[%s347 + $0x9d8] sm:$0xff]
        %v756 = vld [vmem:[%s347 + $0x9e0] sm:$0xff]
        %v757 = vld [vmem:[%s347 + $0x9e8] sm:$0xff]
        %v758 = vld [vmem:[%s347 + $0x9f0] sm:$0xff]
        %v759 = vld [vmem:[%s347 + $0x9f8] sm:$0xff]
        %v760 = vld [vmem:[%s347 + $0xa00] sm:$0xff]
        %v761 = vld [vmem:[%s347 + $0xa08] sm:$0xff]
        %v762 = vld [vmem:[%s347 + $0xa10] sm:$0xff]
        %v763 = vld [vmem:[%s347 + $0xa18] sm:$0xff]
        %v764 = vld [vmem:[%s347 + $0xa20] sm:$0xff]
        %v765 = vld [vmem:[%s347 + $0xa28] sm:$0xff]
        %v766 = vld [vmem:[%s347 + $0xa30] sm:$0xff]
        %v767 = vld [vmem:[%s347 + $0xa38] sm:$0xff]
        %v768 = vld [vmem:[%s347 + $0xa40] sm:$0xff]
        %v769 = vld [vmem:[%s347 + $0xa48] sm:$0xff]
        %v770 = vld [vmem:[%s347 + $0xa50] sm:$0xff]
        %v771 = vld [vmem:[%s347 + $0xa58] sm:$0xff]
        %v772 = vld [vmem:[%s347 + $0xa60] sm:$0xff]
        %v773 = vld [vmem:[%s347 + $0xa68] sm:$0xff]
        %v774 = vld [vmem:[%s347 + $0xa70] sm:$0xff]
        %v775 = vld [vmem:[%s347 + $0xa78] sm:$0xff]
        %v776 = vld [vmem:[%s347 + $0xa80] sm:$0xff]
        %v777 = vld [vmem:[%s347 + $0xa88] sm:$0xff]
        %v778 = vld [vmem:[%s347 + $0xa90] sm:$0xff]
        %v779 = vld [vmem:[%s347 + $0xa98] sm:$0xff]
        %v780 = vld [vmem:[%s347 + $0xaa0] sm:$0xff]
        %v781 = vld [vmem:[%s347 + $0xaa8] sm:$0xff]
        %v782 = vld [vmem:[%s347 + $0xab0] sm:$0xff]
        %v783 = vld [vmem:[%s347 + $0xab8] sm:$0xff]
        %v784 = vld [vmem:[%s347 + $0xac0] sm:$0xff]
        %v785 = vld [vmem:[%s347 + $0xac8] sm:$0xff]
        %v786 = vld [vmem:[%s347 + $0xad0] sm:$0xff]
        %v787 = vld [vmem:[%s347 + $0xad8] sm:$0xff]
        %v788 = vld [vmem:[%s347 + $0xae0] sm:$0xff]
        %v789 = vld [vmem:[%s347 + $0xae8] sm:$0xff]
        %v790 = vld [vmem:[%s347 + $0xaf0] sm:$0xff]
        %v791 = vld [vmem:[%s347 + $0xaf8] sm:$0xff]
        %v792 = vld [vmem:[%s347 + $0xb00] sm:$0xff]
        %v793 = vld [vmem:[%s347 + $0xb08] sm:$0xff]
        %v794 = vld [vmem:[%s347 + $0xb10] sm:$0xff]
        %v795 = vld [vmem:[%s347 + $0xb18] sm:$0xff]
        %v796 = vld [vmem:[%s347 + $0xb20] sm:$0xff]
        %v797 = vld [vmem:[%s347 + $0xb28] sm:$0xff]
        %v798 = vld [vmem:[%s347 + $0xb30] sm:$0xff]
        %v799 = vld [vmem:[%s347 + $0xb38] sm:$0xff]
        %v800 = vld [vmem:[%s347 + $0xb40] sm:$0xff]
        %v801 = vld [vmem:[%s347 + $0xb48] sm:$0xff]
        %v802 = vld [vmem:[%s347 + $0xb50] sm:$0xff]
        %v803 = vld [vmem:[%s347 + $0xb58] sm:$0xff]
        %v804 = vld [vmem:[%s347 + $0xb60] sm:$0xff]
        %v805 = vld [vmem:[%s347 + $0xb68] sm:$0xff]
        %v806 = vld [vmem:[%s347 + $0xb70] sm:$0xff]
        %v807 = vld [vmem:[%s347 + $0xb78] sm:$0xff]
        %v808 = vld [vmem:[%s347 + $0xb80] sm:$0xff]
        %v809 = vld [vmem:[%s347 + $0xb88] sm:$0xff]
        %v810 = vld [vmem:[%s347 + $0xb90] sm:$0xff]
        %v811 = vld [vmem:[%s347 + $0xb98] sm:$0xff]
        %v812 = vld [vmem:[%s347 + $0xba0] sm:$0xff]
        %v813 = vld [vmem:[%s347 + $0xba8] sm:$0xff]
        %v814 = vld [vmem:[%s347 + $0xbb0] sm:$0xff]
        %v815 = vld [vmem:[%s347 + $0xbb8] sm:$0xff]
        %v816 = vld [vmem:[%s347 + $0xbc0] sm:$0xff]
        %v817 = vld [vmem:[%s347 + $0xbc8] sm:$0xff]
        %v818 = vld [vmem:[%s347 + $0xbd0] sm:$0xff]
        %v819 = vld [vmem:[%s347 + $0xbd8] sm:$0xff]
        %v820 = vld [vmem:[%s347 + $0xbe0] sm:$0xff]
        %v821 = vld [vmem:[%s347 + $0xbe8] sm:$0xff]
        %v822 = vld [vmem:[%s347 + $0xbf0] sm:$0xff]
        %v823 = vld [vmem:[%s347 + $0xbf8] sm:$0xff]
        %v824 = vld [vmem:[%s347 + $0xc00] sm:$0xff]
        %v825 = vld [vmem:[%s347 + $0xc08] sm:$0xff]
        %v826 = vld [vmem:[%s347 + $0xc10] sm:$0xff]
        %v827 = vld [vmem:[%s347 + $0xc18] sm:$0xff]
        %v828 = vld [vmem:[%s347 + $0xc20] sm:$0xff]
        %v829 = vld [vmem:[%s347 + $0xc28] sm:$0xff]
        %v830 = vld [vmem:[%s347 + $0xc30] sm:$0xff]
        %v831 = vld [vmem:[%s347 + $0xc38] sm:$0xff]
        %v832 = vld [vmem:[%s347 + $0xc40] sm:$0xff]
        %v833 = vld [vmem:[%s347 + $0xc48] sm:$0xff]
        %v834 = vld [vmem:[%s347 + $0xc50] sm:$0xff]
        %v835 = vld [vmem:[%s347 + $0xc58] sm:$0xff]
        %v836 = vld [vmem:[%s347 + $0xc60] sm:$0xff]
        %v837 = vld [vmem:[%s347 + $0xc68] sm:$0xff]
        %v838 = vld [vmem:[%s347 + $0xc70] sm:$0xff]
        %v839 = vld [vmem:[%s347 + $0xc78] sm:$0xff]
        %v840 = vld [vmem:[%s347 + $0xc80] sm:$0xff]
        %v841 = vld [vmem:[%s347 + $0xc88] sm:$0xff]
        %v842 = vld [vmem:[%s347 + $0xc90] sm:$0xff]
        %v843 = vld [vmem:[%s347 + $0xc98] sm:$0xff]
        %v844 = vld [vmem:[%s347 + $0xca0] sm:$0xff]
        %v845 = vld [vmem:[%s347 + $0xca8] sm:$0xff]
        %v846 = vld [vmem:[%s347 + $0xcb0] sm:$0xff]
        %v847 = vld [vmem:[%s347 + $0xcb8] sm:$0xff]
        %v848 = vld [vmem:[%s347 + $0xcc0] sm:$0xff]
        %v849 = vld [vmem:[%s347 + $0xcc8] sm:$0xff]
        %v850 = vld [vmem:[%s347 + $0xcd0] sm:$0xff]
        %v851 = vld [vmem:[%s347 + $0xcd8] sm:$0xff]
        %v852 = vld [vmem:[%s347 + $0xce0] sm:$0xff]
        %v853 = vld [vmem:[%s347 + $0xce8] sm:$0xff]
        %v854 = vld [vmem:[%s347 + $0xcf0] sm:$0xff]
        %v855 = vld [vmem:[%s347 + $0xcf8] sm:$0xff]
        %v856 = vld [vmem:[%s347 + $0xd00] sm:$0xff]
        %v857 = vld [vmem:[%s347 + $0xd08] sm:$0xff]
        %v858 = vld [vmem:[%s347 + $0xd10] sm:$0xff]
        %v859 = vld [vmem:[%s347 + $0xd18] sm:$0xff]
        %v860 = vld [vmem:[%s347 + $0xd20] sm:$0xff]
        %v861 = vld [vmem:[%s347 + $0xd28] sm:$0xff]
        %v862 = vld [vmem:[%s347 + $0xd30] sm:$0xff]
        %v863 = vld [vmem:[%s347 + $0xd38] sm:$0xff]
        %v864 = vld [vmem:[%s347 + $0xd40] sm:$0xff]
        %v865 = vld [vmem:[%s347 + $0xd48] sm:$0xff]
        %v866 = vld [vmem:[%s347 + $0xd50] sm:$0xff]
        %v867 = vld [vmem:[%s347 + $0xd58] sm:$0xff]
        %v868 = vld [vmem:[%s347 + $0xd60] sm:$0xff]
        %v869 = vld [vmem:[%s347 + $0xd68] sm:$0xff]
        %v870 = vld [vmem:[%s347 + $0xd70] sm:$0xff]
        %v871 = vld [vmem:[%s347 + $0xd78] sm:$0xff]
        %v872 = vld [vmem:[%s347 + $0xd80] sm:$0xff]
        %v873 = vld [vmem:[%s347 + $0xd88] sm:$0xff]
        %v874 = vld [vmem:[%s347 + $0xd90] sm:$0xff]
        %v875 = vld [vmem:[%s347 + $0xd98] sm:$0xff]
        %v876 = vld [vmem:[%s347 + $0xda0] sm:$0xff]
        %v877 = vld [vmem:[%s347 + $0xda8] sm:$0xff]
        %v878 = vld [vmem:[%s347 + $0xdb0] sm:$0xff]
        %v879 = vld [vmem:[%s347 + $0xdb8] sm:$0xff]
        %v880 = vld [vmem:[%s347 + $0xdc0] sm:$0xff]
        %v881 = vld [vmem:[%s347 + $0xdc8] sm:$0xff]
        %v882 = vld [vmem:[%s347 + $0xdd0] sm:$0xff]
        %v883 = vld [vmem:[%s347 + $0xdd8] sm:$0xff]
        %v884 = vld [vmem:[%s347 + $0xde0] sm:$0xff]
        %v885 = vld [vmem:[%s347 + $0xde8] sm:$0xff]
        %v886 = vld [vmem:[%s347 + $0xdf0] sm:$0xff]
        %v887 = vld [vmem:[%s347 + $0xdf8] sm:$0xff]
        %v888 = vld [vmem:[%s347 + $0xe00] sm:$0xff]
        %v889 = vld [vmem:[%s347 + $0xe08] sm:$0xff]
        %v890 = vld [vmem:[%s347 + $0xe10] sm:$0xff]
        %v891 = vld [vmem:[%s347 + $0xe18] sm:$0xff]
        %v892 = vld [vmem:[%s347 + $0xe20] sm:$0xff]
        %v893 = vld [vmem:[%s347 + $0xe28] sm:$0xff]
        %v894 = vld [vmem:[%s347 + $0xe30] sm:$0xff]
        %v895 = vld [vmem:[%s347 + $0xe38] sm:$0xff]
        %v896 = vld [vmem:[%s347 + $0xe40] sm:$0xff]
        %v897 = vld [vmem:[%s347 + $0xe48] sm:$0xff]
        %v898 = vld [vmem:[%s347 + $0xe50] sm:$0xff]
        %v899 = vld [vmem:[%s347 + $0xe58] sm:$0xff]
        %v900 = vld [vmem:[%s347 + $0xe60] sm:$0xff]
        %v901 = vld [vmem:[%s347 + $0xe68] sm:$0xff]
        %v902 = vld [vmem:[%s347 + $0xe70] sm:$0xff]
        %v903 = vld [vmem:[%s347 + $0xe78] sm:$0xff]
        %v904 = vld [vmem:[%s347 + $0xe80] sm:$0xff]
        %v905 = vld [vmem:[%s347 + $0xe88] sm:$0xff]
        %v906 = vld [vmem:[%s347 + $0xe90] sm:$0xff]
        %v907 = vld [vmem:[%s347 + $0xe98] sm:$0xff]
        %v908 = vld [vmem:[%s347 + $0xea0] sm:$0xff]
        %v909 = vld [vmem:[%s347 + $0xea8] sm:$0xff]
        %v910 = vld [vmem:[%s347 + $0xeb0] sm:$0xff]
        %v911 = vld [vmem:[%s347 + $0xeb8] sm:$0xff]
        %v912 = vld [vmem:[%s347 + $0xec0] sm:$0xff]
        %v913 = vld [vmem:[%s347 + $0xec8] sm:$0xff]
        %v914 = vld [vmem:[%s347 + $0xed0] sm:$0xff]
        %v915 = vld [vmem:[%s347 + $0xed8] sm:$0xff]
        %v916 = vld [vmem:[%s347 + $0xee0] sm:$0xff]
        %v917 = vld [vmem:[%s347 + $0xee8] sm:$0xff]
        %v918 = vld [vmem:[%s347 + $0xef0] sm:$0xff]
        %v919 = vld [vmem:[%s347 + $0xef8] sm:$0xff]
        %v920 = vld [vmem:[%s347 + $0xf00] sm:$0xff]
        %v921 = vld [vmem:[%s347 + $0xf08] sm:$0xff]
        %v922 = vld [vmem:[%s347 + $0xf10] sm:$0xff]
        %v923 = vld [vmem:[%s347 + $0xf18] sm:$0xff]
        %v924 = vld [vmem:[%s347 + $0xf20] sm:$0xff]
        %v925 = vld [vmem:[%s347 + $0xf28] sm:$0xff]
        %v926 = vld [vmem:[%s347 + $0xf30] sm:$0xff]
        %v927 = vld [vmem:[%s347 + $0xf38] sm:$0xff]
        %v928 = vld [vmem:[%s347 + $0xf40] sm:$0xff]
        %v929 = vld [vmem:[%s347 + $0xf48] sm:$0xff]
        %v930 = vld [vmem:[%s347 + $0xf50] sm:$0xff]
        %v931 = vld [vmem:[%s347 + $0xf58] sm:$0xff]
        %v932 = vld [vmem:[%s347 + $0xf60] sm:$0xff]
        %v933 = vld [vmem:[%s347 + $0xf68] sm:$0xff]
        %v934 = vld [vmem:[%s347 + $0xf70] sm:$0xff]
        %v935 = vld [vmem:[%s347 + $0xf78] sm:$0xff]
        %v936 = vld [vmem:[%s347 + $0xf80] sm:$0xff]
        %v937 = vld [vmem:[%s347 + $0xf88] sm:$0xff]
        %v938 = vld [vmem:[%s347 + $0xf90] sm:$0xff]
        %v939 = vld [vmem:[%s347 + $0xf98] sm:$0xff]
        %v940 = vld [vmem:[%s347 + $0xfa0] sm:$0xff]
        %v941 = vld [vmem:[%s347 + $0xfa8] sm:$0xff]
        %v942 = vld [vmem:[%s347 + $0xfb0] sm:$0xff]
        %v943 = vld [vmem:[%s347 + $0xfb8] sm:$0xff]
        %v944 = vld [vmem:[%s347 + $0xfc0] sm:$0xff]
        %v945 = vld [vmem:[%s347 + $0xfc8] sm:$0xff]
        %v946 = vld [vmem:[%s347 + $0xfd0] sm:$0xff]
        %v947 = vld [vmem:[%s347 + $0xfd8] sm:$0xff]
        %v948 = vld [vmem:[%s347 + $0xfe0] sm:$0xff]
        %v949 = vld [vmem:[%s347 + $0xfe8] sm:$0xff]
        %v950 = vld [vmem:[%s347 + $0xff0] sm:$0xff]
        %v951 = vld [vmem:[%s347 + $0xff8] sm:$0xff]
        %v952 = vld [vmem:[%s347 + $0x1000] sm:$0xff]
        %v953 = vld [vmem:[%s347 + $0x1008] sm:$0xff]
        %v954 = vld [vmem:[%s347 + $0x1010] sm:$0xff]
        %v955 = vld [vmem:[%s347 + $0x1018] sm:$0xff]
        %v956 = vld [vmem:[%s347 + $0x1020] sm:$0xff]
        %v957 = vld [vmem:[%s347 + $0x1028] sm:$0xff]
        %v958 = vld [vmem:[%s347 + $0x1030] sm:$0xff]
        %v959 = vld [vmem:[%s347 + $0x1038] sm:$0xff]
        %v960 = vld [vmem:[%s347 + $0x1040] sm:$0xff]
        %v961 = vld [vmem:[%s347 + $0x1048] sm:$0xff]
        %v962 = vld [vmem:[%s347 + $0x1050] sm:$0xff]
        %v963 = vld [vmem:[%s347 + $0x1058] sm:$0xff]
        %v964 = vld [vmem:[%s347 + $0x1060] sm:$0xff]
        %v965 = vld [vmem:[%s347 + $0x1068] sm:$0xff]
        %v966 = vld [vmem:[%s347 + $0x1070] sm:$0xff]
        %v967 = vld [vmem:[%s347 + $0x1078] sm:$0xff]
        %v968 = vld [vmem:[%s347 + $0x1080] sm:$0xff]
        %v969 = vld [vmem:[%s347 + $0x1088] sm:$0xff]
        %v970 = vld [vmem:[%s347 + $0x1090] sm:$0xff]
        %v971 = vld [vmem:[%s347 + $0x1098] sm:$0xff]
        %v972 = vld [vmem:[%s347 + $0x10a0] sm:$0xff]
        %v973 = vld [vmem:[%s347 + $0x10a8] sm:$0xff]
        %v974 = vld [vmem:[%s347 + $0x10b0] sm:$0xff]
        %v975 = vld [vmem:[%s347 + $0x10b8] sm:$0xff]
        %v976 = vld [vmem:[%s347 + $0x10c0] sm:$0xff]
        %v977 = vld [vmem:[%s347 + $0x10c8] sm:$0xff]
        %v978 = vld [vmem:[%s347 + $0x10d0] sm:$0xff]
        %v979 = vld [vmem:[%s347 + $0x10d8] sm:$0xff]
        %v980 = vld [vmem:[%s347 + $0x10e0] sm:$0xff]
        %v981 = vld [vmem:[%s347 + $0x10e8] sm:$0xff]
        %v982 = vld [vmem:[%s347 + $0x10f0] sm:$0xff]
        %v983 = vld [vmem:[%s347 + $0x10f8] sm:$0xff]
        %v984 = vld [vmem:[%s347 + $0x1100] sm:$0xff]
        %v985 = vld [vmem:[%s347 + $0x1108] sm:$0xff]
        %v986 = vld [vmem:[%s347 + $0x1110] sm:$0xff]
        %v987 = vld [vmem:[%s347 + $0x1118] sm:$0xff]
        %v988 = vld [vmem:[%s347 + $0x1120] sm:$0xff]
        %v989 = vld [vmem:[%s347 + $0x1128] sm:$0xff]
        %v990 = vld [vmem:[%s347 + $0x1130] sm:$0xff]
        %v991 = vld [vmem:[%s347 + $0x1138] sm:$0xff]
        %v992 = vld [vmem:[%s347 + $0x1140] sm:$0xff]
        %v993 = vld [vmem:[%s347 + $0x1148] sm:$0xff]
        %v994 = vld [vmem:[%s347 + $0x1150] sm:$0xff]
        %v995 = vld [vmem:[%s347 + $0x1158] sm:$0xff]
        %v996 = vld [vmem:[%s347 + $0x1160] sm:$0xff]
        %v997 = vld [vmem:[%s347 + $0x1168] sm:$0xff]
        %v998 = vld [vmem:[%s347 + $0x1170] sm:$0xff]
        %v999 = vld [vmem:[%s347 + $0x1178] sm:$0xff]
        %v1000 = vld [vmem:[%s347 + $0x1180] sm:$0xff]
        %v1001 = vld [vmem:[%s347 + $0x1188] sm:$0xff]
        %v1002 = vld [vmem:[%s347 + $0x1190] sm:$0xff]
        %v1003 = vld [vmem:[%s347 + $0x1198] sm:$0xff]
        %v1004 = vld [vmem:[%s347 + $0x11a0] sm:$0xff]
        %v1005 = vld [vmem:[%s347 + $0x11a8] sm:$0xff]
        %v1006 = vld [vmem:[%s347 + $0x11b0] sm:$0xff]
        %v1007 = vld [vmem:[%s347 + $0x11b8] sm:$0xff]
        %v1008 = vld [vmem:[%s347 + $0x11c0] sm:$0xff]
        %v1009 = vld [vmem:[%s347 + $0x11c8] sm:$0xff]
        %v1010 = vld [vmem:[%s347 + $0x11d0] sm:$0xff]
        %v1011 = vld [vmem:[%s347 + $0x11d8] sm:$0xff]
        %v1012 = vld [vmem:[%s347 + $0x11e0] sm:$0xff]
        %v1013 = vld [vmem:[%s347 + $0x11e8] sm:$0xff]
        %v1014 = vld [vmem:[%s347 + $0x11f0] sm:$0xff]
        %v1015 = vld [vmem:[%s347 + $0x11f8] sm:$0xff]
        %v1016 = vld [vmem:[%s347 + $0x1200] sm:$0xff]
        %v1017 = vld [vmem:[%s347 + $0x1208] sm:$0xff]
        %v1018 = vld [vmem:[%s347 + $0x1210] sm:$0xff]
        %v1019 = vld [vmem:[%s347 + $0x1218] sm:$0xff]
        %v1020 = vld [vmem:[%s347 + $0x1220] sm:$0xff]
        %v1021 = vld [vmem:[%s347 + $0x1228] sm:$0xff]
        %v1022 = vld [vmem:[%s347 + $0x1230] sm:$0xff]
        %v1023 = vld [vmem:[%s347 + $0x1238] sm:$0xff]
        %v1024 = vld [vmem:[%s347 + $0x1240] sm:$0xff]
        %v1025 = vld [vmem:[%s347 + $0x1248] sm:$0xff]
        %v1026 = vld [vmem:[%s347 + $0x1250] sm:$0xff]
        %v1027 = vld [vmem:[%s347 + $0x1258] sm:$0xff]
        %v1028 = vld [vmem:[%s347 + $0x1260] sm:$0xff]
        %v1029 = vld [vmem:[%s347 + $0x1268] sm:$0xff]
        %v1030 = vld [vmem:[%s347 + $0x1270] sm:$0xff]
        %v1031 = vld [vmem:[%s347 + $0x1278] sm:$0xff]
        %v1032 = vld [vmem:[%s347 + $0x1280] sm:$0xff]
        %v1033 = vld [vmem:[%s347 + $0x1288] sm:$0xff]
        %v1034 = vld [vmem:[%s347 + $0x1290] sm:$0xff]
        %v1035 = vld [vmem:[%s347 + $0x1298] sm:$0xff]
        %v1036 = vld [vmem:[%s347 + $0x12a0] sm:$0xff]
        %v1037 = vld [vmem:[%s347 + $0x12a8] sm:$0xff]
        %v1038 = vld [vmem:[%s347 + $0x12b0] sm:$0xff]
        %v1039 = vld [vmem:[%s347 + $0x12b8] sm:$0xff]
        %v1040 = vld [vmem:[%s347 + $0x12c0] sm:$0xff]
        %v1041 = vld [vmem:[%s347 + $0x12c8] sm:$0xff]
        %v1042 = vld [vmem:[%s347 + $0x12d0] sm:$0xff]
        %v1043 = vld [vmem:[%s347 + $0x12d8] sm:$0xff]
        %v1044 = vld [vmem:[%s347 + $0x12e0] sm:$0xff]
        %v1045 = vld [vmem:[%s347 + $0x12e8] sm:$0xff]
        %v1046 = vld [vmem:[%s347 + $0x12f0] sm:$0xff]
        %v1047 = vld [vmem:[%s347 + $0x12f8] sm:$0xff]
        %v1048 = vld [vmem:[%s347 + $0x1300] sm:$0xff]
        %v1049 = vld [vmem:[%s347 + $0x1308] sm:$0xff]
        %v1050 = vld [vmem:[%s347 + $0x1310] sm:$0xff]
        %v1051 = vld [vmem:[%s347 + $0x1318] sm:$0xff]
        %v1052 = vld [vmem:[%s347 + $0x1320] sm:$0xff]
        %v1053 = vld [vmem:[%s347 + $0x1328] sm:$0xff]
        %v1054 = vld [vmem:[%s347 + $0x1330] sm:$0xff]
        %v1055 = vld [vmem:[%s347 + $0x1338] sm:$0xff]
        %v1056 = vld [vmem:[%s347 + $0x1340] sm:$0xff]
        %v1057 = vld [vmem:[%s347 + $0x1348] sm:$0xff]
        %v1058 = vld [vmem:[%s347 + $0x1350] sm:$0xff]
        %v1059 = vld [vmem:[%s347 + $0x1358] sm:$0xff]
        %v1060 = vld [vmem:[%s347 + $0x1360] sm:$0xff]
        %v1061 = vld [vmem:[%s347 + $0x1368] sm:$0xff]
        %v1062 = vld [vmem:[%s347 + $0x1370] sm:$0xff]
        %v1063 = vld [vmem:[%s347 + $0x1378] sm:$0xff]
        %v1064 = vld [vmem:[%s347 + $0x1380] sm:$0xff]
        %v1065 = vld [vmem:[%s347 + $0x1388] sm:$0xff]
        %v1066 = vld [vmem:[%s347 + $0x1390] sm:$0xff]
        %v1067 = vld [vmem:[%s347 + $0x1398] sm:$0xff]
        %v1068 = vld [vmem:[%s347 + $0x13a0] sm:$0xff]
        %v1069 = vld [vmem:[%s347 + $0x13a8] sm:$0xff]
        %v1070 = vld [vmem:[%s347 + $0x13b0] sm:$0xff]
        %v1071 = vld [vmem:[%s347 + $0x13b8] sm:$0xff]
        %v1072 = vld [vmem:[%s347 + $0x13c0] sm:$0xff]
        %v1073 = vld [vmem:[%s347 + $0x13c8] sm:$0xff]
        %v1074 = vld [vmem:[%s347 + $0x13d0] sm:$0xff]
        %v1075 = vld [vmem:[%s347 + $0x13d8] sm:$0xff]
        %v1076 = vld [vmem:[%s347 + $0x13e0] sm:$0xff]
        %v1077 = vld [vmem:[%s347 + $0x13e8] sm:$0xff]
        %v1078 = vld [vmem:[%s347 + $0x13f0] sm:$0xff]
        %v1079 = vld [vmem:[%s347 + $0x13f8] sm:$0xff]
        %v1080 = vld [vmem:[%s347 + $0x1400] sm:$0xff]
        %v1081 = vld [vmem:[%s347 + $0x1408] sm:$0xff]
        %v1082 = vld [vmem:[%s347 + $0x1410] sm:$0xff]
        %v1083 = vld [vmem:[%s347 + $0x1418] sm:$0xff]
        %v1084 = vld [vmem:[%s347 + $0x1420] sm:$0xff]
        %v1085 = vld [vmem:[%s347 + $0x1428] sm:$0xff]
        %v1086 = vld [vmem:[%s347 + $0x1430] sm:$0xff]
        %v1087 = vld [vmem:[%s347 + $0x1438] sm:$0xff]
        %v1088 = vld [vmem:[%s347 + $0x1440] sm:$0xff]
        %v1089 = vld [vmem:[%s347 + $0x1448] sm:$0xff]
        %v1090 = vld [vmem:[%s347 + $0x1450] sm:$0xff]
        %v1091 = vld [vmem:[%s347 + $0x1458] sm:$0xff]
        %v1092 = vld [vmem:[%s347 + $0x1460] sm:$0xff]
        %v1093 = vld [vmem:[%s347 + $0x1468] sm:$0xff]
        %v1094 = vld [vmem:[%s347 + $0x1470] sm:$0xff]
        %v1095 = vld [vmem:[%s347 + $0x1478] sm:$0xff]
        %v1096 = vld [vmem:[%s347 + $0x1480] sm:$0xff]
        %v1097 = vld [vmem:[%s347 + $0x1488] sm:$0xff]
        %v1098 = vld [vmem:[%s347 + $0x1490] sm:$0xff]
        %v1099 = vld [vmem:[%s347 + $0x1498] sm:$0xff]
        %v1100 = vld [vmem:[%s347 + $0x14a0] sm:$0xff]
        %v1101 = vld [vmem:[%s347 + $0x14a8] sm:$0xff]
        %v1102 = vld [vmem:[%s347 + $0x14b0] sm:$0xff]
        %v1103 = vld [vmem:[%s347 + $0x14b8] sm:$0xff]
        %v1104 = vld [vmem:[%s347 + $0x14c0] sm:$0xff]
        %v1105 = vld [vmem:[%s347 + $0x14c8] sm:$0xff]
        %v1106 = vld [vmem:[%s347 + $0x14d0] sm:$0xff]
        %v1107 = vld [vmem:[%s347 + $0x14d8] sm:$0xff]
        %v1108 = vld [vmem:[%s347 + $0x14e0] sm:$0xff]
        %v1109 = vld [vmem:[%s347 + $0x14e8] sm:$0xff]
        %v1110 = vld [vmem:[%s347 + $0x14f0] sm:$0xff]
        %v1111 = vld [vmem:[%s347 + $0x14f8] sm:$0xff]
        %v1112 = vld [vmem:[%s347 + $0x1500] sm:$0xff]
        %v1113 = vld [vmem:[%s347 + $0x1508] sm:$0xff]
        %v1114 = vld [vmem:[%s347 + $0x1510] sm:$0xff]
        %v1115 = vld [vmem:[%s347 + $0x1518] sm:$0xff]
        %v1116 = vld [vmem:[%s347 + $0x1520] sm:$0xff]
        %v1117 = vld [vmem:[%s347 + $0x1528] sm:$0xff]
        %v1118 = vld [vmem:[%s347 + $0x1530] sm:$0xff]
        %v1119 = vld [vmem:[%s347 + $0x1538] sm:$0xff]
        %v1120 = vld [vmem:[%s347 + $0x1540] sm:$0xff]
        %v1121 = vld [vmem:[%s347 + $0x1548] sm:$0xff]
        %v1122 = vld [vmem:[%s347 + $0x1550] sm:$0xff]
        %v1123 = vld [vmem:[%s347 + $0x1558] sm:$0xff]
        %v1124 = vld [vmem:[%s347 + $0x1560] sm:$0xff]
        %v1125 = vld [vmem:[%s347 + $0x1568] sm:$0xff]
        %v1126 = vld [vmem:[%s347 + $0x1570] sm:$0xff]
        %v1127 = vld [vmem:[%s347 + $0x1578] sm:$0xff]
        %v1128 = vld [vmem:[%s347 + $0x1580] sm:$0xff]
        %v1129 = vld [vmem:[%s347 + $0x1588] sm:$0xff]
        %v1130 = vld [vmem:[%s347 + $0x1590] sm:$0xff]
        %v1131 = vld [vmem:[%s347 + $0x1598] sm:$0xff]
        %v1132 = vld [vmem:[%s347 + $0x15a0] sm:$0xff]
        %v1133 = vld [vmem:[%s347 + $0x15a8] sm:$0xff]
        %v1134 = vld [vmem:[%s347 + $0x15b0] sm:$0xff]
        %v1135 = vld [vmem:[%s347 + $0x15b8] sm:$0xff]
        %v1136 = vld [vmem:[%s347 + $0x15c0] sm:$0xff]
        %v1137 = vld [vmem:[%s347 + $0x15c8] sm:$0xff]
        %v1138 = vld [vmem:[%s347 + $0x15d0] sm:$0xff]
        %v1139 = vld [vmem:[%s347 + $0x15d8] sm:$0xff]
        %v1140 = vld [vmem:[%s347 + $0x15e0] sm:$0xff]
        %v1141 = vld [vmem:[%s347 + $0x15e8] sm:$0xff]
        %v1142 = vld [vmem:[%s347 + $0x15f0] sm:$0xff]
        %v1143 = vld [vmem:[%s347 + $0x15f8] sm:$0xff]
        %v1144 = vld [vmem:[%s347 + $0x1600] sm:$0xff]
        %v1145 = vld [vmem:[%s347 + $0x1608] sm:$0xff]
        %v1146 = vld [vmem:[%s347 + $0x1610] sm:$0xff]
        %v1147 = vld [vmem:[%s347 + $0x1618] sm:$0xff]
        %v1148 = vld [vmem:[%s347 + $0x1620] sm:$0xff]
        %v1149 = vld [vmem:[%s347 + $0x1628] sm:$0xff]
        %v1150 = vld [vmem:[%s347 + $0x1630] sm:$0xff]
        %v1151 = vld [vmem:[%s347 + $0x1638] sm:$0xff]
        %v1152 = vld [vmem:[%s347 + $0x1640] sm:$0xff]
        %v1153 = vld [vmem:[%s347 + $0x1648] sm:$0xff]
        %v1154 = vld [vmem:[%s347 + $0x1650] sm:$0xff]
        %v1155 = vld [vmem:[%s347 + $0x1658] sm:$0xff]
        %v1156 = vld [vmem:[%s347 + $0x1660] sm:$0xff]
        %v1157 = vld [vmem:[%s347 + $0x1668] sm:$0xff]
        %v1158 = vld [vmem:[%s347 + $0x1670] sm:$0xff]
        %v1159 = vld [vmem:[%s347 + $0x1678] sm:$0xff]
        %v1160 = vld [vmem:[%s347 + $0x1680] sm:$0xff]
        %v1161 = vld [vmem:[%s347 + $0x1688] sm:$0xff]
        %v1162 = vld [vmem:[%s347 + $0x1690] sm:$0xff]
        %v1163 = vld [vmem:[%s347 + $0x1698] sm:$0xff]
        %v1164 = vld [vmem:[%s347 + $0x16a0] sm:$0xff]
        %v1165 = vld [vmem:[%s347 + $0x16a8] sm:$0xff]
        %v1166 = vld [vmem:[%s347 + $0x16b0] sm:$0xff]
        %v1167 = vld [vmem:[%s347 + $0x16b8] sm:$0xff]
        %v1168 = vld [vmem:[%s347 + $0x16c0] sm:$0xff]
        %v1169 = vld [vmem:[%s347 + $0x16c8] sm:$0xff]
        %v1170 = vld [vmem:[%s347 + $0x16d0] sm:$0xff]
        %v1171 = vld [vmem:[%s347 + $0x16d8] sm:$0xff]
        %v1172 = vld [vmem:[%s347 + $0x16e0] sm:$0xff]
        %v1173 = vld [vmem:[%s347 + $0x16e8] sm:$0xff]
        %v1174 = vld [vmem:[%s347 + $0x16f0] sm:$0xff]
        %v1175 = vld [vmem:[%s347 + $0x16f8] sm:$0xff]
        %v1176 = vld [vmem:[%s347 + $0x1700] sm:$0xff]
        %v1177 = vld [vmem:[%s347 + $0x1708] sm:$0xff]
        %v1178 = vld [vmem:[%s347 + $0x1710] sm:$0xff]
        %v1179 = vld [vmem:[%s347 + $0x1718] sm:$0xff]
        %v1180 = vld [vmem:[%s347 + $0x1720] sm:$0xff]
        %v1181 = vld [vmem:[%s347 + $0x1728] sm:$0xff]
        %v1182 = vld [vmem:[%s347 + $0x1730] sm:$0xff]
        %v1183 = vld [vmem:[%s347 + $0x1738] sm:$0xff]
        %v1184 = vld [vmem:[%s347 + $0x1740] sm:$0xff]
        %v1185 = vld [vmem:[%s347 + $0x1748] sm:$0xff]
        %v1186 = vld [vmem:[%s347 + $0x1750] sm:$0xff]
        %v1187 = vld [vmem:[%s347 + $0x1758] sm:$0xff]
        %v1188 = vld [vmem:[%s347 + $0x1760] sm:$0xff]
        %v1189 = vld [vmem:[%s347 + $0x1768] sm:$0xff]
        %v1190 = vld [vmem:[%s347 + $0x1770] sm:$0xff]
        %v1191 = vld [vmem:[%s347 + $0x1778] sm:$0xff]
        %v1192 = vld [vmem:[%s347 + $0x1780] sm:$0xff]
        %v1193 = vld [vmem:[%s347 + $0x1788] sm:$0xff]
        %v1194 = vld [vmem:[%s347 + $0x1790] sm:$0xff]
        %v1195 = vld [vmem:[%s347 + $0x1798] sm:$0xff]
        %v1196 = vld [vmem:[%s347 + $0x17a0] sm:$0xff]
        %v1197 = vld [vmem:[%s347 + $0x17a8] sm:$0xff]
        %v1198 = vld [vmem:[%s347 + $0x17b0] sm:$0xff]
        %v1199 = vld [vmem:[%s347 + $0x17b8] sm:$0xff]
        %v1200 = vld [vmem:[%s347 + $0x17c0] sm:$0xff]
        %v1201 = vld [vmem:[%s347 + $0x17c8] sm:$0xff]
        %v1202 = vld [vmem:[%s347 + $0x17d0] sm:$0xff]
        %v1203 = vld [vmem:[%s347 + $0x17d8] sm:$0xff]
        %v1204 = vld [vmem:[%s347 + $0x17e0] sm:$0xff]
        %v1205 = vld [vmem:[%s347 + $0x17e8] sm:$0xff]
        %v1206 = vld [vmem:[%s347 + $0x17f0] sm:$0xff]
        %v1207 = vld [vmem:[%s347 + $0x17f8] sm:$0xff]
        %v1208 = vld [vmem:[%s347 + $0x1800] sm:$0xff]
        %v1209 = vld [vmem:[%s347 + $0x1808] sm:$0xff]
        %v1210 = vld [vmem:[%s347 + $0x1810] sm:$0xff]
        %v1211 = vld [vmem:[%s347 + $0x1818] sm:$0xff]
        %v1212 = vld [vmem:[%s347 + $0x1820] sm:$0xff]
        %v1213 = vld [vmem:[%s347 + $0x1828] sm:$0xff]
        %v1214 = vld [vmem:[%s347 + $0x1830] sm:$0xff]
        %v1215 = vld [vmem:[%s347 + $0x1838] sm:$0xff]
        %v1216 = vld [vmem:[%s347 + $0x1840] sm:$0xff]
        %v1217 = vld [vmem:[%s347 + $0x1848] sm:$0xff]
        %v1218 = vld [vmem:[%s347 + $0x1850] sm:$0xff]
        %v1219 = vld [vmem:[%s347 + $0x1858] sm:$0xff]
        %v1220 = vld [vmem:[%s347 + $0x1860] sm:$0xff]
        %v1221 = vld [vmem:[%s347 + $0x1868] sm:$0xff]
        %v1222 = vld [vmem:[%s347 + $0x1870] sm:$0xff]
        %v1223 = vld [vmem:[%s347 + $0x1878] sm:$0xff]
        %v1224 = vld [vmem:[%s347 + $0x1880] sm:$0xff]
        %v1225 = vld [vmem:[%s347 + $0x1888] sm:$0xff]
        %v1226 = vld [vmem:[%s347 + $0x1890] sm:$0xff]
        %v1227 = vld [vmem:[%s347 + $0x1898] sm:$0xff]
        %v1228 = vld [vmem:[%s347 + $0x18a0] sm:$0xff]
        %v1229 = vld [vmem:[%s347 + $0x18a8] sm:$0xff]
        %v1230 = vld [vmem:[%s347 + $0x18b0] sm:$0xff]
        %v1231 = vld [vmem:[%s347 + $0x18b8] sm:$0xff]
        %v1232 = vld [vmem:[%s347 + $0x18c0] sm:$0xff]
        %v1233 = vld [vmem:[%s347 + $0x18c8] sm:$0xff]
        %v1234 = vld [vmem:[%s347 + $0x18d0] sm:$0xff]
        %v1235 = vld [vmem:[%s347 + $0x18d8] sm:$0xff]
        %v1236 = vld [vmem:[%s347 + $0x18e0] sm:$0xff]
        %v1237 = vld [vmem:[%s347 + $0x18e8] sm:$0xff]
        %v1238 = vld [vmem:[%s347 + $0x18f0] sm:$0xff]
        %v1239 = vld [vmem:[%s347 + $0x18f8] sm:$0xff]
        %v1240 = vld [vmem:[%s347 + $0x1900] sm:$0xff]
        %v1241 = vld [vmem:[%s347 + $0x1908] sm:$0xff]
        %v1242 = vld [vmem:[%s347 + $0x1910] sm:$0xff]
        %v1243 = vld [vmem:[%s347 + $0x1918] sm:$0xff]
        %v1244 = vld [vmem:[%s347 + $0x1920] sm:$0xff]
        %v1245 = vld [vmem:[%s347 + $0x1928] sm:$0xff]
        %v1246 = vld [vmem:[%s347 + $0x1930] sm:$0xff]
        %v1247 = vld [vmem:[%s347 + $0x1938] sm:$0xff]
        %v1248 = vld [vmem:[%s347 + $0x1940] sm:$0xff]
        %v1249 = vld [vmem:[%s347 + $0x1948] sm:$0xff]
        %v1250 = vld [vmem:[%s347 + $0x1950] sm:$0xff]
        %v1251 = vld [vmem:[%s347 + $0x1958] sm:$0xff]
        %v1252 = vld [vmem:[%s347 + $0x1960] sm:$0xff]
        %v1253 = vld [vmem:[%s347 + $0x1968] sm:$0xff]
        %v1254 = vld [vmem:[%s347 + $0x1970] sm:$0xff]
        %v1255 = vld [vmem:[%s347 + $0x1978] sm:$0xff]
        %v1256 = vld [vmem:[%s347 + $0x1980] sm:$0xff]
        %v1257 = vld [vmem:[%s347 + $0x1988] sm:$0xff]
        %v1258 = vld [vmem:[%s347 + $0x1990] sm:$0xff]
        %v1259 = vld [vmem:[%s347 + $0x1998] sm:$0xff]
        %v1260 = vld [vmem:[%s347 + $0x19a0] sm:$0xff]
        %v1261 = vld [vmem:[%s347 + $0x19a8] sm:$0xff]
        %v1262 = vld [vmem:[%s347 + $0x19b0] sm:$0xff]
        %v1263 = vld [vmem:[%s347 + $0x19b8] sm:$0xff]
        %v1264 = vld [vmem:[%s347 + $0x19c0] sm:$0xff]
        %v1265 = vld [vmem:[%s347 + $0x19c8] sm:$0xff]
        %v1266 = vld [vmem:[%s347 + $0x19d0] sm:$0xff]
        %v1267 = vld [vmem:[%s347 + $0x19d8] sm:$0xff]
        %v1268 = vld [vmem:[%s347 + $0x19e0] sm:$0xff]
        %v1269 = vld [vmem:[%s347 + $0x19e8] sm:$0xff]
        %v1270 = vld [vmem:[%s347 + $0x19f0] sm:$0xff]
        %v1271 = vld [vmem:[%s347 + $0x19f8] sm:$0xff]
        %v1272 = vld [vmem:[%s347 + $0x1a00] sm:$0xff]
        %v1273 = vld [vmem:[%s347 + $0x1a08] sm:$0xff]
        %v1274 = vld [vmem:[%s347 + $0x1a10] sm:$0xff]
        %v1275 = vld [vmem:[%s347 + $0x1a18] sm:$0xff]
        %v1276 = vld [vmem:[%s347 + $0x1a20] sm:$0xff]
        %v1277 = vld [vmem:[%s347 + $0x1a28] sm:$0xff]
        %v1278 = vld [vmem:[%s347 + $0x1a30] sm:$0xff]
        %v1279 = vld [vmem:[%s347 + $0x1a38] sm:$0xff]
        %v1280 = vld [vmem:[%s347 + $0x1a40] sm:$0xff]
        %v1281 = vld [vmem:[%s347 + $0x1a48] sm:$0xff]
        %v1282 = vld [vmem:[%s347 + $0x1a50] sm:$0xff]
        %v1283 = vld [vmem:[%s347 + $0x1a58] sm:$0xff]
        %v1284 = vld [vmem:[%s347 + $0x1a60] sm:$0xff]
        %v1285 = vld [vmem:[%s347 + $0x1a68] sm:$0xff]
        %v1286 = vld [vmem:[%s347 + $0x1a70] sm:$0xff]
        %v1287 = vld [vmem:[%s347 + $0x1a78] sm:$0xff]
        %v1288 = vld [vmem:[%s347 + $0x1a80] sm:$0xff]
        %v1289 = vld [vmem:[%s347 + $0x1a88] sm:$0xff]
        %v1290 = vld [vmem:[%s347 + $0x1a90] sm:$0xff]
        %v1291 = vld [vmem:[%s347 + $0x1a98] sm:$0xff]
        %v1292 = vld [vmem:[%s347 + $0x1aa0] sm:$0xff]
        %v1293 = vld [vmem:[%s347 + $0x1aa8] sm:$0xff]
        %v1294 = vld [vmem:[%s347 + $0x1ab0] sm:$0xff]
        %v1295 = vld [vmem:[%s347 + $0x1ab8] sm:$0xff]
        %v1296 = vld [vmem:[%s347 + $0x1ac0] sm:$0xff]
        %v1297 = vld [vmem:[%s347 + $0x1ac8] sm:$0xff]
        %v1298 = vld [vmem:[%s347 + $0x1ad0] sm:$0xff]
        %v1299 = vld [vmem:[%s347 + $0x1ad8] sm:$0xff]
        %v1300 = vld [vmem:[%s347 + $0x1ae0] sm:$0xff]
        %v1301 = vld [vmem:[%s347 + $0x1ae8] sm:$0xff]
        %v1302 = vld [vmem:[%s347 + $0x1af0] sm:$0xff]
        %v1303 = vld [vmem:[%s347 + $0x1af8] sm:$0xff]
        %v1304 = vld [vmem:[%s347 + $0x1b00] sm:$0xff]
        %v1305 = vld [vmem:[%s347 + $0x1b08] sm:$0xff]
        %v1306 = vld [vmem:[%s347 + $0x1b10] sm:$0xff]
        %v1307 = vld [vmem:[%s347 + $0x1b18] sm:$0xff]
        %v1308 = vld [vmem:[%s347 + $0x1b20] sm:$0xff]
        %v1309 = vld [vmem:[%s347 + $0x1b28] sm:$0xff]
        %v1310 = vld [vmem:[%s347 + $0x1b30] sm:$0xff]
        %v1311 = vld [vmem:[%s347 + $0x1b38] sm:$0xff]
        %v1312 = vld [vmem:[%s347 + $0x1b40] sm:$0xff]
        %v1313 = vld [vmem:[%s347 + $0x1b48] sm:$0xff]
        %v1314 = vld [vmem:[%s347 + $0x1b50] sm:$0xff]
        %v1315 = vld [vmem:[%s347 + $0x1b58] sm:$0xff]
        %v1316 = vld [vmem:[%s347 + $0x1b60] sm:$0xff]
        %v1317 = vld [vmem:[%s347 + $0x1b68] sm:$0xff]
        %v1318 = vld [vmem:[%s347 + $0x1b70] sm:$0xff]
        %v1319 = vld [vmem:[%s347 + $0x1b78] sm:$0xff]
        %v1320 = vld [vmem:[%s347 + $0x1b80] sm:$0xff]
        %v1321 = vld [vmem:[%s347 + $0x1b88] sm:$0xff]
        %v1322 = vld [vmem:[%s347 + $0x1b90] sm:$0xff]
        %v1323 = vld [vmem:[%s347 + $0x1b98] sm:$0xff]
        %v1324 = vld [vmem:[%s347 + $0x1ba0] sm:$0xff]
        %v1325 = vld [vmem:[%s347 + $0x1ba8] sm:$0xff]
        %v1326 = vld [vmem:[%s347 + $0x1bb0] sm:$0xff]
        %v1327 = vld [vmem:[%s347 + $0x1bb8] sm:$0xff]
        %v1328 = vld [vmem:[%s347 + $0x1bc0] sm:$0xff]
        %v1329 = vld [vmem:[%s347 + $0x1bc8] sm:$0xff]
        %v1330 = vld [vmem:[%s347 + $0x1bd0] sm:$0xff]
        %v1331 = vld [vmem:[%s347 + $0x1bd8] sm:$0xff]
        %v1332 = vld [vmem:[%s347 + $0x1be0] sm:$0xff]
        %v1333 = vld [vmem:[%s347 + $0x1be8] sm:$0xff]
        %v1334 = vld [vmem:[%s347 + $0x1bf0] sm:$0xff]
        %v1335 = vld [vmem:[%s347 + $0x1bf8] sm:$0xff]
        %v1336 = vld [vmem:[%s347 + $0x1c00] sm:$0xff]
        %v1337 = vld [vmem:[%s347 + $0x1c08] sm:$0xff]
        %v1338 = vld [vmem:[%s347 + $0x1c10] sm:$0xff]
        %v1339 = vld [vmem:[%s347 + $0x1c18] sm:$0xff]
        %v1344 = vcombine.high %v436, %v436
        %v1346 = vunpack.c.l.s4 1983009808
        %v1347 = vunpack.c.0.s8 %v1346
        %v1348 = vlaneseq
        %v1349 = vshrl.u32 %v1348, 7
        %v1350 = vsub.s32 %v1347, %v1349
        %v1351 = vrot.slane %v436, %v1350
        %v1353 = vunpack.c.l.s4 1983009808
        %v1354 = vunpack.c.0.s8 %v1353
        %v1355 = vlaneseq
        %v1356 = vshrl.u32 %v1355, 7
        %v1357 = vsub.s32 %v1354, %v1356
        %v1358 = vrot.slane %v1344, %v1357
        %v1359 = vcombine.high %v1351, %v1351
        %v1360 = vcombine.high %v1358, %v1358
        %v1361 = vcombine.high %v437, %v437
        %v1363 = vunpack.c.l.s4 1983009808
        %v1364 = vunpack.c.0.s8 %v1363
        %v1365 = vlaneseq
        %v1366 = vshrl.u32 %v1365, 7
        %v1367 = vsub.s32 %v1364, %v1366
        %v1368 = vrot.slane %v437, %v1367
        %v1370 = vunpack.c.l.s4 1983009808
        %v1371 = vunpack.c.0.s8 %v1370
        %v1372 = vlaneseq
        %v1373 = vshrl.u32 %v1372, 7
        %v1374 = vsub.s32 %v1371, %v1373
        %v1375 = vrot.slane %v1361, %v1374
        %v1376 = vcombine.high %v1368, %v1368
        %v1377 = vcombine.high %v1375, %v1375
        %v1378 = vcombine.high %v438, %v438
        %v1380 = vunpack.c.l.s4 1983009808
        %v1381 = vunpack.c.0.s8 %v1380
        %v1382 = vlaneseq
        %v1383 = vshrl.u32 %v1382, 7
        %v1384 = vsub.s32 %v1381, %v1383
        %v1385 = vrot.slane %v438, %v1384
        %v1387 = vunpack.c.l.s4 1983009808
        %v1388 = vunpack.c.0.s8 %v1387
        %v1389 = vlaneseq
        %v1390 = vshrl.u32 %v1389, 7
        %v1391 = vsub.s32 %v1388, %v1390
        %v1392 = vrot.slane %v1378, %v1391
        %v1393 = vcombine.high %v1385, %v1385
        %v1394 = vcombine.high %v1392, %v1392
        %v1395 = vcombine.high %v439, %v439
        %v1397 = vunpack.c.l.s4 1983009808
        %v1398 = vunpack.c.0.s8 %v1397
        %v1399 = vlaneseq
        %v1400 = vshrl.u32 %v1399, 7
        %v1401 = vsub.s32 %v1398, %v1400
        %v1402 = vrot.slane %v439, %v1401
        %v1404 = vunpack.c.l.s4 1983009808
        %v1405 = vunpack.c.0.s8 %v1404
        %v1406 = vlaneseq
        %v1407 = vshrl.u32 %v1406, 7
        %v1408 = vsub.s32 %v1405, %v1407
        %v1409 = vrot.slane %v1395, %v1408
        %v1410 = vcombine.high %v1402, %v1402
        %v2325 = vunpack.c.l.b16 %v440
        %v2326 = vunpack.c.h.b16 %v440
        %v2327 = vunpack.c.l.b16 %v441
        %v2328 = vunpack.c.h.b16 %v441
        %v2329 = vunpack.c.l.b16 %v442
        %v2330 = vunpack.c.h.b16 %v442
        %v2331 = vunpack.c.l.b16 %v443
        %v2332 = vunpack.c.h.b16 %v443
        %v2333 = vunpack.c.l.b16 %v444
        %v2334 = vunpack.c.h.b16 %v444
        %v2335 = vunpack.c.l.b16 %v445
        %v2336 = vunpack.c.h.b16 %v445
        %v2337 = vunpack.c.l.b16 %v446
        %v2338 = vunpack.c.h.b16 %v446
        %v2339 = vunpack.c.l.b16 %v447
        %v2340 = vunpack.c.h.b16 %v447
        %v2341 = vunpack.c.l.b16 %v448
        %v2342 = vunpack.c.h.b16 %v448
        %v2343 = vunpack.c.l.b16 %v449
        %v2344 = vunpack.c.h.b16 %v449
        %v2345 = vunpack.c.l.b16 %v450
        %v2346 = vunpack.c.h.b16 %v450
        %v2347 = vunpack.c.l.b16 %v451
        %v2348 = vunpack.c.h.b16 %v451
        %v2349 = vunpack.c.l.b16 %v452
        %v2350 = vunpack.c.h.b16 %v452
        %v2351 = vunpack.c.l.b16 %v453
        %v2352 = vunpack.c.h.b16 %v453
        %v2353 = vunpack.c.l.b16 %v454
        %v2354 = vunpack.c.h.b16 %v454
        %v2355 = vunpack.c.l.b16 %v455
        %v2356 = vunpack.c.h.b16 %v455
        %v2357 = vunpack.c.l.b16 %v456
        %v2358 = vunpack.c.h.b16 %v456
        %v2359 = vunpack.c.l.b16 %v457
        %v2360 = vunpack.c.h.b16 %v457
        %v2361 = vunpack.c.l.b16 %v458
        %v2362 = vunpack.c.h.b16 %v458
        %v2363 = vunpack.c.l.b16 %v459
        %v2364 = vunpack.c.h.b16 %v459
        %v2365 = vunpack.c.l.b16 %v460
        %v2366 = vunpack.c.h.b16 %v460
        %v2367 = vunpack.c.l.b16 %v461
        %v2368 = vunpack.c.h.b16 %v461
        %v2369 = vunpack.c.l.b16 %v462
        %v2370 = vunpack.c.h.b16 %v462
        %v2371 = vunpack.c.l.b16 %v463
        %v2372 = vunpack.c.h.b16 %v463
        %v2373 = vunpack.c.l.b16 %v464
        %v2374 = vunpack.c.h.b16 %v464
        %v2375 = vunpack.c.l.b16 %v465
        %v2376 = vunpack.c.h.b16 %v465
        %v2377 = vunpack.c.l.b16 %v466
        %v2378 = vunpack.c.h.b16 %v466
        %v2379 = vunpack.c.l.b16 %v467
        %v2380 = vunpack.c.h.b16 %v467
        %v2381 = vunpack.c.l.b16 %v468
        %v2382 = vunpack.c.h.b16 %v468
        %v2383 = vunpack.c.l.b16 %v469
        %v2384 = vunpack.c.h.b16 %v469
        %v2385 = vunpack.c.l.b16 %v470
        %v2386 = vunpack.c.h.b16 %v470
        %v2387 = vunpack.c.l.b16 %v471
        %v2388 = vunpack.c.h.b16 %v471
        %v2389 = vunpack.c.l.b16 %v472
        %v2390 = vunpack.c.h.b16 %v472
        %v2391 = vunpack.c.l.b16 %v473
        %v2392 = vunpack.c.h.b16 %v473
        %v2393 = vunpack.c.l.b16 %v474
        %v2394 = vunpack.c.h.b16 %v474
        %v2395 = vunpack.c.l.b16 %v475
        %v2396 = vunpack.c.h.b16 %v475
        %v2397 = vunpack.c.l.b16 %v476
        %v2398 = vunpack.c.h.b16 %v476
        %v2399 = vunpack.c.l.b16 %v477
        %v2400 = vunpack.c.h.b16 %v477
        %v2401 = vunpack.c.l.b16 %v478
        %v2402 = vunpack.c.h.b16 %v478
        %v2403 = vunpack.c.l.b16 %v479
        %v2404 = vunpack.c.h.b16 %v479
        %v2405 = vunpack.c.l.b16 %v480
        %v2406 = vunpack.c.h.b16 %v480
        %v2407 = vunpack.c.l.b16 %v481
        %v2408 = vunpack.c.h.b16 %v481
        %v2409 = vunpack.c.l.b16 %v482
        %v2410 = vunpack.c.h.b16 %v482
        %v2411 = vunpack.c.l.b16 %v483
        %v2412 = vunpack.c.h.b16 %v483
        %v2413 = vunpack.c.l.b16 %v484
        %v2414 = vunpack.c.h.b16 %v484
        %v2415 = vunpack.c.l.b16 %v485
        %v2416 = vunpack.c.h.b16 %v485
        %v2417 = vunpack.c.l.b16 %v486
        %v2418 = vunpack.c.h.b16 %v486
        %v2419 = vunpack.c.l.b16 %v487
        %v2420 = vunpack.c.h.b16 %v487
        %v2421 = vunpack.c.l.b16 %v488
        %v2422 = vunpack.c.h.b16 %v488
        %v2423 = vunpack.c.l.b16 %v489
        %v2424 = vunpack.c.h.b16 %v489
        %v2425 = vunpack.c.l.b16 %v490
        %v2426 = vunpack.c.h.b16 %v490
        %v2427 = vunpack.c.l.b16 %v491
        %v2428 = vunpack.c.h.b16 %v491
        %v2429 = vunpack.c.l.b16 %v492
        %v2430 = vunpack.c.h.b16 %v492
        %v2431 = vunpack.c.l.b16 %v493
        %v2432 = vunpack.c.h.b16 %v493
        %v2433 = vunpack.c.l.b16 %v494
        %v2434 = vunpack.c.h.b16 %v494
        %v2435 = vunpack.c.l.b16 %v495
        %v2436 = vunpack.c.h.b16 %v495
        %v2437 = vunpack.c.l.b16 %v496
        %v2438 = vunpack.c.h.b16 %v496
        %v2439 = vunpack.c.l.b16 %v497
        %v2440 = vunpack.c.h.b16 %v497
        %v2441 = vunpack.c.l.b16 %v498
        %v2442 = vunpack.c.h.b16 %v498
        %v2443 = vunpack.c.l.b16 %v499
        %v2444 = vunpack.c.h.b16 %v499
        %v2445 = vunpack.c.l.b16 %v500
        %v2446 = vunpack.c.h.b16 %v500
        %v2447 = vunpack.c.l.b16 %v501
        %v2448 = vunpack.c.h.b16 %v501
        %v2449 = vunpack.c.l.b16 %v502
        %v2450 = vunpack.c.h.b16 %v502
        %v2451 = vunpack.c.l.b16 %v503
        %v2452 = vunpack.c.h.b16 %v503
        %v2453 = vunpack.c.l.b16 %v504
        %v2454 = vunpack.c.h.b16 %v504
        %v2455 = vunpack.c.l.b16 %v505
        %v2456 = vunpack.c.h.b16 %v505
        %v2457 = vunpack.c.l.b16 %v506
        %v2458 = vunpack.c.h.b16 %v506
        %v2459 = vunpack.c.l.b16 %v507
        %v2460 = vunpack.c.h.b16 %v507
        %v2461 = vunpack.c.l.b16 %v508
        %v2462 = vunpack.c.h.b16 %v508
        %v2463 = vunpack.c.l.b16 %v509
        %v2464 = vunpack.c.h.b16 %v509
        %v2465 = vunpack.c.l.b16 %v510
        %v2466 = vunpack.c.h.b16 %v510
        %v2467 = vunpack.c.l.b16 %v511
        %v2468 = vunpack.c.h.b16 %v511
        %v2469 = vunpack.c.l.b16 %v512
        %v2470 = vunpack.c.h.b16 %v512
        %v2471 = vunpack.c.l.b16 %v513
        %v2472 = vunpack.c.h.b16 %v513
        %v2473 = vunpack.c.l.b16 %v514
        %v2474 = vunpack.c.h.b16 %v514
        %v2475 = vunpack.c.l.b16 %v515
        %v2476 = vunpack.c.h.b16 %v515
        %v2477 = vunpack.c.l.b16 %v516
        %v2478 = vunpack.c.h.b16 %v516
        %v2479 = vunpack.c.l.b16 %v517
        %v2480 = vunpack.c.h.b16 %v517
        %v2481 = vunpack.c.l.b16 %v518
        %v2482 = vunpack.c.h.b16 %v518
        %v2483 = vunpack.c.l.b16 %v519
        %v2484 = vunpack.c.h.b16 %v519
        %v2485 = vunpack.c.l.b16 %v520
        %v2486 = vunpack.c.h.b16 %v520
        %v2487 = vunpack.c.l.b16 %v521
        %v2488 = vunpack.c.h.b16 %v521
        %v2489 = vunpack.c.l.b16 %v522
        %v2490 = vunpack.c.h.b16 %v522
        %v2491 = vunpack.c.l.b16 %v523
        %v2492 = vunpack.c.h.b16 %v523
        %v2493 = vunpack.c.l.b16 %v524
        %v2494 = vunpack.c.h.b16 %v524
        %v2495 = vunpack.c.l.b16 %v525
        %v2496 = vunpack.c.h.b16 %v525
        %v2497 = vunpack.c.l.b16 %v526
        %v2498 = vunpack.c.h.b16 %v526
        %v2499 = vunpack.c.l.b16 %v527
        %v2500 = vunpack.c.h.b16 %v527
        %v2501 = vunpack.c.l.b16 %v528
        %v2502 = vunpack.c.h.b16 %v528
        %v2503 = vunpack.c.l.b16 %v529
        %v2504 = vunpack.c.h.b16 %v529
        %v2505 = vunpack.c.l.b16 %v530
        %v2506 = vunpack.c.h.b16 %v530
        %v2507 = vunpack.c.l.b16 %v531
        %v2508 = vunpack.c.h.b16 %v531
        %v2509 = vunpack.c.l.b16 %v532
        %v2510 = vunpack.c.h.b16 %v532
        %v2511 = vunpack.c.l.b16 %v533
        %v2512 = vunpack.c.h.b16 %v533
        %v2513 = vunpack.c.l.b16 %v534
        %v2514 = vunpack.c.h.b16 %v534
        %v2515 = vunpack.c.l.b16 %v535
        %v2516 = vunpack.c.h.b16 %v535
        %v2517 = vunpack.c.l.b16 %v536
        %v2518 = vunpack.c.h.b16 %v536
        %v2519 = vunpack.c.l.b16 %v537
        %v2520 = vunpack.c.h.b16 %v537
        %v2521 = vunpack.c.l.b16 %v538
        %v2522 = vunpack.c.h.b16 %v538
        %v2523 = vunpack.c.l.b16 %v539
        %v2524 = vunpack.c.h.b16 %v539
        %v2525 = vunpack.c.l.b16 %v540
        %v2526 = vunpack.c.h.b16 %v540
        %v2527 = vunpack.c.l.b16 %v541
        %v2528 = vunpack.c.h.b16 %v541
        %v2529 = vunpack.c.l.b16 %v542
        %v2530 = vunpack.c.h.b16 %v542
        %v2531 = vunpack.c.l.b16 %v543
        %v2532 = vunpack.c.h.b16 %v543
        %v2533 = vunpack.c.l.b16 %v544
        %v2534 = vunpack.c.h.b16 %v544
        %v2535 = vunpack.c.l.b16 %v545
        %v2536 = vunpack.c.h.b16 %v545
        %v2537 = vunpack.c.l.b16 %v546
        %v2538 = vunpack.c.h.b16 %v546
        %v2539 = vunpack.c.l.b16 %v547
        %v2540 = vunpack.c.h.b16 %v547
        %v2541 = vunpack.c.l.b16 %v548
        %v2542 = vunpack.c.h.b16 %v548
        %v2543 = vunpack.c.l.b16 %v549
        %v2544 = vunpack.c.h.b16 %v549
        %v2545 = vunpack.c.l.b16 %v550
        %v2546 = vunpack.c.h.b16 %v550
        %v2547 = vunpack.c.l.b16 %v551
        %v2548 = vunpack.c.h.b16 %v551
        %v2549 = vunpack.c.l.b16 %v552
        %v2550 = vunpack.c.h.b16 %v552
        %v2551 = vunpack.c.l.b16 %v553
        %v2552 = vunpack.c.h.b16 %v553
        %v2553 = vunpack.c.l.b16 %v554
        %v2554 = vunpack.c.h.b16 %v554
        %v2555 = vunpack.c.l.b16 %v555
        %v2556 = vunpack.c.h.b16 %v555
        %v2557 = vunpack.c.l.b16 %v556
        %v2558 = vunpack.c.h.b16 %v556
        %v2559 = vunpack.c.l.b16 %v557
        %v2560 = vunpack.c.h.b16 %v557
        %v2561 = vunpack.c.l.b16 %v558
        %v2562 = vunpack.c.h.b16 %v558
        %v2563 = vunpack.c.l.b16 %v559
        %v2564 = vunpack.c.h.b16 %v559
        %v2565 = vunpack.c.l.b16 %v560
        %v2566 = vunpack.c.h.b16 %v560
        %v2567 = vunpack.c.l.b16 %v561
        %v2568 = vunpack.c.h.b16 %v561
        %v2569 = vunpack.c.l.b16 %v562
        %v2570 = vunpack.c.h.b16 %v562
        %v2571 = vunpack.c.l.b16 %v563
        %v2572 = vunpack.c.h.b16 %v563
        %v2573 = vunpack.c.l.b16 %v564
        %v2574 = vunpack.c.h.b16 %v564
        %v2575 = vunpack.c.l.b16 %v565
        %v2576 = vunpack.c.h.b16 %v565
        %v2577 = vunpack.c.l.b16 %v566
        %v2578 = vunpack.c.h.b16 %v566
        %v2579 = vunpack.c.l.b16 %v567
        %v2580 = vunpack.c.h.b16 %v567
        %v2581 = vunpack.c.l.b16 %v568
        %v2582 = vunpack.c.h.b16 %v568
        %v2583 = vunpack.c.l.b16 %v569
        %v2584 = vunpack.c.h.b16 %v569
        %v2585 = vunpack.c.l.b16 %v570
        %v2586 = vunpack.c.h.b16 %v570
        %v2587 = vunpack.c.l.b16 %v571
        %v2588 = vunpack.c.h.b16 %v571
        %v2589 = vunpack.c.l.b16 %v572
        %v2590 = vunpack.c.h.b16 %v572
        %v2591 = vunpack.c.l.b16 %v573
        %v2592 = vunpack.c.h.b16 %v573
        %v2593 = vunpack.c.l.b16 %v574
        %v2594 = vunpack.c.h.b16 %v574
        %v2595 = vunpack.c.l.b16 %v575
        %v2596 = vunpack.c.h.b16 %v575
        %v2597 = vunpack.c.l.b16 %v576
        %v2598 = vunpack.c.h.b16 %v576
        %v2599 = vunpack.c.l.b16 %v577
        %v2600 = vunpack.c.h.b16 %v577
        %v2601 = vunpack.c.l.b16 %v578
        %v2602 = vunpack.c.h.b16 %v578
        %v2603 = vunpack.c.l.b16 %v579
        %v2604 = vunpack.c.h.b16 %v579
        %v2605 = vunpack.c.l.b16 %v580
        %v2606 = vunpack.c.h.b16 %v580
        %v2607 = vunpack.c.l.b16 %v581
        %v2608 = vunpack.c.h.b16 %v581
        %v2609 = vunpack.c.l.b16 %v582
        %v2610 = vunpack.c.h.b16 %v582
        %v2611 = vunpack.c.l.b16 %v583
        %v2612 = vunpack.c.h.b16 %v583
        %v2613 = vunpack.c.l.b16 %v584
        %v2614 = vunpack.c.h.b16 %v584
        %v2615 = vunpack.c.l.b16 %v585
        %v2616 = vunpack.c.h.b16 %v585
        %v2617 = vunpack.c.l.b16 %v586
        %v2618 = vunpack.c.h.b16 %v586
        %v2619 = vunpack.c.l.b16 %v587
        %v2620 = vunpack.c.h.b16 %v587
        %v2621 = vunpack.c.l.b16 %v588
        %v2622 = vunpack.c.h.b16 %v588
        %v2623 = vunpack.c.l.b16 %v589
        %v2624 = vunpack.c.h.b16 %v589
        %v2625 = vunpack.c.l.b16 %v590
        %v2626 = vunpack.c.h.b16 %v590
        %v2627 = vunpack.c.l.b16 %v591
        %v2628 = vunpack.c.h.b16 %v591
        %v2629 = vunpack.c.l.b16 %v592
        %v2630 = vunpack.c.h.b16 %v592
        %v2631 = vunpack.c.l.b16 %v593
        %v2632 = vunpack.c.h.b16 %v593
        %v2633 = vunpack.c.l.b16 %v594
        %v2634 = vunpack.c.h.b16 %v594
        %v2635 = vunpack.c.l.b16 %v595
        %v2636 = vunpack.c.h.b16 %v595
        %v2637 = vunpack.c.l.b16 %v596
        %v2638 = vunpack.c.h.b16 %v596
        %v2639 = vunpack.c.l.b16 %v597
        %v2640 = vunpack.c.h.b16 %v597
        %v2641 = vunpack.c.l.b16 %v598
        %v2642 = vunpack.c.h.b16 %v598
        %v2643 = vunpack.c.l.b16 %v599
        %v2644 = vunpack.c.h.b16 %v599
        %v2645 = vunpack.c.l.b16 %v600
        %v2646 = vunpack.c.h.b16 %v600
        %v2647 = vunpack.c.l.b16 %v601
        %v2648 = vunpack.c.h.b16 %v601
        %v2649 = vunpack.c.l.b16 %v602
        %v2650 = vunpack.c.h.b16 %v602
        %v2651 = vunpack.c.l.b16 %v603
        %v2652 = vunpack.c.h.b16 %v603
        %v2653 = vunpack.c.l.b16 %v604
        %v2654 = vunpack.c.h.b16 %v604
        %v2655 = vunpack.c.l.b16 %v605
        %v2656 = vunpack.c.h.b16 %v605
        %v2657 = vunpack.c.l.b16 %v606
        %v2658 = vunpack.c.h.b16 %v606
        %v2659 = vunpack.c.l.b16 %v607
        %v2660 = vunpack.c.h.b16 %v607
        %v2661 = vunpack.c.l.b16 %v608
        %v2662 = vunpack.c.h.b16 %v608
        %v2663 = vunpack.c.l.b16 %v609
        %v2664 = vunpack.c.h.b16 %v609
        %v2665 = vunpack.c.l.b16 %v610
        %v2666 = vunpack.c.h.b16 %v610
        %v2667 = vunpack.c.l.b16 %v611
        %v2668 = vunpack.c.h.b16 %v611
        %v2669 = vunpack.c.l.b16 %v612
        %v2670 = vunpack.c.h.b16 %v612
        %v2671 = vunpack.c.l.b16 %v613
        %v2672 = vunpack.c.h.b16 %v613
        %v2673 = vunpack.c.l.b16 %v614
        %v2674 = vunpack.c.h.b16 %v614
        %v2675 = vunpack.c.l.b16 %v615
        %v2676 = vunpack.c.h.b16 %v615
        %v2677 = vunpack.c.l.b16 %v616
        %v2678 = vunpack.c.h.b16 %v616
        %v2679 = vunpack.c.l.b16 %v617
        %v2680 = vunpack.c.h.b16 %v617
        %v2681 = vunpack.c.l.b16 %v618
        %v2682 = vunpack.c.h.b16 %v618
        %v2683 = vunpack.c.l.b16 %v619
        %v2684 = vunpack.c.h.b16 %v619
        %v2685 = vunpack.c.l.b16 %v620
        %v2686 = vunpack.c.h.b16 %v620
        %v2687 = vunpack.c.l.b16 %v621
        %v2688 = vunpack.c.h.b16 %v621
        %v2689 = vunpack.c.l.b16 %v622
        %v2690 = vunpack.c.h.b16 %v622
        %v2691 = vunpack.c.l.b16 %v623
        %v2692 = vunpack.c.h.b16 %v623
        %v2693 = vunpack.c.l.b16 %v624
        %v2694 = vunpack.c.h.b16 %v624
        %v2695 = vunpack.c.l.b16 %v625
        %v2696 = vunpack.c.h.b16 %v625
        %v2697 = vunpack.c.l.b16 %v626
        %v2698 = vunpack.c.h.b16 %v626
        %v2699 = vunpack.c.l.b16 %v627
        %v2700 = vunpack.c.h.b16 %v627
        %v2701 = vunpack.c.l.b16 %v628
        %v2702 = vunpack.c.h.b16 %v628
        %v2703 = vunpack.c.l.b16 %v629
        %v2704 = vunpack.c.h.b16 %v629
        %v2705 = vunpack.c.l.b16 %v630
        %v2706 = vunpack.c.h.b16 %v630
        %v2707 = vunpack.c.l.b16 %v631
        %v2708 = vunpack.c.h.b16 %v631
        %v2709 = vunpack.c.l.b16 %v632
        %v2710 = vunpack.c.h.b16 %v632
        %v2711 = vunpack.c.l.b16 %v633
        %v2712 = vunpack.c.h.b16 %v633
        %v2713 = vunpack.c.l.b16 %v634
        %v2714 = vunpack.c.h.b16 %v634
        %v2715 = vunpack.c.l.b16 %v635
        %v2716 = vunpack.c.h.b16 %v635
        %v2717 = vunpack.c.l.b16 %v636
        %v2718 = vunpack.c.h.b16 %v636
        %v2719 = vunpack.c.l.b16 %v637
        %v2720 = vunpack.c.h.b16 %v637
        %v2721 = vunpack.c.l.b16 %v638
        %v2722 = vunpack.c.h.b16 %v638
        %v2723 = vunpack.c.l.b16 %v639
        %v2724 = vunpack.c.h.b16 %v639
        %v2725 = vunpack.c.l.b16 %v640
        %v2726 = vunpack.c.h.b16 %v640
        %v2727 = vunpack.c.l.b16 %v641
        %v2728 = vunpack.c.h.b16 %v641
        %v2729 = vunpack.c.l.b16 %v642
        %v2730 = vunpack.c.h.b16 %v642
        %v2731 = vunpack.c.l.b16 %v643
        %v2732 = vunpack.c.h.b16 %v643
        %v2733 = vunpack.c.l.b16 %v644
        %v2734 = vunpack.c.h.b16 %v644
        %v2735 = vunpack.c.l.b16 %v645
        %v2736 = vunpack.c.h.b16 %v645
        %v2737 = vunpack.c.l.b16 %v646
        %v2738 = vunpack.c.h.b16 %v646
        %v2739 = vunpack.c.l.b16 %v647
        %v2740 = vunpack.c.h.b16 %v647
        %v2741 = vunpack.c.l.b16 %v648
        %v2742 = vunpack.c.h.b16 %v648
        %v2743 = vunpack.c.l.b16 %v649
        %v2744 = vunpack.c.h.b16 %v649
        %v2745 = vunpack.c.l.b16 %v650
        %v2746 = vunpack.c.h.b16 %v650
        %v2747 = vunpack.c.l.b16 %v651
        %v2748 = vunpack.c.h.b16 %v651
        %v2749 = vunpack.c.l.b16 %v652
        %v2750 = vunpack.c.h.b16 %v652
        %v2751 = vunpack.c.l.b16 %v653
        %v2752 = vunpack.c.h.b16 %v653
        %v2753 = vunpack.c.l.b16 %v654
        %v2754 = vunpack.c.h.b16 %v654
        %v2755 = vunpack.c.l.b16 %v655
        %v2756 = vunpack.c.h.b16 %v655
        %v2757 = vunpack.c.l.b16 %v656
        %v2758 = vunpack.c.h.b16 %v656
        %v2759 = vunpack.c.l.b16 %v657
        %v2760 = vunpack.c.h.b16 %v657
        %v2761 = vunpack.c.l.b16 %v658
        %v2762 = vunpack.c.h.b16 %v658
        %v2763 = vunpack.c.l.b16 %v659
        %v2764 = vunpack.c.h.b16 %v659
        %v2765 = vunpack.c.l.b16 %v660
        %v2766 = vunpack.c.h.b16 %v660
        %v2767 = vunpack.c.l.b16 %v661
        %v2768 = vunpack.c.h.b16 %v661
        %v2769 = vunpack.c.l.b16 %v662
        %v2770 = vunpack.c.h.b16 %v662
        %v2771 = vunpack.c.l.b16 %v663
        %v2772 = vunpack.c.h.b16 %v663
        %v2773 = vunpack.c.l.b16 %v664
        %v2774 = vunpack.c.h.b16 %v664
        %v2775 = vunpack.c.l.b16 %v665
        %v2776 = vunpack.c.h.b16 %v665
        %v2777 = vunpack.c.l.b16 %v666
        %v2778 = vunpack.c.h.b16 %v666
        %v2779 = vunpack.c.l.b16 %v667
        %v2780 = vunpack.c.h.b16 %v667
        %v2781 = vunpack.c.l.b16 %v668
        %v2782 = vunpack.c.h.b16 %v668
        %v2783 = vunpack.c.l.b16 %v669
        %v2784 = vunpack.c.h.b16 %v669
        %v2785 = vunpack.c.l.b16 %v670
        %v2786 = vunpack.c.h.b16 %v670
        %v2787 = vunpack.c.l.b16 %v671
        %v2788 = vunpack.c.h.b16 %v671
        %v2789 = vunpack.c.l.b16 %v672
        %v2790 = vunpack.c.h.b16 %v672
        %v2791 = vunpack.c.l.b16 %v673
        %v2792 = vunpack.c.h.b16 %v673
        %v2793 = vunpack.c.l.b16 %v674
        %v2794 = vunpack.c.h.b16 %v674
        %v2795 = vunpack.c.l.b16 %v675
        %v2796 = vunpack.c.h.b16 %v675
        %v2797 = vunpack.c.l.b16 %v676
        %v2798 = vunpack.c.h.b16 %v676
        %v2799 = vunpack.c.l.b16 %v677
        %v2800 = vunpack.c.h.b16 %v677
        %v2801 = vunpack.c.l.b16 %v678
        %v2802 = vunpack.c.h.b16 %v678
        %v2803 = vunpack.c.l.b16 %v679
        %v2804 = vunpack.c.h.b16 %v679
        %v2805 = vunpack.c.l.b16 %v680
        %v2806 = vunpack.c.h.b16 %v680
        %v2807 = vunpack.c.l.b16 %v681
        %v2808 = vunpack.c.h.b16 %v681
        %v2809 = vunpack.c.l.b16 %v682
        %v2810 = vunpack.c.h.b16 %v682
        %v2811 = vunpack.c.l.b16 %v683
        %v2812 = vunpack.c.h.b16 %v683
        %v2813 = vunpack.c.l.b16 %v684
        %v2814 = vunpack.c.h.b16 %v684
        %v2815 = vunpack.c.l.b16 %v685
        %v2816 = vunpack.c.h.b16 %v685
        %v2817 = vunpack.c.l.b16 %v686
        %v2818 = vunpack.c.h.b16 %v686
        %v2819 = vunpack.c.l.b16 %v687
        %v2820 = vunpack.c.h.b16 %v687
        %v2821 = vunpack.c.l.b16 %v688
        %v2822 = vunpack.c.h.b16 %v688
        %v2823 = vunpack.c.l.b16 %v689
        %v2824 = vunpack.c.h.b16 %v689
        %v2825 = vunpack.c.l.b16 %v690
        %v2826 = vunpack.c.h.b16 %v690
        %v2827 = vunpack.c.l.b16 %v691
        %v2828 = vunpack.c.h.b16 %v691
        %v2829 = vunpack.c.l.b16 %v692
        %v2830 = vunpack.c.h.b16 %v692
        %v2831 = vunpack.c.l.b16 %v693
        %v2832 = vunpack.c.h.b16 %v693
        %v2833 = vunpack.c.l.b16 %v694
        %v2834 = vunpack.c.h.b16 %v694
        %v2835 = vunpack.c.l.b16 %v695
        %v2836 = vunpack.c.h.b16 %v695
        %v2837 = vunpack.c.l.b16 %v696
        %v2838 = vunpack.c.h.b16 %v696
        %v2839 = vunpack.c.l.b16 %v697
        %v2840 = vunpack.c.h.b16 %v697
        %v2841 = vunpack.c.l.b16 %v698
        %v2842 = vunpack.c.h.b16 %v698
        %v2843 = vunpack.c.l.b16 %v699
        %v2844 = vunpack.c.h.b16 %v699
        %v2845 = vunpack.c.l.b16 %v700
        %v2846 = vunpack.c.h.b16 %v700
        %v2847 = vunpack.c.l.b16 %v701
        %v2848 = vunpack.c.h.b16 %v701
        %v2849 = vunpack.c.l.b16 %v702
        %v2850 = vunpack.c.h.b16 %v702
        %v2851 = vunpack.c.l.b16 %v703
        %v2852 = vunpack.c.h.b16 %v703
        %v2853 = vunpack.c.l.b16 %v704
        %v2854 = vunpack.c.h.b16 %v704
        %v2855 = vunpack.c.l.b16 %v705
        %v2856 = vunpack.c.h.b16 %v705
        %v2857 = vunpack.c.l.b16 %v706
        %v2858 = vunpack.c.h.b16 %v706
        %v2859 = vunpack.c.l.b16 %v707
        %v2860 = vunpack.c.h.b16 %v707
        %v2861 = vunpack.c.l.b16 %v708
        %v2862 = vunpack.c.h.b16 %v708
        %v2863 = vunpack.c.l.b16 %v709
        %v2864 = vunpack.c.h.b16 %v709
        %v2865 = vunpack.c.l.b16 %v710
        %v2866 = vunpack.c.h.b16 %v710
        %v2867 = vunpack.c.l.b16 %v711
        %v2868 = vunpack.c.h.b16 %v711
        %v2869 = vunpack.c.l.b16 %v712
        %v2870 = vunpack.c.h.b16 %v712
        %v2871 = vunpack.c.l.b16 %v713
        %v2872 = vunpack.c.h.b16 %v713
        %v2873 = vunpack.c.l.b16 %v714
        %v2874 = vunpack.c.h.b16 %v714
        %v2875 = vunpack.c.l.b16 %v715
        %v2876 = vunpack.c.h.b16 %v715
        %v2877 = vunpack.c.l.b16 %v716
        %v2878 = vunpack.c.h.b16 %v716
        %v2879 = vunpack.c.l.b16 %v717
        %v2880 = vunpack.c.h.b16 %v717
        %v2881 = vunpack.c.l.b16 %v718
        %v2882 = vunpack.c.h.b16 %v718
        %v2883 = vunpack.c.l.b16 %v719
        %v2884 = vunpack.c.h.b16 %v719
        %v2885 = vunpack.c.l.b16 %v720
        %v2886 = vunpack.c.h.b16 %v720
        %v2887 = vunpack.c.l.b16 %v721
        %v2888 = vunpack.c.h.b16 %v721
        %v2889 = vunpack.c.l.b16 %v722
        %v2890 = vunpack.c.h.b16 %v722
        %v2891 = vunpack.c.l.b16 %v723
        %v2892 = vunpack.c.h.b16 %v723
        %v2893 = vunpack.c.l.b16 %v724
        %v2894 = vunpack.c.h.b16 %v724
        %v2895 = vunpack.c.l.b16 %v725
        %v2896 = vunpack.c.h.b16 %v725
        %v2897 = vunpack.c.l.b16 %v726
        %v2898 = vunpack.c.h.b16 %v726
        %v2899 = vunpack.c.l.b16 %v727
        %v2900 = vunpack.c.h.b16 %v727
        %v2901 = vunpack.c.l.b16 %v728
        %v2902 = vunpack.c.h.b16 %v728
        %v2903 = vunpack.c.l.b16 %v729
        %v2904 = vunpack.c.h.b16 %v729
        %v2905 = vunpack.c.l.b16 %v730
        %v2906 = vunpack.c.h.b16 %v730
        %v2907 = vunpack.c.l.b16 %v731
        %v2908 = vunpack.c.h.b16 %v731
        %v2909 = vunpack.c.l.b16 %v732
        %v2910 = vunpack.c.h.b16 %v732
        %v2911 = vunpack.c.l.b16 %v733
        %v2912 = vunpack.c.h.b16 %v733
        %v2913 = vunpack.c.l.b16 %v734
        %v2914 = vunpack.c.h.b16 %v734
        %v2915 = vunpack.c.l.b16 %v735
        %v2916 = vunpack.c.h.b16 %v735
        %v2917 = vunpack.c.l.b16 %v736
        %v2918 = vunpack.c.h.b16 %v736
        %v2919 = vunpack.c.l.b16 %v737
        %v2920 = vunpack.c.h.b16 %v737
        %v2921 = vunpack.c.l.b16 %v738
        %v2922 = vunpack.c.h.b16 %v738
        %v2923 = vunpack.c.l.b16 %v739
        %v2924 = vunpack.c.h.b16 %v739
        %v2925 = vunpack.c.l.b16 %v740
        %v2926 = vunpack.c.h.b16 %v740
        %v2927 = vunpack.c.l.b16 %v741
        %v2928 = vunpack.c.h.b16 %v741
        %v2929 = vunpack.c.l.b16 %v742
        %v2930 = vunpack.c.h.b16 %v742
        %v2931 = vunpack.c.l.b16 %v743
        %v2932 = vunpack.c.h.b16 %v743
        %v2933 = vunpack.c.l.b16 %v744
        %v2934 = vunpack.c.h.b16 %v744
        %v2935 = vunpack.c.l.b16 %v745
        %v2936 = vunpack.c.h.b16 %v745
        %v2937 = vunpack.c.l.b16 %v746
        %v2938 = vunpack.c.h.b16 %v746
        %v2939 = vunpack.c.l.b16 %v747
        %v2940 = vunpack.c.h.b16 %v747
        %v2941 = vunpack.c.l.b16 %v748
        %v2942 = vunpack.c.h.b16 %v748
        %v2943 = vunpack.c.l.b16 %v749
        %v2944 = vunpack.c.h.b16 %v749
        %v2945 = vunpack.c.l.b16 %v750
        %v2946 = vunpack.c.h.b16 %v750
        %v2947 = vunpack.c.l.b16 %v751
        %v2948 = vunpack.c.h.b16 %v751
        %v2949 = vunpack.c.l.b16 %v752
        %v2950 = vunpack.c.h.b16 %v752
        %v2951 = vunpack.c.l.b16 %v753
        %v2952 = vunpack.c.h.b16 %v753
        %v2953 = vunpack.c.l.b16 %v754
        %v2954 = vunpack.c.h.b16 %v754
        %v2955 = vunpack.c.l.b16 %v755
        %v2956 = vunpack.c.h.b16 %v755
        %v2957 = vunpack.c.l.b16 %v756
        %v2958 = vunpack.c.h.b16 %v756
        %v2959 = vunpack.c.l.b16 %v757
        %v2960 = vunpack.c.h.b16 %v757
        %v2961 = vunpack.c.l.b16 %v758
        %v2962 = vunpack.c.h.b16 %v758
        %v2963 = vunpack.c.l.b16 %v759
        %v2964 = vunpack.c.h.b16 %v759
        %v2965 = vunpack.c.l.b16 %v760
        %v2966 = vunpack.c.h.b16 %v760
        %v2967 = vunpack.c.l.b16 %v761
        %v2968 = vunpack.c.h.b16 %v761
        %v2969 = vunpack.c.l.b16 %v762
        %v2970 = vunpack.c.h.b16 %v762
        %v2971 = vunpack.c.l.b16 %v763
        %v2972 = vunpack.c.h.b16 %v763
        %v2973 = vunpack.c.l.b16 %v764
        %v2974 = vunpack.c.h.b16 %v764
        %v2975 = vunpack.c.l.b16 %v765
        %v2976 = vunpack.c.h.b16 %v765
        %v2977 = vunpack.c.l.b16 %v766
        %v2978 = vunpack.c.h.b16 %v766
        %v2979 = vunpack.c.l.b16 %v767
        %v2980 = vunpack.c.h.b16 %v767
        %v2981 = vunpack.c.l.b16 %v768
        %v2982 = vunpack.c.h.b16 %v768
        %v2983 = vunpack.c.l.b16 %v769
        %v2984 = vunpack.c.h.b16 %v769
        %v2985 = vunpack.c.l.b16 %v770
        %v2986 = vunpack.c.h.b16 %v770
        %v2987 = vunpack.c.l.b16 %v771
        %v2988 = vunpack.c.h.b16 %v771
        %v2989 = vunpack.c.l.b16 %v772
        %v2990 = vunpack.c.h.b16 %v772
        %v2991 = vunpack.c.l.b16 %v773
        %v2992 = vunpack.c.h.b16 %v773
        %v2993 = vunpack.c.l.b16 %v774
        %v2994 = vunpack.c.h.b16 %v774
        %v2995 = vunpack.c.l.b16 %v775
        %v2996 = vunpack.c.h.b16 %v775
        %v2997 = vunpack.c.l.b16 %v776
        %v2998 = vunpack.c.h.b16 %v776
        %v2999 = vunpack.c.l.b16 %v777
        %v3000 = vunpack.c.h.b16 %v777
        %v3001 = vunpack.c.l.b16 %v778
        %v3002 = vunpack.c.h.b16 %v778
        %v3003 = vunpack.c.l.b16 %v779
        %v3004 = vunpack.c.h.b16 %v779
        %v3005 = vunpack.c.l.b16 %v780
        %v3006 = vunpack.c.h.b16 %v780
        %v3007 = vunpack.c.l.b16 %v781
        %v3008 = vunpack.c.h.b16 %v781
        %v3009 = vunpack.c.l.b16 %v782
        %v3010 = vunpack.c.h.b16 %v782
        %v3011 = vunpack.c.l.b16 %v783
        %v3012 = vunpack.c.h.b16 %v783
        %v3013 = vunpack.c.l.b16 %v784
        %v3014 = vunpack.c.h.b16 %v784
        %v3015 = vunpack.c.l.b16 %v785
        %v3016 = vunpack.c.h.b16 %v785
        %v3017 = vunpack.c.l.b16 %v786
        %v3018 = vunpack.c.h.b16 %v786
        %v3019 = vunpack.c.l.b16 %v787
        %v3020 = vunpack.c.h.b16 %v787
        %v3021 = vunpack.c.l.b16 %v788
        %v3022 = vunpack.c.h.b16 %v788
        %v3023 = vunpack.c.l.b16 %v789
        %v3024 = vunpack.c.h.b16 %v789
        %v3025 = vunpack.c.l.b16 %v790
        %v3026 = vunpack.c.h.b16 %v790
        %v3027 = vunpack.c.l.b16 %v791
        %v3028 = vunpack.c.h.b16 %v791
        %v3029 = vunpack.c.l.b16 %v792
        %v3030 = vunpack.c.h.b16 %v792
        %v3031 = vunpack.c.l.b16 %v793
        %v3032 = vunpack.c.h.b16 %v793
        %v3033 = vunpack.c.l.b16 %v794
        %v3034 = vunpack.c.h.b16 %v794
        %v3035 = vunpack.c.l.b16 %v795
        %v3036 = vunpack.c.h.b16 %v795
        %v3037 = vunpack.c.l.b16 %v796
        %v3038 = vunpack.c.h.b16 %v796
        %v3039 = vunpack.c.l.b16 %v797
        %v3040 = vunpack.c.h.b16 %v797
        %v3041 = vunpack.c.l.b16 %v798
        %v3042 = vunpack.c.h.b16 %v798
        %v3043 = vunpack.c.l.b16 %v799
        %v3044 = vunpack.c.h.b16 %v799
        %v3045 = vunpack.c.l.b16 %v800
        %v3046 = vunpack.c.h.b16 %v800
        %v3047 = vunpack.c.l.b16 %v801
        %v3048 = vunpack.c.h.b16 %v801
        %v3049 = vunpack.c.l.b16 %v802
        %v3050 = vunpack.c.h.b16 %v802
        %v3051 = vunpack.c.l.b16 %v803
        %v3052 = vunpack.c.h.b16 %v803
        %v3053 = vunpack.c.l.b16 %v804
        %v3054 = vunpack.c.h.b16 %v804
        %v3055 = vunpack.c.l.b16 %v805
        %v3056 = vunpack.c.h.b16 %v805
        %v3057 = vunpack.c.l.b16 %v806
        %v3058 = vunpack.c.h.b16 %v806
        %v3059 = vunpack.c.l.b16 %v807
        %v3060 = vunpack.c.h.b16 %v807
        %v3061 = vunpack.c.l.b16 %v808
        %v3062 = vunpack.c.h.b16 %v808
        %v3063 = vunpack.c.l.b16 %v809
        %v3064 = vunpack.c.h.b16 %v809
        %v3065 = vunpack.c.l.b16 %v810
        %v3066 = vunpack.c.h.b16 %v810
        %v3067 = vunpack.c.l.b16 %v811
        %v3068 = vunpack.c.h.b16 %v811
        %v3069 = vunpack.c.l.b16 %v812
        %v3070 = vunpack.c.h.b16 %v812
        %v3071 = vunpack.c.l.b16 %v813
        %v3072 = vunpack.c.h.b16 %v813
        %v3073 = vunpack.c.l.b16 %v814
        %v3074 = vunpack.c.h.b16 %v814
        %v3075 = vunpack.c.l.b16 %v815
        %v3076 = vunpack.c.h.b16 %v815
        %v3077 = vunpack.c.l.b16 %v816
        %v3078 = vunpack.c.h.b16 %v816
        %v3079 = vunpack.c.l.b16 %v817
        %v3080 = vunpack.c.h.b16 %v817
        %v3081 = vunpack.c.l.b16 %v818
        %v3082 = vunpack.c.h.b16 %v818
        %v3083 = vunpack.c.l.b16 %v819
        %v3084 = vunpack.c.h.b16 %v819
        %v3085 = vunpack.c.l.b16 %v820
        %v3086 = vunpack.c.h.b16 %v820
        %v3087 = vunpack.c.l.b16 %v821
        %v3088 = vunpack.c.h.b16 %v821
        %v3089 = vunpack.c.l.b16 %v822
        %v3090 = vunpack.c.h.b16 %v822
        %v3091 = vunpack.c.l.b16 %v823
        %v3092 = vunpack.c.h.b16 %v823
        %v3093 = vunpack.c.l.b16 %v824
        %v3094 = vunpack.c.h.b16 %v824
        %v3095 = vunpack.c.l.b16 %v825
        %v3096 = vunpack.c.h.b16 %v825
        %v3097 = vunpack.c.l.b16 %v826
        %v3098 = vunpack.c.h.b16 %v826
        %v3099 = vunpack.c.l.b16 %v827
        %v3100 = vunpack.c.h.b16 %v827
        %v3101 = vunpack.c.l.b16 %v828
        %v3102 = vunpack.c.h.b16 %v828
        %v3103 = vunpack.c.l.b16 %v829
        %v3104 = vunpack.c.h.b16 %v829
        %v3105 = vunpack.c.l.b16 %v830
        %v3106 = vunpack.c.h.b16 %v830
        %v3107 = vunpack.c.l.b16 %v831
        %v3108 = vunpack.c.h.b16 %v831
        %v3109 = vunpack.c.l.b16 %v832
        %v3110 = vunpack.c.h.b16 %v832
        %v3111 = vunpack.c.l.b16 %v833
        %v3112 = vunpack.c.h.b16 %v833
        %v3113 = vunpack.c.l.b16 %v834
        %v3114 = vunpack.c.h.b16 %v834
        %v3115 = vunpack.c.l.b16 %v835
        %v3116 = vunpack.c.h.b16 %v835
        %v3117 = vunpack.c.l.b16 %v836
        %v3118 = vunpack.c.h.b16 %v836
        %v3119 = vunpack.c.l.b16 %v837
        %v3120 = vunpack.c.h.b16 %v837
        %v3121 = vunpack.c.l.b16 %v838
        %v3122 = vunpack.c.h.b16 %v838
        %v3123 = vunpack.c.l.b16 %v839
        %v3124 = vunpack.c.h.b16 %v839
        %v3125 = vunpack.c.l.b16 %v840
        %v3126 = vunpack.c.h.b16 %v840
        %v3127 = vunpack.c.l.b16 %v841
        %v3128 = vunpack.c.h.b16 %v841
        %v3129 = vunpack.c.l.b16 %v842
        %v3130 = vunpack.c.h.b16 %v842
        %v3131 = vunpack.c.l.b16 %v843
        %v3132 = vunpack.c.h.b16 %v843
        %v3133 = vunpack.c.l.b16 %v844
        %v3134 = vunpack.c.h.b16 %v844
        %v3135 = vunpack.c.l.b16 %v845
        %v3136 = vunpack.c.h.b16 %v845
        %v3137 = vunpack.c.l.b16 %v846
        %v3138 = vunpack.c.h.b16 %v846
        %v3139 = vunpack.c.l.b16 %v847
        %v3140 = vunpack.c.h.b16 %v847
        %v3141 = vunpack.c.l.b16 %v848
        %v3142 = vunpack.c.h.b16 %v848
        %v3143 = vunpack.c.l.b16 %v849
        %v3144 = vunpack.c.h.b16 %v849
        %v3145 = vunpack.c.l.b16 %v850
        %v3146 = vunpack.c.h.b16 %v850
        %v3147 = vunpack.c.l.b16 %v851
        %v3148 = vunpack.c.h.b16 %v851
        %v3149 = vunpack.c.l.b16 %v852
        %v3150 = vunpack.c.h.b16 %v852
        %v3151 = vunpack.c.l.b16 %v853
        %v3152 = vunpack.c.h.b16 %v853
        %v3153 = vunpack.c.l.b16 %v854
        %v3154 = vunpack.c.h.b16 %v854
        %v3155 = vunpack.c.l.b16 %v855
        %v3156 = vunpack.c.h.b16 %v855
        %v3157 = vunpack.c.l.b16 %v856
        %v3158 = vunpack.c.h.b16 %v856
        %v3159 = vunpack.c.l.b16 %v857
        %v3160 = vunpack.c.h.b16 %v857
        %v3161 = vunpack.c.l.b16 %v858
        %v3162 = vunpack.c.h.b16 %v858
        %v3163 = vunpack.c.l.b16 %v859
        %v3164 = vunpack.c.h.b16 %v859
        %v3165 = vunpack.c.l.b16 %v860
        %v3166 = vunpack.c.h.b16 %v860
        %v3167 = vunpack.c.l.b16 %v861
        %v3168 = vunpack.c.h.b16 %v861
        %v3169 = vunpack.c.l.b16 %v862
        %v3170 = vunpack.c.h.b16 %v862
        %v3171 = vunpack.c.l.b16 %v863
        %v3172 = vunpack.c.h.b16 %v863
        %v3173 = vunpack.c.l.b16 %v864
        %v3174 = vunpack.c.h.b16 %v864
        %v3175 = vunpack.c.l.b16 %v865
        %v3176 = vunpack.c.h.b16 %v865
        %v3177 = vunpack.c.l.b16 %v866
        %v3178 = vunpack.c.h.b16 %v866
        %v3179 = vunpack.c.l.b16 %v867
        %v3180 = vunpack.c.h.b16 %v867
        %v3181 = vunpack.c.l.b16 %v868
        %v3182 = vunpack.c.h.b16 %v868
        %v3183 = vunpack.c.l.b16 %v869
        %v3184 = vunpack.c.h.b16 %v869
        %v3185 = vunpack.c.l.b16 %v870
        %v3186 = vunpack.c.h.b16 %v870
        %v3187 = vunpack.c.l.b16 %v871
        %v3188 = vunpack.c.h.b16 %v871
        %v3189 = vunpack.c.l.b16 %v872
        %v3190 = vunpack.c.h.b16 %v872
        %v3191 = vunpack.c.l.b16 %v873
        %v3192 = vunpack.c.h.b16 %v873
        %v3193 = vunpack.c.l.b16 %v874
        %v3194 = vunpack.c.h.b16 %v874
        %v3195 = vunpack.c.l.b16 %v875
        %v3196 = vunpack.c.h.b16 %v875
        %v3197 = vunpack.c.l.b16 %v876
        %v3198 = vunpack.c.h.b16 %v876
        %v3199 = vunpack.c.l.b16 %v877
        %v3200 = vunpack.c.h.b16 %v877
        %v3201 = vunpack.c.l.b16 %v878
        %v3202 = vunpack.c.h.b16 %v878
        %v3203 = vunpack.c.l.b16 %v879
        %v3204 = vunpack.c.h.b16 %v879
        %v3205 = vunpack.c.l.b16 %v880
        %v3206 = vunpack.c.h.b16 %v880
        %v3207 = vunpack.c.l.b16 %v881
        %v3208 = vunpack.c.h.b16 %v881
        %v3209 = vunpack.c.l.b16 %v882
        %v3210 = vunpack.c.h.b16 %v882
        %v3211 = vunpack.c.l.b16 %v883
        %v3212 = vunpack.c.h.b16 %v883
        %v3213 = vunpack.c.l.b16 %v884
        %v3214 = vunpack.c.h.b16 %v884
        %v3215 = vunpack.c.l.b16 %v885
        %v3216 = vunpack.c.h.b16 %v885
        %v3217 = vunpack.c.l.b16 %v886
        %v3218 = vunpack.c.h.b16 %v886
        %v3219 = vunpack.c.l.b16 %v887
        %v3220 = vunpack.c.h.b16 %v887
        %v3221 = vunpack.c.l.b16 %v888
        %v3222 = vunpack.c.h.b16 %v888
        %v3223 = vunpack.c.l.b16 %v889
        %v3224 = vunpack.c.h.b16 %v889
        %v3225 = vunpack.c.l.b16 %v890
        %v3226 = vunpack.c.h.b16 %v890
        %v3227 = vunpack.c.l.b16 %v891
        %v3228 = vunpack.c.h.b16 %v891
        %v3229 = vunpack.c.l.b16 %v892
        %v3230 = vunpack.c.h.b16 %v892
        %v3231 = vunpack.c.l.b16 %v893
        %v3232 = vunpack.c.h.b16 %v893
        %v3233 = vunpack.c.l.b16 %v894
        %v3234 = vunpack.c.h.b16 %v894
        %v3235 = vunpack.c.l.b16 %v895
        %v3236 = vunpack.c.h.b16 %v895
        %v3237 = vunpack.c.l.b16 %v896
        %v3238 = vunpack.c.h.b16 %v896
        %v3239 = vunpack.c.l.b16 %v897
        %v3240 = vunpack.c.h.b16 %v897
        %v3241 = vunpack.c.l.b16 %v898
        %v3242 = vunpack.c.h.b16 %v898
        %v3243 = vunpack.c.l.b16 %v899
        %v3244 = vunpack.c.h.b16 %v899
        %v3245 = vunpack.c.l.b16 %v900
        %v3246 = vunpack.c.h.b16 %v900
        %v3247 = vunpack.c.l.b16 %v901
        %v3248 = vunpack.c.h.b16 %v901
        %v3249 = vunpack.c.l.b16 %v902
        %v3250 = vunpack.c.h.b16 %v902
        %v3251 = vunpack.c.l.b16 %v903
        %v3252 = vunpack.c.h.b16 %v903
        %v3253 = vunpack.c.l.b16 %v904
        %v3254 = vunpack.c.h.b16 %v904
        %v3255 = vunpack.c.l.b16 %v905
        %v3256 = vunpack.c.h.b16 %v905
        %v3257 = vunpack.c.l.b16 %v906
        %v3258 = vunpack.c.h.b16 %v906
        %v3259 = vunpack.c.l.b16 %v907
        %v3260 = vunpack.c.h.b16 %v907
        %v3261 = vunpack.c.l.b16 %v908
        %v3262 = vunpack.c.h.b16 %v908
        %v3263 = vunpack.c.l.b16 %v909
        %v3264 = vunpack.c.h.b16 %v909
        %v3265 = vunpack.c.l.b16 %v910
        %v3266 = vunpack.c.h.b16 %v910
        %v3267 = vunpack.c.l.b16 %v911
        %v3268 = vunpack.c.h.b16 %v911
        %v3269 = vunpack.c.l.b16 %v912
        %v3270 = vunpack.c.h.b16 %v912
        %v3271 = vunpack.c.l.b16 %v913
        %v3272 = vunpack.c.h.b16 %v913
        %v3273 = vunpack.c.l.b16 %v914
        %v3274 = vunpack.c.h.b16 %v914
        %v3275 = vunpack.c.l.b16 %v915
        %v3276 = vunpack.c.h.b16 %v915
        %v3277 = vunpack.c.l.b16 %v916
        %v3278 = vunpack.c.h.b16 %v916
        %v3279 = vunpack.c.l.b16 %v917
        %v3280 = vunpack.c.h.b16 %v917
        %v3281 = vunpack.c.l.b16 %v918
        %v3282 = vunpack.c.h.b16 %v918
        %v3283 = vunpack.c.l.b16 %v919
        %v3284 = vunpack.c.h.b16 %v919
        %v3285 = vunpack.c.l.b16 %v920
        %v3286 = vunpack.c.h.b16 %v920
        %v3287 = vunpack.c.l.b16 %v921
        %v3288 = vunpack.c.h.b16 %v921
        %v3289 = vunpack.c.l.b16 %v922
        %v3290 = vunpack.c.h.b16 %v922
        %v3291 = vunpack.c.l.b16 %v923
        %v3292 = vunpack.c.h.b16 %v923
        %v3293 = vunpack.c.l.b16 %v924
        %v3294 = vunpack.c.h.b16 %v924
        %v3295 = vunpack.c.l.b16 %v925
        %v3296 = vunpack.c.h.b16 %v925
        %v3297 = vunpack.c.l.b16 %v926
        %v3298 = vunpack.c.h.b16 %v926
        %v3299 = vunpack.c.l.b16 %v927
        %v3300 = vunpack.c.h.b16 %v927
        %v3301 = vunpack.c.l.b16 %v928
        %v3302 = vunpack.c.h.b16 %v928
        %v3303 = vunpack.c.l.b16 %v929
        %v3304 = vunpack.c.h.b16 %v929
        %v3305 = vunpack.c.l.b16 %v930
        %v3306 = vunpack.c.h.b16 %v930
        %v3307 = vunpack.c.l.b16 %v931
        %v3308 = vunpack.c.h.b16 %v931
        %v3309 = vunpack.c.l.b16 %v932
        %v3310 = vunpack.c.h.b16 %v932
        %v3311 = vunpack.c.l.b16 %v933
        %v3312 = vunpack.c.h.b16 %v933
        %v3313 = vunpack.c.l.b16 %v934
        %v3314 = vunpack.c.h.b16 %v934
        %v3315 = vunpack.c.l.b16 %v935
        %v3316 = vunpack.c.h.b16 %v935
        %v3317 = vunpack.c.l.b16 %v936
        %v3318 = vunpack.c.h.b16 %v936
        %v3319 = vunpack.c.l.b16 %v937
        %v3320 = vunpack.c.h.b16 %v937
        %v3321 = vunpack.c.l.b16 %v938
        %v3322 = vunpack.c.h.b16 %v938
        %v3323 = vunpack.c.l.b16 %v939
        %v3324 = vunpack.c.h.b16 %v939
        %v3325 = vunpack.c.l.b16 %v940
        %v3326 = vunpack.c.h.b16 %v940
        %v3327 = vunpack.c.l.b16 %v941
        %v3328 = vunpack.c.h.b16 %v941
        %v3329 = vunpack.c.l.b16 %v942
        %v3330 = vunpack.c.h.b16 %v942
        %v3331 = vunpack.c.l.b16 %v943
        %v3332 = vunpack.c.h.b16 %v943
        %v3333 = vunpack.c.l.b16 %v944
        %v3334 = vunpack.c.h.b16 %v944
        %v3335 = vunpack.c.l.b16 %v945
        %v3336 = vunpack.c.h.b16 %v945
        %v3337 = vunpack.c.l.b16 %v946
        %v3338 = vunpack.c.h.b16 %v946
        %v3339 = vunpack.c.l.b16 %v947
        %v3340 = vunpack.c.h.b16 %v947
        %v3341 = vunpack.c.l.b16 %v948
        %v3342 = vunpack.c.h.b16 %v948
        %v3343 = vunpack.c.l.b16 %v949
        %v3344 = vunpack.c.h.b16 %v949
        %v3345 = vunpack.c.l.b16 %v950
        %v3346 = vunpack.c.h.b16 %v950
        %v3347 = vunpack.c.l.b16 %v951
        %v3348 = vunpack.c.h.b16 %v951
        %v3349 = vunpack.c.l.b16 %v952
        %v3350 = vunpack.c.h.b16 %v952
        %v3351 = vunpack.c.l.b16 %v953
        %v3352 = vunpack.c.h.b16 %v953
        %v3353 = vunpack.c.l.b16 %v954
        %v3354 = vunpack.c.h.b16 %v954
        %v3355 = vunpack.c.l.b16 %v955
        %v3356 = vunpack.c.h.b16 %v955
        %v3357 = vunpack.c.l.b16 %v956
        %v3358 = vunpack.c.h.b16 %v956
        %v3359 = vunpack.c.l.b16 %v957
        %v3360 = vunpack.c.h.b16 %v957
        %v3361 = vunpack.c.l.b16 %v958
        %v3362 = vunpack.c.h.b16 %v958
        %v3363 = vunpack.c.l.b16 %v959
        %v3364 = vunpack.c.h.b16 %v959
        %v3365 = vunpack.c.l.b16 %v960
        %v3366 = vunpack.c.h.b16 %v960
        %v3367 = vunpack.c.l.b16 %v961
        %v3368 = vunpack.c.h.b16 %v961
        %v3369 = vunpack.c.l.b16 %v962
        %v3370 = vunpack.c.h.b16 %v962
        %v3371 = vunpack.c.l.b16 %v963
        %v3372 = vunpack.c.h.b16 %v963
        %v3373 = vunpack.c.l.b16 %v964
        %v3374 = vunpack.c.h.b16 %v964
        %v3375 = vunpack.c.l.b16 %v965
        %v3376 = vunpack.c.h.b16 %v965
        %v3377 = vunpack.c.l.b16 %v966
        %v3378 = vunpack.c.h.b16 %v966
        %v3379 = vunpack.c.l.b16 %v967
        %v3380 = vunpack.c.h.b16 %v967
        %v3381 = vunpack.c.l.b16 %v968
        %v3382 = vunpack.c.h.b16 %v968
        %v3383 = vunpack.c.l.b16 %v969
        %v3384 = vunpack.c.h.b16 %v969
        %v3385 = vunpack.c.l.b16 %v970
        %v3386 = vunpack.c.h.b16 %v970
        %v3387 = vunpack.c.l.b16 %v971
        %v3388 = vunpack.c.h.b16 %v971
        %v3389 = vunpack.c.l.b16 %v972
        %v3390 = vunpack.c.h.b16 %v972
        %v3391 = vunpack.c.l.b16 %v973
        %v3392 = vunpack.c.h.b16 %v973
        %v3393 = vunpack.c.l.b16 %v974
        %v3394 = vunpack.c.h.b16 %v974
        %v3395 = vunpack.c.l.b16 %v975
        %v3396 = vunpack.c.h.b16 %v975
        %v3397 = vunpack.c.l.b16 %v976
        %v3398 = vunpack.c.h.b16 %v976
        %v3399 = vunpack.c.l.b16 %v977
        %v3400 = vunpack.c.h.b16 %v977
        %v3401 = vunpack.c.l.b16 %v978
        %v3402 = vunpack.c.h.b16 %v978
        %v3403 = vunpack.c.l.b16 %v979
        %v3404 = vunpack.c.h.b16 %v979
        %v3405 = vunpack.c.l.b16 %v980
        %v3406 = vunpack.c.h.b16 %v980
        %v3407 = vunpack.c.l.b16 %v981
        %v3408 = vunpack.c.h.b16 %v981
        %v3409 = vunpack.c.l.b16 %v982
        %v3410 = vunpack.c.h.b16 %v982
        %v3411 = vunpack.c.l.b16 %v983
        %v3412 = vunpack.c.h.b16 %v983
        %v3413 = vunpack.c.l.b16 %v984
        %v3414 = vunpack.c.h.b16 %v984
        %v3415 = vunpack.c.l.b16 %v985
        %v3416 = vunpack.c.h.b16 %v985
        %v3417 = vunpack.c.l.b16 %v986
        %v3418 = vunpack.c.h.b16 %v986
        %v3419 = vunpack.c.l.b16 %v987
        %v3420 = vunpack.c.h.b16 %v987
        %v3421 = vunpack.c.l.b16 %v988
        %v3422 = vunpack.c.h.b16 %v988
        %v3423 = vunpack.c.l.b16 %v989
        %v3424 = vunpack.c.h.b16 %v989
        %v3425 = vunpack.c.l.b16 %v990
        %v3426 = vunpack.c.h.b16 %v990
        %v3427 = vunpack.c.l.b16 %v991
        %v3428 = vunpack.c.h.b16 %v991
        %v3429 = vunpack.c.l.b16 %v992
        %v3430 = vunpack.c.h.b16 %v992
        %v3431 = vunpack.c.l.b16 %v993
        %v3432 = vunpack.c.h.b16 %v993
        %v3433 = vunpack.c.l.b16 %v994
        %v3434 = vunpack.c.h.b16 %v994
        %v3435 = vunpack.c.l.b16 %v995
        %v3436 = vunpack.c.h.b16 %v995
        %v3437 = vunpack.c.l.b16 %v996
        %v3438 = vunpack.c.h.b16 %v996
        %v3439 = vunpack.c.l.b16 %v997
        %v3440 = vunpack.c.h.b16 %v997
        %v3441 = vunpack.c.l.b16 %v998
        %v3442 = vunpack.c.h.b16 %v998
        %v3443 = vunpack.c.l.b16 %v999
        %v3444 = vunpack.c.h.b16 %v999
        %v3445 = vunpack.c.l.b16 %v1000
        %v3446 = vunpack.c.h.b16 %v1000
        %v3447 = vunpack.c.l.b16 %v1001
        %v3448 = vunpack.c.h.b16 %v1001
        %v3449 = vunpack.c.l.b16 %v1002
        %v3450 = vunpack.c.h.b16 %v1002
        %v3451 = vunpack.c.l.b16 %v1003
        %v3452 = vunpack.c.h.b16 %v1003
        %v3453 = vunpack.c.l.b16 %v1004
        %v3454 = vunpack.c.h.b16 %v1004
        %v3455 = vunpack.c.l.b16 %v1005
        %v3456 = vunpack.c.h.b16 %v1005
        %v3457 = vunpack.c.l.b16 %v1006
        %v3458 = vunpack.c.h.b16 %v1006
        %v3459 = vunpack.c.l.b16 %v1007
        %v3460 = vunpack.c.h.b16 %v1007
        %v3461 = vunpack.c.l.b16 %v1008
        %v3462 = vunpack.c.h.b16 %v1008
        %v3463 = vunpack.c.l.b16 %v1009
        %v3464 = vunpack.c.h.b16 %v1009
        %v3465 = vunpack.c.l.b16 %v1010
        %v3466 = vunpack.c.h.b16 %v1010
        %v3467 = vunpack.c.l.b16 %v1011
        %v3468 = vunpack.c.h.b16 %v1011
        %v3469 = vunpack.c.l.b16 %v1012
        %v3470 = vunpack.c.h.b16 %v1012
        %v3471 = vunpack.c.l.b16 %v1013
        %v3472 = vunpack.c.h.b16 %v1013
        %v3473 = vunpack.c.l.b16 %v1014
        %v3474 = vunpack.c.h.b16 %v1014
        %v3475 = vunpack.c.l.b16 %v1015
        %v3476 = vunpack.c.h.b16 %v1015
        %v3477 = vunpack.c.l.b16 %v1016
        %v3478 = vunpack.c.h.b16 %v1016
        %v3479 = vunpack.c.l.b16 %v1017
        %v3480 = vunpack.c.h.b16 %v1017
        %v3481 = vunpack.c.l.b16 %v1018
        %v3482 = vunpack.c.h.b16 %v1018
        %v3483 = vunpack.c.l.b16 %v1019
        %v3484 = vunpack.c.h.b16 %v1019
        %v3485 = vunpack.c.l.b16 %v1020
        %v3486 = vunpack.c.h.b16 %v1020
        %v3487 = vunpack.c.l.b16 %v1021
        %v3488 = vunpack.c.h.b16 %v1021
        %v3489 = vunpack.c.l.b16 %v1022
        %v3490 = vunpack.c.h.b16 %v1022
        %v3491 = vunpack.c.l.b16 %v1023
        %v3492 = vunpack.c.h.b16 %v1023
        %v3493 = vunpack.c.l.b16 %v1024
        %v3494 = vunpack.c.h.b16 %v1024
        %v3495 = vunpack.c.l.b16 %v1025
        %v3496 = vunpack.c.h.b16 %v1025
        %v3497 = vunpack.c.l.b16 %v1026
        %v3498 = vunpack.c.h.b16 %v1026
        %v3499 = vunpack.c.l.b16 %v1027
        %v3500 = vunpack.c.h.b16 %v1027
        %v3501 = vunpack.c.l.b16 %v1028
        %v3502 = vunpack.c.h.b16 %v1028
        %v3503 = vunpack.c.l.b16 %v1029
        %v3504 = vunpack.c.h.b16 %v1029
        %v3505 = vunpack.c.l.b16 %v1030
        %v3506 = vunpack.c.h.b16 %v1030
        %v3507 = vunpack.c.l.b16 %v1031
        %v3508 = vunpack.c.h.b16 %v1031
        %v3509 = vunpack.c.l.b16 %v1032
        %v3510 = vunpack.c.h.b16 %v1032
        %v3511 = vunpack.c.l.b16 %v1033
        %v3512 = vunpack.c.h.b16 %v1033
        %v3513 = vunpack.c.l.b16 %v1034
        %v3514 = vunpack.c.h.b16 %v1034
        %v3515 = vunpack.c.l.b16 %v1035
        %v3516 = vunpack.c.h.b16 %v1035
        %v3517 = vunpack.c.l.b16 %v1036
        %v3518 = vunpack.c.h.b16 %v1036
        %v3519 = vunpack.c.l.b16 %v1037
        %v3520 = vunpack.c.h.b16 %v1037
        %v3521 = vunpack.c.l.b16 %v1038
        %v3522 = vunpack.c.h.b16 %v1038
        %v3523 = vunpack.c.l.b16 %v1039
        %v3524 = vunpack.c.h.b16 %v1039
        %v3525 = vunpack.c.l.b16 %v1040
        %v3526 = vunpack.c.h.b16 %v1040
        %v3527 = vunpack.c.l.b16 %v1041
        %v3528 = vunpack.c.h.b16 %v1041
        %v3529 = vunpack.c.l.b16 %v1042
        %v3530 = vunpack.c.h.b16 %v1042
        %v3531 = vunpack.c.l.b16 %v1043
        %v3532 = vunpack.c.h.b16 %v1043
        %v3533 = vunpack.c.l.b16 %v1044
        %v3534 = vunpack.c.h.b16 %v1044
        %v3535 = vunpack.c.l.b16 %v1045
        %v3536 = vunpack.c.h.b16 %v1045
        %v3537 = vunpack.c.l.b16 %v1046
        %v3538 = vunpack.c.h.b16 %v1046
        %v3539 = vunpack.c.l.b16 %v1047
        %v3540 = vunpack.c.h.b16 %v1047
        %v3541 = vunpack.c.l.b16 %v1048
        %v3542 = vunpack.c.h.b16 %v1048
        %v3543 = vunpack.c.l.b16 %v1049
        %v3544 = vunpack.c.h.b16 %v1049
        %v3545 = vunpack.c.l.b16 %v1050
        %v3546 = vunpack.c.h.b16 %v1050
        %v3547 = vunpack.c.l.b16 %v1051
        %v3548 = vunpack.c.h.b16 %v1051
        %v3549 = vunpack.c.l.b16 %v1052
        %v3550 = vunpack.c.h.b16 %v1052
        %v3551 = vunpack.c.l.b16 %v1053
        %v3552 = vunpack.c.h.b16 %v1053
        %v3553 = vunpack.c.l.b16 %v1054
        %v3554 = vunpack.c.h.b16 %v1054
        %v3555 = vunpack.c.l.b16 %v1055
        %v3556 = vunpack.c.h.b16 %v1055
        %v3557 = vunpack.c.l.b16 %v1056
        %v3558 = vunpack.c.h.b16 %v1056
        %v3559 = vunpack.c.l.b16 %v1057
        %v3560 = vunpack.c.h.b16 %v1057
        %v3561 = vunpack.c.l.b16 %v1058
        %v3562 = vunpack.c.h.b16 %v1058
        %v3563 = vunpack.c.l.b16 %v1059
        %v3564 = vunpack.c.h.b16 %v1059
        %v3565 = vunpack.c.l.b16 %v1060
        %v3566 = vunpack.c.h.b16 %v1060
        %v3567 = vunpack.c.l.b16 %v1061
        %v3568 = vunpack.c.h.b16 %v1061
        %v3569 = vunpack.c.l.b16 %v1062
        %v3570 = vunpack.c.h.b16 %v1062
        %v3571 = vunpack.c.l.b16 %v1063
        %v3572 = vunpack.c.h.b16 %v1063
        %v3573 = vunpack.c.l.b16 %v1064
        %v3574 = vunpack.c.h.b16 %v1064
        %v3575 = vunpack.c.l.b16 %v1065
        %v3576 = vunpack.c.h.b16 %v1065
        %v3577 = vunpack.c.l.b16 %v1066
        %v3578 = vunpack.c.h.b16 %v1066
        %v3579 = vunpack.c.l.b16 %v1067
        %v3580 = vunpack.c.h.b16 %v1067
        %v3581 = vunpack.c.l.b16 %v1068
        %v3582 = vunpack.c.h.b16 %v1068
        %v3583 = vunpack.c.l.b16 %v1069
        %v3584 = vunpack.c.h.b16 %v1069
        %v3585 = vunpack.c.l.b16 %v1070
        %v3586 = vunpack.c.h.b16 %v1070
        %v3587 = vunpack.c.l.b16 %v1071
        %v3588 = vunpack.c.h.b16 %v1071
        %v3589 = vunpack.c.l.b16 %v1072
        %v3590 = vunpack.c.h.b16 %v1072
        %v3591 = vunpack.c.l.b16 %v1073
        %v3592 = vunpack.c.h.b16 %v1073
        %v3593 = vunpack.c.l.b16 %v1074
        %v3594 = vunpack.c.h.b16 %v1074
        %v3595 = vunpack.c.l.b16 %v1075
        %v3596 = vunpack.c.h.b16 %v1075
        %v3597 = vunpack.c.l.b16 %v1076
        %v3598 = vunpack.c.h.b16 %v1076
        %v3599 = vunpack.c.l.b16 %v1077
        %v3600 = vunpack.c.h.b16 %v1077
        %v3601 = vunpack.c.l.b16 %v1078
        %v3602 = vunpack.c.h.b16 %v1078
        %v3603 = vunpack.c.l.b16 %v1079
        %v3604 = vunpack.c.h.b16 %v1079
        %v3605 = vunpack.c.l.b16 %v1080
        %v3606 = vunpack.c.h.b16 %v1080
        %v3607 = vunpack.c.l.b16 %v1081
        %v3608 = vunpack.c.h.b16 %v1081
        %v3609 = vunpack.c.l.b16 %v1082
        %v3610 = vunpack.c.h.b16 %v1082
        %v3611 = vunpack.c.l.b16 %v1083
        %v3612 = vunpack.c.h.b16 %v1083
        %v3613 = vunpack.c.l.b16 %v1084
        %v3614 = vunpack.c.h.b16 %v1084
        %v3615 = vunpack.c.l.b16 %v1085
        %v3616 = vunpack.c.h.b16 %v1085
        %v3617 = vunpack.c.l.b16 %v1086
        %v3618 = vunpack.c.h.b16 %v1086
        %v3619 = vunpack.c.l.b16 %v1087
        %v3620 = vunpack.c.h.b16 %v1087
        %v3621 = vunpack.c.l.b16 %v1088
        %v3622 = vunpack.c.h.b16 %v1088
        %v3623 = vunpack.c.l.b16 %v1089
        %v3624 = vunpack.c.h.b16 %v1089
        %v3625 = vunpack.c.l.b16 %v1090
        %v3626 = vunpack.c.h.b16 %v1090
        %v3627 = vunpack.c.l.b16 %v1091
        %v3628 = vunpack.c.h.b16 %v1091
        %v3629 = vunpack.c.l.b16 %v1092
        %v3630 = vunpack.c.h.b16 %v1092
        %v3631 = vunpack.c.l.b16 %v1093
        %v3632 = vunpack.c.h.b16 %v1093
        %v3633 = vunpack.c.l.b16 %v1094
        %v3634 = vunpack.c.h.b16 %v1094
        %v3635 = vunpack.c.l.b16 %v1095
        %v3636 = vunpack.c.h.b16 %v1095
        %v3637 = vunpack.c.l.b16 %v1096
        %v3638 = vunpack.c.h.b16 %v1096
        %v3639 = vunpack.c.l.b16 %v1097
        %v3640 = vunpack.c.h.b16 %v1097
        %v3641 = vunpack.c.l.b16 %v1098
        %v3642 = vunpack.c.h.b16 %v1098
        %v3643 = vunpack.c.l.b16 %v1099
        %v3644 = vunpack.c.h.b16 %v1099
        %v3645 = vunpack.c.l.b16 %v1100
        %v3646 = vunpack.c.h.b16 %v1100
        %v3647 = vunpack.c.l.b16 %v1101
        %v3648 = vunpack.c.h.b16 %v1101
        %v3649 = vunpack.c.l.b16 %v1102
        %v3650 = vunpack.c.h.b16 %v1102
        %v3651 = vunpack.c.l.b16 %v1103
        %v3652 = vunpack.c.h.b16 %v1103
        %v3653 = vunpack.c.l.b16 %v1104
        %v3654 = vunpack.c.h.b16 %v1104
        %v3655 = vunpack.c.l.b16 %v1105
        %v3656 = vunpack.c.h.b16 %v1105
        %v3657 = vunpack.c.l.b16 %v1106
        %v3658 = vunpack.c.h.b16 %v1106
        %v3659 = vunpack.c.l.b16 %v1107
        %v3660 = vunpack.c.h.b16 %v1107
        %v3661 = vunpack.c.l.b16 %v1108
        %v3662 = vunpack.c.h.b16 %v1108
        %v3663 = vunpack.c.l.b16 %v1109
        %v3664 = vunpack.c.h.b16 %v1109
        %v3665 = vunpack.c.l.b16 %v1110
        %v3666 = vunpack.c.h.b16 %v1110
        %v3667 = vunpack.c.l.b16 %v1111
        %v3668 = vunpack.c.h.b16 %v1111
        %v3669 = vunpack.c.l.b16 %v1112
        %v3670 = vunpack.c.h.b16 %v1112
        %v3671 = vunpack.c.l.b16 %v1113
        %v3672 = vunpack.c.h.b16 %v1113
        %v3673 = vunpack.c.l.b16 %v1114
        %v3674 = vunpack.c.h.b16 %v1114
        %v3675 = vunpack.c.l.b16 %v1115
        %v3676 = vunpack.c.h.b16 %v1115
        %v3677 = vunpack.c.l.b16 %v1116
        %v3678 = vunpack.c.h.b16 %v1116
        %v3679 = vunpack.c.l.b16 %v1117
        %v3680 = vunpack.c.h.b16 %v1117
        %v3681 = vunpack.c.l.b16 %v1118
        %v3682 = vunpack.c.h.b16 %v1118
        %v3683 = vunpack.c.l.b16 %v1119
        %v3684 = vunpack.c.h.b16 %v1119
        %v3685 = vunpack.c.l.b16 %v1120
        %v3686 = vunpack.c.h.b16 %v1120
        %v3687 = vunpack.c.l.b16 %v1121
        %v3688 = vunpack.c.h.b16 %v1121
        %v3689 = vunpack.c.l.b16 %v1122
        %v3690 = vunpack.c.h.b16 %v1122
        %v3691 = vunpack.c.l.b16 %v1123
        %v3692 = vunpack.c.h.b16 %v1123
        %v3693 = vunpack.c.l.b16 %v1124
        %v3694 = vunpack.c.h.b16 %v1124
        %v3695 = vunpack.c.l.b16 %v1125
        %v3696 = vunpack.c.h.b16 %v1125
        %v3697 = vunpack.c.l.b16 %v1126
        %v3698 = vunpack.c.h.b16 %v1126
        %v3699 = vunpack.c.l.b16 %v1127
        %v3700 = vunpack.c.h.b16 %v1127
        %v3701 = vunpack.c.l.b16 %v1128
        %v3702 = vunpack.c.h.b16 %v1128
        %v3703 = vunpack.c.l.b16 %v1129
        %v3704 = vunpack.c.h.b16 %v1129
        %v3705 = vunpack.c.l.b16 %v1130
        %v3706 = vunpack.c.h.b16 %v1130
        %v3707 = vunpack.c.l.b16 %v1131
        %v3708 = vunpack.c.h.b16 %v1131
        %v3709 = vunpack.c.l.b16 %v1132
        %v3710 = vunpack.c.h.b16 %v1132
        %v3711 = vunpack.c.l.b16 %v1133
        %v3712 = vunpack.c.h.b16 %v1133
        %v3713 = vunpack.c.l.b16 %v1134
        %v3714 = vunpack.c.h.b16 %v1134
        %v3715 = vunpack.c.l.b16 %v1135
        %v3716 = vunpack.c.h.b16 %v1135
        %v3717 = vunpack.c.l.b16 %v1136
        %v3718 = vunpack.c.h.b16 %v1136
        %v3719 = vunpack.c.l.b16 %v1137
        %v3720 = vunpack.c.h.b16 %v1137
        %v3721 = vunpack.c.l.b16 %v1138
        %v3722 = vunpack.c.h.b16 %v1138
        %v3723 = vunpack.c.l.b16 %v1139
        %v3724 = vunpack.c.h.b16 %v1139
        %v3725 = vunpack.c.l.b16 %v1140
        %v3726 = vunpack.c.h.b16 %v1140
        %v3727 = vunpack.c.l.b16 %v1141
        %v3728 = vunpack.c.h.b16 %v1141
        %v3729 = vunpack.c.l.b16 %v1142
        %v3730 = vunpack.c.h.b16 %v1142
        %v3731 = vunpack.c.l.b16 %v1143
        %v3732 = vunpack.c.h.b16 %v1143
        %v3733 = vunpack.c.l.b16 %v1144
        %v3734 = vunpack.c.h.b16 %v1144
        %v3735 = vunpack.c.l.b16 %v1145
        %v3736 = vunpack.c.h.b16 %v1145
        %v3737 = vunpack.c.l.b16 %v1146
        %v3738 = vunpack.c.h.b16 %v1146
        %v3739 = vunpack.c.l.b16 %v1147
        %v3740 = vunpack.c.h.b16 %v1147
        %v3741 = vunpack.c.l.b16 %v1148
        %v3742 = vunpack.c.h.b16 %v1148
        %v3743 = vunpack.c.l.b16 %v1149
        %v3744 = vunpack.c.h.b16 %v1149
        %v3745 = vunpack.c.l.b16 %v1150
        %v3746 = vunpack.c.h.b16 %v1150
        %v3747 = vunpack.c.l.b16 %v1151
        %v3748 = vunpack.c.h.b16 %v1151
        %v3749 = vunpack.c.l.b16 %v1152
        %v3750 = vunpack.c.h.b16 %v1152
        %v3751 = vunpack.c.l.b16 %v1153
        %v3752 = vunpack.c.h.b16 %v1153
        %v3753 = vunpack.c.l.b16 %v1154
        %v3754 = vunpack.c.h.b16 %v1154
        %v3755 = vunpack.c.l.b16 %v1155
        %v3756 = vunpack.c.h.b16 %v1155
        %v3757 = vunpack.c.l.b16 %v1156
        %v3758 = vunpack.c.h.b16 %v1156
        %v3759 = vunpack.c.l.b16 %v1157
        %v3760 = vunpack.c.h.b16 %v1157
        %v3761 = vunpack.c.l.b16 %v1158
        %v3762 = vunpack.c.h.b16 %v1158
        %v3763 = vunpack.c.l.b16 %v1159
        %v3764 = vunpack.c.h.b16 %v1159
        %v3765 = vunpack.c.l.b16 %v1160
        %v3766 = vunpack.c.h.b16 %v1160
        %v3767 = vunpack.c.l.b16 %v1161
        %v3768 = vunpack.c.h.b16 %v1161
        %v3769 = vunpack.c.l.b16 %v1162
        %v3770 = vunpack.c.h.b16 %v1162
        %v3771 = vunpack.c.l.b16 %v1163
        %v3772 = vunpack.c.h.b16 %v1163
        %v3773 = vunpack.c.l.b16 %v1164
        %v3774 = vunpack.c.h.b16 %v1164
        %v3775 = vunpack.c.l.b16 %v1165
        %v3776 = vunpack.c.h.b16 %v1165
        %v3777 = vunpack.c.l.b16 %v1166
        %v3778 = vunpack.c.h.b16 %v1166
        %v3779 = vunpack.c.l.b16 %v1167
        %v3780 = vunpack.c.h.b16 %v1167
        %v3781 = vunpack.c.l.b16 %v1168
        %v3782 = vunpack.c.h.b16 %v1168
        %v3783 = vunpack.c.l.b16 %v1169
        %v3784 = vunpack.c.h.b16 %v1169
        %v3785 = vunpack.c.l.b16 %v1170
        %v3786 = vunpack.c.h.b16 %v1170
        %v3787 = vunpack.c.l.b16 %v1171
        %v3788 = vunpack.c.h.b16 %v1171
        %v3789 = vunpack.c.l.b16 %v1172
        %v3790 = vunpack.c.h.b16 %v1172
        %v3791 = vunpack.c.l.b16 %v1173
        %v3792 = vunpack.c.h.b16 %v1173
        %v3793 = vunpack.c.l.b16 %v1174
        %v3794 = vunpack.c.h.b16 %v1174
        %v3795 = vunpack.c.l.b16 %v1175
        %v3796 = vunpack.c.h.b16 %v1175
        %v3797 = vunpack.c.l.b16 %v1176
        %v3798 = vunpack.c.h.b16 %v1176
        %v3799 = vunpack.c.l.b16 %v1177
        %v3800 = vunpack.c.h.b16 %v1177
        %v3801 = vunpack.c.l.b16 %v1178
        %v3802 = vunpack.c.h.b16 %v1178
        %v3803 = vunpack.c.l.b16 %v1179
        %v3804 = vunpack.c.h.b16 %v1179
        %v3805 = vunpack.c.l.b16 %v1180
        %v3806 = vunpack.c.h.b16 %v1180
        %v3807 = vunpack.c.l.b16 %v1181
        %v3808 = vunpack.c.h.b16 %v1181
        %v3809 = vunpack.c.l.b16 %v1182
        %v3810 = vunpack.c.h.b16 %v1182
        %v3811 = vunpack.c.l.b16 %v1183
        %v3812 = vunpack.c.h.b16 %v1183
        %v3813 = vunpack.c.l.b16 %v1184
        %v3814 = vunpack.c.h.b16 %v1184
        %v3815 = vunpack.c.l.b16 %v1185
        %v3816 = vunpack.c.h.b16 %v1185
        %v3817 = vunpack.c.l.b16 %v1186
        %v3818 = vunpack.c.h.b16 %v1186
        %v3819 = vunpack.c.l.b16 %v1187
        %v3820 = vunpack.c.h.b16 %v1187
        %v3821 = vunpack.c.l.b16 %v1188
        %v3822 = vunpack.c.h.b16 %v1188
        %v3823 = vunpack.c.l.b16 %v1189
        %v3824 = vunpack.c.h.b16 %v1189
        %v3825 = vunpack.c.l.b16 %v1190
        %v3826 = vunpack.c.h.b16 %v1190
        %v3827 = vunpack.c.l.b16 %v1191
        %v3828 = vunpack.c.h.b16 %v1191
        %v3829 = vunpack.c.l.b16 %v1192
        %v3830 = vunpack.c.h.b16 %v1192
        %v3831 = vunpack.c.l.b16 %v1193
        %v3832 = vunpack.c.h.b16 %v1193
        %v3833 = vunpack.c.l.b16 %v1194
        %v3834 = vunpack.c.h.b16 %v1194
        %v3835 = vunpack.c.l.b16 %v1195
        %v3836 = vunpack.c.h.b16 %v1195
        %v3837 = vunpack.c.l.b16 %v1196
        %v3838 = vunpack.c.h.b16 %v1196
        %v3839 = vunpack.c.l.b16 %v1197
        %v3840 = vunpack.c.h.b16 %v1197
        %v3841 = vunpack.c.l.b16 %v1198
        %v3842 = vunpack.c.h.b16 %v1198
        %v3843 = vunpack.c.l.b16 %v1199
        %v3844 = vunpack.c.h.b16 %v1199
        %v3845 = vunpack.c.l.b16 %v1200
        %v3846 = vunpack.c.h.b16 %v1200
        %v3847 = vunpack.c.l.b16 %v1201
        %v3848 = vunpack.c.h.b16 %v1201
        %v3849 = vunpack.c.l.b16 %v1202
        %v3850 = vunpack.c.h.b16 %v1202
        %v3851 = vunpack.c.l.b16 %v1203
        %v3852 = vunpack.c.h.b16 %v1203
        %v3853 = vunpack.c.l.b16 %v1204
        %v3854 = vunpack.c.h.b16 %v1204
        %v3855 = vunpack.c.l.b16 %v1205
        %v3856 = vunpack.c.h.b16 %v1205
        %v3857 = vunpack.c.l.b16 %v1206
        %v3858 = vunpack.c.h.b16 %v1206
        %v3859 = vunpack.c.l.b16 %v1207
        %v3860 = vunpack.c.h.b16 %v1207
        %v3861 = vunpack.c.l.b16 %v1208
        %v3862 = vunpack.c.h.b16 %v1208
        %v3863 = vunpack.c.l.b16 %v1209
        %v3864 = vunpack.c.h.b16 %v1209
        %v3865 = vunpack.c.l.b16 %v1210
        %v3866 = vunpack.c.h.b16 %v1210
        %v3867 = vunpack.c.l.b16 %v1211
        %v3868 = vunpack.c.h.b16 %v1211
        %v3869 = vunpack.c.l.b16 %v1212
        %v3870 = vunpack.c.h.b16 %v1212
        %v3871 = vunpack.c.l.b16 %v1213
        %v3872 = vunpack.c.h.b16 %v1213
        %v3873 = vunpack.c.l.b16 %v1214
        %v3874 = vunpack.c.h.b16 %v1214
        %v3875 = vunpack.c.l.b16 %v1215
        %v3876 = vunpack.c.h.b16 %v1215
        %v3877 = vunpack.c.l.b16 %v1216
        %v3878 = vunpack.c.h.b16 %v1216
        %v3879 = vunpack.c.l.b16 %v1217
        %v3880 = vunpack.c.h.b16 %v1217
        %v3881 = vunpack.c.l.b16 %v1218
        %v3882 = vunpack.c.h.b16 %v1218
        %v3883 = vunpack.c.l.b16 %v1219
        %v3884 = vunpack.c.h.b16 %v1219
        %v3885 = vunpack.c.l.b16 %v1220
        %v3886 = vunpack.c.h.b16 %v1220
        %v3887 = vunpack.c.l.b16 %v1221
        %v3888 = vunpack.c.h.b16 %v1221
        %v3889 = vunpack.c.l.b16 %v1222
        %v3890 = vunpack.c.h.b16 %v1222
        %v3891 = vunpack.c.l.b16 %v1223
        %v3892 = vunpack.c.h.b16 %v1223
        %v3893 = vunpack.c.l.b16 %v1224
        %v3894 = vunpack.c.h.b16 %v1224
        %v3895 = vunpack.c.l.b16 %v1225
        %v3896 = vunpack.c.h.b16 %v1225
        %v3897 = vunpack.c.l.b16 %v1226
        %v3898 = vunpack.c.h.b16 %v1226
        %v3899 = vunpack.c.l.b16 %v1227
        %v3900 = vunpack.c.h.b16 %v1227
        %v3901 = vunpack.c.l.b16 %v1228
        %v3902 = vunpack.c.h.b16 %v1228
        %v3903 = vunpack.c.l.b16 %v1229
        %v3904 = vunpack.c.h.b16 %v1229
        %v3905 = vunpack.c.l.b16 %v1230
        %v3906 = vunpack.c.h.b16 %v1230
        %v3907 = vunpack.c.l.b16 %v1231
        %v3908 = vunpack.c.h.b16 %v1231
        %v3909 = vunpack.c.l.b16 %v1232
        %v3910 = vunpack.c.h.b16 %v1232
        %v3911 = vunpack.c.l.b16 %v1233
        %v3912 = vunpack.c.h.b16 %v1233
        %v3913 = vunpack.c.l.b16 %v1234
        %v3914 = vunpack.c.h.b16 %v1234
        %v3915 = vunpack.c.l.b16 %v1235
        %v3916 = vunpack.c.h.b16 %v1235
        %v3917 = vunpack.c.l.b16 %v1236
        %v3918 = vunpack.c.h.b16 %v1236
        %v3919 = vunpack.c.l.b16 %v1237
        %v3920 = vunpack.c.h.b16 %v1237
        %v3921 = vunpack.c.l.b16 %v1238
        %v3922 = vunpack.c.h.b16 %v1238
        %v3923 = vunpack.c.l.b16 %v1239
        %v3924 = vunpack.c.h.b16 %v1239
        %v3925 = vunpack.c.l.b16 %v1240
        %v3926 = vunpack.c.h.b16 %v1240
        %v3927 = vunpack.c.l.b16 %v1241
        %v3928 = vunpack.c.h.b16 %v1241
        %v3929 = vunpack.c.l.b16 %v1242
        %v3930 = vunpack.c.h.b16 %v1242
        %v3931 = vunpack.c.l.b16 %v1243
        %v3932 = vunpack.c.h.b16 %v1243
        %v3933 = vunpack.c.l.b16 %v1244
        %v3934 = vunpack.c.h.b16 %v1244
        %v3935 = vunpack.c.l.b16 %v1245
        %v3936 = vunpack.c.h.b16 %v1245
        %v3937 = vunpack.c.l.b16 %v1246
        %v3938 = vunpack.c.h.b16 %v1246
        %v3939 = vunpack.c.l.b16 %v1247
        %v3940 = vunpack.c.h.b16 %v1247
        %v3941 = vunpack.c.l.b16 %v1248
        %v3942 = vunpack.c.h.b16 %v1248
        %v3943 = vunpack.c.l.b16 %v1249
        %v3944 = vunpack.c.h.b16 %v1249
        %v3945 = vunpack.c.l.b16 %v1250
        %v3946 = vunpack.c.h.b16 %v1250
        %v3947 = vunpack.c.l.b16 %v1251
        %v3948 = vunpack.c.h.b16 %v1251
        %v3949 = vunpack.c.l.b16 %v1252
        %v3950 = vunpack.c.h.b16 %v1252
        %v3951 = vunpack.c.l.b16 %v1253
        %v3952 = vunpack.c.h.b16 %v1253
        %v3953 = vunpack.c.l.b16 %v1254
        %v3954 = vunpack.c.h.b16 %v1254
        %v3955 = vunpack.c.l.b16 %v1255
        %v3956 = vunpack.c.h.b16 %v1255
        %v3957 = vunpack.c.l.b16 %v1256
        %v3958 = vunpack.c.h.b16 %v1256
        %v3959 = vunpack.c.l.b16 %v1257
        %v3960 = vunpack.c.h.b16 %v1257
        %v3961 = vunpack.c.l.b16 %v1258
        %v3962 = vunpack.c.h.b16 %v1258
        %v3963 = vunpack.c.l.b16 %v1259
        %v3964 = vunpack.c.h.b16 %v1259
        %v3965 = vunpack.c.l.b16 %v1260
        %v3966 = vunpack.c.h.b16 %v1260
        %v3967 = vunpack.c.l.b16 %v1261
        %v3968 = vunpack.c.h.b16 %v1261
        %v3969 = vunpack.c.l.b16 %v1262
        %v3970 = vunpack.c.h.b16 %v1262
        %v3971 = vunpack.c.l.b16 %v1263
        %v3972 = vunpack.c.h.b16 %v1263
        %v3973 = vunpack.c.l.b16 %v1264
        %v3974 = vunpack.c.h.b16 %v1264
        %v3975 = vunpack.c.l.b16 %v1265
        %v3976 = vunpack.c.h.b16 %v1265
        %v3977 = vunpack.c.l.b16 %v1266
        %v3978 = vunpack.c.h.b16 %v1266
        %v3979 = vunpack.c.l.b16 %v1267
        %v3980 = vunpack.c.h.b16 %v1267
        %v3981 = vunpack.c.l.b16 %v1268
        %v3982 = vunpack.c.h.b16 %v1268
        %v3983 = vunpack.c.l.b16 %v1269
        %v3984 = vunpack.c.h.b16 %v1269
        %v3985 = vunpack.c.l.b16 %v1270
        %v3986 = vunpack.c.h.b16 %v1270
        %v3987 = vunpack.c.l.b16 %v1271
        %v3988 = vunpack.c.h.b16 %v1271
        %v3989 = vunpack.c.l.b16 %v1272
        %v3990 = vunpack.c.h.b16 %v1272
        %v3991 = vunpack.c.l.b16 %v1273
        %v3992 = vunpack.c.h.b16 %v1273
        %v3993 = vunpack.c.l.b16 %v1274
        %v3994 = vunpack.c.h.b16 %v1274
        %v3995 = vunpack.c.l.b16 %v1275
        %v3996 = vunpack.c.h.b16 %v1275
        %v3997 = vunpack.c.l.b16 %v1276
        %v3998 = vunpack.c.h.b16 %v1276
        %v3999 = vunpack.c.l.b16 %v1277
        %v4000 = vunpack.c.h.b16 %v1277
        %v4001 = vunpack.c.l.b16 %v1278
        %v4002 = vunpack.c.h.b16 %v1278
        %v4003 = vunpack.c.l.b16 %v1279
        %v4004 = vunpack.c.h.b16 %v1279
        %v4005 = vunpack.c.l.b16 %v1280
        %v4006 = vunpack.c.h.b16 %v1280
        %v4007 = vunpack.c.l.b16 %v1281
        %v4008 = vunpack.c.h.b16 %v1281
        %v4009 = vunpack.c.l.b16 %v1282
        %v4010 = vunpack.c.h.b16 %v1282
        %v4011 = vunpack.c.l.b16 %v1283
        %v4012 = vunpack.c.h.b16 %v1283
        %v4013 = vunpack.c.l.b16 %v1284
        %v4014 = vunpack.c.h.b16 %v1284
        %v4015 = vunpack.c.l.b16 %v1285
        %v4016 = vunpack.c.h.b16 %v1285
        %v4017 = vunpack.c.l.b16 %v1286
        %v4018 = vunpack.c.h.b16 %v1286
        %v4019 = vunpack.c.l.b16 %v1287
        %v4020 = vunpack.c.h.b16 %v1287
        %v4021 = vunpack.c.l.b16 %v1288
        %v4022 = vunpack.c.h.b16 %v1288
        %v4023 = vunpack.c.l.b16 %v1289
        %v4024 = vunpack.c.h.b16 %v1289
        %v4025 = vunpack.c.l.b16 %v1290
        %v4026 = vunpack.c.h.b16 %v1290
        %v4027 = vunpack.c.l.b16 %v1291
        %v4028 = vunpack.c.h.b16 %v1291
        %v4029 = vunpack.c.l.b16 %v1292
        %v4030 = vunpack.c.h.b16 %v1292
        %v4031 = vunpack.c.l.b16 %v1293
        %v4032 = vunpack.c.h.b16 %v1293
        %v4033 = vunpack.c.l.b16 %v1294
        %v4034 = vunpack.c.h.b16 %v1294
        %v4035 = vunpack.c.l.b16 %v1295
        %v4036 = vunpack.c.h.b16 %v1295
        %v4037 = vunpack.c.l.b16 %v1296
        %v4038 = vunpack.c.h.b16 %v1296
        %v4039 = vunpack.c.l.b16 %v1297
        %v4040 = vunpack.c.h.b16 %v1297
        %v4041 = vunpack.c.l.b16 %v1298
        %v4042 = vunpack.c.h.b16 %v1298
        %v4043 = vunpack.c.l.b16 %v1299
        %v4044 = vunpack.c.h.b16 %v1299
        %v4045 = vunpack.c.l.b16 %v1300
        %v4046 = vunpack.c.h.b16 %v1300
        %v4047 = vunpack.c.l.b16 %v1301
        %v4048 = vunpack.c.h.b16 %v1301
        %v4049 = vunpack.c.l.b16 %v1302
        %v4050 = vunpack.c.h.b16 %v1302
        %v4051 = vunpack.c.l.b16 %v1303
        %v4052 = vunpack.c.h.b16 %v1303
        %v4053 = vunpack.c.l.b16 %v1304
        %v4054 = vunpack.c.h.b16 %v1304
        %v4055 = vunpack.c.l.b16 %v1305
        %v4056 = vunpack.c.h.b16 %v1305
        %v4057 = vunpack.c.l.b16 %v1306
        %v4058 = vunpack.c.h.b16 %v1306
        %v4059 = vunpack.c.l.b16 %v1307
        %v4060 = vunpack.c.h.b16 %v1307
        %v4061 = vunpack.c.l.b16 %v1308
        %v4062 = vunpack.c.h.b16 %v1308
        %v4063 = vunpack.c.l.b16 %v1309
        %v4064 = vunpack.c.h.b16 %v1309
        %v4065 = vunpack.c.l.b16 %v1310
        %v4066 = vunpack.c.h.b16 %v1310
        %v4067 = vunpack.c.l.b16 %v1311
        %v4068 = vunpack.c.h.b16 %v1311
        %v4069 = vunpack.c.l.b16 %v1312
        %v4070 = vunpack.c.h.b16 %v1312
        %v4071 = vunpack.c.l.b16 %v1313
        %v4072 = vunpack.c.h.b16 %v1313
        %v4073 = vunpack.c.l.b16 %v1314
        %v4074 = vunpack.c.h.b16 %v1314
        %v4075 = vunpack.c.l.b16 %v1315
        %v4076 = vunpack.c.h.b16 %v1315
        %v4077 = vunpack.c.l.b16 %v1316
        %v4078 = vunpack.c.h.b16 %v1316
        %v4079 = vunpack.c.l.b16 %v1317
        %v4080 = vunpack.c.h.b16 %v1317
        %v4081 = vunpack.c.l.b16 %v1318
        %v4082 = vunpack.c.h.b16 %v1318
        %v4083 = vunpack.c.l.b16 %v1319
        %v4084 = vunpack.c.h.b16 %v1319
        %v4085 = vunpack.c.l.b16 %v1320
        %v4086 = vunpack.c.h.b16 %v1320
        %v4087 = vunpack.c.l.b16 %v1321
        %v4088 = vunpack.c.h.b16 %v1321
        %v4089 = vunpack.c.l.b16 %v1322
        %v4090 = vunpack.c.h.b16 %v1322
        %v4091 = vunpack.c.l.b16 %v1323
        %v4092 = vunpack.c.h.b16 %v1323
        %v4093 = vunpack.c.l.b16 %v1324
        %v4094 = vunpack.c.h.b16 %v1324
        %v4095 = vunpack.c.l.b16 %v1325
        %v4096 = vunpack.c.h.b16 %v1325
        %v4097 = vunpack.c.l.b16 %v1326
        %v4098 = vunpack.c.h.b16 %v1326
        %v4099 = vunpack.c.l.b16 %v1327
        %v4100 = vunpack.c.h.b16 %v1327
        %v4101 = vunpack.c.l.b16 %v1328
        %v4102 = vunpack.c.h.b16 %v1328
        %v4103 = vunpack.c.l.b16 %v1329
        %v4104 = vunpack.c.h.b16 %v1329
        %v4105 = vunpack.c.l.b16 %v1330
        %v4106 = vunpack.c.h.b16 %v1330
        %v4107 = vunpack.c.l.b16 %v1331
        %v4108 = vunpack.c.h.b16 %v1331
        %v4109 = vunpack.c.l.b16 %v1332
        %v4110 = vunpack.c.h.b16 %v1332
        %v4111 = vunpack.c.l.b16 %v1333
        %v4112 = vunpack.c.h.b16 %v1333
        %v4113 = vunpack.c.l.b16 %v1334
        %v4114 = vunpack.c.h.b16 %v1334
        %v4115 = vunpack.c.l.b16 %v1335
        %v4116 = vunpack.c.h.b16 %v1335
        %v4117 = vunpack.c.l.b16 %v1336
        %v4118 = vunpack.c.h.b16 %v1336
        %v4119 = vunpack.c.l.b16 %v1337
        %v4120 = vunpack.c.h.b16 %v1337
        %v4121 = vunpack.c.l.b16 %v1338
        %v4122 = vunpack.c.h.b16 %v1338
        %v4123 = vunpack.c.l.b16 %v1339
        %v4124 = vunpack.c.h.b16 %v1339
        %v4125 = vpack.c.b16 %v2333, %v2325
        %v4126 = vpack.c.b16 %v2334, %v2326
        %v4127 = vpack.c.b16 %v2335, %v2327
        %v4128 = vpack.c.b16 %v2336, %v2328
        %v4129 = vpack.c.b16 %v2337, %v2329
        %v4130 = vpack.c.b16 %v2338, %v2330
        %v4131 = vpack.c.b16 %v2339, %v2331
        %v4132 = vpack.c.b16 %v2340, %v2332
        %v4133 = vpack.c.b16 %v2349, %v2341
        %v4134 = vpack.c.b16 %v2350, %v2342
        %v4135 = vpack.c.b16 %v2351, %v2343
        %v4136 = vpack.c.b16 %v2352, %v2344
        %v4137 = vpack.c.b16 %v2353, %v2345
        %v4138 = vpack.c.b16 %v2354, %v2346
        %v4139 = vpack.c.b16 %v2355, %v2347
        %v4140 = vpack.c.b16 %v2356, %v2348
        %v4141 = vpack.c.b16 %v2365, %v2357
        %v4142 = vpack.c.b16 %v2366, %v2358
        %v4143 = vpack.c.b16 %v2367, %v2359
        %v4144 = vpack.c.b16 %v2368, %v2360
        %v4145 = vpack.c.b16 %v2369, %v2361
        %v4146 = vpack.c.b16 %v2370, %v2362
        %v4147 = vpack.c.b16 %v2371, %v2363
        %v4148 = vpack.c.b16 %v2372, %v2364
        %v4149 = vpack.c.b16 %v2381, %v2373
        %v4150 = vpack.c.b16 %v2382, %v2374
        %v4151 = vpack.c.b16 %v2383, %v2375
        %v4152 = vpack.c.b16 %v2384, %v2376
        %v4153 = vpack.c.b16 %v2385, %v2377
        %v4154 = vpack.c.b16 %v2386, %v2378
        %v4155 = vpack.c.b16 %v2387, %v2379
        %v4156 = vpack.c.b16 %v2388, %v2380
        %v4157 = vpack.c.b16 %v2397, %v2389
        %v4158 = vpack.c.b16 %v2398, %v2390
        %v4159 = vpack.c.b16 %v2399, %v2391
        %v4160 = vpack.c.b16 %v2400, %v2392
        %v4161 = vpack.c.b16 %v2401, %v2393
        %v4162 = vpack.c.b16 %v2402, %v2394
        %v4163 = vpack.c.b16 %v2403, %v2395
        %v4164 = vpack.c.b16 %v2404, %v2396
        %v4165 = vpack.c.b16 %v2413, %v2405
        %v4166 = vpack.c.b16 %v2414, %v2406
        %v4167 = vpack.c.b16 %v2415, %v2407
        %v4168 = vpack.c.b16 %v2416, %v2408
        %v4169 = vpack.c.b16 %v2417, %v2409
        %v4170 = vpack.c.b16 %v2418, %v2410
        %v4171 = vpack.c.b16 %v2419, %v2411
        %v4172 = vpack.c.b16 %v2420, %v2412
        %v4173 = vpack.c.b16 %v2429, %v2421
        %v4174 = vpack.c.b16 %v2430, %v2422
        %v4175 = vpack.c.b16 %v2431, %v2423
        %v4176 = vpack.c.b16 %v2432, %v2424
        %v4177 = vpack.c.b16 %v2433, %v2425
        %v4178 = vpack.c.b16 %v2434, %v2426
        %v4179 = vpack.c.b16 %v2435, %v2427
        %v4180 = vpack.c.b16 %v2436, %v2428
        %v4181 = vpack.c.b16 %v2445, %v2437
        %v4182 = vpack.c.b16 %v2446, %v2438
        %v4183 = vpack.c.b16 %v2447, %v2439
        %v4184 = vpack.c.b16 %v2448, %v2440
        %v4185 = vpack.c.b16 %v2449, %v2441
        %v4186 = vpack.c.b16 %v2450, %v2442
        %v4187 = vpack.c.b16 %v2451, %v2443
        %v4188 = vpack.c.b16 %v2452, %v2444
        %v4189 = vpack.c.b16 %v2461, %v2453
        %v4190 = vpack.c.b16 %v2462, %v2454
        %v4191 = vpack.c.b16 %v2463, %v2455
        %v4192 = vpack.c.b16 %v2464, %v2456
        %v4193 = vpack.c.b16 %v2465, %v2457
        %v4194 = vpack.c.b16 %v2466, %v2458
        %v4195 = vpack.c.b16 %v2467, %v2459
        %v4196 = vpack.c.b16 %v2468, %v2460
        %v4197 = vpack.c.b16 %v2477, %v2469
        %v4198 = vpack.c.b16 %v2478, %v2470
        %v4199 = vpack.c.b16 %v2479, %v2471
        %v4200 = vpack.c.b16 %v2480, %v2472
        %v4201 = vpack.c.b16 %v2481, %v2473
        %v4202 = vpack.c.b16 %v2482, %v2474
        %v4203 = vpack.c.b16 %v2483, %v2475
        %v4204 = vpack.c.b16 %v2484, %v2476
        %v4205 = vpack.c.b16 %v2493, %v2485
        %v4206 = vpack.c.b16 %v2494, %v2486
        %v4207 = vpack.c.b16 %v2495, %v2487
        %v4208 = vpack.c.b16 %v2496, %v2488
        %v4209 = vpack.c.b16 %v2497, %v2489
        %v4210 = vpack.c.b16 %v2498, %v2490
        %v4211 = vpack.c.b16 %v2499, %v2491
        %v4212 = vpack.c.b16 %v2500, %v2492
        %v4213 = vpack.c.b16 %v2509, %v2501
        %v4214 = vpack.c.b16 %v2510, %v2502
        %v4215 = vpack.c.b16 %v2511, %v2503
        %v4216 = vpack.c.b16 %v2512, %v2504
        %v4217 = vpack.c.b16 %v2513, %v2505
        %v4218 = vpack.c.b16 %v2514, %v2506
        %v4219 = vpack.c.b16 %v2515, %v2507
        %v4220 = vpack.c.b16 %v2516, %v2508
        %v4221 = vpack.c.b16 %v2525, %v2517
        %v4222 = vpack.c.b16 %v2526, %v2518
        %v4223 = vpack.c.b16 %v2527, %v2519
        %v4224 = vpack.c.b16 %v2528, %v2520
        %v4225 = vpack.c.b16 %v2529, %v2521
        %v4226 = vpack.c.b16 %v2530, %v2522
        %v4227 = vpack.c.b16 %v2531, %v2523
        %v4228 = vpack.c.b16 %v2532, %v2524
        %v4229 = vpack.c.b16 %v2541, %v2533
        %v4230 = vpack.c.b16 %v2542, %v2534
        %v4231 = vpack.c.b16 %v2543, %v2535
        %v4232 = vpack.c.b16 %v2544, %v2536
        %v4233 = vpack.c.b16 %v2545, %v2537
        %v4234 = vpack.c.b16 %v2546, %v2538
        %v4235 = vpack.c.b16 %v2547, %v2539
        %v4236 = vpack.c.b16 %v2548, %v2540
        %v4237 = vpack.c.b16 %v2557, %v2549
        %v4238 = vpack.c.b16 %v2558, %v2550
        %v4239 = vpack.c.b16 %v2559, %v2551
        %v4240 = vpack.c.b16 %v2560, %v2552
        %v4241 = vpack.c.b16 %v2561, %v2553
        %v4242 = vpack.c.b16 %v2562, %v2554
        %v4243 = vpack.c.b16 %v2563, %v2555
        %v4244 = vpack.c.b16 %v2564, %v2556
        %v4245 = vpack.c.b16 %v2573, %v2565
        %v4246 = vpack.c.b16 %v2574, %v2566
        %v4247 = vpack.c.b16 %v2575, %v2567
        %v4248 = vpack.c.b16 %v2576, %v2568
        %v4249 = vpack.c.b16 %v2577, %v2569
        %v4250 = vpack.c.b16 %v2578, %v2570
        %v4251 = vpack.c.b16 %v2579, %v2571
        %v4252 = vpack.c.b16 %v2580, %v2572
        %v4253 = vpack.c.b16 %v2589, %v2581
        %v4254 = vpack.c.b16 %v2590, %v2582
        %v4255 = vpack.c.b16 %v2591, %v2583
        %v4256 = vpack.c.b16 %v2592, %v2584
        %v4257 = vpack.c.b16 %v2593, %v2585
        %v4258 = vpack.c.b16 %v2594, %v2586
        %v4259 = vpack.c.b16 %v2595, %v2587
        %v4260 = vpack.c.b16 %v2596, %v2588
        %v4261 = vpack.c.b16 %v2605, %v2597
        %v4262 = vpack.c.b16 %v2606, %v2598
        %v4263 = vpack.c.b16 %v2607, %v2599
        %v4264 = vpack.c.b16 %v2608, %v2600
        %v4265 = vpack.c.b16 %v2609, %v2601
        %v4266 = vpack.c.b16 %v2610, %v2602
        %v4267 = vpack.c.b16 %v2611, %v2603
        %v4268 = vpack.c.b16 %v2612, %v2604
        %v4269 = vpack.c.b16 %v2621, %v2613
        %v4270 = vpack.c.b16 %v2622, %v2614
        %v4271 = vpack.c.b16 %v2623, %v2615
        %v4272 = vpack.c.b16 %v2624, %v2616
        %v4273 = vpack.c.b16 %v2625, %v2617
        %v4274 = vpack.c.b16 %v2626, %v2618
        %v4275 = vpack.c.b16 %v2627, %v2619
        %v4276 = vpack.c.b16 %v2628, %v2620
        %v4277 = vpack.c.b16 %v2637, %v2629
        %v4278 = vpack.c.b16 %v2638, %v2630
        %v4279 = vpack.c.b16 %v2639, %v2631
        %v4280 = vpack.c.b16 %v2640, %v2632
        %v4281 = vpack.c.b16 %v2641, %v2633
        %v4282 = vpack.c.b16 %v2642, %v2634
        %v4283 = vpack.c.b16 %v2643, %v2635
        %v4284 = vpack.c.b16 %v2644, %v2636
        %v4285 = vpack.c.b16 %v2653, %v2645
        %v4286 = vpack.c.b16 %v2654, %v2646
        %v4287 = vpack.c.b16 %v2655, %v2647
        %v4288 = vpack.c.b16 %v2656, %v2648
        %v4289 = vpack.c.b16 %v2657, %v2649
        %v4290 = vpack.c.b16 %v2658, %v2650
        %v4291 = vpack.c.b16 %v2659, %v2651
        %v4292 = vpack.c.b16 %v2660, %v2652
        %v4293 = vpack.c.b16 %v2669, %v2661
        %v4294 = vpack.c.b16 %v2670, %v2662
        %v4295 = vpack.c.b16 %v2671, %v2663
        %v4296 = vpack.c.b16 %v2672, %v2664
        %v4297 = vpack.c.b16 %v2673, %v2665
        %v4298 = vpack.c.b16 %v2674, %v2666
        %v4299 = vpack.c.b16 %v2675, %v2667
        %v4300 = vpack.c.b16 %v2676, %v2668
        %v4301 = vpack.c.b16 %v2685, %v2677
        %v4302 = vpack.c.b16 %v2686, %v2678
        %v4303 = vpack.c.b16 %v2687, %v2679
        %v4304 = vpack.c.b16 %v2688, %v2680
        %v4305 = vpack.c.b16 %v2689, %v2681
        %v4306 = vpack.c.b16 %v2690, %v2682
        %v4307 = vpack.c.b16 %v2691, %v2683
        %v4308 = vpack.c.b16 %v2692, %v2684
        %v4309 = vpack.c.b16 %v2701, %v2693
        %v4310 = vpack.c.b16 %v2702, %v2694
        %v4311 = vpack.c.b16 %v2703, %v2695
        %v4312 = vpack.c.b16 %v2704, %v2696
        %v4313 = vpack.c.b16 %v2705, %v2697
        %v4314 = vpack.c.b16 %v2706, %v2698
        %v4315 = vpack.c.b16 %v2707, %v2699
        %v4316 = vpack.c.b16 %v2708, %v2700
        %v4317 = vpack.c.b16 %v2717, %v2709
        %v4318 = vpack.c.b16 %v2718, %v2710
        %v4319 = vpack.c.b16 %v2719, %v2711
        %v4320 = vpack.c.b16 %v2720, %v2712
        %v4321 = vpack.c.b16 %v2721, %v2713
        %v4322 = vpack.c.b16 %v2722, %v2714
        %v4323 = vpack.c.b16 %v2723, %v2715
        %v4324 = vpack.c.b16 %v2724, %v2716
        %v4325 = vpack.c.b16 %v2733, %v2725
        %v4326 = vpack.c.b16 %v2734, %v2726
        %v4327 = vpack.c.b16 %v2735, %v2727
        %v4328 = vpack.c.b16 %v2736, %v2728
        %v4329 = vpack.c.b16 %v2737, %v2729
        %v4330 = vpack.c.b16 %v2738, %v2730
        %v4331 = vpack.c.b16 %v2739, %v2731
        %v4332 = vpack.c.b16 %v2740, %v2732
        %v4333 = vpack.c.b16 %v2749, %v2741
        %v4334 = vpack.c.b16 %v2750, %v2742
        %v4335 = vpack.c.b16 %v2751, %v2743
        %v4336 = vpack.c.b16 %v2752, %v2744
        %v4337 = vpack.c.b16 %v2753, %v2745
        %v4338 = vpack.c.b16 %v2754, %v2746
        %v4339 = vpack.c.b16 %v2755, %v2747
        %v4340 = vpack.c.b16 %v2756, %v2748
        %v4341 = vpack.c.b16 %v2765, %v2757
        %v4342 = vpack.c.b16 %v2766, %v2758
        %v4343 = vpack.c.b16 %v2767, %v2759
        %v4344 = vpack.c.b16 %v2768, %v2760
        %v4345 = vpack.c.b16 %v2769, %v2761
        %v4346 = vpack.c.b16 %v2770, %v2762
        %v4347 = vpack.c.b16 %v2771, %v2763
        %v4348 = vpack.c.b16 %v2772, %v2764
        %v4349 = vpack.c.b16 %v2781, %v2773
        %v4350 = vpack.c.b16 %v2782, %v2774
        %v4351 = vpack.c.b16 %v2783, %v2775
        %v4352 = vpack.c.b16 %v2784, %v2776
        %v4353 = vpack.c.b16 %v2785, %v2777
        %v4354 = vpack.c.b16 %v2786, %v2778
        %v4355 = vpack.c.b16 %v2787, %v2779
        %v4356 = vpack.c.b16 %v2788, %v2780
        %v4357 = vpack.c.b16 %v2797, %v2789
        %v4358 = vpack.c.b16 %v2798, %v2790
        %v4359 = vpack.c.b16 %v2799, %v2791
        %v4360 = vpack.c.b16 %v2800, %v2792
        %v4361 = vpack.c.b16 %v2801, %v2793
        %v4362 = vpack.c.b16 %v2802, %v2794
        %v4363 = vpack.c.b16 %v2803, %v2795
        %v4364 = vpack.c.b16 %v2804, %v2796
        %v4365 = vpack.c.b16 %v2813, %v2805
        %v4366 = vpack.c.b16 %v2814, %v2806
        %v4367 = vpack.c.b16 %v2815, %v2807
        %v4368 = vpack.c.b16 %v2816, %v2808
        %v4369 = vpack.c.b16 %v2817, %v2809
        %v4370 = vpack.c.b16 %v2818, %v2810
        %v4371 = vpack.c.b16 %v2819, %v2811
        %v4372 = vpack.c.b16 %v2820, %v2812
        %v4373 = vpack.c.b16 %v2829, %v2821
        %v4374 = vpack.c.b16 %v2830, %v2822
        %v4375 = vpack.c.b16 %v2831, %v2823
        %v4376 = vpack.c.b16 %v2832, %v2824
        %v4377 = vpack.c.b16 %v2833, %v2825
        %v4378 = vpack.c.b16 %v2834, %v2826
        %v4379 = vpack.c.b16 %v2835, %v2827
        %v4380 = vpack.c.b16 %v2836, %v2828
        %v4381 = vpack.c.b16 %v2845, %v2837
        %v4382 = vpack.c.b16 %v2846, %v2838
        %v4383 = vpack.c.b16 %v2847, %v2839
        %v4384 = vpack.c.b16 %v2848, %v2840
        %v4385 = vpack.c.b16 %v2849, %v2841
        %v4386 = vpack.c.b16 %v2850, %v2842
        %v4387 = vpack.c.b16 %v2851, %v2843
        %v4388 = vpack.c.b16 %v2852, %v2844
        %v4389 = vpack.c.b16 %v2861, %v2853
        %v4390 = vpack.c.b16 %v2862, %v2854
        %v4391 = vpack.c.b16 %v2863, %v2855
        %v4392 = vpack.c.b16 %v2864, %v2856
        %v4393 = vpack.c.b16 %v2865, %v2857
        %v4394 = vpack.c.b16 %v2866, %v2858
        %v4395 = vpack.c.b16 %v2867, %v2859
        %v4396 = vpack.c.b16 %v2868, %v2860
        %v4397 = vpack.c.b16 %v2877, %v2869
        %v4398 = vpack.c.b16 %v2878, %v2870
        %v4399 = vpack.c.b16 %v2879, %v2871
        %v4400 = vpack.c.b16 %v2880, %v2872
        %v4401 = vpack.c.b16 %v2881, %v2873
        %v4402 = vpack.c.b16 %v2882, %v2874
        %v4403 = vpack.c.b16 %v2883, %v2875
        %v4404 = vpack.c.b16 %v2884, %v2876
        %v4405 = vpack.c.b16 %v2893, %v2885
        %v4406 = vpack.c.b16 %v2894, %v2886
        %v4407 = vpack.c.b16 %v2895, %v2887
        %v4408 = vpack.c.b16 %v2896, %v2888
        %v4409 = vpack.c.b16 %v2897, %v2889
        %v4410 = vpack.c.b16 %v2898, %v2890
        %v4411 = vpack.c.b16 %v2899, %v2891
        %v4412 = vpack.c.b16 %v2900, %v2892
        %v4413 = vpack.c.b16 %v2909, %v2901
        %v4414 = vpack.c.b16 %v2910, %v2902
        %v4415 = vpack.c.b16 %v2911, %v2903
        %v4416 = vpack.c.b16 %v2912, %v2904
        %v4417 = vpack.c.b16 %v2913, %v2905
        %v4418 = vpack.c.b16 %v2914, %v2906
        %v4419 = vpack.c.b16 %v2915, %v2907
        %v4420 = vpack.c.b16 %v2916, %v2908
        %v4421 = vpack.c.b16 %v2925, %v2917
        %v4422 = vpack.c.b16 %v2926, %v2918
        %v4423 = vpack.c.b16 %v2927, %v2919
        %v4424 = vpack.c.b16 %v2928, %v2920
        %v4425 = vpack.c.b16 %v2929, %v2921
        %v4426 = vpack.c.b16 %v2930, %v2922
        %v4427 = vpack.c.b16 %v2931, %v2923
        %v4428 = vpack.c.b16 %v2932, %v2924
        %v4429 = vpack.c.b16 %v2941, %v2933
        %v4430 = vpack.c.b16 %v2942, %v2934
        %v4431 = vpack.c.b16 %v2943, %v2935
        %v4432 = vpack.c.b16 %v2944, %v2936
        %v4433 = vpack.c.b16 %v2945, %v2937
        %v4434 = vpack.c.b16 %v2946, %v2938
        %v4435 = vpack.c.b16 %v2947, %v2939
        %v4436 = vpack.c.b16 %v2948, %v2940
        %v4437 = vpack.c.b16 %v2957, %v2949
        %v4438 = vpack.c.b16 %v2958, %v2950
        %v4439 = vpack.c.b16 %v2959, %v2951
        %v4440 = vpack.c.b16 %v2960, %v2952
        %v4441 = vpack.c.b16 %v2961, %v2953
        %v4442 = vpack.c.b16 %v2962, %v2954
        %v4443 = vpack.c.b16 %v2963, %v2955
        %v4444 = vpack.c.b16 %v2964, %v2956
        %v4445 = vpack.c.b16 %v2973, %v2965
        %v4446 = vpack.c.b16 %v2974, %v2966
        %v4447 = vpack.c.b16 %v2975, %v2967
        %v4448 = vpack.c.b16 %v2976, %v2968
        %v4449 = vpack.c.b16 %v2977, %v2969
        %v4450 = vpack.c.b16 %v2978, %v2970
        %v4451 = vpack.c.b16 %v2979, %v2971
        %v4452 = vpack.c.b16 %v2980, %v2972
        %v4453 = vpack.c.b16 %v2989, %v2981
        %v4454 = vpack.c.b16 %v2990, %v2982
        %v4455 = vpack.c.b16 %v2991, %v2983
        %v4456 = vpack.c.b16 %v2992, %v2984
        %v4457 = vpack.c.b16 %v2993, %v2985
        %v4458 = vpack.c.b16 %v2994, %v2986
        %v4459 = vpack.c.b16 %v2995, %v2987
        %v4460 = vpack.c.b16 %v2996, %v2988
        %v4461 = vpack.c.b16 %v3005, %v2997
        %v4462 = vpack.c.b16 %v3006, %v2998
        %v4463 = vpack.c.b16 %v3007, %v2999
        %v4464 = vpack.c.b16 %v3008, %v3000
        %v4465 = vpack.c.b16 %v3009, %v3001
        %v4466 = vpack.c.b16 %v3010, %v3002
        %v4467 = vpack.c.b16 %v3011, %v3003
        %v4468 = vpack.c.b16 %v3012, %v3004
        %v4469 = vpack.c.b16 %v3021, %v3013
        %v4470 = vpack.c.b16 %v3022, %v3014
        %v4471 = vpack.c.b16 %v3023, %v3015
        %v4472 = vpack.c.b16 %v3024, %v3016
        %v4473 = vpack.c.b16 %v3025, %v3017
        %v4474 = vpack.c.b16 %v3026, %v3018
        %v4475 = vpack.c.b16 %v3027, %v3019
        %v4476 = vpack.c.b16 %v3028, %v3020
        %v4477 = vpack.c.b16 %v3037, %v3029
        %v4478 = vpack.c.b16 %v3038, %v3030
        %v4479 = vpack.c.b16 %v3039, %v3031
        %v4480 = vpack.c.b16 %v3040, %v3032
        %v4481 = vpack.c.b16 %v3041, %v3033
        %v4482 = vpack.c.b16 %v3042, %v3034
        %v4483 = vpack.c.b16 %v3043, %v3035
        %v4484 = vpack.c.b16 %v3044, %v3036
        %v4485 = vpack.c.b16 %v3053, %v3045
        %v4486 = vpack.c.b16 %v3054, %v3046
        %v4487 = vpack.c.b16 %v3055, %v3047
        %v4488 = vpack.c.b16 %v3056, %v3048
        %v4489 = vpack.c.b16 %v3057, %v3049
        %v4490 = vpack.c.b16 %v3058, %v3050
        %v4491 = vpack.c.b16 %v3059, %v3051
        %v4492 = vpack.c.b16 %v3060, %v3052
        %v4493 = vpack.c.b16 %v3069, %v3061
        %v4494 = vpack.c.b16 %v3070, %v3062
        %v4495 = vpack.c.b16 %v3071, %v3063
        %v4496 = vpack.c.b16 %v3072, %v3064
        %v4497 = vpack.c.b16 %v3073, %v3065
        %v4498 = vpack.c.b16 %v3074, %v3066
        %v4499 = vpack.c.b16 %v3075, %v3067
        %v4500 = vpack.c.b16 %v3076, %v3068
        %v4501 = vpack.c.b16 %v3085, %v3077
        %v4502 = vpack.c.b16 %v3086, %v3078
        %v4503 = vpack.c.b16 %v3087, %v3079
        %v4504 = vpack.c.b16 %v3088, %v3080
        %v4505 = vpack.c.b16 %v3089, %v3081
        %v4506 = vpack.c.b16 %v3090, %v3082
        %v4507 = vpack.c.b16 %v3091, %v3083
        %v4508 = vpack.c.b16 %v3092, %v3084
        %v4509 = vpack.c.b16 %v3101, %v3093
        %v4510 = vpack.c.b16 %v3102, %v3094
        %v4511 = vpack.c.b16 %v3103, %v3095
        %v4512 = vpack.c.b16 %v3104, %v3096
        %v4513 = vpack.c.b16 %v3105, %v3097
        %v4514 = vpack.c.b16 %v3106, %v3098
        %v4515 = vpack.c.b16 %v3107, %v3099
        %v4516 = vpack.c.b16 %v3108, %v3100
        %v4517 = vpack.c.b16 %v3117, %v3109
        %v4518 = vpack.c.b16 %v3118, %v3110
        %v4519 = vpack.c.b16 %v3119, %v3111
        %v4520 = vpack.c.b16 %v3120, %v3112
        %v4521 = vpack.c.b16 %v3121, %v3113
        %v4522 = vpack.c.b16 %v3122, %v3114
        %v4523 = vpack.c.b16 %v3123, %v3115
        %v4524 = vpack.c.b16 %v3124, %v3116
        %v4525 = vpack.c.b16 %v3133, %v3125
        %v4526 = vpack.c.b16 %v3134, %v3126
        %v4527 = vpack.c.b16 %v3135, %v3127
        %v4528 = vpack.c.b16 %v3136, %v3128
        %v4529 = vpack.c.b16 %v3137, %v3129
        %v4530 = vpack.c.b16 %v3138, %v3130
        %v4531 = vpack.c.b16 %v3139, %v3131
        %v4532 = vpack.c.b16 %v3140, %v3132
        %v4533 = vpack.c.b16 %v3149, %v3141
        %v4534 = vpack.c.b16 %v3150, %v3142
        %v4535 = vpack.c.b16 %v3151, %v3143
        %v4536 = vpack.c.b16 %v3152, %v3144
        %v4537 = vpack.c.b16 %v3153, %v3145
        %v4538 = vpack.c.b16 %v3154, %v3146
        %v4539 = vpack.c.b16 %v3155, %v3147
        %v4540 = vpack.c.b16 %v3156, %v3148
        %v4541 = vpack.c.b16 %v3165, %v3157
        %v4542 = vpack.c.b16 %v3166, %v3158
        %v4543 = vpack.c.b16 %v3167, %v3159
        %v4544 = vpack.c.b16 %v3168, %v3160
        %v4545 = vpack.c.b16 %v3169, %v3161
        %v4546 = vpack.c.b16 %v3170, %v3162
        %v4547 = vpack.c.b16 %v3171, %v3163
        %v4548 = vpack.c.b16 %v3172, %v3164
        %v4549 = vpack.c.b16 %v3181, %v3173
        %v4550 = vpack.c.b16 %v3182, %v3174
        %v4551 = vpack.c.b16 %v3183, %v3175
        %v4552 = vpack.c.b16 %v3184, %v3176
        %v4553 = vpack.c.b16 %v3185, %v3177
        %v4554 = vpack.c.b16 %v3186, %v3178
        %v4555 = vpack.c.b16 %v3187, %v3179
        %v4556 = vpack.c.b16 %v3188, %v3180
        %v4557 = vpack.c.b16 %v3197, %v3189
        %v4558 = vpack.c.b16 %v3198, %v3190
        %v4559 = vpack.c.b16 %v3199, %v3191
        %v4560 = vpack.c.b16 %v3200, %v3192
        %v4561 = vpack.c.b16 %v3201, %v3193
        %v4562 = vpack.c.b16 %v3202, %v3194
        %v4563 = vpack.c.b16 %v3203, %v3195
        %v4564 = vpack.c.b16 %v3204, %v3196
        %v4565 = vpack.c.b16 %v3213, %v3205
        %v4566 = vpack.c.b16 %v3214, %v3206
        %v4567 = vpack.c.b16 %v3215, %v3207
        %v4568 = vpack.c.b16 %v3216, %v3208
        %v4569 = vpack.c.b16 %v3217, %v3209
        %v4570 = vpack.c.b16 %v3218, %v3210
        %v4571 = vpack.c.b16 %v3219, %v3211
        %v4572 = vpack.c.b16 %v3220, %v3212
        %v4573 = vpack.c.b16 %v3229, %v3221
        %v4574 = vpack.c.b16 %v3230, %v3222
        %v4575 = vpack.c.b16 %v3231, %v3223
        %v4576 = vpack.c.b16 %v3232, %v3224
        %v4577 = vpack.c.b16 %v3233, %v3225
        %v4578 = vpack.c.b16 %v3234, %v3226
        %v4579 = vpack.c.b16 %v3235, %v3227
        %v4580 = vpack.c.b16 %v3236, %v3228
        %v4581 = vpack.c.b16 %v3245, %v3237
        %v4582 = vpack.c.b16 %v3246, %v3238
        %v4583 = vpack.c.b16 %v3247, %v3239
        %v4584 = vpack.c.b16 %v3248, %v3240
        %v4585 = vpack.c.b16 %v3249, %v3241
        %v4586 = vpack.c.b16 %v3250, %v3242
        %v4587 = vpack.c.b16 %v3251, %v3243
        %v4588 = vpack.c.b16 %v3252, %v3244
        %v4589 = vpack.c.b16 %v3261, %v3253
        %v4590 = vpack.c.b16 %v3262, %v3254
        %v4591 = vpack.c.b16 %v3263, %v3255
        %v4592 = vpack.c.b16 %v3264, %v3256
        %v4593 = vpack.c.b16 %v3265, %v3257
        %v4594 = vpack.c.b16 %v3266, %v3258
        %v4595 = vpack.c.b16 %v3267, %v3259
        %v4596 = vpack.c.b16 %v3268, %v3260
        %v4597 = vpack.c.b16 %v3277, %v3269
        %v4598 = vpack.c.b16 %v3278, %v3270
        %v4599 = vpack.c.b16 %v3279, %v3271
        %v4600 = vpack.c.b16 %v3280, %v3272
        %v4601 = vpack.c.b16 %v3281, %v3273
        %v4602 = vpack.c.b16 %v3282, %v3274
        %v4603 = vpack.c.b16 %v3283, %v3275
        %v4604 = vpack.c.b16 %v3284, %v3276
        %v4605 = vpack.c.b16 %v3293, %v3285
        %v4606 = vpack.c.b16 %v3294, %v3286
        %v4607 = vpack.c.b16 %v3295, %v3287
        %v4608 = vpack.c.b16 %v3296, %v3288
        %v4609 = vpack.c.b16 %v3297, %v3289
        %v4610 = vpack.c.b16 %v3298, %v3290
        %v4611 = vpack.c.b16 %v3299, %v3291
        %v4612 = vpack.c.b16 %v3300, %v3292
        %v4613 = vpack.c.b16 %v3309, %v3301
        %v4614 = vpack.c.b16 %v3310, %v3302
        %v4615 = vpack.c.b16 %v3311, %v3303
        %v4616 = vpack.c.b16 %v3312, %v3304
        %v4617 = vpack.c.b16 %v3313, %v3305
        %v4618 = vpack.c.b16 %v3314, %v3306
        %v4619 = vpack.c.b16 %v3315, %v3307
        %v4620 = vpack.c.b16 %v3316, %v3308
        %v4621 = vpack.c.b16 %v3325, %v3317
        %v4622 = vpack.c.b16 %v3326, %v3318
        %v4623 = vpack.c.b16 %v3327, %v3319
        %v4624 = vpack.c.b16 %v3328, %v3320
        %v4625 = vpack.c.b16 %v3329, %v3321
        %v4626 = vpack.c.b16 %v3330, %v3322
        %v4627 = vpack.c.b16 %v3331, %v3323
        %v4628 = vpack.c.b16 %v3332, %v3324
        %v4629 = vpack.c.b16 %v3341, %v3333
        %v4630 = vpack.c.b16 %v3342, %v3334
        %v4631 = vpack.c.b16 %v3343, %v3335
        %v4632 = vpack.c.b16 %v3344, %v3336
        %v4633 = vpack.c.b16 %v3345, %v3337
        %v4634 = vpack.c.b16 %v3346, %v3338
        %v4635 = vpack.c.b16 %v3347, %v3339
        %v4636 = vpack.c.b16 %v3348, %v3340
        %v4637 = vpack.c.b16 %v3357, %v3349
        %v4638 = vpack.c.b16 %v3358, %v3350
        %v4639 = vpack.c.b16 %v3359, %v3351
        %v4640 = vpack.c.b16 %v3360, %v3352
        %v4641 = vpack.c.b16 %v3361, %v3353
        %v4642 = vpack.c.b16 %v3362, %v3354
        %v4643 = vpack.c.b16 %v3363, %v3355
        %v4644 = vpack.c.b16 %v3364, %v3356
        %v4645 = vpack.c.b16 %v3373, %v3365
        %v4646 = vpack.c.b16 %v3374, %v3366
        %v4647 = vpack.c.b16 %v3375, %v3367
        %v4648 = vpack.c.b16 %v3376, %v3368
        %v4649 = vpack.c.b16 %v3377, %v3369
        %v4650 = vpack.c.b16 %v3378, %v3370
        %v4651 = vpack.c.b16 %v3379, %v3371
        %v4652 = vpack.c.b16 %v3380, %v3372
        %v4653 = vpack.c.b16 %v3389, %v3381
        %v4654 = vpack.c.b16 %v3390, %v3382
        %v4655 = vpack.c.b16 %v3391, %v3383
        %v4656 = vpack.c.b16 %v3392, %v3384
        %v4657 = vpack.c.b16 %v3393, %v3385
        %v4658 = vpack.c.b16 %v3394, %v3386
        %v4659 = vpack.c.b16 %v3395, %v3387
        %v4660 = vpack.c.b16 %v3396, %v3388
        %v4661 = vpack.c.b16 %v3405, %v3397
        %v4662 = vpack.c.b16 %v3406, %v3398
        %v4663 = vpack.c.b16 %v3407, %v3399
        %v4664 = vpack.c.b16 %v3408, %v3400
        %v4665 = vpack.c.b16 %v3409, %v3401
        %v4666 = vpack.c.b16 %v3410, %v3402
        %v4667 = vpack.c.b16 %v3411, %v3403
        %v4668 = vpack.c.b16 %v3412, %v3404
        %v4669 = vpack.c.b16 %v3421, %v3413
        %v4670 = vpack.c.b16 %v3422, %v3414
        %v4671 = vpack.c.b16 %v3423, %v3415
        %v4672 = vpack.c.b16 %v3424, %v3416
        %v4673 = vpack.c.b16 %v3425, %v3417
        %v4674 = vpack.c.b16 %v3426, %v3418
        %v4675 = vpack.c.b16 %v3427, %v3419
        %v4676 = vpack.c.b16 %v3428, %v3420
        %v4677 = vpack.c.b16 %v3437, %v3429
        %v4678 = vpack.c.b16 %v3438, %v3430
        %v4679 = vpack.c.b16 %v3439, %v3431
        %v4680 = vpack.c.b16 %v3440, %v3432
        %v4681 = vpack.c.b16 %v3441, %v3433
        %v4682 = vpack.c.b16 %v3442, %v3434
        %v4683 = vpack.c.b16 %v3443, %v3435
        %v4684 = vpack.c.b16 %v3444, %v3436
        %v4685 = vpack.c.b16 %v3453, %v3445
        %v4686 = vpack.c.b16 %v3454, %v3446
        %v4687 = vpack.c.b16 %v3455, %v3447
        %v4688 = vpack.c.b16 %v3456, %v3448
        %v4689 = vpack.c.b16 %v3457, %v3449
        %v4690 = vpack.c.b16 %v3458, %v3450
        %v4691 = vpack.c.b16 %v3459, %v3451
        %v4692 = vpack.c.b16 %v3460, %v3452
        %v4693 = vpack.c.b16 %v3469, %v3461
        %v4694 = vpack.c.b16 %v3470, %v3462
        %v4695 = vpack.c.b16 %v3471, %v3463
        %v4696 = vpack.c.b16 %v3472, %v3464
        %v4697 = vpack.c.b16 %v3473, %v3465
        %v4698 = vpack.c.b16 %v3474, %v3466
        %v4699 = vpack.c.b16 %v3475, %v3467
        %v4700 = vpack.c.b16 %v3476, %v3468
        %v4701 = vpack.c.b16 %v3485, %v3477
        %v4702 = vpack.c.b16 %v3486, %v3478
        %v4703 = vpack.c.b16 %v3487, %v3479
        %v4704 = vpack.c.b16 %v3488, %v3480
        %v4705 = vpack.c.b16 %v3489, %v3481
        %v4706 = vpack.c.b16 %v3490, %v3482
        %v4707 = vpack.c.b16 %v3491, %v3483
        %v4708 = vpack.c.b16 %v3492, %v3484
        %v4709 = vpack.c.b16 %v3501, %v3493
        %v4710 = vpack.c.b16 %v3502, %v3494
        %v4711 = vpack.c.b16 %v3503, %v3495
        %v4712 = vpack.c.b16 %v3504, %v3496
        %v4713 = vpack.c.b16 %v3505, %v3497
        %v4714 = vpack.c.b16 %v3506, %v3498
        %v4715 = vpack.c.b16 %v3507, %v3499
        %v4716 = vpack.c.b16 %v3508, %v3500
        %v4717 = vpack.c.b16 %v3517, %v3509
        %v4718 = vpack.c.b16 %v3518, %v3510
        %v4719 = vpack.c.b16 %v3519, %v3511
        %v4720 = vpack.c.b16 %v3520, %v3512
        %v4721 = vpack.c.b16 %v3521, %v3513
        %v4722 = vpack.c.b16 %v3522, %v3514
        %v4723 = vpack.c.b16 %v3523, %v3515
        %v4724 = vpack.c.b16 %v3524, %v3516
        %v4725 = vpack.c.b16 %v3533, %v3525
        %v4726 = vpack.c.b16 %v3534, %v3526
        %v4727 = vpack.c.b16 %v3535, %v3527
        %v4728 = vpack.c.b16 %v3536, %v3528
        %v4729 = vpack.c.b16 %v3537, %v3529
        %v4730 = vpack.c.b16 %v3538, %v3530
        %v4731 = vpack.c.b16 %v3539, %v3531
        %v4732 = vpack.c.b16 %v3540, %v3532
        %v4733 = vpack.c.b16 %v3549, %v3541
        %v4734 = vpack.c.b16 %v3550, %v3542
        %v4735 = vpack.c.b16 %v3551, %v3543
        %v4736 = vpack.c.b16 %v3552, %v3544
        %v4737 = vpack.c.b16 %v3553, %v3545
        %v4738 = vpack.c.b16 %v3554, %v3546
        %v4739 = vpack.c.b16 %v3555, %v3547
        %v4740 = vpack.c.b16 %v3556, %v3548
        %v4741 = vpack.c.b16 %v3565, %v3557
        %v4742 = vpack.c.b16 %v3566, %v3558
        %v4743 = vpack.c.b16 %v3567, %v3559
        %v4744 = vpack.c.b16 %v3568, %v3560
        %v4745 = vpack.c.b16 %v3569, %v3561
        %v4746 = vpack.c.b16 %v3570, %v3562
        %v4747 = vpack.c.b16 %v3571, %v3563
        %v4748 = vpack.c.b16 %v3572, %v3564
        %v4749 = vpack.c.b16 %v3581, %v3573
        %v4750 = vpack.c.b16 %v3582, %v3574
        %v4751 = vpack.c.b16 %v3583, %v3575
        %v4752 = vpack.c.b16 %v3584, %v3576
        %v4753 = vpack.c.b16 %v3585, %v3577
        %v4754 = vpack.c.b16 %v3586, %v3578
        %v4755 = vpack.c.b16 %v3587, %v3579
        %v4756 = vpack.c.b16 %v3588, %v3580
        %v4757 = vpack.c.b16 %v3597, %v3589
        %v4758 = vpack.c.b16 %v3598, %v3590
        %v4759 = vpack.c.b16 %v3599, %v3591
        %v4760 = vpack.c.b16 %v3600, %v3592
        %v4761 = vpack.c.b16 %v3601, %v3593
        %v4762 = vpack.c.b16 %v3602, %v3594
        %v4763 = vpack.c.b16 %v3603, %v3595
        %v4764 = vpack.c.b16 %v3604, %v3596
        %v4765 = vpack.c.b16 %v3613, %v3605
        %v4766 = vpack.c.b16 %v3614, %v3606
        %v4767 = vpack.c.b16 %v3615, %v3607
        %v4768 = vpack.c.b16 %v3616, %v3608
        %v4769 = vpack.c.b16 %v3617, %v3609
        %v4770 = vpack.c.b16 %v3618, %v3610
        %v4771 = vpack.c.b16 %v3619, %v3611
        %v4772 = vpack.c.b16 %v3620, %v3612
        %v4773 = vpack.c.b16 %v3629, %v3621
        %v4774 = vpack.c.b16 %v3630, %v3622
        %v4775 = vpack.c.b16 %v3631, %v3623
        %v4776 = vpack.c.b16 %v3632, %v3624
        %v4777 = vpack.c.b16 %v3633, %v3625
        %v4778 = vpack.c.b16 %v3634, %v3626
        %v4779 = vpack.c.b16 %v3635, %v3627
        %v4780 = vpack.c.b16 %v3636, %v3628
        %v4781 = vpack.c.b16 %v3645, %v3637
        %v4782 = vpack.c.b16 %v3646, %v3638
        %v4783 = vpack.c.b16 %v3647, %v3639
        %v4784 = vpack.c.b16 %v3648, %v3640
        %v4785 = vpack.c.b16 %v3649, %v3641
        %v4786 = vpack.c.b16 %v3650, %v3642
        %v4787 = vpack.c.b16 %v3651, %v3643
        %v4788 = vpack.c.b16 %v3652, %v3644
        %v4789 = vpack.c.b16 %v3661, %v3653
        %v4790 = vpack.c.b16 %v3662, %v3654
        %v4791 = vpack.c.b16 %v3663, %v3655
        %v4792 = vpack.c.b16 %v3664, %v3656
        %v4793 = vpack.c.b16 %v3665, %v3657
        %v4794 = vpack.c.b16 %v3666, %v3658
        %v4795 = vpack.c.b16 %v3667, %v3659
        %v4796 = vpack.c.b16 %v3668, %v3660
        %v4797 = vpack.c.b16 %v3677, %v3669
        %v4798 = vpack.c.b16 %v3678, %v3670
        %v4799 = vpack.c.b16 %v3679, %v3671
        %v4800 = vpack.c.b16 %v3680, %v3672
        %v4801 = vpack.c.b16 %v3681, %v3673
        %v4802 = vpack.c.b16 %v3682, %v3674
        %v4803 = vpack.c.b16 %v3683, %v3675
        %v4804 = vpack.c.b16 %v3684, %v3676
        %v4805 = vpack.c.b16 %v3693, %v3685
        %v4806 = vpack.c.b16 %v3694, %v3686
        %v4807 = vpack.c.b16 %v3695, %v3687
        %v4808 = vpack.c.b16 %v3696, %v3688
        %v4809 = vpack.c.b16 %v3697, %v3689
        %v4810 = vpack.c.b16 %v3698, %v3690
        %v4811 = vpack.c.b16 %v3699, %v3691
        %v4812 = vpack.c.b16 %v3700, %v3692
        %v4813 = vpack.c.b16 %v3709, %v3701
        %v4814 = vpack.c.b16 %v3710, %v3702
        %v4815 = vpack.c.b16 %v3711, %v3703
        %v4816 = vpack.c.b16 %v3712, %v3704
        %v4817 = vpack.c.b16 %v3713, %v3705
        %v4818 = vpack.c.b16 %v3714, %v3706
        %v4819 = vpack.c.b16 %v3715, %v3707
        %v4820 = vpack.c.b16 %v3716, %v3708
        %v4821 = vpack.c.b16 %v3725, %v3717
        %v4822 = vpack.c.b16 %v3726, %v3718
        %v4823 = vpack.c.b16 %v3727, %v3719
        %v4824 = vpack.c.b16 %v3728, %v3720
        %v4825 = vpack.c.b16 %v3729, %v3721
        %v4826 = vpack.c.b16 %v3730, %v3722
        %v4827 = vpack.c.b16 %v3731, %v3723
        %v4828 = vpack.c.b16 %v3732, %v3724
        %v4829 = vpack.c.b16 %v3741, %v3733
        %v4830 = vpack.c.b16 %v3742, %v3734
        %v4831 = vpack.c.b16 %v3743, %v3735
        %v4832 = vpack.c.b16 %v3744, %v3736
        %v4833 = vpack.c.b16 %v3745, %v3737
        %v4834 = vpack.c.b16 %v3746, %v3738
        %v4835 = vpack.c.b16 %v3747, %v3739
        %v4836 = vpack.c.b16 %v3748, %v3740
        %v4837 = vpack.c.b16 %v3757, %v3749
        %v4838 = vpack.c.b16 %v3758, %v3750
        %v4839 = vpack.c.b16 %v3759, %v3751
        %v4840 = vpack.c.b16 %v3760, %v3752
        %v4841 = vpack.c.b16 %v3761, %v3753
        %v4842 = vpack.c.b16 %v3762, %v3754
        %v4843 = vpack.c.b16 %v3763, %v3755
        %v4844 = vpack.c.b16 %v3764, %v3756
        %v4845 = vpack.c.b16 %v3773, %v3765
        %v4846 = vpack.c.b16 %v3774, %v3766
        %v4847 = vpack.c.b16 %v3775, %v3767
        %v4848 = vpack.c.b16 %v3776, %v3768
        %v4849 = vpack.c.b16 %v3777, %v3769
        %v4850 = vpack.c.b16 %v3778, %v3770
        %v4851 = vpack.c.b16 %v3779, %v3771
        %v4852 = vpack.c.b16 %v3780, %v3772
        %v4853 = vpack.c.b16 %v3789, %v3781
        %v4854 = vpack.c.b16 %v3790, %v3782
        %v4855 = vpack.c.b16 %v3791, %v3783
        %v4856 = vpack.c.b16 %v3792, %v3784
        %v4857 = vpack.c.b16 %v3793, %v3785
        %v4858 = vpack.c.b16 %v3794, %v3786
        %v4859 = vpack.c.b16 %v3795, %v3787
        %v4860 = vpack.c.b16 %v3796, %v3788
        %v4861 = vpack.c.b16 %v3805, %v3797
        %v4862 = vpack.c.b16 %v3806, %v3798
        %v4863 = vpack.c.b16 %v3807, %v3799
        %v4864 = vpack.c.b16 %v3808, %v3800
        %v4865 = vpack.c.b16 %v3809, %v3801
        %v4866 = vpack.c.b16 %v3810, %v3802
        %v4867 = vpack.c.b16 %v3811, %v3803
        %v4868 = vpack.c.b16 %v3812, %v3804
        %v4869 = vpack.c.b16 %v3821, %v3813
        %v4870 = vpack.c.b16 %v3822, %v3814
        %v4871 = vpack.c.b16 %v3823, %v3815
        %v4872 = vpack.c.b16 %v3824, %v3816
        %v4873 = vpack.c.b16 %v3825, %v3817
        %v4874 = vpack.c.b16 %v3826, %v3818
        %v4875 = vpack.c.b16 %v3827, %v3819
        %v4876 = vpack.c.b16 %v3828, %v3820
        %v4877 = vpack.c.b16 %v3837, %v3829
        %v4878 = vpack.c.b16 %v3838, %v3830
        %v4879 = vpack.c.b16 %v3839, %v3831
        %v4880 = vpack.c.b16 %v3840, %v3832
        %v4881 = vpack.c.b16 %v3841, %v3833
        %v4882 = vpack.c.b16 %v3842, %v3834
        %v4883 = vpack.c.b16 %v3843, %v3835
        %v4884 = vpack.c.b16 %v3844, %v3836
        %v4885 = vpack.c.b16 %v3853, %v3845
        %v4886 = vpack.c.b16 %v3854, %v3846
        %v4887 = vpack.c.b16 %v3855, %v3847
        %v4888 = vpack.c.b16 %v3856, %v3848
        %v4889 = vpack.c.b16 %v3857, %v3849
        %v4890 = vpack.c.b16 %v3858, %v3850
        %v4891 = vpack.c.b16 %v3859, %v3851
        %v4892 = vpack.c.b16 %v3860, %v3852
        %v4893 = vpack.c.b16 %v3869, %v3861
        %v4894 = vpack.c.b16 %v3870, %v3862
        %v4895 = vpack.c.b16 %v3871, %v3863
        %v4896 = vpack.c.b16 %v3872, %v3864
        %v4897 = vpack.c.b16 %v3873, %v3865
        %v4898 = vpack.c.b16 %v3874, %v3866
        %v4899 = vpack.c.b16 %v3875, %v3867
        %v4900 = vpack.c.b16 %v3876, %v3868
        %v4901 = vpack.c.b16 %v3885, %v3877
        %v4902 = vpack.c.b16 %v3886, %v3878
        %v4903 = vpack.c.b16 %v3887, %v3879
        %v4904 = vpack.c.b16 %v3888, %v3880
        %v4905 = vpack.c.b16 %v3889, %v3881
        %v4906 = vpack.c.b16 %v3890, %v3882
        %v4907 = vpack.c.b16 %v3891, %v3883
        %v4908 = vpack.c.b16 %v3892, %v3884
        %v4909 = vpack.c.b16 %v3901, %v3893
        %v4910 = vpack.c.b16 %v3902, %v3894
        %v4911 = vpack.c.b16 %v3903, %v3895
        %v4912 = vpack.c.b16 %v3904, %v3896
        %v4913 = vpack.c.b16 %v3905, %v3897
        %v4914 = vpack.c.b16 %v3906, %v3898
        %v4915 = vpack.c.b16 %v3907, %v3899
        %v4916 = vpack.c.b16 %v3908, %v3900
        %v4917 = vpack.c.b16 %v3917, %v3909
        %v4918 = vpack.c.b16 %v3918, %v3910
        %v4919 = vpack.c.b16 %v3919, %v3911
        %v4920 = vpack.c.b16 %v3920, %v3912
        %v4921 = vpack.c.b16 %v3921, %v3913
        %v4922 = vpack.c.b16 %v3922, %v3914
        %v4923 = vpack.c.b16 %v3923, %v3915
        %v4924 = vpack.c.b16 %v3924, %v3916
        %v4925 = vpack.c.b16 %v3933, %v3925
        %v4926 = vpack.c.b16 %v3934, %v3926
        %v4927 = vpack.c.b16 %v3935, %v3927
        %v4928 = vpack.c.b16 %v3936, %v3928
        %v4929 = vpack.c.b16 %v3937, %v3929
        %v4930 = vpack.c.b16 %v3938, %v3930
        %v4931 = vpack.c.b16 %v3939, %v3931
        %v4932 = vpack.c.b16 %v3940, %v3932
        %v4933 = vpack.c.b16 %v3949, %v3941
        %v4934 = vpack.c.b16 %v3950, %v3942
        %v4935 = vpack.c.b16 %v3951, %v3943
        %v4936 = vpack.c.b16 %v3952, %v3944
        %v4937 = vpack.c.b16 %v3953, %v3945
        %v4938 = vpack.c.b16 %v3954, %v3946
        %v4939 = vpack.c.b16 %v3955, %v3947
        %v4940 = vpack.c.b16 %v3956, %v3948
        %v4941 = vpack.c.b16 %v3965, %v3957
        %v4942 = vpack.c.b16 %v3966, %v3958
        %v4943 = vpack.c.b16 %v3967, %v3959
        %v4944 = vpack.c.b16 %v3968, %v3960
        %v4945 = vpack.c.b16 %v3969, %v3961
        %v4946 = vpack.c.b16 %v3970, %v3962
        %v4947 = vpack.c.b16 %v3971, %v3963
        %v4948 = vpack.c.b16 %v3972, %v3964
        %v4949 = vpack.c.b16 %v3981, %v3973
        %v4950 = vpack.c.b16 %v3982, %v3974
        %v4951 = vpack.c.b16 %v3983, %v3975
        %v4952 = vpack.c.b16 %v3984, %v3976
        %v4953 = vpack.c.b16 %v3985, %v3977
        %v4954 = vpack.c.b16 %v3986, %v3978
        %v4955 = vpack.c.b16 %v3987, %v3979
        %v4956 = vpack.c.b16 %v3988, %v3980
        %v4957 = vpack.c.b16 %v3997, %v3989
        %v4958 = vpack.c.b16 %v3998, %v3990
        %v4959 = vpack.c.b16 %v3999, %v3991
        %v4960 = vpack.c.b16 %v4000, %v3992
        %v4961 = vpack.c.b16 %v4001, %v3993
        %v4962 = vpack.c.b16 %v4002, %v3994
        %v4963 = vpack.c.b16 %v4003, %v3995
        %v4964 = vpack.c.b16 %v4004, %v3996
        %v4965 = vpack.c.b16 %v4013, %v4005
        %v4966 = vpack.c.b16 %v4014, %v4006
        %v4967 = vpack.c.b16 %v4015, %v4007
        %v4968 = vpack.c.b16 %v4016, %v4008
        %v4969 = vpack.c.b16 %v4017, %v4009
        %v4970 = vpack.c.b16 %v4018, %v4010
        %v4971 = vpack.c.b16 %v4019, %v4011
        %v4972 = vpack.c.b16 %v4020, %v4012
        %v4973 = vpack.c.b16 %v4029, %v4021
        %v4974 = vpack.c.b16 %v4030, %v4022
        %v4975 = vpack.c.b16 %v4031, %v4023
        %v4976 = vpack.c.b16 %v4032, %v4024
        %v4977 = vpack.c.b16 %v4033, %v4025
        %v4978 = vpack.c.b16 %v4034, %v4026
        %v4979 = vpack.c.b16 %v4035, %v4027
        %v4980 = vpack.c.b16 %v4036, %v4028
        %v4981 = vpack.c.b16 %v4045, %v4037
        %v4982 = vpack.c.b16 %v4046, %v4038
        %v4983 = vpack.c.b16 %v4047, %v4039
        %v4984 = vpack.c.b16 %v4048, %v4040
        %v4985 = vpack.c.b16 %v4049, %v4041
        %v4986 = vpack.c.b16 %v4050, %v4042
        %v4987 = vpack.c.b16 %v4051, %v4043
        %v4988 = vpack.c.b16 %v4052, %v4044
        %v4989 = vpack.c.b16 %v4061, %v4053
        %v4990 = vpack.c.b16 %v4062, %v4054
        %v4991 = vpack.c.b16 %v4063, %v4055
        %v4992 = vpack.c.b16 %v4064, %v4056
        %v4993 = vpack.c.b16 %v4065, %v4057
        %v4994 = vpack.c.b16 %v4066, %v4058
        %v4995 = vpack.c.b16 %v4067, %v4059
        %v4996 = vpack.c.b16 %v4068, %v4060
        %v4997 = vpack.c.b16 %v4077, %v4069
        %v4998 = vpack.c.b16 %v4078, %v4070
        %v4999 = vpack.c.b16 %v4079, %v4071
        %v5000 = vpack.c.b16 %v4080, %v4072
        %v5001 = vpack.c.b16 %v4081, %v4073
        %v5002 = vpack.c.b16 %v4082, %v4074
        %v5003 = vpack.c.b16 %v4083, %v4075
        %v5004 = vpack.c.b16 %v4084, %v4076
        %v5005 = vpack.c.b16 %v4093, %v4085
        %v5006 = vpack.c.b16 %v4094, %v4086
        %v5007 = vpack.c.b16 %v4095, %v4087
        %v5008 = vpack.c.b16 %v4096, %v4088
        %v5009 = vpack.c.b16 %v4097, %v4089
        %v5010 = vpack.c.b16 %v4098, %v4090
        %v5011 = vpack.c.b16 %v4099, %v4091
        %v5012 = vpack.c.b16 %v4100, %v4092
        %v5013 = vpack.c.b16 %v4109, %v4101
        %v5014 = vpack.c.b16 %v4110, %v4102
        %v5015 = vpack.c.b16 %v4111, %v4103
        %v5016 = vpack.c.b16 %v4112, %v4104
        %v5017 = vpack.c.b16 %v4113, %v4105
        %v5018 = vpack.c.b16 %v4114, %v4106
        %v5019 = vpack.c.b16 %v4115, %v4107
        %v5020 = vpack.c.b16 %v4116, %v4108
        %v5021 = vpack.c.b16 %v4117, %v4117
        %v5022 = vpack.c.b16 %v4118, %v4118
        %v5023 = vpack.c.b16 %v4119, %v4119
        %v5024 = vpack.c.b16 %v4120, %v4120
        %v5025 = vpack.c.b16 %v4121, %v4121
        %v5026 = vpack.c.b16 %v4122, %v4122
        %v5027 = vpack.c.b16 %v4123, %v4123
        %v5028 = vpack.c.b16 %v4124, %v4124
        %vm5925 = vcmask 64512
        %v5927 = vsel %vm5925, %v1409, 0
        %vm5929 = vcmask 1043456
        %v5931 = vsel %vm5929, %v5021, 0
        %v5934 = vsel %vm5929, %v5022, 0
        %v5937 = vsel %vm5929, %v5023, 0
        %v5940 = vsel %vm5929, %v5024, 0
        %v5943 = vsel %vm5929, %v5025, 0
        %v5946 = vsel %vm5929, %v5026, 0
        %v5949 = vsel %vm5929, %v5027, 0
        %v5952 = vsel %vm5929, %v5028, 0
        %5954 = vmatprep.subr.bf16.mxu0 %v4126
        %5955 = vmatpush1.bf16.msra.mxu0 %v4125
        %5956 = vmatprep.subr.bf16.mxu0 %v4134
        %5957 = vmatpush1.bf16.msra.mxu0 %v4133
        %5958 = vmatprep.subr.bf16.mxu0 %v4142
        %5959 = vmatpush1.bf16.msra.mxu0 %v4141
        %5960 = vmatprep.subr.bf16.mxu0 %v4150
        %5961 = vmatpush1.bf16.msra.mxu0 %v4149
        %5962 = vmatprep.subr.bf16.mxu0 %v4158
        %5963 = vmatpush1.bf16.msra.mxu0 %v4157
        %5964 = vmatprep.subr.bf16.mxu0 %v4166
        %5965 = vmatpush1.bf16.msra.mxu0 %v4165
        %5966 = vmatprep.subr.bf16.mxu0 %v4174
        %5967 = vmatpush1.bf16.msra.mxu0 %v4173
        %5968 = vmatprep.subr.bf16.mxu0 %v4182
        %5969 = vmatpush1.bf16.msra.mxu0 %v4181
        %5970 = vmatprep.subr.bf16.mxu0 %v4190
        %5971 = vmatpush1.bf16.msra.mxu0 %v4189
        %5972 = vmatprep.subr.bf16.mxu0 %v4198
        %5973 = vmatpush1.bf16.msra.mxu0 %v4197
        %5974 = vmatprep.subr.bf16.mxu0 %v4206
        %5975 = vmatpush1.bf16.msra.mxu0 %v4205
        %5976 = vmatprep.subr.bf16.mxu0 %v4214
        %5977 = vmatpush1.bf16.msra.mxu0 %v4213
        %5978 = vmatprep.subr.bf16.mxu0 %v4222
        %5979 = vmatpush1.bf16.msra.mxu0 %v4221
        %5980 = vmatprep.subr.bf16.mxu0 %v4230
        %5981 = vmatpush1.bf16.msra.mxu0 %v4229
        %5982 = vmatprep.subr.bf16.mxu0 %v4238
        %5983 = vmatpush1.bf16.msra.mxu0 %v4237
        %5984 = vmatprep.subr.bf16.mxu0 %v4246
        %5985 = vmatpush1.bf16.msra.mxu0 %v4245
        %5986 = vmatprep.mubr.bf16.mxu0 %v1359
        %5987 = vmatmul.mubr.bf16.gmra.mrb[0].mxu0 %v1351
        %v5988 = vpop.f32.mrb[0].mxu0
        %v5989 = vadd.f32 0.0, %v5988
        %v5990 = vpop.f32.mrb[0].mxu0
        %v5991 = vadd.f32 0.0, %v5990
        %v5992 = vpop.f32.mrb[0].mxu0
        %v5993 = vpop.f32.mrb[0].mxu0
        %5994 = vdwg.mxu0
        %5995 = vmatprep.subr.bf16.mxu0 %v4254
        %5996 = vmatpush1.bf16.msra.mxu0 %v4253
        %5997 = vmatprep.subr.bf16.mxu0 %v4262
        %5998 = vmatpush1.bf16.msra.mxu0 %v4261
        %5999 = vmatprep.subr.bf16.mxu0 %v4270
        %6000 = vmatpush1.bf16.msra.mxu0 %v4269
        %6001 = vmatprep.subr.bf16.mxu0 %v4278
        %6002 = vmatpush1.bf16.msra.mxu0 %v4277
        %6003 = vmatprep.subr.bf16.mxu0 %v4286
        %6004 = vmatpush1.bf16.msra.mxu0 %v4285
        %6005 = vmatprep.subr.bf16.mxu0 %v4294
        %6006 = vmatpush1.bf16.msra.mxu0 %v4293
        %6007 = vmatprep.subr.bf16.mxu0 %v4302
        %6008 = vmatpush1.bf16.msra.mxu0 %v4301
        %6009 = vmatprep.subr.bf16.mxu0 %v4310
        %6010 = vmatpush1.bf16.msra.mxu0 %v4309
        %6011 = vmatprep.subr.bf16.mxu0 %v4318
        %6012 = vmatpush1.bf16.msra.mxu0 %v4317
        %6013 = vmatprep.subr.bf16.mxu0 %v4326
        %6014 = vmatpush1.bf16.msra.mxu0 %v4325
        %6015 = vmatprep.subr.bf16.mxu0 %v4334
        %6016 = vmatpush1.bf16.msra.mxu0 %v4333
        %6017 = vmatprep.subr.bf16.mxu0 %v4342
        %6018 = vmatpush1.bf16.msra.mxu0 %v4341
        %6019 = vmatprep.subr.bf16.mxu0 %v4350
        %6020 = vmatpush1.bf16.msra.mxu0 %v4349
        %6021 = vmatprep.subr.bf16.mxu0 %v4358
        %6022 = vmatpush1.bf16.msra.mxu0 %v4357
        %6023 = vmatprep.subr.bf16.mxu0 %v4366
        %6024 = vmatpush1.bf16.msra.mxu0 %v4365
        %6025 = vmatprep.subr.bf16.mxu0 %v4374
        %6026 = vmatpush1.bf16.msra.mxu0 %v4373
        %6027 = vmatprep.mubr.bf16.mxu0 %v1360
        %6028 = vmatmul.mubr.bf16.gmra.mrb[0].mxu0 %v1358
        %v6029 = vpop.f32.mrb[0].mxu0
        %v6030 = vadd.f32 %v5989, %v6029
        %v6031 = vpop.f32.mrb[0].mxu0
        %v6032 = vadd.f32 %v5991, %v6031
        %v6033 = vpop.f32.mrb[0].mxu0
        %v6034 = vpop.f32.mrb[0].mxu0
        %6035 = vdwg.mxu0
        %6036 = vmatprep.subr.bf16.mxu0 %v4382
        %6037 = vmatpush1.bf16.msra.mxu0 %v4381
        %6038 = vmatprep.subr.bf16.mxu0 %v4390
        %6039 = vmatpush1.bf16.msra.mxu0 %v4389
        %6040 = vmatprep.subr.bf16.mxu0 %v4398
        %6041 = vmatpush1.bf16.msra.mxu0 %v4397
        %6042 = vmatprep.subr.bf16.mxu0 %v4406
        %6043 = vmatpush1.bf16.msra.mxu0 %v4405
        %6044 = vmatprep.subr.bf16.mxu0 %v4414
        %6045 = vmatpush1.bf16.msra.mxu0 %v4413
        %6046 = vmatprep.subr.bf16.mxu0 %v4422
        %6047 = vmatpush1.bf16.msra.mxu0 %v4421
        %6048 = vmatprep.subr.bf16.mxu0 %v4430
        %6049 = vmatpush1.bf16.msra.mxu0 %v4429
        %6050 = vmatprep.subr.bf16.mxu0 %v4438
        %6051 = vmatpush1.bf16.msra.mxu0 %v4437
        %6052 = vmatprep.subr.bf16.mxu0 %v4446
        %6053 = vmatpush1.bf16.msra.mxu0 %v4445
        %6054 = vmatprep.subr.bf16.mxu0 %v4454
        %6055 = vmatpush1.bf16.msra.mxu0 %v4453
        %6056 = vmatprep.subr.bf16.mxu0 %v4462
        %6057 = vmatpush1.bf16.msra.mxu0 %v4461
        %6058 = vmatprep.subr.bf16.mxu0 %v4470
        %6059 = vmatpush1.bf16.msra.mxu0 %v4469
        %6060 = vmatprep.subr.bf16.mxu0 %v4478
        %6061 = vmatpush1.bf16.msra.mxu0 %v4477
        %6062 = vmatprep.subr.bf16.mxu0 %v4486
        %6063 = vmatpush1.bf16.msra.mxu0 %v4485
        %6064 = vmatprep.subr.bf16.mxu0 %v4494
        %6065 = vmatpush1.bf16.msra.mxu0 %v4493
        %6066 = vmatprep.subr.bf16.mxu0 %v4502
        %6067 = vmatpush1.bf16.msra.mxu0 %v4501
        %6068 = vmatprep.mubr.bf16.mxu0 %v1376
        %6069 = vmatmul.mubr.bf16.gmra.mrb[0].mxu0 %v1368
        %v6070 = vpop.f32.mrb[0].mxu0
        %v6071 = vadd.f32 %v6030, %v6070
        %v6072 = vpop.f32.mrb[0].mxu0
        %v6073 = vadd.f32 %v6032, %v6072
        %v6074 = vpop.f32.mrb[0].mxu0
        %v6075 = vpop.f32.mrb[0].mxu0
        %6076 = vdwg.mxu0
        %6077 = vmatprep.subr.bf16.mxu0 %v4510
        %6078 = vmatpush1.bf16.msra.mxu0 %v4509
        %6079 = vmatprep.subr.bf16.mxu0 %v4518
        %6080 = vmatpush1.bf16.msra.mxu0 %v4517
        %6081 = vmatprep.subr.bf16.mxu0 %v4526
        %6082 = vmatpush1.bf16.msra.mxu0 %v4525
        %6083 = vmatprep.subr.bf16.mxu0 %v4534
        %6084 = vmatpush1.bf16.msra.mxu0 %v4533
        %6085 = vmatprep.subr.bf16.mxu0 %v4542
        %6086 = vmatpush1.bf16.msra.mxu0 %v4541
        %6087 = vmatprep.subr.bf16.mxu0 %v4550
        %6088 = vmatpush1.bf16.msra.mxu0 %v4549
        %6089 = vmatprep.subr.bf16.mxu0 %v4558
        %6090 = vmatpush1.bf16.msra.mxu0 %v4557
        %6091 = vmatprep.subr.bf16.mxu0 %v4566
        %6092 = vmatpush1.bf16.msra.mxu0 %v4565
        %6093 = vmatprep.subr.bf16.mxu0 %v4574
        %6094 = vmatpush1.bf16.msra.mxu0 %v4573
        %6095 = vmatprep.subr.bf16.mxu0 %v4582
        %6096 = vmatpush1.bf16.msra.mxu0 %v4581
        %6097 = vmatprep.subr.bf16.mxu0 %v4590
        %6098 = vmatpush1.bf16.msra.mxu0 %v4589
        %6099 = vmatprep.subr.bf16.mxu0 %v4598
        %6100 = vmatpush1.bf16.msra.mxu0 %v4597
        %6101 = vmatprep.subr.bf16.mxu0 %v4606
        %6102 = vmatpush1.bf16.msra.mxu0 %v4605
        %6103 = vmatprep.subr.bf16.mxu0 %v4614
        %6104 = vmatpush1.bf16.msra.mxu0 %v4613
        %6105 = vmatprep.subr.bf16.mxu0 %v4622
        %6106 = vmatpush1.bf16.msra.mxu0 %v4621
        %6107 = vmatprep.subr.bf16.mxu0 %v4630
        %6108 = vmatpush1.bf16.msra.mxu0 %v4629
        %6109 = vmatprep.mubr.bf16.mxu0 %v1377
        %6110 = vmatmul.mubr.bf16.gmra.mrb[0].mxu0 %v1375
        %v6111 = vpop.f32.mrb[0].mxu0
        %v6112 = vadd.f32 %v6071, %v6111
        %v6113 = vpop.f32.mrb[0].mxu0
        %v6114 = vadd.f32 %v6073, %v6113
        %v6115 = vpop.f32.mrb[0].mxu0
        %v6116 = vpop.f32.mrb[0].mxu0
        %6117 = vdwg.mxu0
        %6118 = vmatprep.subr.bf16.mxu0 %v4638
        %6119 = vmatpush1.bf16.msra.mxu0 %v4637
        %6120 = vmatprep.subr.bf16.mxu0 %v4646
        %6121 = vmatpush1.bf16.msra.mxu0 %v4645
        %6122 = vmatprep.subr.bf16.mxu0 %v4654
        %6123 = vmatpush1.bf16.msra.mxu0 %v4653
        %6124 = vmatprep.subr.bf16.mxu0 %v4662
        %6125 = vmatpush1.bf16.msra.mxu0 %v4661
        %6126 = vmatprep.subr.bf16.mxu0 %v4670
        %6127 = vmatpush1.bf16.msra.mxu0 %v4669
        %6128 = vmatprep.subr.bf16.mxu0 %v4678
        %6129 = vmatpush1.bf16.msra.mxu0 %v4677
        %6130 = vmatprep.subr.bf16.mxu0 %v4686
        %6131 = vmatpush1.bf16.msra.mxu0 %v4685
        %6132 = vmatprep.subr.bf16.mxu0 %v4694
        %6133 = vmatpush1.bf16.msra.mxu0 %v4693
        %6134 = vmatprep.subr.bf16.mxu0 %v4702
        %6135 = vmatpush1.bf16.msra.mxu0 %v4701
        %6136 = vmatprep.subr.bf16.mxu0 %v4710
        %6137 = vmatpush1.bf16.msra.mxu0 %v4709
        %6138 = vmatprep.subr.bf16.mxu0 %v4718
        %6139 = vmatpush1.bf16.msra.mxu0 %v4717
        %6140 = vmatprep.subr.bf16.mxu0 %v4726
        %6141 = vmatpush1.bf16.msra.mxu0 %v4725
        %6142 = vmatprep.subr.bf16.mxu0 %v4734
        %6143 = vmatpush1.bf16.msra.mxu0 %v4733
        %6144 = vmatprep.subr.bf16.mxu0 %v4742
        %6145 = vmatpush1.bf16.msra.mxu0 %v4741
        %6146 = vmatprep.subr.bf16.mxu0 %v4750
        %6147 = vmatpush1.bf16.msra.mxu0 %v4749
        %6148 = vmatprep.subr.bf16.mxu0 %v4758
        %6149 = vmatpush1.bf16.msra.mxu0 %v4757
        %6150 = vmatprep.mubr.bf16.mxu0 %v1393
        %6151 = vmatmul.mubr.bf16.gmra.mrb[0].mxu0 %v1385
        %v6152 = vpop.f32.mrb[0].mxu0
        %v6153 = vadd.f32 %v6112, %v6152
        %v6154 = vpop.f32.mrb[0].mxu0
        %v6155 = vadd.f32 %v6114, %v6154
        %v6156 = vpop.f32.mrb[0].mxu0
        %v6157 = vpop.f32.mrb[0].mxu0
        %6158 = vdwg.mxu0
        %6159 = vmatprep.subr.bf16.mxu0 %v4766
        %6160 = vmatpush1.bf16.msra.mxu0 %v4765
        %6161 = vmatprep.subr.bf16.mxu0 %v4774
        %6162 = vmatpush1.bf16.msra.mxu0 %v4773
        %6163 = vmatprep.subr.bf16.mxu0 %v4782
        %6164 = vmatpush1.bf16.msra.mxu0 %v4781
        %6165 = vmatprep.subr.bf16.mxu0 %v4790
        %6166 = vmatpush1.bf16.msra.mxu0 %v4789
        %6167 = vmatprep.subr.bf16.mxu0 %v4798
        %6168 = vmatpush1.bf16.msra.mxu0 %v4797
        %6169 = vmatprep.subr.bf16.mxu0 %v4806
        %6170 = vmatpush1.bf16.msra.mxu0 %v4805
        %6171 = vmatprep.subr.bf16.mxu0 %v4814
        %6172 = vmatpush1.bf16.msra.mxu0 %v4813
        %6173 = vmatprep.subr.bf16.mxu0 %v4822
        %6174 = vmatpush1.bf16.msra.mxu0 %v4821
        %6175 = vmatprep.subr.bf16.mxu0 %v4830
        %6176 = vmatpush1.bf16.msra.mxu0 %v4829
        %6177 = vmatprep.subr.bf16.mxu0 %v4838
        %6178 = vmatpush1.bf16.msra.mxu0 %v4837
        %6179 = vmatprep.subr.bf16.mxu0 %v4846
        %6180 = vmatpush1.bf16.msra.mxu0 %v4845
        %6181 = vmatprep.subr.bf16.mxu0 %v4854
        %6182 = vmatpush1.bf16.msra.mxu0 %v4853
        %6183 = vmatprep.subr.bf16.mxu0 %v4862
        %6184 = vmatpush1.bf16.msra.mxu0 %v4861
        %6185 = vmatprep.subr.bf16.mxu0 %v4870
        %6186 = vmatpush1.bf16.msra.mxu0 %v4869
        %6187 = vmatprep.subr.bf16.mxu0 %v4878
        %6188 = vmatpush1.bf16.msra.mxu0 %v4877
        %6189 = vmatprep.subr.bf16.mxu0 %v4886
        %6190 = vmatpush1.bf16.msra.mxu0 %v4885
        %6191 = vmatprep.mubr.bf16.mxu0 %v1394
        %6192 = vmatmul.mubr.bf16.gmra.mrb[0].mxu0 %v1392
        %v6193 = vpop.f32.mrb[0].mxu0
        %v6194 = vadd.f32 %v6153, %v6193
        %v6195 = vpop.f32.mrb[0].mxu0
        %v6196 = vadd.f32 %v6155, %v6195
        %v6197 = vpop.f32.mrb[0].mxu0
        %v6198 = vpop.f32.mrb[0].mxu0
        %6199 = vdwg.mxu0
        %6200 = vmatprep.subr.bf16.mxu0 %v4894
        %6201 = vmatpush1.bf16.msra.mxu0 %v4893
        %6202 = vmatprep.subr.bf16.mxu0 %v4902
        %6203 = vmatpush1.bf16.msra.mxu0 %v4901
        %6204 = vmatprep.subr.bf16.mxu0 %v4910
        %6205 = vmatpush1.bf16.msra.mxu0 %v4909
        %6206 = vmatprep.subr.bf16.mxu0 %v4918
        %6207 = vmatpush1.bf16.msra.mxu0 %v4917
        %6208 = vmatprep.subr.bf16.mxu0 %v4926
        %6209 = vmatpush1.bf16.msra.mxu0 %v4925
        %6210 = vmatprep.subr.bf16.mxu0 %v4934
        %6211 = vmatpush1.bf16.msra.mxu0 %v4933
        %6212 = vmatprep.subr.bf16.mxu0 %v4942
        %6213 = vmatpush1.bf16.msra.mxu0 %v4941
        %6214 = vmatprep.subr.bf16.mxu0 %v4950
        %6215 = vmatpush1.bf16.msra.mxu0 %v4949
        %6216 = vmatprep.subr.bf16.mxu0 %v4958
        %6217 = vmatpush1.bf16.msra.mxu0 %v4957
        %6218 = vmatprep.subr.bf16.mxu0 %v4966
        %6219 = vmatpush1.bf16.msra.mxu0 %v4965
        %6220 = vmatprep.subr.bf16.mxu0 %v4974
        %6221 = vmatpush1.bf16.msra.mxu0 %v4973
        %6222 = vmatprep.subr.bf16.mxu0 %v4982
        %6223 = vmatpush1.bf16.msra.mxu0 %v4981
        %6224 = vmatprep.subr.bf16.mxu0 %v4990
        %6225 = vmatpush1.bf16.msra.mxu0 %v4989
        %6226 = vmatprep.subr.bf16.mxu0 %v4998
        %6227 = vmatpush1.bf16.msra.mxu0 %v4997
        %6228 = vmatprep.subr.bf16.mxu0 %v5006
        %6229 = vmatpush1.bf16.msra.mxu0 %v5005
        %6230 = vmatprep.subr.bf16.mxu0 %v5014
        %6231 = vmatpush1.bf16.msra.mxu0 %v5013
        %6232 = vmatprep.mubr.bf16.mxu0 %v1410
        %6233 = vmatmul.mubr.bf16.gmra.mrb[0].mxu0 %v1402
        %v6234 = vpop.f32.mrb[0].mxu0
        %v6235 = vadd.f32 %v6194, %v6234
        %v6236 = vpop.f32.mrb[0].mxu0
        %v6237 = vadd.f32 %v6196, %v6236
        %v6238 = vpop.f32.mrb[0].mxu0
        %v6239 = vpop.f32.mrb[0].mxu0
        %6240 = vdwg.mxu0
        %6241 = vmatprep.subr.bf16.mxu0 %v5934
        %6242 = vmatpush1.bf16.msra.mxu0 %v5931
        %6243 = vmatprep.subr.bf16.mxu0 0
        %6244 = vmatpush1.bf16.msra.mxu0 0
        %6245 = vmatprep.subr.bf16.mxu0 0
        %6246 = vmatpush1.bf16.msra.mxu0 0
        %6247 = vmatprep.subr.bf16.mxu0 0
        %6248 = vmatpush1.bf16.msra.mxu0 0
        %6249 = vmatprep.subr.bf16.mxu0 0
        %6250 = vmatpush1.bf16.msra.mxu0 0
        %6251 = vmatprep.subr.bf16.mxu0 0
        %6252 = vmatpush1.bf16.msra.mxu0 0
        %6253 = vmatprep.subr.bf16.mxu0 0
        %6254 = vmatpush1.bf16.msra.mxu0 0
        %6255 = vmatprep.subr.bf16.mxu0 0
        %6256 = vmatpush1.bf16.msra.mxu0 0
        %6257 = vmatprep.subr.bf16.mxu0 0
        %6258 = vmatpush1.bf16.msra.mxu0 0
        %6259 = vmatprep.subr.bf16.mxu0 0
        %6260 = vmatpush1.bf16.msra.mxu0 0
        %6261 = vmatprep.subr.bf16.mxu0 0
        %6262 = vmatpush1.bf16.msra.mxu0 0
        %6263 = vmatprep.subr.bf16.mxu0 0
        %6264 = vmatpush1.bf16.msra.mxu0 0
        %6265 = vmatprep.subr.bf16.mxu0 0
        %6266 = vmatpush1.bf16.msra.mxu0 0
        %6267 = vmatprep.subr.bf16.mxu0 0
        %6268 = vmatpush1.bf16.msra.mxu0 0
        %6269 = vmatprep.subr.bf16.mxu0 0
        %6270 = vmatpush1.bf16.msra.mxu0 0
        %6271 = vmatprep.subr.bf16.mxu0 0
        %6272 = vmatpush1.bf16.msra.mxu0 0
        %6273 = vmatprep.mubr.bf16.mxu0 0
        %6274 = vmatmul.mubr.bf16.gmra.mrb[0].mxu0 %v5927
        %v6275 = vpop.f32.mrb[0].mxu0
        %v6276 = vadd.f32 %v6235, %v6275
        %v6277 = vpop.f32.mrb[0].mxu0
        %v6278 = vadd.f32 %v6237, %v6277
        %v6279 = vpop.f32.mrb[0].mxu0
        %v6280 = vpop.f32.mrb[0].mxu0
        %6281 = vdwg.mxu0
        %6282 = vmatprep.subr.bf16.mxu0 %v4128
        %6283 = vmatpush1.bf16.msra.mxu0 %v4127
        %6284 = vmatprep.subr.bf16.mxu0 %v4136
        %6285 = vmatpush1.bf16.msra.mxu0 %v4135
        %6286 = vmatprep.subr.bf16.mxu0 %v4144
        %6287 = vmatpush1.bf16.msra.mxu0 %v4143
        %6288 = vmatprep.subr.bf16.mxu0 %v4152
        %6289 = vmatpush1.bf16.msra.mxu0 %v4151
        %6290 = vmatprep.subr.bf16.mxu0 %v4160
        %6291 = vmatpush1.bf16.msra.mxu0 %v4159
        %6292 = vmatprep.subr.bf16.mxu0 %v4168
        %6293 = vmatpush1.bf16.msra.mxu0 %v4167
        %6294 = vmatprep.subr.bf16.mxu0 %v4176
        %6295 = vmatpush1.bf16.msra.mxu0 %v4175
        %6296 = vmatprep.subr.bf16.mxu0 %v4184
        %6297 = vmatpush1.bf16.msra.mxu0 %v4183
        %6298 = vmatprep.subr.bf16.mxu0 %v4192
        %6299 = vmatpush1.bf16.msra.mxu0 %v4191
        %6300 = vmatprep.subr.bf16.mxu0 %v4200
        %6301 = vmatpush1.bf16.msra.mxu0 %v4199
        %6302 = vmatprep.subr.bf16.mxu0 %v4208
        %6303 = vmatpush1.bf16.msra.mxu0 %v4207
        %6304 = vmatprep.subr.bf16.mxu0 %v4216
        %6305 = vmatpush1.bf16.msra.mxu0 %v4215
        %6306 = vmatprep.subr.bf16.mxu0 %v4224
        %6307 = vmatpush1.bf16.msra.mxu0 %v4223
        %6308 = vmatprep.subr.bf16.mxu0 %v4232
        %6309 = vmatpush1.bf16.msra.mxu0 %v4231
        %6310 = vmatprep.subr.bf16.mxu0 %v4240
        %6311 = vmatpush1.bf16.msra.mxu0 %v4239
        %6312 = vmatprep.subr.bf16.mxu0 %v4248
        %6313 = vmatpush1.bf16.msra.mxu0 %v4247
        %6314 = vmatprep.mubr.bf16.mxu0 %v1359
        %6315 = vmatmul.mubr.bf16.gmra.mrb[0].mxu0 %v1351
        %v6316 = vpop.f32.mrb[0].mxu0
        %v6317 = vadd.f32 0.0, %v6316
        %v6318 = vpop.f32.mrb[0].mxu0
        %v6319 = vadd.f32 0.0, %v6318
        %v6320 = vpop.f32.mrb[0].mxu0
        %v6321 = vpop.f32.mrb[0].mxu0
        %6322 = vdwg.mxu0
        %6323 = vmatprep.subr.bf16.mxu0 %v4256
        %6324 = vmatpush1.bf16.msra.mxu0 %v4255
        %6325 = vmatprep.subr.bf16.mxu0 %v4264
        %6326 = vmatpush1.bf16.msra.mxu0 %v4263
        %6327 = vmatprep.subr.bf16.mxu0 %v4272
        %6328 = vmatpush1.bf16.msra.mxu0 %v4271
        %6329 = vmatprep.subr.bf16.mxu0 %v4280
        %6330 = vmatpush1.bf16.msra.mxu0 %v4279
        %6331 = vmatprep.subr.bf16.mxu0 %v4288
        %6332 = vmatpush1.bf16.msra.mxu0 %v4287
        %6333 = vmatprep.subr.bf16.mxu0 %v4296
        %6334 = vmatpush1.bf16.msra.mxu0 %v4295
        %6335 = vmatprep.subr.bf16.mxu0 %v4304
        %6336 = vmatpush1.bf16.msra.mxu0 %v4303
        %6337 = vmatprep.subr.bf16.mxu0 %v4312
        %6338 = vmatpush1.bf16.msra.mxu0 %v4311
        %6339 = vmatprep.subr.bf16.mxu0 %v4320
        %6340 = vmatpush1.bf16.msra.mxu0 %v4319
        %6341 = vmatprep.subr.bf16.mxu0 %v4328
        %6342 = vmatpush1.bf16.msra.mxu0 %v4327
        %6343 = vmatprep.subr.bf16.mxu0 %v4336
        %6344 = vmatpush1.bf16.msra.mxu0 %v4335
        %6345 = vmatprep.subr.bf16.mxu0 %v4344
        %6346 = vmatpush1.bf16.msra.mxu0 %v4343
        %6347 = vmatprep.subr.bf16.mxu0 %v4352
        %6348 = vmatpush1.bf16.msra.mxu0 %v4351
        %6349 = vmatprep.subr.bf16.mxu0 %v4360
        %6350 = vmatpush1.bf16.msra.mxu0 %v4359
        %6351 = vmatprep.subr.bf16.mxu0 %v4368
        %6352 = vmatpush1.bf16.msra.mxu0 %v4367
        %6353 = vmatprep.subr.bf16.mxu0 %v4376
        %6354 = vmatpush1.bf16.msra.mxu0 %v4375
        %6355 = vmatprep.mubr.bf16.mxu0 %v1360
        %6356 = vmatmul.mubr.bf16.gmra.mrb[0].mxu0 %v1358
        %v6357 = vpop.f32.mrb[0].mxu0
        %v6358 = vadd.f32 %v6317, %v6357
        %v6359 = vpop.f32.mrb[0].mxu0
        %v6360 = vadd.f32 %v6319, %v6359
        %v6361 = vpop.f32.mrb[0].mxu0
        %v6362 = vpop.f32.mrb[0].mxu0
        %6363 = vdwg.mxu0
        %6364 = vmatprep.subr.bf16.mxu0 %v4384
        %6365 = vmatpush1.bf16.msra.mxu0 %v4383
        %6366 = vmatprep.subr.bf16.mxu0 %v4392
        %6367 = vmatpush1.bf16.msra.mxu0 %v4391
        %6368 = vmatprep.subr.bf16.mxu0 %v4400
        %6369 = vmatpush1.bf16.msra.mxu0 %v4399
        %6370 = vmatprep.subr.bf16.mxu0 %v4408
        %6371 = vmatpush1.bf16.msra.mxu0 %v4407
        %6372 = vmatprep.subr.bf16.mxu0 %v4416
        %6373 = vmatpush1.bf16.msra.mxu0 %v4415
        %6374 = vmatprep.subr.bf16.mxu0 %v4424
        %6375 = vmatpush1.bf16.msra.mxu0 %v4423
        %6376 = vmatprep.subr.bf16.mxu0 %v4432
        %6377 = vmatpush1.bf16.msra.mxu0 %v4431
        %6378 = vmatprep.subr.bf16.mxu0 %v4440
        %6379 = vmatpush1.bf16.msra.mxu0 %v4439
        %6380 = vmatprep.subr.bf16.mxu0 %v4448
        %6381 = vmatpush1.bf16.msra.mxu0 %v4447
        %6382 = vmatprep.subr.bf16.mxu0 %v4456
        %6383 = vmatpush1.bf16.msra.mxu0 %v4455
        %6384 = vmatprep.subr.bf16.mxu0 %v4464
        %6385 = vmatpush1.bf16.msra.mxu0 %v4463
        %6386 = vmatprep.subr.bf16.mxu0 %v4472
        %6387 = vmatpush1.bf16.msra.mxu0 %v4471
        %6388 = vmatprep.subr.bf16.mxu0 %v4480
        %6389 = vmatpush1.bf16.msra.mxu0 %v4479
        %6390 = vmatprep.subr.bf16.mxu0 %v4488
        %6391 = vmatpush1.bf16.msra.mxu0 %v4487
        %6392 = vmatprep.subr.bf16.mxu0 %v4496
        %6393 = vmatpush1.bf16.msra.mxu0 %v4495
        %6394 = vmatprep.subr.bf16.mxu0 %v4504
        %6395 = vmatpush1.bf16.msra.mxu0 %v4503
        %6396 = vmatprep.mubr.bf16.mxu0 %v1376
        %6397 = vmatmul.mubr.bf16.gmra.mrb[0].mxu0 %v1368
        %v6398 = vpop.f32.mrb[0].mxu0
        %v6399 = vadd.f32 %v6358, %v6398
        %v6400 = vpop.f32.mrb[0].mxu0
        %v6401 = vadd.f32 %v6360, %v6400
        %v6402 = vpop.f32.mrb[0].mxu0
        %v6403 = vpop.f32.mrb[0].mxu0
        %6404 = vdwg.mxu0
        %6405 = vmatprep.subr.bf16.mxu0 %v4512
        %6406 = vmatpush1.bf16.msra.mxu0 %v4511
        %6407 = vmatprep.subr.bf16.mxu0 %v4520
        %6408 = vmatpush1.bf16.msra.mxu0 %v4519
        %6409 = vmatprep.subr.bf16.mxu0 %v4528
        %6410 = vmatpush1.bf16.msra.mxu0 %v4527
        %6411 = vmatprep.subr.bf16.mxu0 %v4536
        %6412 = vmatpush1.bf16.msra.mxu0 %v4535
        %6413 = vmatprep.subr.bf16.mxu0 %v4544
        %6414 = vmatpush1.bf16.msra.mxu0 %v4543
        %6415 = vmatprep.subr.bf16.mxu0 %v4552
        %6416 = vmatpush1.bf16.msra.mxu0 %v4551
        %6417 = vmatprep.subr.bf16.mxu0 %v4560
        %6418 = vmatpush1.bf16.msra.mxu0 %v4559
        %6419 = vmatprep.subr.bf16.mxu0 %v4568
        %6420 = vmatpush1.bf16.msra.mxu0 %v4567
        %6421 = vmatprep.subr.bf16.mxu0 %v4576
        %6422 = vmatpush1.bf16.msra.mxu0 %v4575
        %6423 = vmatprep.subr.bf16.mxu0 %v4584
        %6424 = vmatpush1.bf16.msra.mxu0 %v4583
        %6425 = vmatprep.subr.bf16.mxu0 %v4592
        %6426 = vmatpush1.bf16.msra.mxu0 %v4591
        %6427 = vmatprep.subr.bf16.mxu0 %v4600
        %6428 = vmatpush1.bf16.msra.mxu0 %v4599
        %6429 = vmatprep.subr.bf16.mxu0 %v4608
        %6430 = vmatpush1.bf16.msra.mxu0 %v4607
        %6431 = vmatprep.subr.bf16.mxu0 %v4616
        %6432 = vmatpush1.bf16.msra.mxu0 %v4615
        %6433 = vmatprep.subr.bf16.mxu0 %v4624
        %6434 = vmatpush1.bf16.msra.mxu0 %v4623
        %6435 = vmatprep.subr.bf16.mxu0 %v4632
        %6436 = vmatpush1.bf16.msra.mxu0 %v4631
        %6437 = vmatprep.mubr.bf16.mxu0 %v1377
        %6438 = vmatmul.mubr.bf16.gmra.mrb[0].mxu0 %v1375
        %v6439 = vpop.f32.mrb[0].mxu0
        %v6440 = vadd.f32 %v6399, %v6439
        %v6441 = vpop.f32.mrb[0].mxu0
        %v6442 = vadd.f32 %v6401, %v6441
        %v6443 = vpop.f32.mrb[0].mxu0
        %v6444 = vpop.f32.mrb[0].mxu0
        %6445 = vdwg.mxu0
        %6446 = vmatprep.subr.bf16.mxu0 %v4640
        %6447 = vmatpush1.bf16.msra.mxu0 %v4639
        %6448 = vmatprep.subr.bf16.mxu0 %v4648
        %6449 = vmatpush1.bf16.msra.mxu0 %v4647
        %6450 = vmatprep.subr.bf16.mxu0 %v4656
        %6451 = vmatpush1.bf16.msra.mxu0 %v4655
        %6452 = vmatprep.subr.bf16.mxu0 %v4664
        %6453 = vmatpush1.bf16.msra.mxu0 %v4663
        %6454 = vmatprep.subr.bf16.mxu0 %v4672
        %6455 = vmatpush1.bf16.msra.mxu0 %v4671
        %6456 = vmatprep.subr.bf16.mxu0 %v4680
        %6457 = vmatpush1.bf16.msra.mxu0 %v4679
        %6458 = vmatprep.subr.bf16.mxu0 %v4688
        %6459 = vmatpush1.bf16.msra.mxu0 %v4687
        %6460 = vmatprep.subr.bf16.mxu0 %v4696
        %6461 = vmatpush1.bf16.msra.mxu0 %v4695
        %6462 = vmatprep.subr.bf16.mxu0 %v4704
        %6463 = vmatpush1.bf16.msra.mxu0 %v4703
        %6464 = vmatprep.subr.bf16.mxu0 %v4712
        %6465 = vmatpush1.bf16.msra.mxu0 %v4711
        %6466 = vmatprep.subr.bf16.mxu0 %v4720
        %6467 = vmatpush1.bf16.msra.mxu0 %v4719
        %6468 = vmatprep.subr.bf16.mxu0 %v4728
        %6469 = vmatpush1.bf16.msra.mxu0 %v4727
        %6470 = vmatprep.subr.bf16.mxu0 %v4736
        %6471 = vmatpush1.bf16.msra.mxu0 %v4735
        %6472 = vmatprep.subr.bf16.mxu0 %v4744
        %6473 = vmatpush1.bf16.msra.mxu0 %v4743
        %6474 = vmatprep.subr.bf16.mxu0 %v4752
        %6475 = vmatpush1.bf16.msra.mxu0 %v4751
        %6476 = vmatprep.subr.bf16.mxu0 %v4760
        %6477 = vmatpush1.bf16.msra.mxu0 %v4759
        %6478 = vmatprep.mubr.bf16.mxu0 %v1393
        %6479 = vmatmul.mubr.bf16.gmra.mrb[0].mxu0 %v1385
        %v6480 = vpop.f32.mrb[0].mxu0
        %v6481 = vadd.f32 %v6440, %v6480
        %v6482 = vpop.f32.mrb[0].mxu0
        %v6483 = vadd.f32 %v6442, %v6482
        %v6484 = vpop.f32.mrb[0].mxu0
        %v6485 = vpop.f32.mrb[0].mxu0
        %6486 = vdwg.mxu0
        %6487 = vmatprep.subr.bf16.mxu0 %v4768
        %6488 = vmatpush1.bf16.msra.mxu0 %v4767
        %6489 = vmatprep.subr.bf16.mxu0 %v4776
        %6490 = vmatpush1.bf16.msra.mxu0 %v4775
        %6491 = vmatprep.subr.bf16.mxu0 %v4784
        %6492 = vmatpush1.bf16.msra.mxu0 %v4783
        %6493 = vmatprep.subr.bf16.mxu0 %v4792
        %6494 = vmatpush1.bf16.msra.mxu0 %v4791
        %6495 = vmatprep.subr.bf16.mxu0 %v4800
        %6496 = vmatpush1.bf16.msra.mxu0 %v4799
        %6497 = vmatprep.subr.bf16.mxu0 %v4808
        %6498 = vmatpush1.bf16.msra.mxu0 %v4807
        %6499 = vmatprep.subr.bf16.mxu0 %v4816
        %6500 = vmatpush1.bf16.msra.mxu0 %v4815
        %6501 = vmatprep.subr.bf16.mxu0 %v4824
        %6502 = vmatpush1.bf16.msra.mxu0 %v4823
        %6503 = vmatprep.subr.bf16.mxu0 %v4832
        %6504 = vmatpush1.bf16.msra.mxu0 %v4831
        %6505 = vmatprep.subr.bf16.mxu0 %v4840
        %6506 = vmatpush1.bf16.msra.mxu0 %v4839
        %6507 = vmatprep.subr.bf16.mxu0 %v4848
        %6508 = vmatpush1.bf16.msra.mxu0 %v4847
        %6509 = vmatprep.subr.bf16.mxu0 %v4856
        %6510 = vmatpush1.bf16.msra.mxu0 %v4855
        %6511 = vmatprep.subr.bf16.mxu0 %v4864
        %6512 = vmatpush1.bf16.msra.mxu0 %v4863
        %6513 = vmatprep.subr.bf16.mxu0 %v4872
        %6514 = vmatpush1.bf16.msra.mxu0 %v4871
        %6515 = vmatprep.subr.bf16.mxu0 %v4880
        %6516 = vmatpush1.bf16.msra.mxu0 %v4879
        %6517 = vmatprep.subr.bf16.mxu0 %v4888
        %6518 = vmatpush1.bf16.msra.mxu0 %v4887
        %6519 = vmatprep.mubr.bf16.mxu0 %v1394
        %6520 = vmatmul.mubr.bf16.gmra.mrb[0].mxu0 %v1392
        %v6521 = vpop.f32.mrb[0].mxu0
        %v6522 = vadd.f32 %v6481, %v6521
        %v6523 = vpop.f32.mrb[0].mxu0
        %v6524 = vadd.f32 %v6483, %v6523
        %v6525 = vpop.f32.mrb[0].mxu0
        %v6526 = vpop.f32.mrb[0].mxu0
        %6527 = vdwg.mxu0
        %6528 = vmatprep.subr.bf16.mxu0 %v4896
        %6529 = vmatpush1.bf16.msra.mxu0 %v4895
        %6530 = vmatprep.subr.bf16.mxu0 %v4904
        %6531 = vmatpush1.bf16.msra.mxu0 %v4903
        %6532 = vmatprep.subr.bf16.mxu0 %v4912
        %6533 = vmatpush1.bf16.msra.mxu0 %v4911
        %6534 = vmatprep.subr.bf16.mxu0 %v4920
        %6535 = vmatpush1.bf16.msra.mxu0 %v4919
        %6536 = vmatprep.subr.bf16.mxu0 %v4928
        %6537 = vmatpush1.bf16.msra.mxu0 %v4927
        %6538 = vmatprep.subr.bf16.mxu0 %v4936
        %6539 = vmatpush1.bf16.msra.mxu0 %v4935
        %6540 = vmatprep.subr.bf16.mxu0 %v4944
        %6541 = vmatpush1.bf16.msra.mxu0 %v4943
        %6542 = vmatprep.subr.bf16.mxu0 %v4952
        %6543 = vmatpush1.bf16.msra.mxu0 %v4951
        %6544 = vmatprep.subr.bf16.mxu0 %v4960
        %6545 = vmatpush1.bf16.msra.mxu0 %v4959
        %6546 = vmatprep.subr.bf16.mxu0 %v4968
        %6547 = vmatpush1.bf16.msra.mxu0 %v4967
        %6548 = vmatprep.subr.bf16.mxu0 %v4976
        %6549 = vmatpush1.bf16.msra.mxu0 %v4975
        %6550 = vmatprep.subr.bf16.mxu0 %v4984
        %6551 = vmatpush1.bf16.msra.mxu0 %v4983
        %6552 = vmatprep.subr.bf16.mxu0 %v4992
        %6553 = vmatpush1.bf16.msra.mxu0 %v4991
        %6554 = vmatprep.subr.bf16.mxu0 %v5000
        %6555 = vmatpush1.bf16.msra.mxu0 %v4999
        %6556 = vmatprep.subr.bf16.mxu0 %v5008
        %6557 = vmatpush1.bf16.msra.mxu0 %v5007
        %6558 = vmatprep.subr.bf16.mxu0 %v5016
        %6559 = vmatpush1.bf16.msra.mxu0 %v5015
        %6560 = vmatprep.mubr.bf16.mxu0 %v1410
        %6561 = vmatmul.mubr.bf16.gmra.mrb[0].mxu0 %v1402
        %v6562 = vpop.f32.mrb[0].mxu0
        %v6563 = vadd.f32 %v6522, %v6562
        %v6564 = vpop.f32.mrb[0].mxu0
        %v6565 = vadd.f32 %v6524, %v6564
        %v6566 = vpop.f32.mrb[0].mxu0
        %v6567 = vpop.f32.mrb[0].mxu0
        %6568 = vdwg.mxu0
        %6569 = vmatprep.subr.bf16.mxu0 %v5940
        %6570 = vmatpush1.bf16.msra.mxu0 %v5937
        %6571 = vmatprep.subr.bf16.mxu0 0
        %6572 = vmatpush1.bf16.msra.mxu0 0
        %6573 = vmatprep.subr.bf16.mxu0 0
        %6574 = vmatpush1.bf16.msra.mxu0 0
        %6575 = vmatprep.subr.bf16.mxu0 0
        %6576 = vmatpush1.bf16.msra.mxu0 0
        %6577 = vmatprep.subr.bf16.mxu0 0
        %6578 = vmatpush1.bf16.msra.mxu0 0
        %6579 = vmatprep.subr.bf16.mxu0 0
        %6580 = vmatpush1.bf16.msra.mxu0 0
        %6581 = vmatprep.subr.bf16.mxu0 0
        %6582 = vmatpush1.bf16.msra.mxu0 0
        %6583 = vmatprep.subr.bf16.mxu0 0
        %6584 = vmatpush1.bf16.msra.mxu0 0
        %6585 = vmatprep.subr.bf16.mxu0 0
        %6586 = vmatpush1.bf16.msra.mxu0 0
        %6587 = vmatprep.subr.bf16.mxu0 0
        %6588 = vmatpush1.bf16.msra.mxu0 0
        %6589 = vmatprep.subr.bf16.mxu0 0
        %6590 = vmatpush1.bf16.msra.mxu0 0
        %6591 = vmatprep.subr.bf16.mxu0 0
        %6592 = vmatpush1.bf16.msra.mxu0 0
        %6593 = vmatprep.subr.bf16.mxu0 0
        %6594 = vmatpush1.bf16.msra.mxu0 0
        %6595 = vmatprep.subr.bf16.mxu0 0
        %6596 = vmatpush1.bf16.msra.mxu0 0
        %6597 = vmatprep.subr.bf16.mxu0 0
        %6598 = vmatpush1.bf16.msra.mxu0 0
        %6599 = vmatprep.subr.bf16.mxu0 0
        %6600 = vmatpush1.bf16.msra.mxu0 0
        %6601 = vmatprep.mubr.bf16.mxu0 0
        %6602 = vmatmul.mubr.bf16.gmra.mrb[0].mxu0 %v5927
        %v6603 = vpop.f32.mrb[0].mxu0
        %v6604 = vadd.f32 %v6563, %v6603
        %v6605 = vpop.f32.mrb[0].mxu0
        %v6606 = vadd.f32 %v6565, %v6605
        %v6607 = vpop.f32.mrb[0].mxu0
        %v6608 = vpop.f32.mrb[0].mxu0
        %6609 = vdwg.mxu0
        %6610 = vmatprep.subr.bf16.mxu0 %v4130
        %6611 = vmatpush1.bf16.msra.mxu0 %v4129
        %6612 = vmatprep.subr.bf16.mxu0 %v4138
        %6613 = vmatpush1.bf16.msra.mxu0 %v4137
        %6614 = vmatprep.subr.bf16.mxu0 %v4146
        %6615 = vmatpush1.bf16.msra.mxu0 %v4145
        %6616 = vmatprep.subr.bf16.mxu0 %v4154
        %6617 = vmatpush1.bf16.msra.mxu0 %v4153
        %6618 = vmatprep.subr.bf16.mxu0 %v4162
        %6619 = vmatpush1.bf16.msra.mxu0 %v4161
        %6620 = vmatprep.subr.bf16.mxu0 %v4170
        %6621 = vmatpush1.bf16.msra.mxu0 %v4169
        %6622 = vmatprep.subr.bf16.mxu0 %v4178
        %6623 = vmatpush1.bf16.msra.mxu0 %v4177
        %6624 = vmatprep.subr.bf16.mxu0 %v4186
        %6625 = vmatpush1.bf16.msra.mxu0 %v4185
        %6626 = vmatprep.subr.bf16.mxu0 %v4194
        %6627 = vmatpush1.bf16.msra.mxu0 %v4193
        %6628 = vmatprep.subr.bf16.mxu0 %v4202
        %6629 = vmatpush1.bf16.msra.mxu0 %v4201
        %6630 = vmatprep.subr.bf16.mxu0 %v4210
        %6631 = vmatpush1.bf16.msra.mxu0 %v4209
        %6632 = vmatprep.subr.bf16.mxu0 %v4218
        %6633 = vmatpush1.bf16.msra.mxu0 %v4217
        %6634 = vmatprep.subr.bf16.mxu0 %v4226
        %6635 = vmatpush1.bf16.msra.mxu0 %v4225
        %6636 = vmatprep.subr.bf16.mxu0 %v4234
        %6637 = vmatpush1.bf16.msra.mxu0 %v4233
        %6638 = vmatprep.subr.bf16.mxu0 %v4242
        %6639 = vmatpush1.bf16.msra.mxu0 %v4241
        %6640 = vmatprep.subr.bf16.mxu0 %v4250
        %6641 = vmatpush1.bf16.msra.mxu0 %v4249
        %6642 = vmatprep.mubr.bf16.mxu0 %v1359
        %6643 = vmatmul.mubr.bf16.gmra.mrb[0].mxu0 %v1351
        %v6644 = vpop.f32.mrb[0].mxu0
        %v6645 = vadd.f32 0.0, %v6644
        %v6646 = vpop.f32.mrb[0].mxu0
        %v6647 = vadd.f32 0.0, %v6646
        %v6648 = vpop.f32.mrb[0].mxu0
        %v6649 = vpop.f32.mrb[0].mxu0
        %6650 = vdwg.mxu0
        %6651 = vmatprep.subr.bf16.mxu0 %v4258
        %6652 = vmatpush1.bf16.msra.mxu0 %v4257
        %6653 = vmatprep.subr.bf16.mxu0 %v4266
        %6654 = vmatpush1.bf16.msra.mxu0 %v4265
        %6655 = vmatprep.subr.bf16.mxu0 %v4274
        %6656 = vmatpush1.bf16.msra.mxu0 %v4273
        %6657 = vmatprep.subr.bf16.mxu0 %v4282
        %6658 = vmatpush1.bf16.msra.mxu0 %v4281
        %6659 = vmatprep.subr.bf16.mxu0 %v4290
        %6660 = vmatpush1.bf16.msra.mxu0 %v4289
        %6661 = vmatprep.subr.bf16.mxu0 %v4298
        %6662 = vmatpush1.bf16.msra.mxu0 %v4297
        %6663 = vmatprep.subr.bf16.mxu0 %v4306
        %6664 = vmatpush1.bf16.msra.mxu0 %v4305
        %6665 = vmatprep.subr.bf16.mxu0 %v4314
        %6666 = vmatpush1.bf16.msra.mxu0 %v4313
        %6667 = vmatprep.subr.bf16.mxu0 %v4322
        %6668 = vmatpush1.bf16.msra.mxu0 %v4321
        %6669 = vmatprep.subr.bf16.mxu0 %v4330
        %6670 = vmatpush1.bf16.msra.mxu0 %v4329
        %6671 = vmatprep.subr.bf16.mxu0 %v4338
        %6672 = vmatpush1.bf16.msra.mxu0 %v4337
        %6673 = vmatprep.subr.bf16.mxu0 %v4346
        %6674 = vmatpush1.bf16.msra.mxu0 %v4345
        %6675 = vmatprep.subr.bf16.mxu0 %v4354
        %6676 = vmatpush1.bf16.msra.mxu0 %v4353
        %6677 = vmatprep.subr.bf16.mxu0 %v4362
        %6678 = vmatpush1.bf16.msra.mxu0 %v4361
        %6679 = vmatprep.subr.bf16.mxu0 %v4370
        %6680 = vmatpush1.bf16.msra.mxu0 %v4369
        %6681 = vmatprep.subr.bf16.mxu0 %v4378
        %6682 = vmatpush1.bf16.msra.mxu0 %v4377
        %6683 = vmatprep.mubr.bf16.mxu0 %v1360
        %6684 = vmatmul.mubr.bf16.gmra.mrb[0].mxu0 %v1358
        %v6685 = vpop.f32.mrb[0].mxu0
        %v6686 = vadd.f32 %v6645, %v6685
        %v6687 = vpop.f32.mrb[0].mxu0
        %v6688 = vadd.f32 %v6647, %v6687
        %v6689 = vpop.f32.mrb[0].mxu0
        %v6690 = vpop.f32.mrb[0].mxu0
        %6691 = vdwg.mxu0
        %6692 = vmatprep.subr.bf16.mxu0 %v4386
        %6693 = vmatpush1.bf16.msra.mxu0 %v4385
        %6694 = vmatprep.subr.bf16.mxu0 %v4394
        %6695 = vmatpush1.bf16.msra.mxu0 %v4393
        %6696 = vmatprep.subr.bf16.mxu0 %v4402
        %6697 = vmatpush1.bf16.msra.mxu0 %v4401
        %6698 = vmatprep.subr.bf16.mxu0 %v4410
        %6699 = vmatpush1.bf16.msra.mxu0 %v4409
        %6700 = vmatprep.subr.bf16.mxu0 %v4418
        %6701 = vmatpush1.bf16.msra.mxu0 %v4417
        %6702 = vmatprep.subr.bf16.mxu0 %v4426
        %6703 = vmatpush1.bf16.msra.mxu0 %v4425
        %6704 = vmatprep.subr.bf16.mxu0 %v4434
        %6705 = vmatpush1.bf16.msra.mxu0 %v4433
        %6706 = vmatprep.subr.bf16.mxu0 %v4442
        %6707 = vmatpush1.bf16.msra.mxu0 %v4441
        %6708 = vmatprep.subr.bf16.mxu0 %v4450
        %6709 = vmatpush1.bf16.msra.mxu0 %v4449
        %6710 = vmatprep.subr.bf16.mxu0 %v4458
        %6711 = vmatpush1.bf16.msra.mxu0 %v4457
        %6712 = vmatprep.subr.bf16.mxu0 %v4466
        %6713 = vmatpush1.bf16.msra.mxu0 %v4465
        %6714 = vmatprep.subr.bf16.mxu0 %v4474
        %6715 = vmatpush1.bf16.msra.mxu0 %v4473
        %6716 = vmatprep.subr.bf16.mxu0 %v4482
        %6717 = vmatpush1.bf16.msra.mxu0 %v4481
        %6718 = vmatprep.subr.bf16.mxu0 %v4490
        %6719 = vmatpush1.bf16.msra.mxu0 %v4489
        %6720 = vmatprep.subr.bf16.mxu0 %v4498
        %6721 = vmatpush1.bf16.msra.mxu0 %v4497
        %6722 = vmatprep.subr.bf16.mxu0 %v4506
        %6723 = vmatpush1.bf16.msra.mxu0 %v4505
        %6724 = vmatprep.mubr.bf16.mxu0 %v1376
        %6725 = vmatmul.mubr.bf16.gmra.mrb[0].mxu0 %v1368
        %v6726 = vpop.f32.mrb[0].mxu0
        %v6727 = vadd.f32 %v6686, %v6726
        %v6728 = vpop.f32.mrb[0].mxu0
        %v6729 = vadd.f32 %v6688, %v6728
        %v6730 = vpop.f32.mrb[0].mxu0
        %v6731 = vpop.f32.mrb[0].mxu0
        %6732 = vdwg.mxu0
        %6733 = vmatprep.subr.bf16.mxu0 %v4514
        %6734 = vmatpush1.bf16.msra.mxu0 %v4513
        %6735 = vmatprep.subr.bf16.mxu0 %v4522
        %6736 = vmatpush1.bf16.msra.mxu0 %v4521
        %6737 = vmatprep.subr.bf16.mxu0 %v4530
        %6738 = vmatpush1.bf16.msra.mxu0 %v4529
        %6739 = vmatprep.subr.bf16.mxu0 %v4538
        %6740 = vmatpush1.bf16.msra.mxu0 %v4537
        %6741 = vmatprep.subr.bf16.mxu0 %v4546
        %6742 = vmatpush1.bf16.msra.mxu0 %v4545
        %6743 = vmatprep.subr.bf16.mxu0 %v4554
        %6744 = vmatpush1.bf16.msra.mxu0 %v4553
        %6745 = vmatprep.subr.bf16.mxu0 %v4562
        %6746 = vmatpush1.bf16.msra.mxu0 %v4561
        %6747 = vmatprep.subr.bf16.mxu0 %v4570
        %6748 = vmatpush1.bf16.msra.mxu0 %v4569
        %6749 = vmatprep.subr.bf16.mxu0 %v4578
        %6750 = vmatpush1.bf16.msra.mxu0 %v4577
        %6751 = vmatprep.subr.bf16.mxu0 %v4586
        %6752 = vmatpush1.bf16.msra.mxu0 %v4585
        %6753 = vmatprep.subr.bf16.mxu0 %v4594
        %6754 = vmatpush1.bf16.msra.mxu0 %v4593
        %6755 = vmatprep.subr.bf16.mxu0 %v4602
        %6756 = vmatpush1.bf16.msra.mxu0 %v4601
        %6757 = vmatprep.subr.bf16.mxu0 %v4610
        %6758 = vmatpush1.bf16.msra.mxu0 %v4609
        %6759 = vmatprep.subr.bf16.mxu0 %v4618
        %6760 = vmatpush1.bf16.msra.mxu0 %v4617
        %6761 = vmatprep.subr.bf16.mxu0 %v4626
        %6762 = vmatpush1.bf16.msra.mxu0 %v4625
        %6763 = vmatprep.subr.bf16.mxu0 %v4634
        %6764 = vmatpush1.bf16.msra.mxu0 %v4633
        %6765 = vmatprep.mubr.bf16.mxu0 %v1377
        %6766 = vmatmul.mubr.bf16.gmra.mrb[0].mxu0 %v1375
        %v6767 = vpop.f32.mrb[0].mxu0
        %v6768 = vadd.f32 %v6727, %v6767
        %v6769 = vpop.f32.mrb[0].mxu0
        %v6770 = vadd.f32 %v6729, %v6769
        %v6771 = vpop.f32.mrb[0].mxu0
        %v6772 = vpop.f32.mrb[0].mxu0
        %6773 = vdwg.mxu0
        %6774 = vmatprep.subr.bf16.mxu0 %v4642
        %6775 = vmatpush1.bf16.msra.mxu0 %v4641
        %6776 = vmatprep.subr.bf16.mxu0 %v4650
        %6777 = vmatpush1.bf16.msra.mxu0 %v4649
        %6778 = vmatprep.subr.bf16.mxu0 %v4658
        %6779 = vmatpush1.bf16.msra.mxu0 %v4657
        %6780 = vmatprep.subr.bf16.mxu0 %v4666
        %6781 = vmatpush1.bf16.msra.mxu0 %v4665
        %6782 = vmatprep.subr.bf16.mxu0 %v4674
        %6783 = vmatpush1.bf16.msra.mxu0 %v4673
        %6784 = vmatprep.subr.bf16.mxu0 %v4682
        %6785 = vmatpush1.bf16.msra.mxu0 %v4681
        %6786 = vmatprep.subr.bf16.mxu0 %v4690
        %6787 = vmatpush1.bf16.msra.mxu0 %v4689
        %6788 = vmatprep.subr.bf16.mxu0 %v4698
        %6789 = vmatpush1.bf16.msra.mxu0 %v4697
        %6790 = vmatprep.subr.bf16.mxu0 %v4706
        %6791 = vmatpush1.bf16.msra.mxu0 %v4705
        %6792 = vmatprep.subr.bf16.mxu0 %v4714
        %6793 = vmatpush1.bf16.msra.mxu0 %v4713
        %6794 = vmatprep.subr.bf16.mxu0 %v4722
        %6795 = vmatpush1.bf16.msra.mxu0 %v4721
        %6796 = vmatprep.subr.bf16.mxu0 %v4730
        %6797 = vmatpush1.bf16.msra.mxu0 %v4729
        %6798 = vmatprep.subr.bf16.mxu0 %v4738
        %6799 = vmatpush1.bf16.msra.mxu0 %v4737
        %6800 = vmatprep.subr.bf16.mxu0 %v4746
        %6801 = vmatpush1.bf16.msra.mxu0 %v4745
        %6802 = vmatprep.subr.bf16.mxu0 %v4754
        %6803 = vmatpush1.bf16.msra.mxu0 %v4753
        %6804 = vmatprep.subr.bf16.mxu0 %v4762
        %6805 = vmatpush1.bf16.msra.mxu0 %v4761
        %6806 = vmatprep.mubr.bf16.mxu0 %v1393
        %6807 = vmatmul.mubr.bf16.gmra.mrb[0].mxu0 %v1385
        %v6808 = vpop.f32.mrb[0].mxu0
        %v6809 = vadd.f32 %v6768, %v6808
        %v6810 = vpop.f32.mrb[0].mxu0
        %v6811 = vadd.f32 %v6770, %v6810
        %v6812 = vpop.f32.mrb[0].mxu0
        %v6813 = vpop.f32.mrb[0].mxu0
        %6814 = vdwg.mxu0
        %6815 = vmatprep.subr.bf16.mxu0 %v4770
        %6816 = vmatpush1.bf16.msra.mxu0 %v4769
        %6817 = vmatprep.subr.bf16.mxu0 %v4778
        %6818 = vmatpush1.bf16.msra.mxu0 %v4777
        %6819 = vmatprep.subr.bf16.mxu0 %v4786
        %6820 = vmatpush1.bf16.msra.mxu0 %v4785
        %6821 = vmatprep.subr.bf16.mxu0 %v4794
        %6822 = vmatpush1.bf16.msra.mxu0 %v4793
        %6823 = vmatprep.subr.bf16.mxu0 %v4802
        %6824 = vmatpush1.bf16.msra.mxu0 %v4801
        %6825 = vmatprep.subr.bf16.mxu0 %v4810
        %6826 = vmatpush1.bf16.msra.mxu0 %v4809
        %6827 = vmatprep.subr.bf16.mxu0 %v4818
        %6828 = vmatpush1.bf16.msra.mxu0 %v4817
        %6829 = vmatprep.subr.bf16.mxu0 %v4826
        %6830 = vmatpush1.bf16.msra.mxu0 %v4825
        %6831 = vmatprep.subr.bf16.mxu0 %v4834
        %6832 = vmatpush1.bf16.msra.mxu0 %v4833
        %6833 = vmatprep.subr.bf16.mxu0 %v4842
        %6834 = vmatpush1.bf16.msra.mxu0 %v4841
        %6835 = vmatprep.subr.bf16.mxu0 %v4850
        %6836 = vmatpush1.bf16.msra.mxu0 %v4849
        %6837 = vmatprep.subr.bf16.mxu0 %v4858
        %6838 = vmatpush1.bf16.msra.mxu0 %v4857
        %6839 = vmatprep.subr.bf16.mxu0 %v4866
        %6840 = vmatpush1.bf16.msra.mxu0 %v4865
        %6841 = vmatprep.subr.bf16.mxu0 %v4874
        %6842 = vmatpush1.bf16.msra.mxu0 %v4873
        %6843 = vmatprep.subr.bf16.mxu0 %v4882
        %6844 = vmatpush1.bf16.msra.mxu0 %v4881
        %6845 = vmatprep.subr.bf16.mxu0 %v4890
        %6846 = vmatpush1.bf16.msra.mxu0 %v4889
        %6847 = vmatprep.mubr.bf16.mxu0 %v1394
        %6848 = vmatmul.mubr.bf16.gmra.mrb[0].mxu0 %v1392
        %v6849 = vpop.f32.mrb[0].mxu0
        %v6850 = vadd.f32 %v6809, %v6849
        %v6851 = vpop.f32.mrb[0].mxu0
        %v6852 = vadd.f32 %v6811, %v6851
        %v6853 = vpop.f32.mrb[0].mxu0
        %v6854 = vpop.f32.mrb[0].mxu0
        %6855 = vdwg.mxu0
        %6856 = vmatprep.subr.bf16.mxu0 %v4898
        %6857 = vmatpush1.bf16.msra.mxu0 %v4897
        %6858 = vmatprep.subr.bf16.mxu0 %v4906
        %6859 = vmatpush1.bf16.msra.mxu0 %v4905
        %6860 = vmatprep.subr.bf16.mxu0 %v4914
        %6861 = vmatpush1.bf16.msra.mxu0 %v4913
        %6862 = vmatprep.subr.bf16.mxu0 %v4922
        %6863 = vmatpush1.bf16.msra.mxu0 %v4921
        %6864 = vmatprep.subr.bf16.mxu0 %v4930
        %6865 = vmatpush1.bf16.msra.mxu0 %v4929
        %6866 = vmatprep.subr.bf16.mxu0 %v4938
        %6867 = vmatpush1.bf16.msra.mxu0 %v4937
        %6868 = vmatprep.subr.bf16.mxu0 %v4946
        %6869 = vmatpush1.bf16.msra.mxu0 %v4945
        %6870 = vmatprep.subr.bf16.mxu0 %v4954
        %6871 = vmatpush1.bf16.msra.mxu0 %v4953
        %6872 = vmatprep.subr.bf16.mxu0 %v4962
        %6873 = vmatpush1.bf16.msra.mxu0 %v4961
        %6874 = vmatprep.subr.bf16.mxu0 %v4970
        %6875 = vmatpush1.bf16.msra.mxu0 %v4969
        %6876 = vmatprep.subr.bf16.mxu0 %v4978
        %6877 = vmatpush1.bf16.msra.mxu0 %v4977
        %6878 = vmatprep.subr.bf16.mxu0 %v4986
        %6879 = vmatpush1.bf16.msra.mxu0 %v4985
        %6880 = vmatprep.subr.bf16.mxu0 %v4994
        %6881 = vmatpush1.bf16.msra.mxu0 %v4993
        %6882 = vmatprep.subr.bf16.mxu0 %v5002
        %6883 = vmatpush1.bf16.msra.mxu0 %v5001
        %6884 = vmatprep.subr.bf16.mxu0 %v5010
        %6885 = vmatpush1.bf16.msra.mxu0 %v5009
        %6886 = vmatprep.subr.bf16.mxu0 %v5018
        %6887 = vmatpush1.bf16.msra.mxu0 %v5017
        %6888 = vmatprep.mubr.bf16.mxu0 %v1410
        %6889 = vmatmul.mubr.bf16.gmra.mrb[0].mxu0 %v1402
        %v6890 = vpop.f32.mrb[0].mxu0
        %v6891 = vadd.f32 %v6850, %v6890
        %v6892 = vpop.f32.mrb[0].mxu0
        %v6893 = vadd.f32 %v6852, %v6892
        %v6894 = vpop.f32.mrb[0].mxu0
        %v6895 = vpop.f32.mrb[0].mxu0
        %6896 = vdwg.mxu0
        %6897 = vmatprep.subr.bf16.mxu0 %v5946
        %6898 = vmatpush1.bf16.msra.mxu0 %v5943
        %6899 = vmatprep.subr.bf16.mxu0 0
        %6900 = vmatpush1.bf16.msra.mxu0 0
        %6901 = vmatprep.subr.bf16.mxu0 0
        %6902 = vmatpush1.bf16.msra.mxu0 0
        %6903 = vmatprep.subr.bf16.mxu0 0
        %6904 = vmatpush1.bf16.msra.mxu0 0
        %6905 = vmatprep.subr.bf16.mxu0 0
        %6906 = vmatpush1.bf16.msra.mxu0 0
        %6907 = vmatprep.subr.bf16.mxu0 0
        %6908 = vmatpush1.bf16.msra.mxu0 0
        %6909 = vmatprep.subr.bf16.mxu0 0
        %6910 = vmatpush1.bf16.msra.mxu0 0
        %6911 = vmatprep.subr.bf16.mxu0 0
        %6912 = vmatpush1.bf16.msra.mxu0 0
        %6913 = vmatprep.subr.bf16.mxu0 0
        %6914 = vmatpush1.bf16.msra.mxu0 0
        %6915 = vmatprep.subr.bf16.mxu0 0
        %6916 = vmatpush1.bf16.msra.mxu0 0
        %6917 = vmatprep.subr.bf16.mxu0 0
        %6918 = vmatpush1.bf16.msra.mxu0 0
        %6919 = vmatprep.subr.bf16.mxu0 0
        %6920 = vmatpush1.bf16.msra.mxu0 0
        %6921 = vmatprep.subr.bf16.mxu0 0
        %6922 = vmatpush1.bf16.msra.mxu0 0
        %6923 = vmatprep.subr.bf16.mxu0 0
        %6924 = vmatpush1.bf16.msra.mxu0 0
        %6925 = vmatprep.subr.bf16.mxu0 0
        %6926 = vmatpush1.bf16.msra.mxu0 0
        %6927 = vmatprep.subr.bf16.mxu0 0
        %6928 = vmatpush1.bf16.msra.mxu0 0
        %6929 = vmatprep.mubr.bf16.mxu0 0
        %6930 = vmatmul.mubr.bf16.gmra.mrb[0].mxu0 %v5927
        %v6931 = vpop.f32.mrb[0].mxu0
        %v6932 = vadd.f32 %v6891, %v6931
        %v6933 = vpop.f32.mrb[0].mxu0
        %v6934 = vadd.f32 %v6893, %v6933
        %v6935 = vpop.f32.mrb[0].mxu0
        %v6936 = vpop.f32.mrb[0].mxu0
        %6937 = vdwg.mxu0
        %6938 = vmatprep.subr.bf16.mxu0 %v4132
        %6939 = vmatpush1.bf16.msra.mxu0 %v4131
        %6940 = vmatprep.subr.bf16.mxu0 %v4140
        %6941 = vmatpush1.bf16.msra.mxu0 %v4139
        %6942 = vmatprep.subr.bf16.mxu0 %v4148
        %6943 = vmatpush1.bf16.msra.mxu0 %v4147
        %6944 = vmatprep.subr.bf16.mxu0 %v4156
        %6945 = vmatpush1.bf16.msra.mxu0 %v4155
        %6946 = vmatprep.subr.bf16.mxu0 %v4164
        %6947 = vmatpush1.bf16.msra.mxu0 %v4163
        %6948 = vmatprep.subr.bf16.mxu0 %v4172
        %6949 = vmatpush1.bf16.msra.mxu0 %v4171
        %6950 = vmatprep.subr.bf16.mxu0 %v4180
        %6951 = vmatpush1.bf16.msra.mxu0 %v4179
        %6952 = vmatprep.subr.bf16.mxu0 %v4188
        %6953 = vmatpush1.bf16.msra.mxu0 %v4187
        %6954 = vmatprep.subr.bf16.mxu0 %v4196
        %6955 = vmatpush1.bf16.msra.mxu0 %v4195
        %6956 = vmatprep.subr.bf16.mxu0 %v4204
        %6957 = vmatpush1.bf16.msra.mxu0 %v4203
        %6958 = vmatprep.subr.bf16.mxu0 %v4212
        %6959 = vmatpush1.bf16.msra.mxu0 %v4211
        %6960 = vmatprep.subr.bf16.mxu0 %v4220
        %6961 = vmatpush1.bf16.msra.mxu0 %v4219
        %6962 = vmatprep.subr.bf16.mxu0 %v4228
        %6963 = vmatpush1.bf16.msra.mxu0 %v4227
        %6964 = vmatprep.subr.bf16.mxu0 %v4236
        %6965 = vmatpush1.bf16.msra.mxu0 %v4235
        %6966 = vmatprep.subr.bf16.mxu0 %v4244
        %6967 = vmatpush1.bf16.msra.mxu0 %v4243
        %6968 = vmatprep.subr.bf16.mxu0 %v4252
        %6969 = vmatpush1.bf16.msra.mxu0 %v4251
        %6970 = vmatprep.mubr.bf16.mxu0 %v1359
        %6971 = vmatmul.mubr.bf16.gmra.mrb[0].mxu0 %v1351
        %v6972 = vpop.f32.mrb[0].mxu0
        %v6973 = vadd.f32 0.0, %v6972
        %v6974 = vpop.f32.mrb[0].mxu0
        %v6975 = vadd.f32 0.0, %v6974
        %v6976 = vpop.f32.mrb[0].mxu0
        %v6977 = vpop.f32.mrb[0].mxu0
        %6978 = vdwg.mxu0
        %6979 = vmatprep.subr.bf16.mxu0 %v4260
        %6980 = vmatpush1.bf16.msra.mxu0 %v4259
        %6981 = vmatprep.subr.bf16.mxu0 %v4268
        %6982 = vmatpush1.bf16.msra.mxu0 %v4267
        %6983 = vmatprep.subr.bf16.mxu0 %v4276
        %6984 = vmatpush1.bf16.msra.mxu0 %v4275
        %6985 = vmatprep.subr.bf16.mxu0 %v4284
        %6986 = vmatpush1.bf16.msra.mxu0 %v4283
        %6987 = vmatprep.subr.bf16.mxu0 %v4292
        %6988 = vmatpush1.bf16.msra.mxu0 %v4291
        %6989 = vmatprep.subr.bf16.mxu0 %v4300
        %6990 = vmatpush1.bf16.msra.mxu0 %v4299
        %6991 = vmatprep.subr.bf16.mxu0 %v4308
        %6992 = vmatpush1.bf16.msra.mxu0 %v4307
        %6993 = vmatprep.subr.bf16.mxu0 %v4316
        %6994 = vmatpush1.bf16.msra.mxu0 %v4315
        %6995 = vmatprep.subr.bf16.mxu0 %v4324
        %6996 = vmatpush1.bf16.msra.mxu0 %v4323
        %6997 = vmatprep.subr.bf16.mxu0 %v4332
        %6998 = vmatpush1.bf16.msra.mxu0 %v4331
        %6999 = vmatprep.subr.bf16.mxu0 %v4340
        %7000 = vmatpush1.bf16.msra.mxu0 %v4339
        %7001 = vmatprep.subr.bf16.mxu0 %v4348
        %7002 = vmatpush1.bf16.msra.mxu0 %v4347
        %7003 = vmatprep.subr.bf16.mxu0 %v4356
        %7004 = vmatpush1.bf16.msra.mxu0 %v4355
        %7005 = vmatprep.subr.bf16.mxu0 %v4364
        %7006 = vmatpush1.bf16.msra.mxu0 %v4363
        %7007 = vmatprep.subr.bf16.mxu0 %v4372
        %7008 = vmatpush1.bf16.msra.mxu0 %v4371
        %7009 = vmatprep.subr.bf16.mxu0 %v4380
        %7010 = vmatpush1.bf16.msra.mxu0 %v4379
        %7011 = vmatprep.mubr.bf16.mxu0 %v1360
        %7012 = vmatmul.mubr.bf16.gmra.mrb[0].mxu0 %v1358
        %v7013 = vpop.f32.mrb[0].mxu0
        %v7014 = vadd.f32 %v6973, %v7013
        %v7015 = vpop.f32.mrb[0].mxu0
        %v7016 = vadd.f32 %v6975, %v7015
        %v7017 = vpop.f32.mrb[0].mxu0
        %v7018 = vpop.f32.mrb[0].mxu0
        %7019 = vdwg.mxu0
        %7020 = vmatprep.subr.bf16.mxu0 %v4388
        %7021 = vmatpush1.bf16.msra.mxu0 %v4387
        %7022 = vmatprep.subr.bf16.mxu0 %v4396
        %7023 = vmatpush1.bf16.msra.mxu0 %v4395
        %7024 = vmatprep.subr.bf16.mxu0 %v4404
        %7025 = vmatpush1.bf16.msra.mxu0 %v4403
        %7026 = vmatprep.subr.bf16.mxu0 %v4412
        %7027 = vmatpush1.bf16.msra.mxu0 %v4411
        %7028 = vmatprep.subr.bf16.mxu0 %v4420
        %7029 = vmatpush1.bf16.msra.mxu0 %v4419
        %7030 = vmatprep.subr.bf16.mxu0 %v4428
        %7031 = vmatpush1.bf16.msra.mxu0 %v4427
        %7032 = vmatprep.subr.bf16.mxu0 %v4436
        %7033 = vmatpush1.bf16.msra.mxu0 %v4435
        %7034 = vmatprep.subr.bf16.mxu0 %v4444
        %7035 = vmatpush1.bf16.msra.mxu0 %v4443
        %7036 = vmatprep.subr.bf16.mxu0 %v4452
        %7037 = vmatpush1.bf16.msra.mxu0 %v4451
        %7038 = vmatprep.subr.bf16.mxu0 %v4460
        %7039 = vmatpush1.bf16.msra.mxu0 %v4459
        %7040 = vmatprep.subr.bf16.mxu0 %v4468
        %7041 = vmatpush1.bf16.msra.mxu0 %v4467
        %7042 = vmatprep.subr.bf16.mxu0 %v4476
        %7043 = vmatpush1.bf16.msra.mxu0 %v4475
        %7044 = vmatprep.subr.bf16.mxu0 %v4484
        %7045 = vmatpush1.bf16.msra.mxu0 %v4483
        %7046 = vmatprep.subr.bf16.mxu0 %v4492
        %7047 = vmatpush1.bf16.msra.mxu0 %v4491
        %7048 = vmatprep.subr.bf16.mxu0 %v4500
        %7049 = vmatpush1.bf16.msra.mxu0 %v4499
        %7050 = vmatprep.subr.bf16.mxu0 %v4508
        %7051 = vmatpush1.bf16.msra.mxu0 %v4507
        %7052 = vmatprep.mubr.bf16.mxu0 %v1376
        %7053 = vmatmul.mubr.bf16.gmra.mrb[0].mxu0 %v1368
        %v7054 = vpop.f32.mrb[0].mxu0
        %v7055 = vadd.f32 %v7014, %v7054
        %v7056 = vpop.f32.mrb[0].mxu0
        %v7057 = vadd.f32 %v7016, %v7056
        %v7058 = vpop.f32.mrb[0].mxu0
        %v7059 = vpop.f32.mrb[0].mxu0
        %7060 = vdwg.mxu0
        %7061 = vmatprep.subr.bf16.mxu0 %v4516
        %7062 = vmatpush1.bf16.msra.mxu0 %v4515
        %7063 = vmatprep.subr.bf16.mxu0 %v4524
        %7064 = vmatpush1.bf16.msra.mxu0 %v4523
        %7065 = vmatprep.subr.bf16.mxu0 %v4532
        %7066 = vmatpush1.bf16.msra.mxu0 %v4531
        %7067 = vmatprep.subr.bf16.mxu0 %v4540
        %7068 = vmatpush1.bf16.msra.mxu0 %v4539
        %7069 = vmatprep.subr.bf16.mxu0 %v4548
        %7070 = vmatpush1.bf16.msra.mxu0 %v4547
        %7071 = vmatprep.subr.bf16.mxu0 %v4556
        %7072 = vmatpush1.bf16.msra.mxu0 %v4555
        %7073 = vmatprep.subr.bf16.mxu0 %v4564
        %7074 = vmatpush1.bf16.msra.mxu0 %v4563
        %7075 = vmatprep.subr.bf16.mxu0 %v4572
        %7076 = vmatpush1.bf16.msra.mxu0 %v4571
        %7077 = vmatprep.subr.bf16.mxu0 %v4580
        %7078 = vmatpush1.bf16.msra.mxu0 %v4579
        %7079 = vmatprep.subr.bf16.mxu0 %v4588
        %7080 = vmatpush1.bf16.msra.mxu0 %v4587
        %7081 = vmatprep.subr.bf16.mxu0 %v4596
        %7082 = vmatpush1.bf16.msra.mxu0 %v4595
        %7083 = vmatprep.subr.bf16.mxu0 %v4604
        %7084 = vmatpush1.bf16.msra.mxu0 %v4603
        %7085 = vmatprep.subr.bf16.mxu0 %v4612
        %7086 = vmatpush1.bf16.msra.mxu0 %v4611
        %7087 = vmatprep.subr.bf16.mxu0 %v4620
        %7088 = vmatpush1.bf16.msra.mxu0 %v4619
        %7089 = vmatprep.subr.bf16.mxu0 %v4628
        %7090 = vmatpush1.bf16.msra.mxu0 %v4627
        %7091 = vmatprep.subr.bf16.mxu0 %v4636
        %7092 = vmatpush1.bf16.msra.mxu0 %v4635
        %7093 = vmatprep.mubr.bf16.mxu0 %v1377
        %7094 = vmatmul.mubr.bf16.gmra.mrb[0].mxu0 %v1375
        %v7095 = vpop.f32.mrb[0].mxu0
        %v7096 = vadd.f32 %v7055, %v7095
        %v7097 = vpop.f32.mrb[0].mxu0
        %v7098 = vadd.f32 %v7057, %v7097
        %v7099 = vpop.f32.mrb[0].mxu0
        %v7100 = vpop.f32.mrb[0].mxu0
        %7101 = vdwg.mxu0
        %7102 = vmatprep.subr.bf16.mxu0 %v4644
        %7103 = vmatpush1.bf16.msra.mxu0 %v4643
        %7104 = vmatprep.subr.bf16.mxu0 %v4652
        %7105 = vmatpush1.bf16.msra.mxu0 %v4651
        %7106 = vmatprep.subr.bf16.mxu0 %v4660
        %7107 = vmatpush1.bf16.msra.mxu0 %v4659
        %7108 = vmatprep.subr.bf16.mxu0 %v4668
        %7109 = vmatpush1.bf16.msra.mxu0 %v4667
        %7110 = vmatprep.subr.bf16.mxu0 %v4676
        %7111 = vmatpush1.bf16.msra.mxu0 %v4675
        %7112 = vmatprep.subr.bf16.mxu0 %v4684
        %7113 = vmatpush1.bf16.msra.mxu0 %v4683
        %7114 = vmatprep.subr.bf16.mxu0 %v4692
        %7115 = vmatpush1.bf16.msra.mxu0 %v4691
        %7116 = vmatprep.subr.bf16.mxu0 %v4700
        %7117 = vmatpush1.bf16.msra.mxu0 %v4699
        %7118 = vmatprep.subr.bf16.mxu0 %v4708
        %7119 = vmatpush1.bf16.msra.mxu0 %v4707
        %7120 = vmatprep.subr.bf16.mxu0 %v4716
        %7121 = vmatpush1.bf16.msra.mxu0 %v4715
        %7122 = vmatprep.subr.bf16.mxu0 %v4724
        %7123 = vmatpush1.bf16.msra.mxu0 %v4723
        %7124 = vmatprep.subr.bf16.mxu0 %v4732
        %7125 = vmatpush1.bf16.msra.mxu0 %v4731
        %7126 = vmatprep.subr.bf16.mxu0 %v4740
        %7127 = vmatpush1.bf16.msra.mxu0 %v4739
        %7128 = vmatprep.subr.bf16.mxu0 %v4748
        %7129 = vmatpush1.bf16.msra.mxu0 %v4747
        %7130 = vmatprep.subr.bf16.mxu0 %v4756
        %7131 = vmatpush1.bf16.msra.mxu0 %v4755
        %7132 = vmatprep.subr.bf16.mxu0 %v4764
        %7133 = vmatpush1.bf16.msra.mxu0 %v4763
        %7134 = vmatprep.mubr.bf16.mxu0 %v1393
        %7135 = vmatmul.mubr.bf16.gmra.mrb[0].mxu0 %v1385
        %v7136 = vpop.f32.mrb[0].mxu0
        %v7137 = vadd.f32 %v7096, %v7136
        %v7138 = vpop.f32.mrb[0].mxu0
        %v7139 = vadd.f32 %v7098, %v7138
        %v7140 = vpop.f32.mrb[0].mxu0
        %v7141 = vpop.f32.mrb[0].mxu0
        %7142 = vdwg.mxu0
        %7143 = vmatprep.subr.bf16.mxu0 %v4772
        %7144 = vmatpush1.bf16.msra.mxu0 %v4771
        %7145 = vmatprep.subr.bf16.mxu0 %v4780
        %7146 = vmatpush1.bf16.msra.mxu0 %v4779
        %7147 = vmatprep.subr.bf16.mxu0 %v4788
        %7148 = vmatpush1.bf16.msra.mxu0 %v4787
        %7149 = vmatprep.subr.bf16.mxu0 %v4796
        %7150 = vmatpush1.bf16.msra.mxu0 %v4795
        %7151 = vmatprep.subr.bf16.mxu0 %v4804
        %7152 = vmatpush1.bf16.msra.mxu0 %v4803
        %7153 = vmatprep.subr.bf16.mxu0 %v4812
        %7154 = vmatpush1.bf16.msra.mxu0 %v4811
        %7155 = vmatprep.subr.bf16.mxu0 %v4820
        %7156 = vmatpush1.bf16.msra.mxu0 %v4819
        %7157 = vmatprep.subr.bf16.mxu0 %v4828
        %7158 = vmatpush1.bf16.msra.mxu0 %v4827
        %7159 = vmatprep.subr.bf16.mxu0 %v4836
        %7160 = vmatpush1.bf16.msra.mxu0 %v4835
        %7161 = vmatprep.subr.bf16.mxu0 %v4844
        %7162 = vmatpush1.bf16.msra.mxu0 %v4843
        %7163 = vmatprep.subr.bf16.mxu0 %v4852
        %7164 = vmatpush1.bf16.msra.mxu0 %v4851
        %7165 = vmatprep.subr.bf16.mxu0 %v4860
        %7166 = vmatpush1.bf16.msra.mxu0 %v4859
        %7167 = vmatprep.subr.bf16.mxu0 %v4868
        %7168 = vmatpush1.bf16.msra.mxu0 %v4867
        %7169 = vmatprep.subr.bf16.mxu0 %v4876
        %7170 = vmatpush1.bf16.msra.mxu0 %v4875
        %7171 = vmatprep.subr.bf16.mxu0 %v4884
        %7172 = vmatpush1.bf16.msra.mxu0 %v4883
        %7173 = vmatprep.subr.bf16.mxu0 %v4892
        %7174 = vmatpush1.bf16.msra.mxu0 %v4891
        %7175 = vmatprep.mubr.bf16.mxu0 %v1394
        %7176 = vmatmul.mubr.bf16.gmra.mrb[0].mxu0 %v1392
        %v7177 = vpop.f32.mrb[0].mxu0
        %v7178 = vadd.f32 %v7137, %v7177
        %v7179 = vpop.f32.mrb[0].mxu0
        %v7180 = vadd.f32 %v7139, %v7179
        %v7181 = vpop.f32.mrb[0].mxu0
        %v7182 = vpop.f32.mrb[0].mxu0
        %7183 = vdwg.mxu0
        %7184 = vmatprep.subr.bf16.mxu0 %v4900
        %7185 = vmatpush1.bf16.msra.mxu0 %v4899
        %7186 = vmatprep.subr.bf16.mxu0 %v4908
        %7187 = vmatpush1.bf16.msra.mxu0 %v4907
        %7188 = vmatprep.subr.bf16.mxu0 %v4916
        %7189 = vmatpush1.bf16.msra.mxu0 %v4915
        %7190 = vmatprep.subr.bf16.mxu0 %v4924
        %7191 = vmatpush1.bf16.msra.mxu0 %v4923
        %7192 = vmatprep.subr.bf16.mxu0 %v4932
        %7193 = vmatpush1.bf16.msra.mxu0 %v4931
        %7194 = vmatprep.subr.bf16.mxu0 %v4940
        %7195 = vmatpush1.bf16.msra.mxu0 %v4939
        %7196 = vmatprep.subr.bf16.mxu0 %v4948
        %7197 = vmatpush1.bf16.msra.mxu0 %v4947
        %7198 = vmatprep.subr.bf16.mxu0 %v4956
        %7199 = vmatpush1.bf16.msra.mxu0 %v4955
        %7200 = vmatprep.subr.bf16.mxu0 %v4964
        %7201 = vmatpush1.bf16.msra.mxu0 %v4963
        %7202 = vmatprep.subr.bf16.mxu0 %v4972
        %7203 = vmatpush1.bf16.msra.mxu0 %v4971
        %7204 = vmatprep.subr.bf16.mxu0 %v4980
        %7205 = vmatpush1.bf16.msra.mxu0 %v4979
        %7206 = vmatprep.subr.bf16.mxu0 %v4988
        %7207 = vmatpush1.bf16.msra.mxu0 %v4987
        %7208 = vmatprep.subr.bf16.mxu0 %v4996
        %7209 = vmatpush1.bf16.msra.mxu0 %v4995
        %7210 = vmatprep.subr.bf16.mxu0 %v5004
        %7211 = vmatpush1.bf16.msra.mxu0 %v5003
        %7212 = vmatprep.subr.bf16.mxu0 %v5012
        %7213 = vmatpush1.bf16.msra.mxu0 %v5011
        %7214 = vmatprep.subr.bf16.mxu0 %v5020
        %7215 = vmatpush1.bf16.msra.mxu0 %v5019
        %7216 = vmatprep.mubr.bf16.mxu0 %v1410
        %7217 = vmatmul.mubr.bf16.gmra.mrb[0].mxu0 %v1402
        %v7218 = vpop.f32.mrb[0].mxu0
        %v7219 = vadd.f32 %v7178, %v7218
        %v7220 = vpop.f32.mrb[0].mxu0
        %v7221 = vadd.f32 %v7180, %v7220
        %v7222 = vpop.f32.mrb[0].mxu0
        %v7223 = vpop.f32.mrb[0].mxu0
        %7224 = vdwg.mxu0
        %7225 = vmatprep.subr.bf16.mxu0 %v5952
        %7226 = vmatpush1.bf16.msra.mxu0 %v5949
        %7227 = vmatprep.subr.bf16.mxu0 0
        %7228 = vmatpush1.bf16.msra.mxu0 0
        %7229 = vmatprep.subr.bf16.mxu0 0
        %7230 = vmatpush1.bf16.msra.mxu0 0
        %7231 = vmatprep.subr.bf16.mxu0 0
        %7232 = vmatpush1.bf16.msra.mxu0 0
        %7233 = vmatprep.subr.bf16.mxu0 0
        %7234 = vmatpush1.bf16.msra.mxu0 0
        %7235 = vmatprep.subr.bf16.mxu0 0
        %7236 = vmatpush1.bf16.msra.mxu0 0
        %7237 = vmatprep.subr.bf16.mxu0 0
        %7238 = vmatpush1.bf16.msra.mxu0 0
        %7239 = vmatprep.subr.bf16.mxu0 0
        %7240 = vmatpush1.bf16.msra.mxu0 0
        %7241 = vmatprep.subr.bf16.mxu0 0
        %7242 = vmatpush1.bf16.msra.mxu0 0
        %7243 = vmatprep.subr.bf16.mxu0 0
        %7244 = vmatpush1.bf16.msra.mxu0 0
        %7245 = vmatprep.subr.bf16.mxu0 0
        %7246 = vmatpush1.bf16.msra.mxu0 0
        %7247 = vmatprep.subr.bf16.mxu0 0
        %7248 = vmatpush1.bf16.msra.mxu0 0
        %7249 = vmatprep.subr.bf16.mxu0 0
        %7250 = vmatpush1.bf16.msra.mxu0 0
        %7251 = vmatprep.subr.bf16.mxu0 0
        %7252 = vmatpush1.bf16.msra.mxu0 0
        %7253 = vmatprep.subr.bf16.mxu0 0
        %7254 = vmatpush1.bf16.msra.mxu0 0
        %7255 = vmatprep.subr.bf16.mxu0 0
        %7256 = vmatpush1.bf16.msra.mxu0 0
        %7257 = vmatprep.mubr.bf16.mxu0 0
        %7258 = vmatmul.mubr.bf16.gmra.mrb[0].mxu0 %v5927
        %v7259 = vpop.f32.mrb[0].mxu0
        %v7260 = vadd.f32 %v7219, %v7259
        %v7261 = vpop.f32.mrb[0].mxu0
        %v7262 = vadd.f32 %v7221, %v7261
        %v7263 = vpop.f32.mrb[0].mxu0
        %v7264 = vpop.f32.mrb[0].mxu0
        %7265 = vdwg.mxu0
        %v7266 = vsel %vm5929, %v6276, 0.0
        %v7267 = vrot.slane %v7266, 4
        %v7268 = vadd.f32 %v7266, %v7267
        %v7269 = vrot.slane %v7268, 2
        %v7270 = vadd.f32 %v7268, %v7269
        %v7271 = vrot.slane %v7270, 1
        %v7272 = vadd.f32 %v7270, %v7271
        %v7273 = vsel %vm5929, %v6278, 0.0
        %v7274 = vrot.slane %v7273, 4
        %v7275 = vadd.f32 %v7273, %v7274
        %v7276 = vrot.slane %v7275, 2
        %v7277 = vadd.f32 %v7275, %v7276
        %v7278 = vrot.slane %v7277, 1
        %v7279 = vadd.f32 %v7277, %v7278
        %v7280 = vsel %vm5929, %v6604, 0.0
        %v7281 = vrot.slane %v7280, 4
        %v7282 = vadd.f32 %v7280, %v7281
        %v7283 = vrot.slane %v7282, 2
        %v7284 = vadd.f32 %v7282, %v7283
        %v7285 = vrot.slane %v7284, 1
        %v7286 = vadd.f32 %v7284, %v7285
        %v7287 = vsel %vm5929, %v6606, 0.0
        %v7288 = vrot.slane %v7287, 4
        %v7289 = vadd.f32 %v7287, %v7288
        %v7290 = vrot.slane %v7289, 2
        %v7291 = vadd.f32 %v7289, %v7290
        %v7292 = vrot.slane %v7291, 1
        %v7293 = vadd.f32 %v7291, %v7292
        %v7294 = vsel %vm5929, %v6932, 0.0
        %v7295 = vrot.slane %v7294, 4
        %v7296 = vadd.f32 %v7294, %v7295
        %v7297 = vrot.slane %v7296, 2
        %v7298 = vadd.f32 %v7296, %v7297
        %v7299 = vrot.slane %v7298, 1
        %v7300 = vadd.f32 %v7298, %v7299
        %v7301 = vsel %vm5929, %v6934, 0.0
        %v7302 = vrot.slane %v7301, 4
        %v7303 = vadd.f32 %v7301, %v7302
        %v7304 = vrot.slane %v7303, 2
        %v7305 = vadd.f32 %v7303, %v7304
        %v7306 = vrot.slane %v7305, 1
        %v7307 = vadd.f32 %v7305, %v7306
        %v7308 = vsel %vm5929, %v7260, 0.0
        %v7309 = vrot.slane %v7308, 4
        %v7310 = vadd.f32 %v7308, %v7309
        %v7311 = vrot.slane %v7310, 2
        %v7312 = vadd.f32 %v7310, %v7311
        %v7313 = vrot.slane %v7312, 1
        %v7314 = vadd.f32 %v7312, %v7313
        %v7315 = vsel %vm5929, %v7262, 0.0
        %v7316 = vrot.slane %v7315, 4
        %v7317 = vadd.f32 %v7315, %v7316
        %v7318 = vrot.slane %v7317, 2
        %v7319 = vadd.f32 %v7317, %v7318
        %v7320 = vrot.slane %v7319, 1
        %v7321 = vadd.f32 %v7319, %v7320
        %v7322 = vrcp.pop 4.0
        %v7323 = vmul.f32 %v7272, %v7322
        %v7324 = vmul.f32 %v7279, %v7322
        %v7325 = vmul.f32 %v7286, %v7322
        %v7326 = vmul.f32 %v7293, %v7322
        %v7327 = vmul.f32 %v7300, %v7322
        %v7328 = vmul.f32 %v7307, %v7322
        %v7329 = vmul.f32 %v7314, %v7322
        %v7330 = vmul.f32 %v7321, %v7322
        %v7331 = vsub.f32 %v6276, %v7323
        %v7332 = vsub.f32 %v6278, %v7324
        %v7333 = vsub.f32 %v6604, %v7325
        %v7334 = vsub.f32 %v6606, %v7326
        %v7335 = vsub.f32 %v6932, %v7327
        %v7336 = vsub.f32 %v6934, %v7328
        %v7337 = vsub.f32 %v7260, %v7329
        %v7338 = vsub.f32 %v7262, %v7330
        %v7339 = vmul.f32 %v7331, %v7331
        %v7340 = vmul.f32 %v7332, %v7332
        %v7341 = vmul.f32 %v7333, %v7333
        %v7342 = vmul.f32 %v7334, %v7334
        %v7343 = vmul.f32 %v7335, %v7335
        %v7344 = vmul.f32 %v7336, %v7336
        %v7345 = vmul.f32 %v7337, %v7337
        %v7346 = vmul.f32 %v7338, %v7338
        %v7347 = vsel %vm5929, %v7339, 0.0
        %v7348 = vrot.slane %v7347, 4
        %v7349 = vadd.f32 %v7347, %v7348
        %v7350 = vrot.slane %v7349, 2
        %v7351 = vadd.f32 %v7349, %v7350
        %v7352 = vrot.slane %v7351, 1
        %v7353 = vadd.f32 %v7351, %v7352
        %v7354 = vsel %vm5929, %v7340, 0.0
        %v7355 = vrot.slane %v7354, 4
        %v7356 = vadd.f32 %v7354, %v7355
        %v7357 = vrot.slane %v7356, 2
        %v7358 = vadd.f32 %v7356, %v7357
        %v7359 = vrot.slane %v7358, 1
        %v7360 = vadd.f32 %v7358, %v7359
        %v7361 = vsel %vm5929, %v7341, 0.0
        %v7362 = vrot.slane %v7361, 4
        %v7363 = vadd.f32 %v7361, %v7362
        %v7364 = vrot.slane %v7363, 2
        %v7365 = vadd.f32 %v7363, %v7364
        %v7366 = vrot.slane %v7365, 1
        %v7367 = vadd.f32 %v7365, %v7366
        %v7368 = vsel %vm5929, %v7342, 0.0
        %v7369 = vrot.slane %v7368, 4
        %v7370 = vadd.f32 %v7368, %v7369
        %v7371 = vrot.slane %v7370, 2
        %v7372 = vadd.f32 %v7370, %v7371
        %v7373 = vrot.slane %v7372, 1
        %v7374 = vadd.f32 %v7372, %v7373
        %v7375 = vsel %vm5929, %v7343, 0.0
        %v7376 = vrot.slane %v7375, 4
        %v7377 = vadd.f32 %v7375, %v7376
        %v7378 = vrot.slane %v7377, 2
        %v7379 = vadd.f32 %v7377, %v7378
        %v7380 = vrot.slane %v7379, 1
        %v7381 = vadd.f32 %v7379, %v7380
        %v7382 = vsel %vm5929, %v7344, 0.0
        %v7383 = vrot.slane %v7382, 4
        %v7384 = vadd.f32 %v7382, %v7383
        %v7385 = vrot.slane %v7384, 2
        %v7386 = vadd.f32 %v7384, %v7385
        %v7387 = vrot.slane %v7386, 1
        %v7388 = vadd.f32 %v7386, %v7387
        %v7389 = vsel %vm5929, %v7345, 0.0
        %v7390 = vrot.slane %v7389, 4
        %v7391 = vadd.f32 %v7389, %v7390
        %v7392 = vrot.slane %v7391, 2
        %v7393 = vadd.f32 %v7391, %v7392
        %v7394 = vrot.slane %v7393, 1
        %v7395 = vadd.f32 %v7393, %v7394
        %v7396 = vsel %vm5929, %v7346, 0.0
        %v7397 = vrot.slane %v7396, 4
        %v7398 = vadd.f32 %v7396, %v7397
        %v7399 = vrot.slane %v7398, 2
        %v7400 = vadd.f32 %v7398, %v7399
        %v7401 = vrot.slane %v7400, 1
        %v7402 = vadd.f32 %v7400, %v7401
        %v7403 = vmul.f32 %v7353, %v7322
        %v7404 = vmul.f32 %v7360, %v7322
        %v7405 = vmul.f32 %v7367, %v7322
        %v7406 = vmul.f32 %v7374, %v7322
        %v7407 = vmul.f32 %v7381, %v7322
        %v7408 = vmul.f32 %v7388, %v7322
        %v7409 = vmul.f32 %v7395, %v7322
        %v7410 = vmul.f32 %v7402, %v7322
        %v7411 = vadd.f32 %v7403, 1e-05
        %v7412 = vadd.f32 %v7404, 1e-05
        %v7413 = vadd.f32 %v7405, 1e-05
        %v7414 = vadd.f32 %v7406, 1e-05
        %v7415 = vadd.f32 %v7407, 1e-05
        %v7416 = vadd.f32 %v7408, 1e-05
        %v7417 = vadd.f32 %v7409, 1e-05
        %v7418 = vadd.f32 %v7410, 1e-05
        %v7419 = vrsqrt.pop %v7411
        %v7420 = vrsqrt.pop %v7412
        %v7421 = vrsqrt.pop %v7413
        %v7422 = vrsqrt.pop %v7414
        %v7423 = vrsqrt.pop %v7415
        %v7424 = vrsqrt.pop %v7416
        %v7425 = vrsqrt.pop %v7417
        %v7426 = vrsqrt.pop %v7418
        %v7427 = vmul.f32 %v7331, %v7419
        %v7428 = vmul.f32 %v7332, %v7420
        %v7429 = vmul.f32 %v7333, %v7421
        %v7430 = vmul.f32 %v7334, %v7422
        %v7431 = vmul.f32 %v7335, %v7423
        %v7432 = vmul.f32 %v7336, %v7424
        %v7433 = vmul.f32 %v7337, %v7425
        %v7434 = vmul.f32 %v7338, %v7426
        %v7435 = vld [vmem:[%s356] sm:$0xff]
        %v7437 = vlaneseq
        %v7438 = vshrl.u32 %v7437, 7
        %v7439 = vsub.s32 0, %v7438
        %v7440 = vrot.slane %v7435, %v7439
        %v7441 = vlaneseq
        %v7442 = vshrl.u32 %v7441, 7
        %v7443 = vsub.s32 1, %v7442
        %v7444 = vrot.slane %v7435, %v7443
        %v7445 = vlaneseq
        %v7446 = vshrl.u32 %v7445, 7
        %v7447 = vsub.s32 2, %v7446
        %v7448 = vrot.slane %v7435, %v7447
        %v7449 = vlaneseq
        %v7450 = vshrl.u32 %v7449, 7
        %v7451 = vsub.s32 3, %v7450
        %v7452 = vrot.slane %v7435, %v7451
        %v7453 = vlaneseq
        %v7454 = vshrl.u32 %v7453, 7
        %v7455 = vsub.s32 4, %v7454
        %v7456 = vrot.slane %v7435, %v7455
        %v7457 = vlaneseq
        %v7458 = vshrl.u32 %v7457, 7
        %v7459 = vsub.s32 5, %v7458
        %v7460 = vrot.slane %v7435, %v7459
        %v7461 = vlaneseq
        %v7462 = vshrl.u32 %v7461, 7
        %v7463 = vsub.s32 6, %v7462
        %v7464 = vrot.slane %v7435, %v7463
        %v7465 = vlaneseq
        %v7466 = vshrl.u32 %v7465, 7
        %v7467 = vsub.s32 7, %v7466
        %v7468 = vrot.slane %v7435, %v7467
        %v7477 = vmul.f32 %v7427, %v7440
        %v7478 = vmul.f32 %v7428, %v7444
        %v7479 = vmul.f32 %v7429, %v7448
        %v7480 = vmul.f32 %v7430, %v7452
        %v7481 = vmul.f32 %v7431, %v7456
        %v7482 = vmul.f32 %v7432, %v7460
        %v7483 = vmul.f32 %v7433, %v7464
        %v7484 = vmul.f32 %v7434, %v7468
        %v7485 = vld [vmem:[%s365] sm:$0xff]
        %v7487 = vlaneseq
        %v7488 = vshrl.u32 %v7487, 7
        %v7489 = vsub.s32 0, %v7488
        %v7490 = vrot.slane %v7485, %v7489
        %v7491 = vlaneseq
        %v7492 = vshrl.u32 %v7491, 7
        %v7493 = vsub.s32 1, %v7492
        %v7494 = vrot.slane %v7485, %v7493
        %v7495 = vlaneseq
        %v7496 = vshrl.u32 %v7495, 7
        %v7497 = vsub.s32 2, %v7496
        %v7498 = vrot.slane %v7485, %v7497
        %v7499 = vlaneseq
        %v7500 = vshrl.u32 %v7499, 7
        %v7501 = vsub.s32 3, %v7500
        %v7502 = vrot.slane %v7485, %v7501
        %v7503 = vlaneseq
        %v7504 = vshrl.u32 %v7503, 7
        %v7505 = vsub.s32 4, %v7504
        %v7506 = vrot.slane %v7485, %v7505
        %v7507 = vlaneseq
        %v7508 = vshrl.u32 %v7507, 7
        %v7509 = vsub.s32 5, %v7508
        %v7510 = vrot.slane %v7485, %v7509
        %v7511 = vlaneseq
        %v7512 = vshrl.u32 %v7511, 7
        %v7513 = vsub.s32 6, %v7512
        %v7514 = vrot.slane %v7485, %v7513
        %v7515 = vlaneseq
        %v7516 = vshrl.u32 %v7515, 7
        %v7517 = vsub.s32 7, %v7516
        %v7518 = vrot.slane %v7485, %v7517
        %v7527 = vadd.f32 %v7477, %v7490
        %v7528 = vadd.f32 %v7478, %v7494
        %v7529 = vadd.f32 %v7479, %v7498
        %v7530 = vadd.f32 %v7480, %v7502
        %v7531 = vadd.f32 %v7481, %v7506
        %v7532 = vadd.f32 %v7482, %v7510
        %v7533 = vadd.f32 %v7483, %v7514
        %v7534 = vadd.f32 %v7484, %v7518
        %v7535 = vmax.f32 %v7527, 0.0
        %v7536 = vmax.f32 %v7528, 0.0
        %v7537 = vmax.f32 %v7529, 0.0
        %v7538 = vmax.f32 %v7530, 0.0
        %v7539 = vmax.f32 %v7531, 0.0
        %v7540 = vmax.f32 %v7532, 0.0
        %v7541 = vmax.f32 %v7533, 0.0
        %v7542 = vmax.f32 %v7534, 0.0
        %v7543 = vld [vmem:[%s7] sm:$0xff]
        %v7544 = vld [vmem:[%s7 + $0x8] sm:$0xff]
        %v7545 = vld [vmem:[%s7 + $0x10] sm:$0xff]
        %v7546 = vld [vmem:[%s7 + $0x18] sm:$0xff]
        %v7547 = vpack.c.bf16 %v7535, %v7535
        %v7548 = vpack.c.bf16 %v7536, %v7536
        %v7549 = vpack.c.bf16 %v7537, %v7537
        %v7550 = vpack.c.bf16 %v7538, %v7538
        %v7551 = vpack.c.bf16 %v7539, %v7539
        %v7552 = vpack.c.bf16 %v7540, %v7540
        %v7553 = vpack.c.bf16 %v7541, %v7541
        %v7554 = vpack.c.bf16 %v7542, %v7542
        %v7555 = vld [vmem:[%s374] sm:$0xff]
        %v7556 = vld [vmem:[%s374 + $0x8] sm:$0xff]
        %v7557 = vld [vmem:[%s374 + $0x10] sm:$0xff]
        %v7558 = vld [vmem:[%s374 + $0x18] sm:$0xff]
        %v7559 = vld [vmem:[%s374 + $0x20] sm:$0xff]
        %v7560 = vld [vmem:[%s374 + $0x28] sm:$0xff]
        %v7561 = vld [vmem:[%s374 + $0x30] sm:$0xff]
        %v7562 = vld [vmem:[%s374 + $0x38] sm:$0xff]
        %v7563 = vld [vmem:[%s374 + $0x40] sm:$0xff]
        %v7564 = vld [vmem:[%s374 + $0x48] sm:$0xff]
        %v7565 = vld [vmem:[%s374 + $0x50] sm:$0xff]
        %v7566 = vld [vmem:[%s374 + $0x58] sm:$0xff]
        %v7567 = vld [vmem:[%s374 + $0x60] sm:$0xff]
        %v7568 = vld [vmem:[%s374 + $0x68] sm:$0xff]
        %v7569 = vld [vmem:[%s374 + $0x70] sm:$0xff]
        %v7570 = vld [vmem:[%s374 + $0x78] sm:$0xff]
        %v7571 = vld [vmem:[%s374 + $0x80] sm:$0xff]
        %v7572 = vld [vmem:[%s374 + $0x88] sm:$0xff]
        %v7573 = vld [vmem:[%s374 + $0x90] sm:$0xff]
        %v7574 = vld [vmem:[%s374 + $0x98] sm:$0xff]
        %v7575 = vld [vmem:[%s374 + $0xa0] sm:$0xff]
        %v7576 = vld [vmem:[%s374 + $0xa8] sm:$0xff]
        %v7577 = vld [vmem:[%s374 + $0xb0] sm:$0xff]
        %v7578 = vld [vmem:[%s374 + $0xb8] sm:$0xff]
        %v7579 = vld [vmem:[%s374 + $0xc0] sm:$0xff]
        %v7580 = vld [vmem:[%s374 + $0xc8] sm:$0xff]
        %v7581 = vld [vmem:[%s374 + $0xd0] sm:$0xff]
        %v7582 = vld [vmem:[%s374 + $0xd8] sm:$0xff]
        %v7583 = vld [vmem:[%s374 + $0xe0] sm:$0xff]
        %v7584 = vld [vmem:[%s374 + $0xe8] sm:$0xff]
        %v7585 = vld [vmem:[%s374 + $0xf0] sm:$0xff]
        %v7586 = vld [vmem:[%s374 + $0xf8] sm:$0xff]
        %v7587 = vld [vmem:[%s374 + $0x100] sm:$0xff]
        %v7588 = vld [vmem:[%s374 + $0x108] sm:$0xff]
        %v7589 = vld [vmem:[%s374 + $0x110] sm:$0xff]
        %v7590 = vld [vmem:[%s374 + $0x118] sm:$0xff]
        %v7591 = vld [vmem:[%s374 + $0x120] sm:$0xff]
        %v7592 = vld [vmem:[%s374 + $0x128] sm:$0xff]
        %v7593 = vld [vmem:[%s374 + $0x130] sm:$0xff]
        %v7594 = vld [vmem:[%s374 + $0x138] sm:$0xff]
        %v7595 = vld [vmem:[%s374 + $0x140] sm:$0xff]
        %v7596 = vld [vmem:[%s374 + $0x148] sm:$0xff]
        %v7597 = vld [vmem:[%s374 + $0x150] sm:$0xff]
        %v7598 = vld [vmem:[%s374 + $0x158] sm:$0xff]
        %v7599 = vld [vmem:[%s374 + $0x160] sm:$0xff]
        %v7600 = vld [vmem:[%s374 + $0x168] sm:$0xff]
        %v7601 = vld [vmem:[%s374 + $0x170] sm:$0xff]
        %v7602 = vld [vmem:[%s374 + $0x178] sm:$0xff]
        %v7603 = vld [vmem:[%s374 + $0x180] sm:$0xff]
        %v7604 = vld [vmem:[%s374 + $0x188] sm:$0xff]
        %v7605 = vld [vmem:[%s374 + $0x190] sm:$0xff]
        %v7606 = vld [vmem:[%s374 + $0x198] sm:$0xff]
        %v7607 = vld [vmem:[%s374 + $0x1a0] sm:$0xff]
        %v7608 = vld [vmem:[%s374 + $0x1a8] sm:$0xff]
        %v7609 = vld [vmem:[%s374 + $0x1b0] sm:$0xff]
        %v7610 = vld [vmem:[%s374 + $0x1b8] sm:$0xff]
        %v7611 = vld [vmem:[%s374 + $0x1c0] sm:$0xff]
        %v7612 = vld [vmem:[%s374 + $0x1c8] sm:$0xff]
        %v7613 = vld [vmem:[%s374 + $0x1d0] sm:$0xff]
        %v7614 = vld [vmem:[%s374 + $0x1d8] sm:$0xff]
        %v7615 = vld [vmem:[%s374 + $0x1e0] sm:$0xff]
        %v7616 = vld [vmem:[%s374 + $0x1e8] sm:$0xff]
        %v7617 = vld [vmem:[%s374 + $0x1f0] sm:$0xff]
        %v7618 = vld [vmem:[%s374 + $0x1f8] sm:$0xff]
        %v7619 = vld [vmem:[%s374 + $0x200] sm:$0xff]
        %v7620 = vld [vmem:[%s374 + $0x208] sm:$0xff]
        %v7621 = vld [vmem:[%s374 + $0x210] sm:$0xff]
        %v7622 = vld [vmem:[%s374 + $0x218] sm:$0xff]
        %v7623 = vld [vmem:[%s374 + $0x220] sm:$0xff]
        %v7624 = vld [vmem:[%s374 + $0x228] sm:$0xff]
        %v7625 = vld [vmem:[%s374 + $0x230] sm:$0xff]
        %v7626 = vld [vmem:[%s374 + $0x238] sm:$0xff]
        %v7627 = vld [vmem:[%s374 + $0x240] sm:$0xff]
        %v7628 = vld [vmem:[%s374 + $0x248] sm:$0xff]
        %v7629 = vld [vmem:[%s374 + $0x250] sm:$0xff]
        %v7630 = vld [vmem:[%s374 + $0x258] sm:$0xff]
        %v7631 = vld [vmem:[%s374 + $0x260] sm:$0xff]
        %v7632 = vld [vmem:[%s374 + $0x268] sm:$0xff]
        %v7633 = vld [vmem:[%s374 + $0x270] sm:$0xff]
        %v7634 = vld [vmem:[%s374 + $0x278] sm:$0xff]
        %v7635 = vld [vmem:[%s374 + $0x280] sm:$0xff]
        %v7636 = vld [vmem:[%s374 + $0x288] sm:$0xff]
        %v7637 = vld [vmem:[%s374 + $0x290] sm:$0xff]
        %v7638 = vld [vmem:[%s374 + $0x298] sm:$0xff]
        %v7639 = vld [vmem:[%s374 + $0x2a0] sm:$0xff]
        %v7640 = vld [vmem:[%s374 + $0x2a8] sm:$0xff]
        %v7641 = vld [vmem:[%s374 + $0x2b0] sm:$0xff]
        %v7642 = vld [vmem:[%s374 + $0x2b8] sm:$0xff]
        %v7643 = vld [vmem:[%s374 + $0x2c0] sm:$0xff]
        %v7644 = vld [vmem:[%s374 + $0x2c8] sm:$0xff]
        %v7645 = vld [vmem:[%s374 + $0x2d0] sm:$0xff]
        %v7646 = vld [vmem:[%s374 + $0x2d8] sm:$0xff]
        %v7647 = vld [vmem:[%s374 + $0x2e0] sm:$0xff]
        %v7648 = vld [vmem:[%s374 + $0x2e8] sm:$0xff]
        %v7649 = vld [vmem:[%s374 + $0x2f0] sm:$0xff]
        %v7650 = vld [vmem:[%s374 + $0x2f8] sm:$0xff]
        %v7651 = vld [vmem:[%s374 + $0x300] sm:$0xff]
        %v7652 = vld [vmem:[%s374 + $0x308] sm:$0xff]
        %v7653 = vld [vmem:[%s374 + $0x310] sm:$0xff]
        %v7654 = vld [vmem:[%s374 + $0x318] sm:$0xff]
        %v7655 = vld [vmem:[%s374 + $0x320] sm:$0xff]
        %v7656 = vld [vmem:[%s374 + $0x328] sm:$0xff]
        %v7657 = vld [vmem:[%s374 + $0x330] sm:$0xff]
        %v7658 = vld [vmem:[%s374 + $0x338] sm:$0xff]
        %v7659 = vld [vmem:[%s374 + $0x340] sm:$0xff]
        %v7660 = vld [vmem:[%s374 + $0x348] sm:$0xff]
        %v7661 = vld [vmem:[%s374 + $0x350] sm:$0xff]
        %v7662 = vld [vmem:[%s374 + $0x358] sm:$0xff]
        %v7663 = vld [vmem:[%s374 + $0x360] sm:$0xff]
        %v7664 = vld [vmem:[%s374 + $0x368] sm:$0xff]
        %v7665 = vld [vmem:[%s374 + $0x370] sm:$0xff]
        %v7666 = vld [vmem:[%s374 + $0x378] sm:$0xff]
        %v7667 = vld [vmem:[%s374 + $0x380] sm:$0xff]
        %v7668 = vld [vmem:[%s374 + $0x388] sm:$0xff]
        %v7669 = vld [vmem:[%s374 + $0x390] sm:$0xff]
        %v7670 = vld [vmem:[%s374 + $0x398] sm:$0xff]
        %v7671 = vld [vmem:[%s374 + $0x3a0] sm:$0xff]
        %v7672 = vld [vmem:[%s374 + $0x3a8] sm:$0xff]
        %v7673 = vld [vmem:[%s374 + $0x3b0] sm:$0xff]
        %v7674 = vld [vmem:[%s374 + $0x3b8] sm:$0xff]
        %v7675 = vld [vmem:[%s374 + $0x3c0] sm:$0xff]
        %v7676 = vld [vmem:[%s374 + $0x3c8] sm:$0xff]
        %v7677 = vld [vmem:[%s374 + $0x3d0] sm:$0xff]
        %v7678 = vld [vmem:[%s374 + $0x3d8] sm:$0xff]
        %v7679 = vld [vmem:[%s374 + $0x3e0] sm:$0xff]
        %v7680 = vld [vmem:[%s374 + $0x3e8] sm:$0xff]
        %v7681 = vld [vmem:[%s374 + $0x3f0] sm:$0xff]
        %v7682 = vld [vmem:[%s374 + $0x3f8] sm:$0xff]
        %v7683 = vld [vmem:[%s374 + $0x400] sm:$0xff]
        %v7684 = vld [vmem:[%s374 + $0x408] sm:$0xff]
        %v7685 = vld [vmem:[%s374 + $0x410] sm:$0xff]
        %v7686 = vld [vmem:[%s374 + $0x418] sm:$0xff]
        %v7687 = vld [vmem:[%s374 + $0x420] sm:$0xff]
        %v7688 = vld [vmem:[%s374 + $0x428] sm:$0xff]
        %v7689 = vld [vmem:[%s374 + $0x430] sm:$0xff]
        %v7690 = vld [vmem:[%s374 + $0x438] sm:$0xff]
        %v7691 = vld [vmem:[%s374 + $0x440] sm:$0xff]
        %v7692 = vld [vmem:[%s374 + $0x448] sm:$0xff]
        %v7693 = vld [vmem:[%s374 + $0x450] sm:$0xff]
        %v7694 = vld [vmem:[%s374 + $0x458] sm:$0xff]
        %v7695 = vld [vmem:[%s374 + $0x460] sm:$0xff]
        %v7696 = vld [vmem:[%s374 + $0x468] sm:$0xff]
        %v7697 = vld [vmem:[%s374 + $0x470] sm:$0xff]
        %v7698 = vld [vmem:[%s374 + $0x478] sm:$0xff]
        %v7699 = vld [vmem:[%s374 + $0x480] sm:$0xff]
        %v7700 = vld [vmem:[%s374 + $0x488] sm:$0xff]
        %v7701 = vld [vmem:[%s374 + $0x490] sm:$0xff]
        %v7702 = vld [vmem:[%s374 + $0x498] sm:$0xff]
        %v7703 = vld [vmem:[%s374 + $0x4a0] sm:$0xff]
        %v7704 = vld [vmem:[%s374 + $0x4a8] sm:$0xff]
        %v7705 = vld [vmem:[%s374 + $0x4b0] sm:$0xff]
        %v7706 = vld [vmem:[%s374 + $0x4b8] sm:$0xff]
        %v7707 = vld [vmem:[%s374 + $0x4c0] sm:$0xff]
        %v7708 = vld [vmem:[%s374 + $0x4c8] sm:$0xff]
        %v7709 = vld [vmem:[%s374 + $0x4d0] sm:$0xff]
        %v7710 = vld [vmem:[%s374 + $0x4d8] sm:$0xff]
        %v7711 = vld [vmem:[%s374 + $0x4e0] sm:$0xff]
        %v7712 = vld [vmem:[%s374 + $0x4e8] sm:$0xff]
        %v7713 = vld [vmem:[%s374 + $0x4f0] sm:$0xff]
        %v7714 = vld [vmem:[%s374 + $0x4f8] sm:$0xff]
        %v7715 = vld [vmem:[%s374 + $0x500] sm:$0xff]
        %v7716 = vld [vmem:[%s374 + $0x508] sm:$0xff]
        %v7717 = vld [vmem:[%s374 + $0x510] sm:$0xff]
        %v7718 = vld [vmem:[%s374 + $0x518] sm:$0xff]
        %v7719 = vld [vmem:[%s374 + $0x520] sm:$0xff]
        %v7720 = vld [vmem:[%s374 + $0x528] sm:$0xff]
        %v7721 = vld [vmem:[%s374 + $0x530] sm:$0xff]
        %v7722 = vld [vmem:[%s374 + $0x538] sm:$0xff]
        %v7723 = vld [vmem:[%s374 + $0x540] sm:$0xff]
        %v7724 = vld [vmem:[%s374 + $0x548] sm:$0xff]
        %v7725 = vld [vmem:[%s374 + $0x550] sm:$0xff]
        %v7726 = vld [vmem:[%s374 + $0x558] sm:$0xff]
        %v7727 = vld [vmem:[%s374 + $0x560] sm:$0xff]
        %v7728 = vld [vmem:[%s374 + $0x568] sm:$0xff]
        %v7729 = vld [vmem:[%s374 + $0x570] sm:$0xff]
        %v7730 = vld [vmem:[%s374 + $0x578] sm:$0xff]
        %v7731 = vld [vmem:[%s374 + $0x580] sm:$0xff]
        %v7732 = vld [vmem:[%s374 + $0x588] sm:$0xff]
        %v7733 = vld [vmem:[%s374 + $0x590] sm:$0xff]
        %v7734 = vld [vmem:[%s374 + $0x598] sm:$0xff]
        %v7735 = vld [vmem:[%s374 + $0x5a0] sm:$0xff]
        %v7736 = vld [vmem:[%s374 + $0x5a8] sm:$0xff]
        %v7737 = vld [vmem:[%s374 + $0x5b0] sm:$0xff]
        %v7738 = vld [vmem:[%s374 + $0x5b8] sm:$0xff]
        %v7739 = vld [vmem:[%s374 + $0x5c0] sm:$0xff]
        %v7740 = vld [vmem:[%s374 + $0x5c8] sm:$0xff]
        %v7741 = vld [vmem:[%s374 + $0x5d0] sm:$0xff]
        %v7742 = vld [vmem:[%s374 + $0x5d8] sm:$0xff]
        %v7743 = vld [vmem:[%s374 + $0x5e0] sm:$0xff]
        %v7744 = vld [vmem:[%s374 + $0x5e8] sm:$0xff]
        %v7745 = vld [vmem:[%s374 + $0x5f0] sm:$0xff]
        %v7746 = vld [vmem:[%s374 + $0x5f8] sm:$0xff]
        %v7747 = vld [vmem:[%s374 + $0x600] sm:$0xff]
        %v7748 = vld [vmem:[%s374 + $0x608] sm:$0xff]
        %v7749 = vld [vmem:[%s374 + $0x610] sm:$0xff]
        %v7750 = vld [vmem:[%s374 + $0x618] sm:$0xff]
        %v7751 = vld [vmem:[%s374 + $0x620] sm:$0xff]
        %v7752 = vld [vmem:[%s374 + $0x628] sm:$0xff]
        %v7753 = vld [vmem:[%s374 + $0x630] sm:$0xff]
        %v7754 = vld [vmem:[%s374 + $0x638] sm:$0xff]
        %v7755 = vld [vmem:[%s374 + $0x640] sm:$0xff]
        %v7756 = vld [vmem:[%s374 + $0x648] sm:$0xff]
        %v7757 = vld [vmem:[%s374 + $0x650] sm:$0xff]
        %v7758 = vld [vmem:[%s374 + $0x658] sm:$0xff]
        %v7759 = vld [vmem:[%s374 + $0x660] sm:$0xff]
        %v7760 = vld [vmem:[%s374 + $0x668] sm:$0xff]
        %v7761 = vld [vmem:[%s374 + $0x670] sm:$0xff]
        %v7762 = vld [vmem:[%s374 + $0x678] sm:$0xff]
        %v7763 = vld [vmem:[%s374 + $0x680] sm:$0xff]
        %v7764 = vld [vmem:[%s374 + $0x688] sm:$0xff]
        %v7765 = vld [vmem:[%s374 + $0x690] sm:$0xff]
        %v7766 = vld [vmem:[%s374 + $0x698] sm:$0xff]
        %v7767 = vld [vmem:[%s374 + $0x6a0] sm:$0xff]
        %v7768 = vld [vmem:[%s374 + $0x6a8] sm:$0xff]
        %v7769 = vld [vmem:[%s374 + $0x6b0] sm:$0xff]
        %v7770 = vld [vmem:[%s374 + $0x6b8] sm:$0xff]
        %v7771 = vld [vmem:[%s374 + $0x6c0] sm:$0xff]
        %v7772 = vld [vmem:[%s374 + $0x6c8] sm:$0xff]
        %v7773 = vld [vmem:[%s374 + $0x6d0] sm:$0xff]
        %v7774 = vld [vmem:[%s374 + $0x6d8] sm:$0xff]
        %v7775 = vld [vmem:[%s374 + $0x6e0] sm:$0xff]
        %v7776 = vld [vmem:[%s374 + $0x6e8] sm:$0xff]
        %v7777 = vld [vmem:[%s374 + $0x6f0] sm:$0xff]
        %v7778 = vld [vmem:[%s374 + $0x6f8] sm:$0xff]
        %v7779 = vld [vmem:[%s374 + $0x700] sm:$0xff]
        %v7780 = vld [vmem:[%s374 + $0x708] sm:$0xff]
        %v7781 = vld [vmem:[%s374 + $0x710] sm:$0xff]
        %v7782 = vld [vmem:[%s374 + $0x718] sm:$0xff]
        %v7783 = vld [vmem:[%s374 + $0x720] sm:$0xff]
        %v7784 = vld [vmem:[%s374 + $0x728] sm:$0xff]
        %v7785 = vld [vmem:[%s374 + $0x730] sm:$0xff]
        %v7786 = vld [vmem:[%s374 + $0x738] sm:$0xff]
        %v7787 = vld [vmem:[%s374 + $0x740] sm:$0xff]
        %v7788 = vld [vmem:[%s374 + $0x748] sm:$0xff]
        %v7789 = vld [vmem:[%s374 + $0x750] sm:$0xff]
        %v7790 = vld [vmem:[%s374 + $0x758] sm:$0xff]
        %v7791 = vld [vmem:[%s374 + $0x760] sm:$0xff]
        %v7792 = vld [vmem:[%s374 + $0x768] sm:$0xff]
        %v7793 = vld [vmem:[%s374 + $0x770] sm:$0xff]
        %v7794 = vld [vmem:[%s374 + $0x778] sm:$0xff]
        %v7795 = vld [vmem:[%s374 + $0x780] sm:$0xff]
        %v7796 = vld [vmem:[%s374 + $0x788] sm:$0xff]
        %v7797 = vld [vmem:[%s374 + $0x790] sm:$0xff]
        %v7798 = vld [vmem:[%s374 + $0x798] sm:$0xff]
        %v7799 = vld [vmem:[%s374 + $0x7a0] sm:$0xff]
        %v7800 = vld [vmem:[%s374 + $0x7a8] sm:$0xff]
        %v7801 = vld [vmem:[%s374 + $0x7b0] sm:$0xff]
        %v7802 = vld [vmem:[%s374 + $0x7b8] sm:$0xff]
        %v7803 = vld [vmem:[%s374 + $0x7c0] sm:$0xff]
        %v7804 = vld [vmem:[%s374 + $0x7c8] sm:$0xff]
        %v7805 = vld [vmem:[%s374 + $0x7d0] sm:$0xff]
        %v7806 = vld [vmem:[%s374 + $0x7d8] sm:$0xff]
        %v7807 = vld [vmem:[%s374 + $0x7e0] sm:$0xff]
        %v7808 = vld [vmem:[%s374 + $0x7e8] sm:$0xff]
        %v7809 = vld [vmem:[%s374 + $0x7f0] sm:$0xff]
        %v7810 = vld [vmem:[%s374 + $0x7f8] sm:$0xff]
        %v7811 = vld [vmem:[%s374 + $0x800] sm:$0xff]
        %v7812 = vld [vmem:[%s374 + $0x808] sm:$0xff]
        %v7813 = vld [vmem:[%s374 + $0x810] sm:$0xff]
        %v7814 = vld [vmem:[%s374 + $0x818] sm:$0xff]
        %v7815 = vld [vmem:[%s374 + $0x820] sm:$0xff]
        %v7816 = vld [vmem:[%s374 + $0x828] sm:$0xff]
        %v7817 = vld [vmem:[%s374 + $0x830] sm:$0xff]
        %v7818 = vld [vmem:[%s374 + $0x838] sm:$0xff]
        %v7819 = vld [vmem:[%s374 + $0x840] sm:$0xff]
        %v7820 = vld [vmem:[%s374 + $0x848] sm:$0xff]
        %v7821 = vld [vmem:[%s374 + $0x850] sm:$0xff]
        %v7822 = vld [vmem:[%s374 + $0x858] sm:$0xff]
        %v7823 = vld [vmem:[%s374 + $0x860] sm:$0xff]
        %v7824 = vld [vmem:[%s374 + $0x868] sm:$0xff]
        %v7825 = vld [vmem:[%s374 + $0x870] sm:$0xff]
        %v7826 = vld [vmem:[%s374 + $0x878] sm:$0xff]
        %v7827 = vld [vmem:[%s374 + $0x880] sm:$0xff]
        %v7828 = vld [vmem:[%s374 + $0x888] sm:$0xff]
        %v7829 = vld [vmem:[%s374 + $0x890] sm:$0xff]
        %v7830 = vld [vmem:[%s374 + $0x898] sm:$0xff]
        %v7831 = vld [vmem:[%s374 + $0x8a0] sm:$0xff]
        %v7832 = vld [vmem:[%s374 + $0x8a8] sm:$0xff]
        %v7833 = vld [vmem:[%s374 + $0x8b0] sm:$0xff]
        %v7834 = vld [vmem:[%s374 + $0x8b8] sm:$0xff]
        %v7835 = vld [vmem:[%s374 + $0x8c0] sm:$0xff]
        %v7836 = vld [vmem:[%s374 + $0x8c8] sm:$0xff]
        %v7837 = vld [vmem:[%s374 + $0x8d0] sm:$0xff]
        %v7838 = vld [vmem:[%s374 + $0x8d8] sm:$0xff]
        %v7839 = vld [vmem:[%s374 + $0x8e0] sm:$0xff]
        %v7840 = vld [vmem:[%s374 + $0x8e8] sm:$0xff]
        %v7841 = vld [vmem:[%s374 + $0x8f0] sm:$0xff]
        %v7842 = vld [vmem:[%s374 + $0x8f8] sm:$0xff]
        %v7843 = vld [vmem:[%s374 + $0x900] sm:$0xff]
        %v7844 = vld [vmem:[%s374 + $0x908] sm:$0xff]
        %v7845 = vld [vmem:[%s374 + $0x910] sm:$0xff]
        %v7846 = vld [vmem:[%s374 + $0x918] sm:$0xff]
        %v7847 = vld [vmem:[%s374 + $0x920] sm:$0xff]
        %v7848 = vld [vmem:[%s374 + $0x928] sm:$0xff]
        %v7849 = vld [vmem:[%s374 + $0x930] sm:$0xff]
        %v7850 = vld [vmem:[%s374 + $0x938] sm:$0xff]
        %v7851 = vld [vmem:[%s374 + $0x940] sm:$0xff]
        %v7852 = vld [vmem:[%s374 + $0x948] sm:$0xff]
        %v7853 = vld [vmem:[%s374 + $0x950] sm:$0xff]
        %v7854 = vld [vmem:[%s374 + $0x958] sm:$0xff]
        %v7855 = vld [vmem:[%s374 + $0x960] sm:$0xff]
        %v7856 = vld [vmem:[%s374 + $0x968] sm:$0xff]
        %v7857 = vld [vmem:[%s374 + $0x970] sm:$0xff]
        %v7858 = vld [vmem:[%s374 + $0x978] sm:$0xff]
        %v7859 = vld [vmem:[%s374 + $0x980] sm:$0xff]
        %v7860 = vld [vmem:[%s374 + $0x988] sm:$0xff]
        %v7861 = vld [vmem:[%s374 + $0x990] sm:$0xff]
        %v7862 = vld [vmem:[%s374 + $0x998] sm:$0xff]
        %v7863 = vld [vmem:[%s374 + $0x9a0] sm:$0xff]
        %v7864 = vld [vmem:[%s374 + $0x9a8] sm:$0xff]
        %v7865 = vld [vmem:[%s374 + $0x9b0] sm:$0xff]
        %v7866 = vld [vmem:[%s374 + $0x9b8] sm:$0xff]
        %v7867 = vld [vmem:[%s374 + $0x9c0] sm:$0xff]
        %v7868 = vld [vmem:[%s374 + $0x9c8] sm:$0xff]
        %v7869 = vld [vmem:[%s374 + $0x9d0] sm:$0xff]
        %v7870 = vld [vmem:[%s374 + $0x9d8] sm:$0xff]
        %v7871 = vld [vmem:[%s374 + $0x9e0] sm:$0xff]
        %v7872 = vld [vmem:[%s374 + $0x9e8] sm:$0xff]
        %v7873 = vld [vmem:[%s374 + $0x9f0] sm:$0xff]
        %v7874 = vld [vmem:[%s374 + $0x9f8] sm:$0xff]
        %v7875 = vld [vmem:[%s374 + $0xa00] sm:$0xff]
        %v7876 = vld [vmem:[%s374 + $0xa08] sm:$0xff]
        %v7877 = vld [vmem:[%s374 + $0xa10] sm:$0xff]
        %v7878 = vld [vmem:[%s374 + $0xa18] sm:$0xff]
        %v7879 = vld [vmem:[%s374 + $0xa20] sm:$0xff]
        %v7880 = vld [vmem:[%s374 + $0xa28] sm:$0xff]
        %v7881 = vld [vmem:[%s374 + $0xa30] sm:$0xff]
        %v7882 = vld [vmem:[%s374 + $0xa38] sm:$0xff]
        %v7883 = vld [vmem:[%s374 + $0xa40] sm:$0xff]
        %v7884 = vld [vmem:[%s374 + $0xa48] sm:$0xff]
        %v7885 = vld [vmem:[%s374 + $0xa50] sm:$0xff]
        %v7886 = vld [vmem:[%s374 + $0xa58] sm:$0xff]
        %v7887 = vld [vmem:[%s374 + $0xa60] sm:$0xff]
        %v7888 = vld [vmem:[%s374 + $0xa68] sm:$0xff]
        %v7889 = vld [vmem:[%s374 + $0xa70] sm:$0xff]
        %v7890 = vld [vmem:[%s374 + $0xa78] sm:$0xff]
        %v7891 = vld [vmem:[%s374 + $0xa80] sm:$0xff]
        %v7892 = vld [vmem:[%s374 + $0xa88] sm:$0xff]
        %v7893 = vld [vmem:[%s374 + $0xa90] sm:$0xff]
        %v7894 = vld [vmem:[%s374 + $0xa98] sm:$0xff]
        %v7895 = vld [vmem:[%s374 + $0xaa0] sm:$0xff]
        %v7896 = vld [vmem:[%s374 + $0xaa8] sm:$0xff]
        %v7897 = vld [vmem:[%s374 + $0xab0] sm:$0xff]
        %v7898 = vld [vmem:[%s374 + $0xab8] sm:$0xff]
        %v7899 = vld [vmem:[%s374 + $0xac0] sm:$0xff]
        %v7900 = vld [vmem:[%s374 + $0xac8] sm:$0xff]
        %v7901 = vld [vmem:[%s374 + $0xad0] sm:$0xff]
        %v7902 = vld [vmem:[%s374 + $0xad8] sm:$0xff]
        %v7903 = vld [vmem:[%s374 + $0xae0] sm:$0xff]
        %v7904 = vld [vmem:[%s374 + $0xae8] sm:$0xff]
        %v7905 = vld [vmem:[%s374 + $0xaf0] sm:$0xff]
        %v7906 = vld [vmem:[%s374 + $0xaf8] sm:$0xff]
        %v7907 = vld [vmem:[%s374 + $0xb00] sm:$0xff]
        %v7908 = vld [vmem:[%s374 + $0xb08] sm:$0xff]
        %v7909 = vld [vmem:[%s374 + $0xb10] sm:$0xff]
        %v7910 = vld [vmem:[%s374 + $0xb18] sm:$0xff]
        %v7911 = vld [vmem:[%s374 + $0xb20] sm:$0xff]
        %v7912 = vld [vmem:[%s374 + $0xb28] sm:$0xff]
        %v7913 = vld [vmem:[%s374 + $0xb30] sm:$0xff]
        %v7914 = vld [vmem:[%s374 + $0xb38] sm:$0xff]
        %v7915 = vld [vmem:[%s374 + $0xb40] sm:$0xff]
        %v7916 = vld [vmem:[%s374 + $0xb48] sm:$0xff]
        %v7917 = vld [vmem:[%s374 + $0xb50] sm:$0xff]
        %v7918 = vld [vmem:[%s374 + $0xb58] sm:$0xff]
        %v7919 = vld [vmem:[%s374 + $0xb60] sm:$0xff]
        %v7920 = vld [vmem:[%s374 + $0xb68] sm:$0xff]
        %v7921 = vld [vmem:[%s374 + $0xb70] sm:$0xff]
        %v7922 = vld [vmem:[%s374 + $0xb78] sm:$0xff]
        %v7923 = vld [vmem:[%s374 + $0xb80] sm:$0xff]
        %v7924 = vld [vmem:[%s374 + $0xb88] sm:$0xff]
        %v7925 = vld [vmem:[%s374 + $0xb90] sm:$0xff]
        %v7926 = vld [vmem:[%s374 + $0xb98] sm:$0xff]
        %v7927 = vld [vmem:[%s374 + $0xba0] sm:$0xff]
        %v7928 = vld [vmem:[%s374 + $0xba8] sm:$0xff]
        %v7929 = vld [vmem:[%s374 + $0xbb0] sm:$0xff]
        %v7930 = vld [vmem:[%s374 + $0xbb8] sm:$0xff]
        %v7931 = vld [vmem:[%s374 + $0xbc0] sm:$0xff]
        %v7932 = vld [vmem:[%s374 + $0xbc8] sm:$0xff]
        %v7933 = vld [vmem:[%s374 + $0xbd0] sm:$0xff]
        %v7934 = vld [vmem:[%s374 + $0xbd8] sm:$0xff]
        %v7935 = vld [vmem:[%s374 + $0xbe0] sm:$0xff]
        %v7936 = vld [vmem:[%s374 + $0xbe8] sm:$0xff]
        %v7937 = vld [vmem:[%s374 + $0xbf0] sm:$0xff]
        %v7938 = vld [vmem:[%s374 + $0xbf8] sm:$0xff]
        %v7939 = vld [vmem:[%s374 + $0xc00] sm:$0xff]
        %v7940 = vld [vmem:[%s374 + $0xc08] sm:$0xff]
        %v7941 = vld [vmem:[%s374 + $0xc10] sm:$0xff]
        %v7942 = vld [vmem:[%s374 + $0xc18] sm:$0xff]
        %v7943 = vld [vmem:[%s374 + $0xc20] sm:$0xff]
        %v7944 = vld [vmem:[%s374 + $0xc28] sm:$0xff]
        %v7945 = vld [vmem:[%s374 + $0xc30] sm:$0xff]
        %v7946 = vld [vmem:[%s374 + $0xc38] sm:$0xff]
        %v7947 = vld [vmem:[%s374 + $0xc40] sm:$0xff]
        %v7948 = vld [vmem:[%s374 + $0xc48] sm:$0xff]
        %v7949 = vld [vmem:[%s374 + $0xc50] sm:$0xff]
        %v7950 = vld [vmem:[%s374 + $0xc58] sm:$0xff]
        %v7951 = vld [vmem:[%s374 + $0xc60] sm:$0xff]
        %v7952 = vld [vmem:[%s374 + $0xc68] sm:$0xff]
        %v7953 = vld [vmem:[%s374 + $0xc70] sm:$0xff]
        %v7954 = vld [vmem:[%s374 + $0xc78] sm:$0xff]
        %v7955 = vld [vmem:[%s374 + $0xc80] sm:$0xff]
        %v7956 = vld [vmem:[%s374 + $0xc88] sm:$0xff]
        %v7957 = vld [vmem:[%s374 + $0xc90] sm:$0xff]
        %v7958 = vld [vmem:[%s374 + $0xc98] sm:$0xff]
        %v7959 = vld [vmem:[%s374 + $0xca0] sm:$0xff]
        %v7960 = vld [vmem:[%s374 + $0xca8] sm:$0xff]
        %v7961 = vld [vmem:[%s374 + $0xcb0] sm:$0xff]
        %v7962 = vld [vmem:[%s374 + $0xcb8] sm:$0xff]
        %v7963 = vld [vmem:[%s374 + $0xcc0] sm:$0xff]
        %v7964 = vld [vmem:[%s374 + $0xcc8] sm:$0xff]
        %v7965 = vld [vmem:[%s374 + $0xcd0] sm:$0xff]
        %v7966 = vld [vmem:[%s374 + $0xcd8] sm:$0xff]
        %v7967 = vld [vmem:[%s374 + $0xce0] sm:$0xff]
        %v7968 = vld [vmem:[%s374 + $0xce8] sm:$0xff]
        %v7969 = vld [vmem:[%s374 + $0xcf0] sm:$0xff]
        %v7970 = vld [vmem:[%s374 + $0xcf8] sm:$0xff]
        %v7971 = vld [vmem:[%s374 + $0xd00] sm:$0xff]
        %v7972 = vld [vmem:[%s374 + $0xd08] sm:$0xff]
        %v7973 = vld [vmem:[%s374 + $0xd10] sm:$0xff]
        %v7974 = vld [vmem:[%s374 + $0xd18] sm:$0xff]
        %v7975 = vld [vmem:[%s374 + $0xd20] sm:$0xff]
        %v7976 = vld [vmem:[%s374 + $0xd28] sm:$0xff]
        %v7977 = vld [vmem:[%s374 + $0xd30] sm:$0xff]
        %v7978 = vld [vmem:[%s374 + $0xd38] sm:$0xff]
        %v7979 = vld [vmem:[%s374 + $0xd40] sm:$0xff]
        %v7980 = vld [vmem:[%s374 + $0xd48] sm:$0xff]
        %v7981 = vld [vmem:[%s374 + $0xd50] sm:$0xff]
        %v7982 = vld [vmem:[%s374 + $0xd58] sm:$0xff]
        %v7983 = vld [vmem:[%s374 + $0xd60] sm:$0xff]
        %v7984 = vld [vmem:[%s374 + $0xd68] sm:$0xff]
        %v7985 = vld [vmem:[%s374 + $0xd70] sm:$0xff]
        %v7986 = vld [vmem:[%s374 + $0xd78] sm:$0xff]
        %v7987 = vld [vmem:[%s374 + $0xd80] sm:$0xff]
        %v7988 = vld [vmem:[%s374 + $0xd88] sm:$0xff]
        %v7989 = vld [vmem:[%s374 + $0xd90] sm:$0xff]
        %v7990 = vld [vmem:[%s374 + $0xd98] sm:$0xff]
        %v7991 = vld [vmem:[%s374 + $0xda0] sm:$0xff]
        %v7992 = vld [vmem:[%s374 + $0xda8] sm:$0xff]
        %v7993 = vld [vmem:[%s374 + $0xdb0] sm:$0xff]
        %v7994 = vld [vmem:[%s374 + $0xdb8] sm:$0xff]
        %v7995 = vld [vmem:[%s374 + $0xdc0] sm:$0xff]
        %v7996 = vld [vmem:[%s374 + $0xdc8] sm:$0xff]
        %v7997 = vld [vmem:[%s374 + $0xdd0] sm:$0xff]
        %v7998 = vld [vmem:[%s374 + $0xdd8] sm:$0xff]
        %v7999 = vld [vmem:[%s374 + $0xde0] sm:$0xff]
        %v8000 = vld [vmem:[%s374 + $0xde8] sm:$0xff]
        %v8001 = vld [vmem:[%s374 + $0xdf0] sm:$0xff]
        %v8002 = vld [vmem:[%s374 + $0xdf8] sm:$0xff]
        %v8003 = vld [vmem:[%s374 + $0xe00] sm:$0xff]
        %v8004 = vld [vmem:[%s374 + $0xe08] sm:$0xff]
        %v8005 = vld [vmem:[%s374 + $0xe10] sm:$0xff]
        %v8006 = vld [vmem:[%s374 + $0xe18] sm:$0xff]
        %v8007 = vld [vmem:[%s374 + $0xe20] sm:$0xff]
        %v8008 = vld [vmem:[%s374 + $0xe28] sm:$0xff]
        %v8009 = vld [vmem:[%s374 + $0xe30] sm:$0xff]
        %v8010 = vld [vmem:[%s374 + $0xe38] sm:$0xff]
        %v8011 = vld [vmem:[%s374 + $0xe40] sm:$0xff]
        %v8012 = vld [vmem:[%s374 + $0xe48] sm:$0xff]
        %v8013 = vld [vmem:[%s374 + $0xe50] sm:$0xff]
        %v8014 = vld [vmem:[%s374 + $0xe58] sm:$0xff]
        %v8015 = vld [vmem:[%s374 + $0xe60] sm:$0xff]
        %v8016 = vld [vmem:[%s374 + $0xe68] sm:$0xff]
        %v8017 = vld [vmem:[%s374 + $0xe70] sm:$0xff]
        %v8018 = vld [vmem:[%s374 + $0xe78] sm:$0xff]
        %v8019 = vld [vmem:[%s374 + $0xe80] sm:$0xff]
        %v8020 = vld [vmem:[%s374 + $0xe88] sm:$0xff]
        %v8021 = vld [vmem:[%s374 + $0xe90] sm:$0xff]
        %v8022 = vld [vmem:[%s374 + $0xe98] sm:$0xff]
        %v8023 = vld [vmem:[%s374 + $0xea0] sm:$0xff]
        %v8024 = vld [vmem:[%s374 + $0xea8] sm:$0xff]
        %v8025 = vld [vmem:[%s374 + $0xeb0] sm:$0xff]
        %v8026 = vld [vmem:[%s374 + $0xeb8] sm:$0xff]
        %v8027 = vld [vmem:[%s374 + $0xec0] sm:$0xff]
        %v8028 = vld [vmem:[%s374 + $0xec8] sm:$0xff]
        %v8029 = vld [vmem:[%s374 + $0xed0] sm:$0xff]
        %v8030 = vld [vmem:[%s374 + $0xed8] sm:$0xff]
        %v8031 = vld [vmem:[%s374 + $0xee0] sm:$0xff]
        %v8032 = vld [vmem:[%s374 + $0xee8] sm:$0xff]
        %v8033 = vld [vmem:[%s374 + $0xef0] sm:$0xff]
        %v8034 = vld [vmem:[%s374 + $0xef8] sm:$0xff]
        %v8035 = vld [vmem:[%s374 + $0xf00] sm:$0xff]
        %v8036 = vld [vmem:[%s374 + $0xf08] sm:$0xff]
        %v8037 = vld [vmem:[%s374 + $0xf10] sm:$0xff]
        %v8038 = vld [vmem:[%s374 + $0xf18] sm:$0xff]
        %v8039 = vld [vmem:[%s374 + $0xf20] sm:$0xff]
        %v8040 = vld [vmem:[%s374 + $0xf28] sm:$0xff]
        %v8041 = vld [vmem:[%s374 + $0xf30] sm:$0xff]
        %v8042 = vld [vmem:[%s374 + $0xf38] sm:$0xff]
        %v8043 = vld [vmem:[%s374 + $0xf40] sm:$0xff]
        %v8044 = vld [vmem:[%s374 + $0xf48] sm:$0xff]
        %v8045 = vld [vmem:[%s374 + $0xf50] sm:$0xff]
        %v8046 = vld [vmem:[%s374 + $0xf58] sm:$0xff]
        %v8047 = vld [vmem:[%s374 + $0xf60] sm:$0xff]
        %v8048 = vld [vmem:[%s374 + $0xf68] sm:$0xff]
        %v8049 = vld [vmem:[%s374 + $0xf70] sm:$0xff]
        %v8050 = vld [vmem:[%s374 + $0xf78] sm:$0xff]
        %v8051 = vld [vmem:[%s374 + $0xf80] sm:$0xff]
        %v8052 = vld [vmem:[%s374 + $0xf88] sm:$0xff]
        %v8053 = vld [vmem:[%s374 + $0xf90] sm:$0xff]
        %v8054 = vld [vmem:[%s374 + $0xf98] sm:$0xff]
        %v8055 = vld [vmem:[%s374 + $0xfa0] sm:$0xff]
        %v8056 = vld [vmem:[%s374 + $0xfa8] sm:$0xff]
        %v8057 = vld [vmem:[%s374 + $0xfb0] sm:$0xff]
        %v8058 = vld [vmem:[%s374 + $0xfb8] sm:$0xff]
        %v8059 = vld [vmem:[%s374 + $0xfc0] sm:$0xff]
        %v8060 = vld [vmem:[%s374 + $0xfc8] sm:$0xff]
        %v8061 = vld [vmem:[%s374 + $0xfd0] sm:$0xff]
        %v8062 = vld [vmem:[%s374 + $0xfd8] sm:$0xff]
        %v8063 = vld [vmem:[%s374 + $0xfe0] sm:$0xff]
        %v8064 = vld [vmem:[%s374 + $0xfe8] sm:$0xff]
        %v8065 = vld [vmem:[%s374 + $0xff0] sm:$0xff]
        %v8066 = vld [vmem:[%s374 + $0xff8] sm:$0xff]
        %v8579 = vunpack.c.l.b16 %v7555
        %v8580 = vunpack.c.h.b16 %v7555
        %v8581 = vunpack.c.l.b16 %v7556
        %v8582 = vunpack.c.h.b16 %v7556
        %v8583 = vunpack.c.l.b16 %v7557
        %v8584 = vunpack.c.h.b16 %v7557
        %v8585 = vunpack.c.l.b16 %v7558
        %v8586 = vunpack.c.h.b16 %v7558
        %v8587 = vunpack.c.l.b16 %v7559
        %v8588 = vunpack.c.h.b16 %v7559
        %v8589 = vunpack.c.l.b16 %v7560
        %v8590 = vunpack.c.h.b16 %v7560
        %v8591 = vunpack.c.l.b16 %v7561
        %v8592 = vunpack.c.h.b16 %v7561
        %v8593 = vunpack.c.l.b16 %v7562
        %v8594 = vunpack.c.h.b16 %v7562
        %v8595 = vunpack.c.l.b16 %v7563
        %v8596 = vunpack.c.h.b16 %v7563
        %v8597 = vunpack.c.l.b16 %v7564
        %v8598 = vunpack.c.h.b16 %v7564
        %v8599 = vunpack.c.l.b16 %v7565
        %v8600 = vunpack.c.h.b16 %v7565
        %v8601 = vunpack.c.l.b16 %v7566
        %v8602 = vunpack.c.h.b16 %v7566
        %v8603 = vunpack.c.l.b16 %v7567
        %v8604 = vunpack.c.h.b16 %v7567
        %v8605 = vunpack.c.l.b16 %v7568
        %v8606 = vunpack.c.h.b16 %v7568
        %v8607 = vunpack.c.l.b16 %v7569
        %v8608 = vunpack.c.h.b16 %v7569
        %v8609 = vunpack.c.l.b16 %v7570
        %v8610 = vunpack.c.h.b16 %v7570
        %v8611 = vunpack.c.l.b16 %v7571
        %v8612 = vunpack.c.h.b16 %v7571
        %v8613 = vunpack.c.l.b16 %v7572
        %v8614 = vunpack.c.h.b16 %v7572
        %v8615 = vunpack.c.l.b16 %v7573
        %v8616 = vunpack.c.h.b16 %v7573
        %v8617 = vunpack.c.l.b16 %v7574
        %v8618 = vunpack.c.h.b16 %v7574
        %v8619 = vunpack.c.l.b16 %v7575
        %v8620 = vunpack.c.h.b16 %v7575
        %v8621 = vunpack.c.l.b16 %v7576
        %v8622 = vunpack.c.h.b16 %v7576
        %v8623 = vunpack.c.l.b16 %v7577
        %v8624 = vunpack.c.h.b16 %v7577
        %v8625 = vunpack.c.l.b16 %v7578
        %v8626 = vunpack.c.h.b16 %v7578
        %v8627 = vunpack.c.l.b16 %v7579
        %v8628 = vunpack.c.h.b16 %v7579
        %v8629 = vunpack.c.l.b16 %v7580
        %v8630 = vunpack.c.h.b16 %v7580
        %v8631 = vunpack.c.l.b16 %v7581
        %v8632 = vunpack.c.h.b16 %v7581
        %v8633 = vunpack.c.l.b16 %v7582
        %v8634 = vunpack.c.h.b16 %v7582
        %v8635 = vunpack.c.l.b16 %v7583
        %v8636 = vunpack.c.h.b16 %v7583
        %v8637 = vunpack.c.l.b16 %v7584
        %v8638 = vunpack.c.h.b16 %v7584
        %v8639 = vunpack.c.l.b16 %v7585
        %v8640 = vunpack.c.h.b16 %v7585
        %v8641 = vunpack.c.l.b16 %v7586
        %v8642 = vunpack.c.h.b16 %v7586
        %v8643 = vunpack.c.l.b16 %v7587
        %v8644 = vunpack.c.h.b16 %v7587
        %v8645 = vunpack.c.l.b16 %v7588
        %v8646 = vunpack.c.h.b16 %v7588
        %v8647 = vunpack.c.l.b16 %v7589
        %v8648 = vunpack.c.h.b16 %v7589
        %v8649 = vunpack.c.l.b16 %v7590
        %v8650 = vunpack.c.h.b16 %v7590
        %v8651 = vunpack.c.l.b16 %v7591
        %v8652 = vunpack.c.h.b16 %v7591
        %v8653 = vunpack.c.l.b16 %v7592
        %v8654 = vunpack.c.h.b16 %v7592
        %v8655 = vunpack.c.l.b16 %v7593
        %v8656 = vunpack.c.h.b16 %v7593
        %v8657 = vunpack.c.l.b16 %v7594
        %v8658 = vunpack.c.h.b16 %v7594
        %v8659 = vunpack.c.l.b16 %v7595
        %v8660 = vunpack.c.h.b16 %v7595
        %v8661 = vunpack.c.l.b16 %v7596
        %v8662 = vunpack.c.h.b16 %v7596
        %v8663 = vunpack.c.l.b16 %v7597
        %v8664 = vunpack.c.h.b16 %v7597
        %v8665 = vunpack.c.l.b16 %v7598
        %v8666 = vunpack.c.h.b16 %v7598
        %v8667 = vunpack.c.l.b16 %v7599
        %v8668 = vunpack.c.h.b16 %v7599
        %v8669 = vunpack.c.l.b16 %v7600
        %v8670 = vunpack.c.h.b16 %v7600
        %v8671 = vunpack.c.l.b16 %v7601
        %v8672 = vunpack.c.h.b16 %v7601
        %v8673 = vunpack.c.l.b16 %v7602
        %v8674 = vunpack.c.h.b16 %v7602
        %v8675 = vunpack.c.l.b16 %v7603
        %v8676 = vunpack.c.h.b16 %v7603
        %v8677 = vunpack.c.l.b16 %v7604
        %v8678 = vunpack.c.h.b16 %v7604
        %v8679 = vunpack.c.l.b16 %v7605
        %v8680 = vunpack.c.h.b16 %v7605
        %v8681 = vunpack.c.l.b16 %v7606
        %v8682 = vunpack.c.h.b16 %v7606
        %v8683 = vunpack.c.l.b16 %v7607
        %v8684 = vunpack.c.h.b16 %v7607
        %v8685 = vunpack.c.l.b16 %v7608
        %v8686 = vunpack.c.h.b16 %v7608
        %v8687 = vunpack.c.l.b16 %v7609
        %v8688 = vunpack.c.h.b16 %v7609
        %v8689 = vunpack.c.l.b16 %v7610
        %v8690 = vunpack.c.h.b16 %v7610
        %v8691 = vunpack.c.l.b16 %v7611
        %v8692 = vunpack.c.h.b16 %v7611
        %v8693 = vunpack.c.l.b16 %v7612
        %v8694 = vunpack.c.h.b16 %v7612
        %v8695 = vunpack.c.l.b16 %v7613
        %v8696 = vunpack.c.h.b16 %v7613
        %v8697 = vunpack.c.l.b16 %v7614
        %v8698 = vunpack.c.h.b16 %v7614
        %v8699 = vunpack.c.l.b16 %v7615
        %v8700 = vunpack.c.h.b16 %v7615
        %v8701 = vunpack.c.l.b16 %v7616
        %v8702 = vunpack.c.h.b16 %v7616
        %v8703 = vunpack.c.l.b16 %v7617
        %v8704 = vunpack.c.h.b16 %v7617
        %v8705 = vunpack.c.l.b16 %v7618
        %v8706 = vunpack.c.h.b16 %v7618
        %v8707 = vunpack.c.l.b16 %v7619
        %v8708 = vunpack.c.h.b16 %v7619
        %v8709 = vunpack.c.l.b16 %v7620
        %v8710 = vunpack.c.h.b16 %v7620
        %v8711 = vunpack.c.l.b16 %v7621
        %v8712 = vunpack.c.h.b16 %v7621
        %v8713 = vunpack.c.l.b16 %v7622
        %v8714 = vunpack.c.h.b16 %v7622
        %v8715 = vunpack.c.l.b16 %v7623
        %v8716 = vunpack.c.h.b16 %v7623
        %v8717 = vunpack.c.l.b16 %v7624
        %v8718 = vunpack.c.h.b16 %v7624
        %v8719 = vunpack.c.l.b16 %v7625
        %v8720 = vunpack.c.h.b16 %v7625
        %v8721 = vunpack.c.l.b16 %v7626
        %v8722 = vunpack.c.h.b16 %v7626
        %v8723 = vunpack.c.l.b16 %v7627
        %v8724 = vunpack.c.h.b16 %v7627
        %v8725 = vunpack.c.l.b16 %v7628
        %v8726 = vunpack.c.h.b16 %v7628
        %v8727 = vunpack.c.l.b16 %v7629
        %v8728 = vunpack.c.h.b16 %v7629
        %v8729 = vunpack.c.l.b16 %v7630
        %v8730 = vunpack.c.h.b16 %v7630
        %v8731 = vunpack.c.l.b16 %v7631
        %v8732 = vunpack.c.h.b16 %v7631
        %v8733 = vunpack.c.l.b16 %v7632
        %v8734 = vunpack.c.h.b16 %v7632
        %v8735 = vunpack.c.l.b16 %v7633
        %v8736 = vunpack.c.h.b16 %v7633
        %v8737 = vunpack.c.l.b16 %v7634
        %v8738 = vunpack.c.h.b16 %v7634
        %v8739 = vunpack.c.l.b16 %v7635
        %v8740 = vunpack.c.h.b16 %v7635
        %v8741 = vunpack.c.l.b16 %v7636
        %v8742 = vunpack.c.h.b16 %v7636
        %v8743 = vunpack.c.l.b16 %v7637
        %v8744 = vunpack.c.h.b16 %v7637
        %v8745 = vunpack.c.l.b16 %v7638
        %v8746 = vunpack.c.h.b16 %v7638
        %v8747 = vunpack.c.l.b16 %v7639
        %v8748 = vunpack.c.h.b16 %v7639
        %v8749 = vunpack.c.l.b16 %v7640
        %v8750 = vunpack.c.h.b16 %v7640
        %v8751 = vunpack.c.l.b16 %v7641
        %v8752 = vunpack.c.h.b16 %v7641
        %v8753 = vunpack.c.l.b16 %v7642
        %v8754 = vunpack.c.h.b16 %v7642
        %v8755 = vunpack.c.l.b16 %v7643
        %v8756 = vunpack.c.h.b16 %v7643
        %v8757 = vunpack.c.l.b16 %v7644
        %v8758 = vunpack.c.h.b16 %v7644
        %v8759 = vunpack.c.l.b16 %v7645
        %v8760 = vunpack.c.h.b16 %v7645
        %v8761 = vunpack.c.l.b16 %v7646
        %v8762 = vunpack.c.h.b16 %v7646
        %v8763 = vunpack.c.l.b16 %v7647
        %v8764 = vunpack.c.h.b16 %v7647
        %v8765 = vunpack.c.l.b16 %v7648
        %v8766 = vunpack.c.h.b16 %v7648
        %v8767 = vunpack.c.l.b16 %v7649
        %v8768 = vunpack.c.h.b16 %v7649
        %v8769 = vunpack.c.l.b16 %v7650
        %v8770 = vunpack.c.h.b16 %v7650
        %v8771 = vunpack.c.l.b16 %v7651
        %v8772 = vunpack.c.h.b16 %v7651
        %v8773 = vunpack.c.l.b16 %v7652
        %v8774 = vunpack.c.h.b16 %v7652
        %v8775 = vunpack.c.l.b16 %v7653
        %v8776 = vunpack.c.h.b16 %v7653
        %v8777 = vunpack.c.l.b16 %v7654
        %v8778 = vunpack.c.h.b16 %v7654
        %v8779 = vunpack.c.l.b16 %v7655
        %v8780 = vunpack.c.h.b16 %v7655
        %v8781 = vunpack.c.l.b16 %v7656
        %v8782 = vunpack.c.h.b16 %v7656
        %v8783 = vunpack.c.l.b16 %v7657
        %v8784 = vunpack.c.h.b16 %v7657
        %v8785 = vunpack.c.l.b16 %v7658
        %v8786 = vunpack.c.h.b16 %v7658
        %v8787 = vunpack.c.l.b16 %v7659
        %v8788 = vunpack.c.h.b16 %v7659
        %v8789 = vunpack.c.l.b16 %v7660
        %v8790 = vunpack.c.h.b16 %v7660
        %v8791 = vunpack.c.l.b16 %v7661
        %v8792 = vunpack.c.h.b16 %v7661
        %v8793 = vunpack.c.l.b16 %v7662
        %v8794 = vunpack.c.h.b16 %v7662
        %v8795 = vunpack.c.l.b16 %v7663
        %v8796 = vunpack.c.h.b16 %v7663
        %v8797 = vunpack.c.l.b16 %v7664
        %v8798 = vunpack.c.h.b16 %v7664
        %v8799 = vunpack.c.l.b16 %v7665
        %v8800 = vunpack.c.h.b16 %v7665
        %v8801 = vunpack.c.l.b16 %v7666
        %v8802 = vunpack.c.h.b16 %v7666
        %v8803 = vunpack.c.l.b16 %v7667
        %v8804 = vunpack.c.h.b16 %v7667
        %v8805 = vunpack.c.l.b16 %v7668
        %v8806 = vunpack.c.h.b16 %v7668
        %v8807 = vunpack.c.l.b16 %v7669
        %v8808 = vunpack.c.h.b16 %v7669
        %v8809 = vunpack.c.l.b16 %v7670
        %v8810 = vunpack.c.h.b16 %v7670
        %v8811 = vunpack.c.l.b16 %v7671
        %v8812 = vunpack.c.h.b16 %v7671
        %v8813 = vunpack.c.l.b16 %v7672
        %v8814 = vunpack.c.h.b16 %v7672
        %v8815 = vunpack.c.l.b16 %v7673
        %v8816 = vunpack.c.h.b16 %v7673
        %v8817 = vunpack.c.l.b16 %v7674
        %v8818 = vunpack.c.h.b16 %v7674
        %v8819 = vunpack.c.l.b16 %v7675
        %v8820 = vunpack.c.h.b16 %v7675
        %v8821 = vunpack.c.l.b16 %v7676
        %v8822 = vunpack.c.h.b16 %v7676
        %v8823 = vunpack.c.l.b16 %v7677
        %v8824 = vunpack.c.h.b16 %v7677
        %v8825 = vunpack.c.l.b16 %v7678
        %v8826 = vunpack.c.h.b16 %v7678
        %v8827 = vunpack.c.l.b16 %v7679
        %v8828 = vunpack.c.h.b16 %v7679
        %v8829 = vunpack.c.l.b16 %v7680
        %v8830 = vunpack.c.h.b16 %v7680
        %v8831 = vunpack.c.l.b16 %v7681
        %v8832 = vunpack.c.h.b16 %v7681
        %v8833 = vunpack.c.l.b16 %v7682
        %v8834 = vunpack.c.h.b16 %v7682
        %v8835 = vunpack.c.l.b16 %v7683
        %v8836 = vunpack.c.h.b16 %v7683
        %v8837 = vunpack.c.l.b16 %v7684
        %v8838 = vunpack.c.h.b16 %v7684
        %v8839 = vunpack.c.l.b16 %v7685
        %v8840 = vunpack.c.h.b16 %v7685
        %v8841 = vunpack.c.l.b16 %v7686
        %v8842 = vunpack.c.h.b16 %v7686
        %v8843 = vunpack.c.l.b16 %v7687
        %v8844 = vunpack.c.h.b16 %v7687
        %v8845 = vunpack.c.l.b16 %v7688
        %v8846 = vunpack.c.h.b16 %v7688
        %v8847 = vunpack.c.l.b16 %v7689
        %v8848 = vunpack.c.h.b16 %v7689
        %v8849 = vunpack.c.l.b16 %v7690
        %v8850 = vunpack.c.h.b16 %v7690
        %v8851 = vunpack.c.l.b16 %v7691
        %v8852 = vunpack.c.h.b16 %v7691
        %v8853 = vunpack.c.l.b16 %v7692
        %v8854 = vunpack.c.h.b16 %v7692
        %v8855 = vunpack.c.l.b16 %v7693
        %v8856 = vunpack.c.h.b16 %v7693
        %v8857 = vunpack.c.l.b16 %v7694
        %v8858 = vunpack.c.h.b16 %v7694
        %v8859 = vunpack.c.l.b16 %v7695
        %v8860 = vunpack.c.h.b16 %v7695
        %v8861 = vunpack.c.l.b16 %v7696
        %v8862 = vunpack.c.h.b16 %v7696
        %v8863 = vunpack.c.l.b16 %v7697
        %v8864 = vunpack.c.h.b16 %v7697
        %v8865 = vunpack.c.l.b16 %v7698
        %v8866 = vunpack.c.h.b16 %v7698
        %v8867 = vunpack.c.l.b16 %v7699
        %v8868 = vunpack.c.h.b16 %v7699
        %v8869 = vunpack.c.l.b16 %v7700
        %v8870 = vunpack.c.h.b16 %v7700
        %v8871 = vunpack.c.l.b16 %v7701
        %v8872 = vunpack.c.h.b16 %v7701
        %v8873 = vunpack.c.l.b16 %v7702
        %v8874 = vunpack.c.h.b16 %v7702
        %v8875 = vunpack.c.l.b16 %v7703
        %v8876 = vunpack.c.h.b16 %v7703
        %v8877 = vunpack.c.l.b16 %v7704
        %v8878 = vunpack.c.h.b16 %v7704
        %v8879 = vunpack.c.l.b16 %v7705
        %v8880 = vunpack.c.h.b16 %v7705
        %v8881 = vunpack.c.l.b16 %v7706
        %v8882 = vunpack.c.h.b16 %v7706
        %v8883 = vunpack.c.l.b16 %v7707
        %v8884 = vunpack.c.h.b16 %v7707
        %v8885 = vunpack.c.l.b16 %v7708
        %v8886 = vunpack.c.h.b16 %v7708
        %v8887 = vunpack.c.l.b16 %v7709
        %v8888 = vunpack.c.h.b16 %v7709
        %v8889 = vunpack.c.l.b16 %v7710
        %v8890 = vunpack.c.h.b16 %v7710
        %v8891 = vunpack.c.l.b16 %v7711
        %v8892 = vunpack.c.h.b16 %v7711
        %v8893 = vunpack.c.l.b16 %v7712
        %v8894 = vunpack.c.h.b16 %v7712
        %v8895 = vunpack.c.l.b16 %v7713
        %v8896 = vunpack.c.h.b16 %v7713
        %v8897 = vunpack.c.l.b16 %v7714
        %v8898 = vunpack.c.h.b16 %v7714
        %v8899 = vunpack.c.l.b16 %v7715
        %v8900 = vunpack.c.h.b16 %v7715
        %v8901 = vunpack.c.l.b16 %v7716
        %v8902 = vunpack.c.h.b16 %v7716
        %v8903 = vunpack.c.l.b16 %v7717
        %v8904 = vunpack.c.h.b16 %v7717
        %v8905 = vunpack.c.l.b16 %v7718
        %v8906 = vunpack.c.h.b16 %v7718
        %v8907 = vunpack.c.l.b16 %v7719
        %v8908 = vunpack.c.h.b16 %v7719
        %v8909 = vunpack.c.l.b16 %v7720
        %v8910 = vunpack.c.h.b16 %v7720
        %v8911 = vunpack.c.l.b16 %v7721
        %v8912 = vunpack.c.h.b16 %v7721
        %v8913 = vunpack.c.l.b16 %v7722
        %v8914 = vunpack.c.h.b16 %v7722
        %v8915 = vunpack.c.l.b16 %v7723
        %v8916 = vunpack.c.h.b16 %v7723
        %v8917 = vunpack.c.l.b16 %v7724
        %v8918 = vunpack.c.h.b16 %v7724
        %v8919 = vunpack.c.l.b16 %v7725
        %v8920 = vunpack.c.h.b16 %v7725
        %v8921 = vunpack.c.l.b16 %v7726
        %v8922 = vunpack.c.h.b16 %v7726
        %v8923 = vunpack.c.l.b16 %v7727
        %v8924 = vunpack.c.h.b16 %v7727
        %v8925 = vunpack.c.l.b16 %v7728
        %v8926 = vunpack.c.h.b16 %v7728
        %v8927 = vunpack.c.l.b16 %v7729
        %v8928 = vunpack.c.h.b16 %v7729
        %v8929 = vunpack.c.l.b16 %v7730
        %v8930 = vunpack.c.h.b16 %v7730
        %v8931 = vunpack.c.l.b16 %v7731
        %v8932 = vunpack.c.h.b16 %v7731
        %v8933 = vunpack.c.l.b16 %v7732
        %v8934 = vunpack.c.h.b16 %v7732
        %v8935 = vunpack.c.l.b16 %v7733
        %v8936 = vunpack.c.h.b16 %v7733
        %v8937 = vunpack.c.l.b16 %v7734
        %v8938 = vunpack.c.h.b16 %v7734
        %v8939 = vunpack.c.l.b16 %v7735
        %v8940 = vunpack.c.h.b16 %v7735
        %v8941 = vunpack.c.l.b16 %v7736
        %v8942 = vunpack.c.h.b16 %v7736
        %v8943 = vunpack.c.l.b16 %v7737
        %v8944 = vunpack.c.h.b16 %v7737
        %v8945 = vunpack.c.l.b16 %v7738
        %v8946 = vunpack.c.h.b16 %v7738
        %v8947 = vunpack.c.l.b16 %v7739
        %v8948 = vunpack.c.h.b16 %v7739
        %v8949 = vunpack.c.l.b16 %v7740
        %v8950 = vunpack.c.h.b16 %v7740
        %v8951 = vunpack.c.l.b16 %v7741
        %v8952 = vunpack.c.h.b16 %v7741
        %v8953 = vunpack.c.l.b16 %v7742
        %v8954 = vunpack.c.h.b16 %v7742
        %v8955 = vunpack.c.l.b16 %v7743
        %v8956 = vunpack.c.h.b16 %v7743
        %v8957 = vunpack.c.l.b16 %v7744
        %v8958 = vunpack.c.h.b16 %v7744
        %v8959 = vunpack.c.l.b16 %v7745
        %v8960 = vunpack.c.h.b16 %v7745
        %v8961 = vunpack.c.l.b16 %v7746
        %v8962 = vunpack.c.h.b16 %v7746
        %v8963 = vunpack.c.l.b16 %v7747
        %v8964 = vunpack.c.h.b16 %v7747
        %v8965 = vunpack.c.l.b16 %v7748
        %v8966 = vunpack.c.h.b16 %v7748
        %v8967 = vunpack.c.l.b16 %v7749
        %v8968 = vunpack.c.h.b16 %v7749
        %v8969 = vunpack.c.l.b16 %v7750
        %v8970 = vunpack.c.h.b16 %v7750
        %v8971 = vunpack.c.l.b16 %v7751
        %v8972 = vunpack.c.h.b16 %v7751
        %v8973 = vunpack.c.l.b16 %v7752
        %v8974 = vunpack.c.h.b16 %v7752
        %v8975 = vunpack.c.l.b16 %v7753
        %v8976 = vunpack.c.h.b16 %v7753
        %v8977 = vunpack.c.l.b16 %v7754
        %v8978 = vunpack.c.h.b16 %v7754
        %v8979 = vunpack.c.l.b16 %v7755
        %v8980 = vunpack.c.h.b16 %v7755
        %v8981 = vunpack.c.l.b16 %v7756
        %v8982 = vunpack.c.h.b16 %v7756
        %v8983 = vunpack.c.l.b16 %v7757
        %v8984 = vunpack.c.h.b16 %v7757
        %v8985 = vunpack.c.l.b16 %v7758
        %v8986 = vunpack.c.h.b16 %v7758
        %v8987 = vunpack.c.l.b16 %v7759
        %v8988 = vunpack.c.h.b16 %v7759
        %v8989 = vunpack.c.l.b16 %v7760
        %v8990 = vunpack.c.h.b16 %v7760
        %v8991 = vunpack.c.l.b16 %v7761
        %v8992 = vunpack.c.h.b16 %v7761
        %v8993 = vunpack.c.l.b16 %v7762
        %v8994 = vunpack.c.h.b16 %v7762
        %v8995 = vunpack.c.l.b16 %v7763
        %v8996 = vunpack.c.h.b16 %v7763
        %v8997 = vunpack.c.l.b16 %v7764
        %v8998 = vunpack.c.h.b16 %v7764
        %v8999 = vunpack.c.l.b16 %v7765
        %v9000 = vunpack.c.h.b16 %v7765
        %v9001 = vunpack.c.l.b16 %v7766
        %v9002 = vunpack.c.h.b16 %v7766
        %v9003 = vunpack.c.l.b16 %v7767
        %v9004 = vunpack.c.h.b16 %v7767
        %v9005 = vunpack.c.l.b16 %v7768
        %v9006 = vunpack.c.h.b16 %v7768
        %v9007 = vunpack.c.l.b16 %v7769
        %v9008 = vunpack.c.h.b16 %v7769
        %v9009 = vunpack.c.l.b16 %v7770
        %v9010 = vunpack.c.h.b16 %v7770
        %v9011 = vunpack.c.l.b16 %v7771
        %v9012 = vunpack.c.h.b16 %v7771
        %v9013 = vunpack.c.l.b16 %v7772
        %v9014 = vunpack.c.h.b16 %v7772
        %v9015 = vunpack.c.l.b16 %v7773
        %v9016 = vunpack.c.h.b16 %v7773
        %v9017 = vunpack.c.l.b16 %v7774
        %v9018 = vunpack.c.h.b16 %v7774
        %v9019 = vunpack.c.l.b16 %v7775
        %v9020 = vunpack.c.h.b16 %v7775
        %v9021 = vunpack.c.l.b16 %v7776
        %v9022 = vunpack.c.h.b16 %v7776
        %v9023 = vunpack.c.l.b16 %v7777
        %v9024 = vunpack.c.h.b16 %v7777
        %v9025 = vunpack.c.l.b16 %v7778
        %v9026 = vunpack.c.h.b16 %v7778
        %v9027 = vunpack.c.l.b16 %v7779
        %v9028 = vunpack.c.h.b16 %v7779
        %v9029 = vunpack.c.l.b16 %v7780
        %v9030 = vunpack.c.h.b16 %v7780
        %v9031 = vunpack.c.l.b16 %v7781
        %v9032 = vunpack.c.h.b16 %v7781
        %v9033 = vunpack.c.l.b16 %v7782
        %v9034 = vunpack.c.h.b16 %v7782
        %v9035 = vunpack.c.l.b16 %v7783
        %v9036 = vunpack.c.h.b16 %v7783
        %v9037 = vunpack.c.l.b16 %v7784
        %v9038 = vunpack.c.h.b16 %v7784
        %v9039 = vunpack.c.l.b16 %v7785
        %v9040 = vunpack.c.h.b16 %v7785
        %v9041 = vunpack.c.l.b16 %v7786
        %v9042 = vunpack.c.h.b16 %v7786
        %v9043 = vunpack.c.l.b16 %v7787
        %v9044 = vunpack.c.h.b16 %v7787
        %v9045 = vunpack.c.l.b16 %v7788
        %v9046 = vunpack.c.h.b16 %v7788
        %v9047 = vunpack.c.l.b16 %v7789
        %v9048 = vunpack.c.h.b16 %v7789
        %v9049 = vunpack.c.l.b16 %v7790
        %v9050 = vunpack.c.h.b16 %v7790
        %v9051 = vunpack.c.l.b16 %v7791
        %v9052 = vunpack.c.h.b16 %v7791
        %v9053 = vunpack.c.l.b16 %v7792
        %v9054 = vunpack.c.h.b16 %v7792
        %v9055 = vunpack.c.l.b16 %v7793
        %v9056 = vunpack.c.h.b16 %v7793
        %v9057 = vunpack.c.l.b16 %v7794
        %v9058 = vunpack.c.h.b16 %v7794
        %v9059 = vunpack.c.l.b16 %v7795
        %v9060 = vunpack.c.h.b16 %v7795
        %v9061 = vunpack.c.l.b16 %v7796
        %v9062 = vunpack.c.h.b16 %v7796
        %v9063 = vunpack.c.l.b16 %v7797
        %v9064 = vunpack.c.h.b16 %v7797
        %v9065 = vunpack.c.l.b16 %v7798
        %v9066 = vunpack.c.h.b16 %v7798
        %v9067 = vunpack.c.l.b16 %v7799
        %v9068 = vunpack.c.h.b16 %v7799
        %v9069 = vunpack.c.l.b16 %v7800
        %v9070 = vunpack.c.h.b16 %v7800
        %v9071 = vunpack.c.l.b16 %v7801
        %v9072 = vunpack.c.h.b16 %v7801
        %v9073 = vunpack.c.l.b16 %v7802
        %v9074 = vunpack.c.h.b16 %v7802
        %v9075 = vunpack.c.l.b16 %v7803
        %v9076 = vunpack.c.h.b16 %v7803
        %v9077 = vunpack.c.l.b16 %v7804
        %v9078 = vunpack.c.h.b16 %v7804
        %v9079 = vunpack.c.l.b16 %v7805
        %v9080 = vunpack.c.h.b16 %v7805
        %v9081 = vunpack.c.l.b16 %v7806
        %v9082 = vunpack.c.h.b16 %v7806
        %v9083 = vunpack.c.l.b16 %v7807
        %v9084 = vunpack.c.h.b16 %v7807
        %v9085 = vunpack.c.l.b16 %v7808
        %v9086 = vunpack.c.h.b16 %v7808
        %v9087 = vunpack.c.l.b16 %v7809
        %v9088 = vunpack.c.h.b16 %v7809
        %v9089 = vunpack.c.l.b16 %v7810
        %v9090 = vunpack.c.h.b16 %v7810
        %v9091 = vunpack.c.l.b16 %v7811
        %v9092 = vunpack.c.h.b16 %v7811
        %v9093 = vunpack.c.l.b16 %v7812
        %v9094 = vunpack.c.h.b16 %v7812
        %v9095 = vunpack.c.l.b16 %v7813
        %v9096 = vunpack.c.h.b16 %v7813
        %v9097 = vunpack.c.l.b16 %v7814
        %v9098 = vunpack.c.h.b16 %v7814
        %v9099 = vunpack.c.l.b16 %v7815
        %v9100 = vunpack.c.h.b16 %v7815
        %v9101 = vunpack.c.l.b16 %v7816
        %v9102 = vunpack.c.h.b16 %v7816
        %v9103 = vunpack.c.l.b16 %v7817
        %v9104 = vunpack.c.h.b16 %v7817
        %v9105 = vunpack.c.l.b16 %v7818
        %v9106 = vunpack.c.h.b16 %v7818
        %v9107 = vunpack.c.l.b16 %v7819
        %v9108 = vunpack.c.h.b16 %v7819
        %v9109 = vunpack.c.l.b16 %v7820
        %v9110 = vunpack.c.h.b16 %v7820
        %v9111 = vunpack.c.l.b16 %v7821
        %v9112 = vunpack.c.h.b16 %v7821
        %v9113 = vunpack.c.l.b16 %v7822
        %v9114 = vunpack.c.h.b16 %v7822
        %v9115 = vunpack.c.l.b16 %v7823
        %v9116 = vunpack.c.h.b16 %v7823
        %v9117 = vunpack.c.l.b16 %v7824
        %v9118 = vunpack.c.h.b16 %v7824
        %v9119 = vunpack.c.l.b16 %v7825
        %v9120 = vunpack.c.h.b16 %v7825
        %v9121 = vunpack.c.l.b16 %v7826
        %v9122 = vunpack.c.h.b16 %v7826
        %v9123 = vunpack.c.l.b16 %v7827
        %v9124 = vunpack.c.h.b16 %v7827
        %v9125 = vunpack.c.l.b16 %v7828
        %v9126 = vunpack.c.h.b16 %v7828
        %v9127 = vunpack.c.l.b16 %v7829
        %v9128 = vunpack.c.h.b16 %v7829
        %v9129 = vunpack.c.l.b16 %v7830
        %v9130 = vunpack.c.h.b16 %v7830
        %v9131 = vunpack.c.l.b16 %v7831
        %v9132 = vunpack.c.h.b16 %v7831
        %v9133 = vunpack.c.l.b16 %v7832
        %v9134 = vunpack.c.h.b16 %v7832
        %v9135 = vunpack.c.l.b16 %v7833
        %v9136 = vunpack.c.h.b16 %v7833
        %v9137 = vunpack.c.l.b16 %v7834
        %v9138 = vunpack.c.h.b16 %v7834
        %v9139 = vunpack.c.l.b16 %v7835
        %v9140 = vunpack.c.h.b16 %v7835
        %v9141 = vunpack.c.l.b16 %v7836
        %v9142 = vunpack.c.h.b16 %v7836
        %v9143 = vunpack.c.l.b16 %v7837
        %v9144 = vunpack.c.h.b16 %v7837
        %v9145 = vunpack.c.l.b16 %v7838
        %v9146 = vunpack.c.h.b16 %v7838
        %v9147 = vunpack.c.l.b16 %v7839
        %v9148 = vunpack.c.h.b16 %v7839
        %v9149 = vunpack.c.l.b16 %v7840
        %v9150 = vunpack.c.h.b16 %v7840
        %v9151 = vunpack.c.l.b16 %v7841
        %v9152 = vunpack.c.h.b16 %v7841
        %v9153 = vunpack.c.l.b16 %v7842
        %v9154 = vunpack.c.h.b16 %v7842
        %v9155 = vunpack.c.l.b16 %v7843
        %v9156 = vunpack.c.h.b16 %v7843
        %v9157 = vunpack.c.l.b16 %v7844
        %v9158 = vunpack.c.h.b16 %v7844
        %v9159 = vunpack.c.l.b16 %v7845
        %v9160 = vunpack.c.h.b16 %v7845
        %v9161 = vunpack.c.l.b16 %v7846
        %v9162 = vunpack.c.h.b16 %v7846
        %v9163 = vunpack.c.l.b16 %v7847
        %v9164 = vunpack.c.h.b16 %v7847
        %v9165 = vunpack.c.l.b16 %v7848
        %v9166 = vunpack.c.h.b16 %v7848
        %v9167 = vunpack.c.l.b16 %v7849
        %v9168 = vunpack.c.h.b16 %v7849
        %v9169 = vunpack.c.l.b16 %v7850
        %v9170 = vunpack.c.h.b16 %v7850
        %v9171 = vunpack.c.l.b16 %v7851
        %v9172 = vunpack.c.h.b16 %v7851
        %v9173 = vunpack.c.l.b16 %v7852
        %v9174 = vunpack.c.h.b16 %v7852
        %v9175 = vunpack.c.l.b16 %v7853
        %v9176 = vunpack.c.h.b16 %v7853
        %v9177 = vunpack.c.l.b16 %v7854
        %v9178 = vunpack.c.h.b16 %v7854
        %v9179 = vunpack.c.l.b16 %v7855
        %v9180 = vunpack.c.h.b16 %v7855
        %v9181 = vunpack.c.l.b16 %v7856
        %v9182 = vunpack.c.h.b16 %v7856
        %v9183 = vunpack.c.l.b16 %v7857
        %v9184 = vunpack.c.h.b16 %v7857
        %v9185 = vunpack.c.l.b16 %v7858
        %v9186 = vunpack.c.h.b16 %v7858
        %v9187 = vunpack.c.l.b16 %v7859
        %v9188 = vunpack.c.h.b16 %v7859
        %v9189 = vunpack.c.l.b16 %v7860
        %v9190 = vunpack.c.h.b16 %v7860
        %v9191 = vunpack.c.l.b16 %v7861
        %v9192 = vunpack.c.h.b16 %v7861
        %v9193 = vunpack.c.l.b16 %v7862
        %v9194 = vunpack.c.h.b16 %v7862
        %v9195 = vunpack.c.l.b16 %v7863
        %v9196 = vunpack.c.h.b16 %v7863
        %v9197 = vunpack.c.l.b16 %v7864
        %v9198 = vunpack.c.h.b16 %v7864
        %v9199 = vunpack.c.l.b16 %v7865
        %v9200 = vunpack.c.h.b16 %v7865
        %v9201 = vunpack.c.l.b16 %v7866
        %v9202 = vunpack.c.h.b16 %v7866
        %v9203 = vunpack.c.l.b16 %v7867
        %v9204 = vunpack.c.h.b16 %v7867
        %v9205 = vunpack.c.l.b16 %v7868
        %v9206 = vunpack.c.h.b16 %v7868
        %v9207 = vunpack.c.l.b16 %v7869
        %v9208 = vunpack.c.h.b16 %v7869
        %v9209 = vunpack.c.l.b16 %v7870
        %v9210 = vunpack.c.h.b16 %v7870
        %v9211 = vunpack.c.l.b16 %v7871
        %v9212 = vunpack.c.h.b16 %v7871
        %v9213 = vunpack.c.l.b16 %v7872
        %v9214 = vunpack.c.h.b16 %v7872
        %v9215 = vunpack.c.l.b16 %v7873
        %v9216 = vunpack.c.h.b16 %v7873
        %v9217 = vunpack.c.l.b16 %v7874
        %v9218 = vunpack.c.h.b16 %v7874
        %v9219 = vunpack.c.l.b16 %v7875
        %v9220 = vunpack.c.h.b16 %v7875
        %v9221 = vunpack.c.l.b16 %v7876
        %v9222 = vunpack.c.h.b16 %v7876
        %v9223 = vunpack.c.l.b16 %v7877
        %v9224 = vunpack.c.h.b16 %v7877
        %v9225 = vunpack.c.l.b16 %v7878
        %v9226 = vunpack.c.h.b16 %v7878
        %v9227 = vunpack.c.l.b16 %v7879
        %v9228 = vunpack.c.h.b16 %v7879
        %v9229 = vunpack.c.l.b16 %v7880
        %v9230 = vunpack.c.h.b16 %v7880
        %v9231 = vunpack.c.l.b16 %v7881
        %v9232 = vunpack.c.h.b16 %v7881
        %v9233 = vunpack.c.l.b16 %v7882
        %v9234 = vunpack.c.h.b16 %v7882
        %v9235 = vunpack.c.l.b16 %v7883
        %v9236 = vunpack.c.h.b16 %v7883
        %v9237 = vunpack.c.l.b16 %v7884
        %v9238 = vunpack.c.h.b16 %v7884
        %v9239 = vunpack.c.l.b16 %v7885
        %v9240 = vunpack.c.h.b16 %v7885
        %v9241 = vunpack.c.l.b16 %v7886
        %v9242 = vunpack.c.h.b16 %v7886
        %v9243 = vunpack.c.l.b16 %v7887
        %v9244 = vunpack.c.h.b16 %v7887
        %v9245 = vunpack.c.l.b16 %v7888
        %v9246 = vunpack.c.h.b16 %v7888
        %v9247 = vunpack.c.l.b16 %v7889
        %v9248 = vunpack.c.h.b16 %v7889
        %v9249 = vunpack.c.l.b16 %v7890
        %v9250 = vunpack.c.h.b16 %v7890
        %v9251 = vunpack.c.l.b16 %v7891
        %v9252 = vunpack.c.h.b16 %v7891
        %v9253 = vunpack.c.l.b16 %v7892
        %v9254 = vunpack.c.h.b16 %v7892
        %v9255 = vunpack.c.l.b16 %v7893
        %v9256 = vunpack.c.h.b16 %v7893
        %v9257 = vunpack.c.l.b16 %v7894
        %v9258 = vunpack.c.h.b16 %v7894
        %v9259 = vunpack.c.l.b16 %v7895
        %v9260 = vunpack.c.h.b16 %v7895
        %v9261 = vunpack.c.l.b16 %v7896
        %v9262 = vunpack.c.h.b16 %v7896
        %v9263 = vunpack.c.l.b16 %v7897
        %v9264 = vunpack.c.h.b16 %v7897
        %v9265 = vunpack.c.l.b16 %v7898
        %v9266 = vunpack.c.h.b16 %v7898
        %v9267 = vunpack.c.l.b16 %v7899
        %v9268 = vunpack.c.h.b16 %v7899
        %v9269 = vunpack.c.l.b16 %v7900
        %v9270 = vunpack.c.h.b16 %v7900
        %v9271 = vunpack.c.l.b16 %v7901
        %v9272 = vunpack.c.h.b16 %v7901
        %v9273 = vunpack.c.l.b16 %v7902
        %v9274 = vunpack.c.h.b16 %v7902
        %v9275 = vunpack.c.l.b16 %v7903
        %v9276 = vunpack.c.h.b16 %v7903
        %v9277 = vunpack.c.l.b16 %v7904
        %v9278 = vunpack.c.h.b16 %v7904
        %v9279 = vunpack.c.l.b16 %v7905
        %v9280 = vunpack.c.h.b16 %v7905
        %v9281 = vunpack.c.l.b16 %v7906
        %v9282 = vunpack.c.h.b16 %v7906
        %v9283 = vunpack.c.l.b16 %v7907
        %v9284 = vunpack.c.h.b16 %v7907
        %v9285 = vunpack.c.l.b16 %v7908
        %v9286 = vunpack.c.h.b16 %v7908
        %v9287 = vunpack.c.l.b16 %v7909
        %v9288 = vunpack.c.h.b16 %v7909
        %v9289 = vunpack.c.l.b16 %v7910
        %v9290 = vunpack.c.h.b16 %v7910
        %v9291 = vunpack.c.l.b16 %v7911
        %v9292 = vunpack.c.h.b16 %v7911
        %v9293 = vunpack.c.l.b16 %v7912
        %v9294 = vunpack.c.h.b16 %v7912
        %v9295 = vunpack.c.l.b16 %v7913
        %v9296 = vunpack.c.h.b16 %v7913
        %v9297 = vunpack.c.l.b16 %v7914
        %v9298 = vunpack.c.h.b16 %v7914
        %v9299 = vunpack.c.l.b16 %v7915
        %v9300 = vunpack.c.h.b16 %v7915
        %v9301 = vunpack.c.l.b16 %v7916
        %v9302 = vunpack.c.h.b16 %v7916
        %v9303 = vunpack.c.l.b16 %v7917
        %v9304 = vunpack.c.h.b16 %v7917
        %v9305 = vunpack.c.l.b16 %v7918
        %v9306 = vunpack.c.h.b16 %v7918
        %v9307 = vunpack.c.l.b16 %v7919
        %v9308 = vunpack.c.h.b16 %v7919
        %v9309 = vunpack.c.l.b16 %v7920
        %v9310 = vunpack.c.h.b16 %v7920
        %v9311 = vunpack.c.l.b16 %v7921
        %v9312 = vunpack.c.h.b16 %v7921
        %v9313 = vunpack.c.l.b16 %v7922
        %v9314 = vunpack.c.h.b16 %v7922
        %v9315 = vunpack.c.l.b16 %v7923
        %v9316 = vunpack.c.h.b16 %v7923
        %v9317 = vunpack.c.l.b16 %v7924
        %v9318 = vunpack.c.h.b16 %v7924
        %v9319 = vunpack.c.l.b16 %v7925
        %v9320 = vunpack.c.h.b16 %v7925
        %v9321 = vunpack.c.l.b16 %v7926
        %v9322 = vunpack.c.h.b16 %v7926
        %v9323 = vunpack.c.l.b16 %v7927
        %v9324 = vunpack.c.h.b16 %v7927
        %v9325 = vunpack.c.l.b16 %v7928
        %v9326 = vunpack.c.h.b16 %v7928
        %v9327 = vunpack.c.l.b16 %v7929
        %v9328 = vunpack.c.h.b16 %v7929
        %v9329 = vunpack.c.l.b16 %v7930
        %v9330 = vunpack.c.h.b16 %v7930
        %v9331 = vunpack.c.l.b16 %v7931
        %v9332 = vunpack.c.h.b16 %v7931
        %v9333 = vunpack.c.l.b16 %v7932
        %v9334 = vunpack.c.h.b16 %v7932
        %v9335 = vunpack.c.l.b16 %v7933
        %v9336 = vunpack.c.h.b16 %v7933
        %v9337 = vunpack.c.l.b16 %v7934
        %v9338 = vunpack.c.h.b16 %v7934
        %v9339 = vunpack.c.l.b16 %v7935
        %v9340 = vunpack.c.h.b16 %v7935
        %v9341 = vunpack.c.l.b16 %v7936
        %v9342 = vunpack.c.h.b16 %v7936
        %v9343 = vunpack.c.l.b16 %v7937
        %v9344 = vunpack.c.h.b16 %v7937
        %v9345 = vunpack.c.l.b16 %v7938
        %v9346 = vunpack.c.h.b16 %v7938
        %v9347 = vunpack.c.l.b16 %v7939
        %v9348 = vunpack.c.h.b16 %v7939
        %v9349 = vunpack.c.l.b16 %v7940
        %v9350 = vunpack.c.h.b16 %v7940
        %v9351 = vunpack.c.l.b16 %v7941
        %v9352 = vunpack.c.h.b16 %v7941
        %v9353 = vunpack.c.l.b16 %v7942
        %v9354 = vunpack.c.h.b16 %v7942
        %v9355 = vunpack.c.l.b16 %v7943
        %v9356 = vunpack.c.h.b16 %v7943
        %v9357 = vunpack.c.l.b16 %v7944
        %v9358 = vunpack.c.h.b16 %v7944
        %v9359 = vunpack.c.l.b16 %v7945
        %v9360 = vunpack.c.h.b16 %v7945
        %v9361 = vunpack.c.l.b16 %v7946
        %v9362 = vunpack.c.h.b16 %v7946
        %v9363 = vunpack.c.l.b16 %v7947
        %v9364 = vunpack.c.h.b16 %v7947
        %v9365 = vunpack.c.l.b16 %v7948
        %v9366 = vunpack.c.h.b16 %v7948
        %v9367 = vunpack.c.l.b16 %v7949
        %v9368 = vunpack.c.h.b16 %v7949
        %v9369 = vunpack.c.l.b16 %v7950
        %v9370 = vunpack.c.h.b16 %v7950
        %v9371 = vunpack.c.l.b16 %v7951
        %v9372 = vunpack.c.h.b16 %v7951
        %v9373 = vunpack.c.l.b16 %v7952
        %v9374 = vunpack.c.h.b16 %v7952
        %v9375 = vunpack.c.l.b16 %v7953
        %v9376 = vunpack.c.h.b16 %v7953
        %v9377 = vunpack.c.l.b16 %v7954
        %v9378 = vunpack.c.h.b16 %v7954
        %v9379 = vunpack.c.l.b16 %v7955
        %v9380 = vunpack.c.h.b16 %v7955
        %v9381 = vunpack.c.l.b16 %v7956
        %v9382 = vunpack.c.h.b16 %v7956
        %v9383 = vunpack.c.l.b16 %v7957
        %v9384 = vunpack.c.h.b16 %v7957
        %v9385 = vunpack.c.l.b16 %v7958
        %v9386 = vunpack.c.h.b16 %v7958
        %v9387 = vunpack.c.l.b16 %v7959
        %v9388 = vunpack.c.h.b16 %v7959
        %v9389 = vunpack.c.l.b16 %v7960
        %v9390 = vunpack.c.h.b16 %v7960
        %v9391 = vunpack.c.l.b16 %v7961
        %v9392 = vunpack.c.h.b16 %v7961
        %v9393 = vunpack.c.l.b16 %v7962
        %v9394 = vunpack.c.h.b16 %v7962
        %v9395 = vunpack.c.l.b16 %v7963
        %v9396 = vunpack.c.h.b16 %v7963
        %v9397 = vunpack.c.l.b16 %v7964
        %v9398 = vunpack.c.h.b16 %v7964
        %v9399 = vunpack.c.l.b16 %v7965
        %v9400 = vunpack.c.h.b16 %v7965
        %v9401 = vunpack.c.l.b16 %v7966
        %v9402 = vunpack.c.h.b16 %v7966
        %v9403 = vunpack.c.l.b16 %v7967
        %v9404 = vunpack.c.h.b16 %v7967
        %v9405 = vunpack.c.l.b16 %v7968
        %v9406 = vunpack.c.h.b16 %v7968
        %v9407 = vunpack.c.l.b16 %v7969
        %v9408 = vunpack.c.h.b16 %v7969
        %v9409 = vunpack.c.l.b16 %v7970
        %v9410 = vunpack.c.h.b16 %v7970
        %v9411 = vunpack.c.l.b16 %v7971
        %v9412 = vunpack.c.h.b16 %v7971
        %v9413 = vunpack.c.l.b16 %v7972
        %v9414 = vunpack.c.h.b16 %v7972
        %v9415 = vunpack.c.l.b16 %v7973
        %v9416 = vunpack.c.h.b16 %v7973
        %v9417 = vunpack.c.l.b16 %v7974
        %v9418 = vunpack.c.h.b16 %v7974
        %v9419 = vunpack.c.l.b16 %v7975
        %v9420 = vunpack.c.h.b16 %v7975
        %v9421 = vunpack.c.l.b16 %v7976
        %v9422 = vunpack.c.h.b16 %v7976
        %v9423 = vunpack.c.l.b16 %v7977
        %v9424 = vunpack.c.h.b16 %v7977
        %v9425 = vunpack.c.l.b16 %v7978
        %v9426 = vunpack.c.h.b16 %v7978
        %v9427 = vunpack.c.l.b16 %v7979
        %v9428 = vunpack.c.h.b16 %v7979
        %v9429 = vunpack.c.l.b16 %v7980
        %v9430 = vunpack.c.h.b16 %v7980
        %v9431 = vunpack.c.l.b16 %v7981
        %v9432 = vunpack.c.h.b16 %v7981
        %v9433 = vunpack.c.l.b16 %v7982
        %v9434 = vunpack.c.h.b16 %v7982
        %v9435 = vunpack.c.l.b16 %v7983
        %v9436 = vunpack.c.h.b16 %v7983
        %v9437 = vunpack.c.l.b16 %v7984
        %v9438 = vunpack.c.h.b16 %v7984
        %v9439 = vunpack.c.l.b16 %v7985
        %v9440 = vunpack.c.h.b16 %v7985
        %v9441 = vunpack.c.l.b16 %v7986
        %v9442 = vunpack.c.h.b16 %v7986
        %v9443 = vunpack.c.l.b16 %v7987
        %v9444 = vunpack.c.h.b16 %v7987
        %v9445 = vunpack.c.l.b16 %v7988
        %v9446 = vunpack.c.h.b16 %v7988
        %v9447 = vunpack.c.l.b16 %v7989
        %v9448 = vunpack.c.h.b16 %v7989
        %v9449 = vunpack.c.l.b16 %v7990
        %v9450 = vunpack.c.h.b16 %v7990
        %v9451 = vunpack.c.l.b16 %v7991
        %v9452 = vunpack.c.h.b16 %v7991
        %v9453 = vunpack.c.l.b16 %v7992
        %v9454 = vunpack.c.h.b16 %v7992
        %v9455 = vunpack.c.l.b16 %v7993
        %v9456 = vunpack.c.h.b16 %v7993
        %v9457 = vunpack.c.l.b16 %v7994
        %v9458 = vunpack.c.h.b16 %v7994
        %v9459 = vunpack.c.l.b16 %v7995
        %v9460 = vunpack.c.h.b16 %v7995
        %v9461 = vunpack.c.l.b16 %v7996
        %v9462 = vunpack.c.h.b16 %v7996
        %v9463 = vunpack.c.l.b16 %v7997
        %v9464 = vunpack.c.h.b16 %v7997
        %v9465 = vunpack.c.l.b16 %v7998
        %v9466 = vunpack.c.h.b16 %v7998
        %v9467 = vunpack.c.l.b16 %v7999
        %v9468 = vunpack.c.h.b16 %v7999
        %v9469 = vunpack.c.l.b16 %v8000
        %v9470 = vunpack.c.h.b16 %v8000
        %v9471 = vunpack.c.l.b16 %v8001
        %v9472 = vunpack.c.h.b16 %v8001
        %v9473 = vunpack.c.l.b16 %v8002
        %v9474 = vunpack.c.h.b16 %v8002
        %v9475 = vunpack.c.l.b16 %v8003
        %v9476 = vunpack.c.h.b16 %v8003
        %v9477 = vunpack.c.l.b16 %v8004
        %v9478 = vunpack.c.h.b16 %v8004
        %v9479 = vunpack.c.l.b16 %v8005
        %v9480 = vunpack.c.h.b16 %v8005
        %v9481 = vunpack.c.l.b16 %v8006
        %v9482 = vunpack.c.h.b16 %v8006
        %v9483 = vunpack.c.l.b16 %v8007
        %v9484 = vunpack.c.h.b16 %v8007
        %v9485 = vunpack.c.l.b16 %v8008
        %v9486 = vunpack.c.h.b16 %v8008
        %v9487 = vunpack.c.l.b16 %v8009
        %v9488 = vunpack.c.h.b16 %v8009
        %v9489 = vunpack.c.l.b16 %v8010
        %v9490 = vunpack.c.h.b16 %v8010
        %v9491 = vunpack.c.l.b16 %v8011
        %v9492 = vunpack.c.h.b16 %v8011
        %v9493 = vunpack.c.l.b16 %v8012
        %v9494 = vunpack.c.h.b16 %v8012
        %v9495 = vunpack.c.l.b16 %v8013
        %v9496 = vunpack.c.h.b16 %v8013
        %v9497 = vunpack.c.l.b16 %v8014
        %v9498 = vunpack.c.h.b16 %v8014
        %v9499 = vunpack.c.l.b16 %v8015
        %v9500 = vunpack.c.h.b16 %v8015
        %v9501 = vunpack.c.l.b16 %v8016
        %v9502 = vunpack.c.h.b16 %v8016
        %v9503 = vunpack.c.l.b16 %v8017
        %v9504 = vunpack.c.h.b16 %v8017
        %v9505 = vunpack.c.l.b16 %v8018
        %v9506 = vunpack.c.h.b16 %v8018
        %v9507 = vunpack.c.l.b16 %v8019
        %v9508 = vunpack.c.h.b16 %v8019
        %v9509 = vunpack.c.l.b16 %v8020
        %v9510 = vunpack.c.h.b16 %v8020
        %v9511 = vunpack.c.l.b16 %v8021
        %v9512 = vunpack.c.h.b16 %v8021
        %v9513 = vunpack.c.l.b16 %v8022
        %v9514 = vunpack.c.h.b16 %v8022
        %v9515 = vunpack.c.l.b16 %v8023
        %v9516 = vunpack.c.h.b16 %v8023
        %v9517 = vunpack.c.l.b16 %v8024
        %v9518 = vunpack.c.h.b16 %v8024
        %v9519 = vunpack.c.l.b16 %v8025
        %v9520 = vunpack.c.h.b16 %v8025
        %v9521 = vunpack.c.l.b16 %v8026
        %v9522 = vunpack.c.h.b16 %v8026
        %v9523 = vunpack.c.l.b16 %v8027
        %v9524 = vunpack.c.h.b16 %v8027
        %v9525 = vunpack.c.l.b16 %v8028
        %v9526 = vunpack.c.h.b16 %v8028
        %v9527 = vunpack.c.l.b16 %v8029
        %v9528 = vunpack.c.h.b16 %v8029
        %v9529 = vunpack.c.l.b16 %v8030
        %v9530 = vunpack.c.h.b16 %v8030
        %v9531 = vunpack.c.l.b16 %v8031
        %v9532 = vunpack.c.h.b16 %v8031
        %v9533 = vunpack.c.l.b16 %v8032
        %v9534 = vunpack.c.h.b16 %v8032
        %v9535 = vunpack.c.l.b16 %v8033
        %v9536 = vunpack.c.h.b16 %v8033
        %v9537 = vunpack.c.l.b16 %v8034
        %v9538 = vunpack.c.h.b16 %v8034
        %v9539 = vunpack.c.l.b16 %v8035
        %v9540 = vunpack.c.h.b16 %v8035
        %v9541 = vunpack.c.l.b16 %v8036
        %v9542 = vunpack.c.h.b16 %v8036
        %v9543 = vunpack.c.l.b16 %v8037
        %v9544 = vunpack.c.h.b16 %v8037
        %v9545 = vunpack.c.l.b16 %v8038
        %v9546 = vunpack.c.h.b16 %v8038
        %v9547 = vunpack.c.l.b16 %v8039
        %v9548 = vunpack.c.h.b16 %v8039
        %v9549 = vunpack.c.l.b16 %v8040
        %v9550 = vunpack.c.h.b16 %v8040
        %v9551 = vunpack.c.l.b16 %v8041
        %v9552 = vunpack.c.h.b16 %v8041
        %v9553 = vunpack.c.l.b16 %v8042
        %v9554 = vunpack.c.h.b16 %v8042
        %v9555 = vunpack.c.l.b16 %v8043
        %v9556 = vunpack.c.h.b16 %v8043
        %v9557 = vunpack.c.l.b16 %v8044
        %v9558 = vunpack.c.h.b16 %v8044
        %v9559 = vunpack.c.l.b16 %v8045
        %v9560 = vunpack.c.h.b16 %v8045
        %v9561 = vunpack.c.l.b16 %v8046
        %v9562 = vunpack.c.h.b16 %v8046
        %v9563 = vunpack.c.l.b16 %v8047
        %v9564 = vunpack.c.h.b16 %v8047
        %v9565 = vunpack.c.l.b16 %v8048
        %v9566 = vunpack.c.h.b16 %v8048
        %v9567 = vunpack.c.l.b16 %v8049
        %v9568 = vunpack.c.h.b16 %v8049
        %v9569 = vunpack.c.l.b16 %v8050
        %v9570 = vunpack.c.h.b16 %v8050
        %v9571 = vunpack.c.l.b16 %v8051
        %v9572 = vunpack.c.h.b16 %v8051
        %v9573 = vunpack.c.l.b16 %v8052
        %v9574 = vunpack.c.h.b16 %v8052
        %v9575 = vunpack.c.l.b16 %v8053
        %v9576 = vunpack.c.h.b16 %v8053
        %v9577 = vunpack.c.l.b16 %v8054
        %v9578 = vunpack.c.h.b16 %v8054
        %v9579 = vunpack.c.l.b16 %v8055
        %v9580 = vunpack.c.h.b16 %v8055
        %v9581 = vunpack.c.l.b16 %v8056
        %v9582 = vunpack.c.h.b16 %v8056
        %v9583 = vunpack.c.l.b16 %v8057
        %v9584 = vunpack.c.h.b16 %v8057
        %v9585 = vunpack.c.l.b16 %v8058
        %v9586 = vunpack.c.h.b16 %v8058
        %v9587 = vunpack.c.l.b16 %v8059
        %v9588 = vunpack.c.h.b16 %v8059
        %v9589 = vunpack.c.l.b16 %v8060
        %v9590 = vunpack.c.h.b16 %v8060
        %v9591 = vunpack.c.l.b16 %v8061
        %v9592 = vunpack.c.h.b16 %v8061
        %v9593 = vunpack.c.l.b16 %v8062
        %v9594 = vunpack.c.h.b16 %v8062
        %v9595 = vunpack.c.l.b16 %v8063
        %v9596 = vunpack.c.h.b16 %v8063
        %v9597 = vunpack.c.l.b16 %v8064
        %v9598 = vunpack.c.h.b16 %v8064
        %v9599 = vunpack.c.l.b16 %v8065
        %v9600 = vunpack.c.h.b16 %v8065
        %v9601 = vunpack.c.l.b16 %v8066
        %v9602 = vunpack.c.h.b16 %v8066
        %v9603 = vpack.c.b16 %v8587, %v8579
        %v9604 = vpack.c.b16 %v8588, %v8580
        %v9605 = vpack.c.b16 %v8589, %v8581
        %v9606 = vpack.c.b16 %v8590, %v8582
        %v9607 = vpack.c.b16 %v8591, %v8583
        %v9608 = vpack.c.b16 %v8592, %v8584
        %v9609 = vpack.c.b16 %v8593, %v8585
        %v9610 = vpack.c.b16 %v8594, %v8586
        %v9611 = vpack.c.b16 %v8603, %v8595
        %v9612 = vpack.c.b16 %v8604, %v8596
        %v9613 = vpack.c.b16 %v8605, %v8597
        %v9614 = vpack.c.b16 %v8606, %v8598
        %v9615 = vpack.c.b16 %v8607, %v8599
        %v9616 = vpack.c.b16 %v8608, %v8600
        %v9617 = vpack.c.b16 %v8609, %v8601
        %v9618 = vpack.c.b16 %v8610, %v8602
        %v9619 = vpack.c.b16 %v8619, %v8611
        %v9620 = vpack.c.b16 %v8620, %v8612
        %v9621 = vpack.c.b16 %v8621, %v8613
        %v9622 = vpack.c.b16 %v8622, %v8614
        %v9623 = vpack.c.b16 %v8623, %v8615
        %v9624 = vpack.c.b16 %v8624, %v8616
        %v9625 = vpack.c.b16 %v8625, %v8617
        %v9626 = vpack.c.b16 %v8626, %v8618
        %v9627 = vpack.c.b16 %v8635, %v8627
        %v9628 = vpack.c.b16 %v8636, %v8628
        %v9629 = vpack.c.b16 %v8637, %v8629
        %v9630 = vpack.c.b16 %v8638, %v8630
        %v9631 = vpack.c.b16 %v8639, %v8631
        %v9632 = vpack.c.b16 %v8640, %v8632
        %v9633 = vpack.c.b16 %v8641, %v8633
        %v9634 = vpack.c.b16 %v8642, %v8634
        %v9635 = vpack.c.b16 %v8651, %v8643
        %v9636 = vpack.c.b16 %v8652, %v8644
        %v9637 = vpack.c.b16 %v8653, %v8645
        %v9638 = vpack.c.b16 %v8654, %v8646
        %v9639 = vpack.c.b16 %v8655, %v8647
        %v9640 = vpack.c.b16 %v8656, %v8648
        %v9641 = vpack.c.b16 %v8657, %v8649
        %v9642 = vpack.c.b16 %v8658, %v8650
        %v9643 = vpack.c.b16 %v8667, %v8659
        %v9644 = vpack.c.b16 %v8668, %v8660
        %v9645 = vpack.c.b16 %v8669, %v8661
        %v9646 = vpack.c.b16 %v8670, %v8662
        %v9647 = vpack.c.b16 %v8671, %v8663
        %v9648 = vpack.c.b16 %v8672, %v8664
        %v9649 = vpack.c.b16 %v8673, %v8665
        %v9650 = vpack.c.b16 %v8674, %v8666
        %v9651 = vpack.c.b16 %v8683, %v8675
        %v9652 = vpack.c.b16 %v8684, %v8676
        %v9653 = vpack.c.b16 %v8685, %v8677
        %v9654 = vpack.c.b16 %v8686, %v8678
        %v9655 = vpack.c.b16 %v8687, %v8679
        %v9656 = vpack.c.b16 %v8688, %v8680
        %v9657 = vpack.c.b16 %v8689, %v8681
        %v9658 = vpack.c.b16 %v8690, %v8682
        %v9659 = vpack.c.b16 %v8699, %v8691
        %v9660 = vpack.c.b16 %v8700, %v8692
        %v9661 = vpack.c.b16 %v8701, %v8693
        %v9662 = vpack.c.b16 %v8702, %v8694
        %v9663 = vpack.c.b16 %v8703, %v8695
        %v9664 = vpack.c.b16 %v8704, %v8696
        %v9665 = vpack.c.b16 %v8705, %v8697
        %v9666 = vpack.c.b16 %v8706, %v8698
        %v9667 = vpack.c.b16 %v8715, %v8707
        %v9668 = vpack.c.b16 %v8716, %v8708
        %v9669 = vpack.c.b16 %v8717, %v8709
        %v9670 = vpack.c.b16 %v8718, %v8710
        %v9671 = vpack.c.b16 %v8719, %v8711
        %v9672 = vpack.c.b16 %v8720, %v8712
        %v9673 = vpack.c.b16 %v8721, %v8713
        %v9674 = vpack.c.b16 %v8722, %v8714
        %v9675 = vpack.c.b16 %v8731, %v8723
        %v9676 = vpack.c.b16 %v8732, %v8724
        %v9677 = vpack.c.b16 %v8733, %v8725
        %v9678 = vpack.c.b16 %v8734, %v8726
        %v9679 = vpack.c.b16 %v8735, %v8727
        %v9680 = vpack.c.b16 %v8736, %v8728
        %v9681 = vpack.c.b16 %v8737, %v8729
        %v9682 = vpack.c.b16 %v8738, %v8730
        %v9683 = vpack.c.b16 %v8747, %v8739
        %v9684 = vpack.c.b16 %v8748, %v8740
        %v9685 = vpack.c.b16 %v8749, %v8741
        %v9686 = vpack.c.b16 %v8750, %v8742
        %v9687 = vpack.c.b16 %v8751, %v8743
        %v9688 = vpack.c.b16 %v8752, %v8744
        %v9689 = vpack.c.b16 %v8753, %v8745
        %v9690 = vpack.c.b16 %v8754, %v8746
        %v9691 = vpack.c.b16 %v8763, %v8755
        %v9692 = vpack.c.b16 %v8764, %v8756
        %v9693 = vpack.c.b16 %v8765, %v8757
        %v9694 = vpack.c.b16 %v8766, %v8758
        %v9695 = vpack.c.b16 %v8767, %v8759
        %v9696 = vpack.c.b16 %v8768, %v8760
        %v9697 = vpack.c.b16 %v8769, %v8761
        %v9698 = vpack.c.b16 %v8770, %v8762
        %v9699 = vpack.c.b16 %v8779, %v8771
        %v9700 = vpack.c.b16 %v8780, %v8772
        %v9701 = vpack.c.b16 %v8781, %v8773
        %v9702 = vpack.c.b16 %v8782, %v8774
        %v9703 = vpack.c.b16 %v8783, %v8775
        %v9704 = vpack.c.b16 %v8784, %v8776
        %v9705 = vpack.c.b16 %v8785, %v8777
        %v9706 = vpack.c.b16 %v8786, %v8778
        %v9707 = vpack.c.b16 %v8795, %v8787
        %v9708 = vpack.c.b16 %v8796, %v8788
        %v9709 = vpack.c.b16 %v8797, %v8789
        %v9710 = vpack.c.b16 %v8798, %v8790
        %v9711 = vpack.c.b16 %v8799, %v8791
        %v9712 = vpack.c.b16 %v8800, %v8792
        %v9713 = vpack.c.b16 %v8801, %v8793
        %v9714 = vpack.c.b16 %v8802, %v8794
        %v9715 = vpack.c.b16 %v8811, %v8803
        %v9716 = vpack.c.b16 %v8812, %v8804
        %v9717 = vpack.c.b16 %v8813, %v8805
        %v9718 = vpack.c.b16 %v8814, %v8806
        %v9719 = vpack.c.b16 %v8815, %v8807
        %v9720 = vpack.c.b16 %v8816, %v8808
        %v9721 = vpack.c.b16 %v8817, %v8809
        %v9722 = vpack.c.b16 %v8818, %v8810
        %v9723 = vpack.c.b16 %v8827, %v8819
        %v9724 = vpack.c.b16 %v8828, %v8820
        %v9725 = vpack.c.b16 %v8829, %v8821
        %v9726 = vpack.c.b16 %v8830, %v8822
        %v9727 = vpack.c.b16 %v8831, %v8823
        %v9728 = vpack.c.b16 %v8832, %v8824
        %v9729 = vpack.c.b16 %v8833, %v8825
        %v9730 = vpack.c.b16 %v8834, %v8826
        %v9731 = vpack.c.b16 %v8843, %v8835
        %v9732 = vpack.c.b16 %v8844, %v8836
        %v9733 = vpack.c.b16 %v8845, %v8837
        %v9734 = vpack.c.b16 %v8846, %v8838
        %v9735 = vpack.c.b16 %v8847, %v8839
        %v9736 = vpack.c.b16 %v8848, %v8840
        %v9737 = vpack.c.b16 %v8849, %v8841
        %v9738 = vpack.c.b16 %v8850, %v8842
        %v9739 = vpack.c.b16 %v8859, %v8851
        %v9740 = vpack.c.b16 %v8860, %v8852
        %v9741 = vpack.c.b16 %v8861, %v8853
        %v9742 = vpack.c.b16 %v8862, %v8854
        %v9743 = vpack.c.b16 %v8863, %v8855
        %v9744 = vpack.c.b16 %v8864, %v8856
        %v9745 = vpack.c.b16 %v8865, %v8857
        %v9746 = vpack.c.b16 %v8866, %v8858
        %v9747 = vpack.c.b16 %v8875, %v8867
        %v9748 = vpack.c.b16 %v8876, %v8868
        %v9749 = vpack.c.b16 %v8877, %v8869
        %v9750 = vpack.c.b16 %v8878, %v8870
        %v9751 = vpack.c.b16 %v8879, %v8871
        %v9752 = vpack.c.b16 %v8880, %v8872
        %v9753 = vpack.c.b16 %v8881, %v8873
        %v9754 = vpack.c.b16 %v8882, %v8874
        %v9755 = vpack.c.b16 %v8891, %v8883
        %v9756 = vpack.c.b16 %v8892, %v8884
        %v9757 = vpack.c.b16 %v8893, %v8885
        %v9758 = vpack.c.b16 %v8894, %v8886
        %v9759 = vpack.c.b16 %v8895, %v8887
        %v9760 = vpack.c.b16 %v8896, %v8888
        %v9761 = vpack.c.b16 %v8897, %v8889
        %v9762 = vpack.c.b16 %v8898, %v8890
        %v9763 = vpack.c.b16 %v8907, %v8899
        %v9764 = vpack.c.b16 %v8908, %v8900
        %v9765 = vpack.c.b16 %v8909, %v8901
        %v9766 = vpack.c.b16 %v8910, %v8902
        %v9767 = vpack.c.b16 %v8911, %v8903
        %v9768 = vpack.c.b16 %v8912, %v8904
        %v9769 = vpack.c.b16 %v8913, %v8905
        %v9770 = vpack.c.b16 %v8914, %v8906
        %v9771 = vpack.c.b16 %v8923, %v8915
        %v9772 = vpack.c.b16 %v8924, %v8916
        %v9773 = vpack.c.b16 %v8925, %v8917
        %v9774 = vpack.c.b16 %v8926, %v8918
        %v9775 = vpack.c.b16 %v8927, %v8919
        %v9776 = vpack.c.b16 %v8928, %v8920
        %v9777 = vpack.c.b16 %v8929, %v8921
        %v9778 = vpack.c.b16 %v8930, %v8922
        %v9779 = vpack.c.b16 %v8939, %v8931
        %v9780 = vpack.c.b16 %v8940, %v8932
        %v9781 = vpack.c.b16 %v8941, %v8933
        %v9782 = vpack.c.b16 %v8942, %v8934
        %v9783 = vpack.c.b16 %v8943, %v8935
        %v9784 = vpack.c.b16 %v8944, %v8936
        %v9785 = vpack.c.b16 %v8945, %v8937
        %v9786 = vpack.c.b16 %v8946, %v8938
        %v9787 = vpack.c.b16 %v8955, %v8947
        %v9788 = vpack.c.b16 %v8956, %v8948
        %v9789 = vpack.c.b16 %v8957, %v8949
        %v9790 = vpack.c.b16 %v8958, %v8950
        %v9791 = vpack.c.b16 %v8959, %v8951
        %v9792 = vpack.c.b16 %v8960, %v8952
        %v9793 = vpack.c.b16 %v8961, %v8953
        %v9794 = vpack.c.b16 %v8962, %v8954
        %v9795 = vpack.c.b16 %v8971, %v8963
        %v9796 = vpack.c.b16 %v8972, %v8964
        %v9797 = vpack.c.b16 %v8973, %v8965
        %v9798 = vpack.c.b16 %v8974, %v8966
        %v9799 = vpack.c.b16 %v8975, %v8967
        %v9800 = vpack.c.b16 %v8976, %v8968
        %v9801 = vpack.c.b16 %v8977, %v8969
        %v9802 = vpack.c.b16 %v8978, %v8970
        %v9803 = vpack.c.b16 %v8987, %v8979
        %v9804 = vpack.c.b16 %v8988, %v8980
        %v9805 = vpack.c.b16 %v8989, %v8981
        %v9806 = vpack.c.b16 %v8990, %v8982
        %v9807 = vpack.c.b16 %v8991, %v8983
        %v9808 = vpack.c.b16 %v8992, %v8984
        %v9809 = vpack.c.b16 %v8993, %v8985
        %v9810 = vpack.c.b16 %v8994, %v8986
        %v9811 = vpack.c.b16 %v9003, %v8995
        %v9812 = vpack.c.b16 %v9004, %v8996
        %v9813 = vpack.c.b16 %v9005, %v8997
        %v9814 = vpack.c.b16 %v9006, %v8998
        %v9815 = vpack.c.b16 %v9007, %v8999
        %v9816 = vpack.c.b16 %v9008, %v9000
        %v9817 = vpack.c.b16 %v9009, %v9001
        %v9818 = vpack.c.b16 %v9010, %v9002
        %v9819 = vpack.c.b16 %v9019, %v9011
        %v9820 = vpack.c.b16 %v9020, %v9012
        %v9821 = vpack.c.b16 %v9021, %v9013
        %v9822 = vpack.c.b16 %v9022, %v9014
        %v9823 = vpack.c.b16 %v9023, %v9015
        %v9824 = vpack.c.b16 %v9024, %v9016
        %v9825 = vpack.c.b16 %v9025, %v9017
        %v9826 = vpack.c.b16 %v9026, %v9018
        %v9827 = vpack.c.b16 %v9035, %v9027
        %v9828 = vpack.c.b16 %v9036, %v9028
        %v9829 = vpack.c.b16 %v9037, %v9029
        %v9830 = vpack.c.b16 %v9038, %v9030
        %v9831 = vpack.c.b16 %v9039, %v9031
        %v9832 = vpack.c.b16 %v9040, %v9032
        %v9833 = vpack.c.b16 %v9041, %v9033
        %v9834 = vpack.c.b16 %v9042, %v9034
        %v9835 = vpack.c.b16 %v9051, %v9043
        %v9836 = vpack.c.b16 %v9052, %v9044
        %v9837 = vpack.c.b16 %v9053, %v9045
        %v9838 = vpack.c.b16 %v9054, %v9046
        %v9839 = vpack.c.b16 %v9055, %v9047
        %v9840 = vpack.c.b16 %v9056, %v9048
        %v9841 = vpack.c.b16 %v9057, %v9049
        %v9842 = vpack.c.b16 %v9058, %v9050
        %v9843 = vpack.c.b16 %v9067, %v9059
        %v9844 = vpack.c.b16 %v9068, %v9060
        %v9845 = vpack.c.b16 %v9069, %v9061
        %v9846 = vpack.c.b16 %v9070, %v9062
        %v9847 = vpack.c.b16 %v9071, %v9063
        %v9848 = vpack.c.b16 %v9072, %v9064
        %v9849 = vpack.c.b16 %v9073, %v9065
        %v9850 = vpack.c.b16 %v9074, %v9066
        %v9851 = vpack.c.b16 %v9083, %v9075
        %v9852 = vpack.c.b16 %v9084, %v9076
        %v9853 = vpack.c.b16 %v9085, %v9077
        %v9854 = vpack.c.b16 %v9086, %v9078
        %v9855 = vpack.c.b16 %v9087, %v9079
        %v9856 = vpack.c.b16 %v9088, %v9080
        %v9857 = vpack.c.b16 %v9089, %v9081
        %v9858 = vpack.c.b16 %v9090, %v9082
        %v9859 = vpack.c.b16 %v9099, %v9091
        %v9860 = vpack.c.b16 %v9100, %v9092
        %v9861 = vpack.c.b16 %v9101, %v9093
        %v9862 = vpack.c.b16 %v9102, %v9094
        %v9863 = vpack.c.b16 %v9103, %v9095
        %v9864 = vpack.c.b16 %v9104, %v9096
        %v9865 = vpack.c.b16 %v9105, %v9097
        %v9866 = vpack.c.b16 %v9106, %v9098
        %v9867 = vpack.c.b16 %v9115, %v9107
        %v9868 = vpack.c.b16 %v9116, %v9108
        %v9869 = vpack.c.b16 %v9117, %v9109
        %v9870 = vpack.c.b16 %v9118, %v9110
        %v9871 = vpack.c.b16 %v9119, %v9111
        %v9872 = vpack.c.b16 %v9120, %v9112
        %v9873 = vpack.c.b16 %v9121, %v9113
        %v9874 = vpack.c.b16 %v9122, %v9114
        %v9875 = vpack.c.b16 %v9131, %v9123
        %v9876 = vpack.c.b16 %v9132, %v9124
        %v9877 = vpack.c.b16 %v9133, %v9125
        %v9878 = vpack.c.b16 %v9134, %v9126
        %v9879 = vpack.c.b16 %v9135, %v9127
        %v9880 = vpack.c.b16 %v9136, %v9128
        %v9881 = vpack.c.b16 %v9137, %v9129
        %v9882 = vpack.c.b16 %v9138, %v9130
        %v9883 = vpack.c.b16 %v9147, %v9139
        %v9884 = vpack.c.b16 %v9148, %v9140
        %v9885 = vpack.c.b16 %v9149, %v9141
        %v9886 = vpack.c.b16 %v9150, %v9142
        %v9887 = vpack.c.b16 %v9151, %v9143
        %v9888 = vpack.c.b16 %v9152, %v9144
        %v9889 = vpack.c.b16 %v9153, %v9145
        %v9890 = vpack.c.b16 %v9154, %v9146
        %v9891 = vpack.c.b16 %v9163, %v9155
        %v9892 = vpack.c.b16 %v9164, %v9156
        %v9893 = vpack.c.b16 %v9165, %v9157
        %v9894 = vpack.c.b16 %v9166, %v9158
        %v9895 = vpack.c.b16 %v9167, %v9159
        %v9896 = vpack.c.b16 %v9168, %v9160
        %v9897 = vpack.c.b16 %v9169, %v9161
        %v9898 = vpack.c.b16 %v9170, %v9162
        %v9899 = vpack.c.b16 %v9179, %v9171
        %v9900 = vpack.c.b16 %v9180, %v9172
        %v9901 = vpack.c.b16 %v9181, %v9173
        %v9902 = vpack.c.b16 %v9182, %v9174
        %v9903 = vpack.c.b16 %v9183, %v9175
        %v9904 = vpack.c.b16 %v9184, %v9176
        %v9905 = vpack.c.b16 %v9185, %v9177
        %v9906 = vpack.c.b16 %v9186, %v9178
        %v9907 = vpack.c.b16 %v9195, %v9187
        %v9908 = vpack.c.b16 %v9196, %v9188
        %v9909 = vpack.c.b16 %v9197, %v9189
        %v9910 = vpack.c.b16 %v9198, %v9190
        %v9911 = vpack.c.b16 %v9199, %v9191
        %v9912 = vpack.c.b16 %v9200, %v9192
        %v9913 = vpack.c.b16 %v9201, %v9193
        %v9914 = vpack.c.b16 %v9202, %v9194
        %v9915 = vpack.c.b16 %v9211, %v9203
        %v9916 = vpack.c.b16 %v9212, %v9204
        %v9917 = vpack.c.b16 %v9213, %v9205
        %v9918 = vpack.c.b16 %v9214, %v9206
        %v9919 = vpack.c.b16 %v9215, %v9207
        %v9920 = vpack.c.b16 %v9216, %v9208
        %v9921 = vpack.c.b16 %v9217, %v9209
        %v9922 = vpack.c.b16 %v9218, %v9210
        %v9923 = vpack.c.b16 %v9227, %v9219
        %v9924 = vpack.c.b16 %v9228, %v9220
        %v9925 = vpack.c.b16 %v9229, %v9221
        %v9926 = vpack.c.b16 %v9230, %v9222
        %v9927 = vpack.c.b16 %v9231, %v9223
        %v9928 = vpack.c.b16 %v9232, %v9224
        %v9929 = vpack.c.b16 %v9233, %v9225
        %v9930 = vpack.c.b16 %v9234, %v9226
        %v9931 = vpack.c.b16 %v9243, %v9235
        %v9932 = vpack.c.b16 %v9244, %v9236
        %v9933 = vpack.c.b16 %v9245, %v9237
        %v9934 = vpack.c.b16 %v9246, %v9238
        %v9935 = vpack.c.b16 %v9247, %v9239
        %v9936 = vpack.c.b16 %v9248, %v9240
        %v9937 = vpack.c.b16 %v9249, %v9241
        %v9938 = vpack.c.b16 %v9250, %v9242
        %v9939 = vpack.c.b16 %v9259, %v9251
        %v9940 = vpack.c.b16 %v9260, %v9252
        %v9941 = vpack.c.b16 %v9261, %v9253
        %v9942 = vpack.c.b16 %v9262, %v9254
        %v9943 = vpack.c.b16 %v9263, %v9255
        %v9944 = vpack.c.b16 %v9264, %v9256
        %v9945 = vpack.c.b16 %v9265, %v9257
        %v9946 = vpack.c.b16 %v9266, %v9258
        %v9947 = vpack.c.b16 %v9275, %v9267
        %v9948 = vpack.c.b16 %v9276, %v9268
        %v9949 = vpack.c.b16 %v9277, %v9269
        %v9950 = vpack.c.b16 %v9278, %v9270
        %v9951 = vpack.c.b16 %v9279, %v9271
        %v9952 = vpack.c.b16 %v9280, %v9272
        %v9953 = vpack.c.b16 %v9281, %v9273
        %v9954 = vpack.c.b16 %v9282, %v9274
        %v9955 = vpack.c.b16 %v9291, %v9283
        %v9956 = vpack.c.b16 %v9292, %v9284
        %v9957 = vpack.c.b16 %v9293, %v9285
        %v9958 = vpack.c.b16 %v9294, %v9286
        %v9959 = vpack.c.b16 %v9295, %v9287
        %v9960 = vpack.c.b16 %v9296, %v9288
        %v9961 = vpack.c.b16 %v9297, %v9289
        %v9962 = vpack.c.b16 %v9298, %v9290
        %v9963 = vpack.c.b16 %v9307, %v9299
        %v9964 = vpack.c.b16 %v9308, %v9300
        %v9965 = vpack.c.b16 %v9309, %v9301
        %v9966 = vpack.c.b16 %v9310, %v9302
        %v9967 = vpack.c.b16 %v9311, %v9303
        %v9968 = vpack.c.b16 %v9312, %v9304
        %v9969 = vpack.c.b16 %v9313, %v9305
        %v9970 = vpack.c.b16 %v9314, %v9306
        %v9971 = vpack.c.b16 %v9323, %v9315
        %v9972 = vpack.c.b16 %v9324, %v9316
        %v9973 = vpack.c.b16 %v9325, %v9317
        %v9974 = vpack.c.b16 %v9326, %v9318
        %v9975 = vpack.c.b16 %v9327, %v9319
        %v9976 = vpack.c.b16 %v9328, %v9320
        %v9977 = vpack.c.b16 %v9329, %v9321
        %v9978 = vpack.c.b16 %v9330, %v9322
        %v9979 = vpack.c.b16 %v9339, %v9331
        %v9980 = vpack.c.b16 %v9340, %v9332
        %v9981 = vpack.c.b16 %v9341, %v9333
        %v9982 = vpack.c.b16 %v9342, %v9334
        %v9983 = vpack.c.b16 %v9343, %v9335
        %v9984 = vpack.c.b16 %v9344, %v9336
        %v9985 = vpack.c.b16 %v9345, %v9337
        %v9986 = vpack.c.b16 %v9346, %v9338
        %v9987 = vpack.c.b16 %v9355, %v9347
        %v9988 = vpack.c.b16 %v9356, %v9348
        %v9989 = vpack.c.b16 %v9357, %v9349
        %v9990 = vpack.c.b16 %v9358, %v9350
        %v9991 = vpack.c.b16 %v9359, %v9351
        %v9992 = vpack.c.b16 %v9360, %v9352
        %v9993 = vpack.c.b16 %v9361, %v9353
        %v9994 = vpack.c.b16 %v9362, %v9354
        %v9995 = vpack.c.b16 %v9371, %v9363
        %v9996 = vpack.c.b16 %v9372, %v9364
        %v9997 = vpack.c.b16 %v9373, %v9365
        %v9998 = vpack.c.b16 %v9374, %v9366
        %v9999 = vpack.c.b16 %v9375, %v9367
        %v10000 = vpack.c.b16 %v9376, %v9368
        %v10001 = vpack.c.b16 %v9377, %v9369
        %v10002 = vpack.c.b16 %v9378, %v9370
        %v10003 = vpack.c.b16 %v9387, %v9379
        %v10004 = vpack.c.b16 %v9388, %v9380
        %v10005 = vpack.c.b16 %v9389, %v9381
        %v10006 = vpack.c.b16 %v9390, %v9382
        %v10007 = vpack.c.b16 %v9391, %v9383
        %v10008 = vpack.c.b16 %v9392, %v9384
        %v10009 = vpack.c.b16 %v9393, %v9385
        %v10010 = vpack.c.b16 %v9394, %v9386
        %v10011 = vpack.c.b16 %v9403, %v9395
        %v10012 = vpack.c.b16 %v9404, %v9396
        %v10013 = vpack.c.b16 %v9405, %v9397
        %v10014 = vpack.c.b16 %v9406, %v9398
        %v10015 = vpack.c.b16 %v9407, %v9399
        %v10016 = vpack.c.b16 %v9408, %v9400
        %v10017 = vpack.c.b16 %v9409, %v9401
        %v10018 = vpack.c.b16 %v9410, %v9402
        %v10019 = vpack.c.b16 %v9419, %v9411
        %v10020 = vpack.c.b16 %v9420, %v9412
        %v10021 = vpack.c.b16 %v9421, %v9413
        %v10022 = vpack.c.b16 %v9422, %v9414
        %v10023 = vpack.c.b16 %v9423, %v9415
        %v10024 = vpack.c.b16 %v9424, %v9416
        %v10025 = vpack.c.b16 %v9425, %v9417
        %v10026 = vpack.c.b16 %v9426, %v9418
        %v10027 = vpack.c.b16 %v9435, %v9427
        %v10028 = vpack.c.b16 %v9436, %v9428
        %v10029 = vpack.c.b16 %v9437, %v9429
        %v10030 = vpack.c.b16 %v9438, %v9430
        %v10031 = vpack.c.b16 %v9439, %v9431
        %v10032 = vpack.c.b16 %v9440, %v9432
        %v10033 = vpack.c.b16 %v9441, %v9433
        %v10034 = vpack.c.b16 %v9442, %v9434
        %v10035 = vpack.c.b16 %v9451, %v9443
        %v10036 = vpack.c.b16 %v9452, %v9444
        %v10037 = vpack.c.b16 %v9453, %v9445
        %v10038 = vpack.c.b16 %v9454, %v9446
        %v10039 = vpack.c.b16 %v9455, %v9447
        %v10040 = vpack.c.b16 %v9456, %v9448
        %v10041 = vpack.c.b16 %v9457, %v9449
        %v10042 = vpack.c.b16 %v9458, %v9450
        %v10043 = vpack.c.b16 %v9467, %v9459
        %v10044 = vpack.c.b16 %v9468, %v9460
        %v10045 = vpack.c.b16 %v9469, %v9461
        %v10046 = vpack.c.b16 %v9470, %v9462
        %v10047 = vpack.c.b16 %v9471, %v9463
        %v10048 = vpack.c.b16 %v9472, %v9464
        %v10049 = vpack.c.b16 %v9473, %v9465
        %v10050 = vpack.c.b16 %v9474, %v9466
        %v10051 = vpack.c.b16 %v9483, %v9475
        %v10052 = vpack.c.b16 %v9484, %v9476
        %v10053 = vpack.c.b16 %v9485, %v9477
        %v10054 = vpack.c.b16 %v9486, %v9478
        %v10055 = vpack.c.b16 %v9487, %v9479
        %v10056 = vpack.c.b16 %v9488, %v9480
        %v10057 = vpack.c.b16 %v9489, %v9481
        %v10058 = vpack.c.b16 %v9490, %v9482
        %v10059 = vpack.c.b16 %v9499, %v9491
        %v10060 = vpack.c.b16 %v9500, %v9492
        %v10061 = vpack.c.b16 %v9501, %v9493
        %v10062 = vpack.c.b16 %v9502, %v9494
        %v10063 = vpack.c.b16 %v9503, %v9495
        %v10064 = vpack.c.b16 %v9504, %v9496
        %v10065 = vpack.c.b16 %v9505, %v9497
        %v10066 = vpack.c.b16 %v9506, %v9498
        %v10067 = vpack.c.b16 %v9515, %v9507
        %v10068 = vpack.c.b16 %v9516, %v9508
        %v10069 = vpack.c.b16 %v9517, %v9509
        %v10070 = vpack.c.b16 %v9518, %v9510
        %v10071 = vpack.c.b16 %v9519, %v9511
        %v10072 = vpack.c.b16 %v9520, %v9512
        %v10073 = vpack.c.b16 %v9521, %v9513
        %v10074 = vpack.c.b16 %v9522, %v9514
        %v10075 = vpack.c.b16 %v9531, %v9523
        %v10076 = vpack.c.b16 %v9532, %v9524
        %v10077 = vpack.c.b16 %v9533, %v9525
        %v10078 = vpack.c.b16 %v9534, %v9526
        %v10079 = vpack.c.b16 %v9535, %v9527
        %v10080 = vpack.c.b16 %v9536, %v9528
        %v10081 = vpack.c.b16 %v9537, %v9529
        %v10082 = vpack.c.b16 %v9538, %v9530
        %v10083 = vpack.c.b16 %v9547, %v9539
        %v10084 = vpack.c.b16 %v9548, %v9540
        %v10085 = vpack.c.b16 %v9549, %v9541
        %v10086 = vpack.c.b16 %v9550, %v9542
        %v10087 = vpack.c.b16 %v9551, %v9543
        %v10088 = vpack.c.b16 %v9552, %v9544
        %v10089 = vpack.c.b16 %v9553, %v9545
        %v10090 = vpack.c.b16 %v9554, %v9546
        %v10091 = vpack.c.b16 %v9563, %v9555
        %v10092 = vpack.c.b16 %v9564, %v9556
        %v10093 = vpack.c.b16 %v9565, %v9557
        %v10094 = vpack.c.b16 %v9566, %v9558
        %v10095 = vpack.c.b16 %v9567, %v9559
        %v10096 = vpack.c.b16 %v9568, %v9560
        %v10097 = vpack.c.b16 %v9569, %v9561
        %v10098 = vpack.c.b16 %v9570, %v9562
        %v10099 = vpack.c.b16 %v9579, %v9571
        %v10100 = vpack.c.b16 %v9580, %v9572
        %v10101 = vpack.c.b16 %v9581, %v9573
        %v10102 = vpack.c.b16 %v9582, %v9574
        %v10103 = vpack.c.b16 %v9583, %v9575
        %v10104 = vpack.c.b16 %v9584, %v9576
        %v10105 = vpack.c.b16 %v9585, %v9577
        %v10106 = vpack.c.b16 %v9586, %v9578
        %v10107 = vpack.c.b16 %v9595, %v9587
        %v10108 = vpack.c.b16 %v9596, %v9588
        %v10109 = vpack.c.b16 %v9597, %v9589
        %v10110 = vpack.c.b16 %v9598, %v9590
        %v10111 = vpack.c.b16 %v9599, %v9591
        %v10112 = vpack.c.b16 %v9600, %v9592
        %v10113 = vpack.c.b16 %v9601, %v9593
        %v10114 = vpack.c.b16 %v9602, %v9594
        %10627 = vmatprep.subr.bf16.mxu0 %v9604
        %10628 = vmatpush1.bf16.msra.mxu0 %v9603
        %10629 = vmatprep.subr.bf16.mxu0 %v9612
        %10630 = vmatpush1.bf16.msra.mxu0 %v9611
        %10631 = vmatprep.subr.bf16.mxu0 %v9620
        %10632 = vmatpush1.bf16.msra.mxu0 %v9619
        %10633 = vmatprep.subr.bf16.mxu0 %v9628
        %10634 = vmatpush1.bf16.msra.mxu0 %v9627
        %10635 = vmatprep.subr.bf16.mxu0 %v9636
        %10636 = vmatpush1.bf16.msra.mxu0 %v9635
        %10637 = vmatprep.subr.bf16.mxu0 %v9644
        %10638 = vmatpush1.bf16.msra.mxu0 %v9643
        %10639 = vmatprep.subr.bf16.mxu0 %v9652
        %10640 = vmatpush1.bf16.msra.mxu0 %v9651
        %10641 = vmatprep.subr.bf16.mxu0 %v9660
        %10642 = vmatpush1.bf16.msra.mxu0 %v9659
        %10643 = vmatprep.subr.bf16.mxu0 %v9668
        %10644 = vmatpush1.bf16.msra.mxu0 %v9667
        %10645 = vmatprep.subr.bf16.mxu0 %v9676
        %10646 = vmatpush1.bf16.msra.mxu0 %v9675
        %10647 = vmatprep.subr.bf16.mxu0 %v9684
        %10648 = vmatpush1.bf16.msra.mxu0 %v9683
        %10649 = vmatprep.subr.bf16.mxu0 %v9692
        %10650 = vmatpush1.bf16.msra.mxu0 %v9691
        %10651 = vmatprep.subr.bf16.mxu0 %v9700
        %10652 = vmatpush1.bf16.msra.mxu0 %v9699
        %10653 = vmatprep.subr.bf16.mxu0 %v9708
        %10654 = vmatpush1.bf16.msra.mxu0 %v9707
        %10655 = vmatprep.subr.bf16.mxu0 %v9716
        %10656 = vmatpush1.bf16.msra.mxu0 %v9715
        %10657 = vmatprep.subr.bf16.mxu0 %v9724
        %10658 = vmatpush1.bf16.msra.mxu0 %v9723
        %10659 = vmatprep.mubr.bf16.mxu0 %v7548
        %10660 = vmatmul.mubr.bf16.gmra.mrb[0].mxu0 %v7547
        %v10661 = vpop.f32.mrb[0].mxu0
        %v10662 = vadd.f32 0.0, %v10661
        %v10663 = vpop.f32.mrb[0].mxu0
        %v10664 = vadd.f32 0.0, %v10663
        %v10665 = vpop.f32.mrb[0].mxu0
        %v10666 = vpop.f32.mrb[0].mxu0
        %10667 = vdwg.mxu0
        %10668 = vmatprep.subr.bf16.mxu0 %v9732
        %10669 = vmatpush1.bf16.msra.mxu0 %v9731
        %10670 = vmatprep.subr.bf16.mxu0 %v9740
        %10671 = vmatpush1.bf16.msra.mxu0 %v9739
        %10672 = vmatprep.subr.bf16.mxu0 %v9748
        %10673 = vmatpush1.bf16.msra.mxu0 %v9747
        %10674 = vmatprep.subr.bf16.mxu0 %v9756
        %10675 = vmatpush1.bf16.msra.mxu0 %v9755
        %10676 = vmatprep.subr.bf16.mxu0 %v9764
        %10677 = vmatpush1.bf16.msra.mxu0 %v9763
        %10678 = vmatprep.subr.bf16.mxu0 %v9772
        %10679 = vmatpush1.bf16.msra.mxu0 %v9771
        %10680 = vmatprep.subr.bf16.mxu0 %v9780
        %10681 = vmatpush1.bf16.msra.mxu0 %v9779
        %10682 = vmatprep.subr.bf16.mxu0 %v9788
        %10683 = vmatpush1.bf16.msra.mxu0 %v9787
        %10684 = vmatprep.subr.bf16.mxu0 %v9796
        %10685 = vmatpush1.bf16.msra.mxu0 %v9795
        %10686 = vmatprep.subr.bf16.mxu0 %v9804
        %10687 = vmatpush1.bf16.msra.mxu0 %v9803
        %10688 = vmatprep.subr.bf16.mxu0 %v9812
        %10689 = vmatpush1.bf16.msra.mxu0 %v9811
        %10690 = vmatprep.subr.bf16.mxu0 %v9820
        %10691 = vmatpush1.bf16.msra.mxu0 %v9819
        %10692 = vmatprep.subr.bf16.mxu0 %v9828
        %10693 = vmatpush1.bf16.msra.mxu0 %v9827
        %10694 = vmatprep.subr.bf16.mxu0 %v9836
        %10695 = vmatpush1.bf16.msra.mxu0 %v9835
        %10696 = vmatprep.subr.bf16.mxu0 %v9844
        %10697 = vmatpush1.bf16.msra.mxu0 %v9843
        %10698 = vmatprep.subr.bf16.mxu0 %v9852
        %10699 = vmatpush1.bf16.msra.mxu0 %v9851
        %10700 = vmatprep.mubr.bf16.mxu0 %v7550
        %10701 = vmatmul.mubr.bf16.gmra.mrb[0].mxu0 %v7549
        %v10702 = vpop.f32.mrb[0].mxu0
        %v10703 = vadd.f32 %v10662, %v10702
        %v10704 = vpop.f32.mrb[0].mxu0
        %v10705 = vadd.f32 %v10664, %v10704
        %v10706 = vpop.f32.mrb[0].mxu0
        %v10707 = vpop.f32.mrb[0].mxu0
        %10708 = vdwg.mxu0
        %10709 = vmatprep.subr.bf16.mxu0 %v9860
        %10710 = vmatpush1.bf16.msra.mxu0 %v9859
        %10711 = vmatprep.subr.bf16.mxu0 %v9868
        %10712 = vmatpush1.bf16.msra.mxu0 %v9867
        %10713 = vmatprep.subr.bf16.mxu0 %v9876
        %10714 = vmatpush1.bf16.msra.mxu0 %v9875
        %10715 = vmatprep.subr.bf16.mxu0 %v9884
        %10716 = vmatpush1.bf16.msra.mxu0 %v9883
        %10717 = vmatprep.subr.bf16.mxu0 %v9892
        %10718 = vmatpush1.bf16.msra.mxu0 %v9891
        %10719 = vmatprep.subr.bf16.mxu0 %v9900
        %10720 = vmatpush1.bf16.msra.mxu0 %v9899
        %10721 = vmatprep.subr.bf16.mxu0 %v9908
        %10722 = vmatpush1.bf16.msra.mxu0 %v9907
        %10723 = vmatprep.subr.bf16.mxu0 %v9916
        %10724 = vmatpush1.bf16.msra.mxu0 %v9915
        %10725 = vmatprep.subr.bf16.mxu0 %v9924
        %10726 = vmatpush1.bf16.msra.mxu0 %v9923
        %10727 = vmatprep.subr.bf16.mxu0 %v9932
        %10728 = vmatpush1.bf16.msra.mxu0 %v9931
        %10729 = vmatprep.subr.bf16.mxu0 %v9940
        %10730 = vmatpush1.bf16.msra.mxu0 %v9939
        %10731 = vmatprep.subr.bf16.mxu0 %v9948
        %10732 = vmatpush1.bf16.msra.mxu0 %v9947
        %10733 = vmatprep.subr.bf16.mxu0 %v9956
        %10734 = vmatpush1.bf16.msra.mxu0 %v9955
        %10735 = vmatprep.subr.bf16.mxu0 %v9964
        %10736 = vmatpush1.bf16.msra.mxu0 %v9963
        %10737 = vmatprep.subr.bf16.mxu0 %v9972
        %10738 = vmatpush1.bf16.msra.mxu0 %v9971
        %10739 = vmatprep.subr.bf16.mxu0 %v9980
        %10740 = vmatpush1.bf16.msra.mxu0 %v9979
        %10741 = vmatprep.mubr.bf16.mxu0 %v7552
        %10742 = vmatmul.mubr.bf16.gmra.mrb[0].mxu0 %v7551
        %v10743 = vpop.f32.mrb[0].mxu0
        %v10744 = vadd.f32 %v10703, %v10743
        %v10745 = vpop.f32.mrb[0].mxu0
        %v10746 = vadd.f32 %v10705, %v10745
        %v10747 = vpop.f32.mrb[0].mxu0
        %v10748 = vpop.f32.mrb[0].mxu0
        %10749 = vdwg.mxu0
        %10750 = vmatprep.subr.bf16.mxu0 %v9988
        %10751 = vmatpush1.bf16.msra.mxu0 %v9987
        %10752 = vmatprep.subr.bf16.mxu0 %v9996
        %10753 = vmatpush1.bf16.msra.mxu0 %v9995
        %10754 = vmatprep.subr.bf16.mxu0 %v10004
        %10755 = vmatpush1.bf16.msra.mxu0 %v10003
        %10756 = vmatprep.subr.bf16.mxu0 %v10012
        %10757 = vmatpush1.bf16.msra.mxu0 %v10011
        %10758 = vmatprep.subr.bf16.mxu0 %v10020
        %10759 = vmatpush1.bf16.msra.mxu0 %v10019
        %10760 = vmatprep.subr.bf16.mxu0 %v10028
        %10761 = vmatpush1.bf16.msra.mxu0 %v10027
        %10762 = vmatprep.subr.bf16.mxu0 %v10036
        %10763 = vmatpush1.bf16.msra.mxu0 %v10035
        %10764 = vmatprep.subr.bf16.mxu0 %v10044
        %10765 = vmatpush1.bf16.msra.mxu0 %v10043
        %10766 = vmatprep.subr.bf16.mxu0 %v10052
        %10767 = vmatpush1.bf16.msra.mxu0 %v10051
        %10768 = vmatprep.subr.bf16.mxu0 %v10060
        %10769 = vmatpush1.bf16.msra.mxu0 %v10059
        %10770 = vmatprep.subr.bf16.mxu0 %v10068
        %10771 = vmatpush1.bf16.msra.mxu0 %v10067
        %10772 = vmatprep.subr.bf16.mxu0 %v10076
        %10773 = vmatpush1.bf16.msra.mxu0 %v10075
        %10774 = vmatprep.subr.bf16.mxu0 %v10084
        %10775 = vmatpush1.bf16.msra.mxu0 %v10083
        %10776 = vmatprep.subr.bf16.mxu0 %v10092
        %10777 = vmatpush1.bf16.msra.mxu0 %v10091
        %10778 = vmatprep.subr.bf16.mxu0 %v10100
        %10779 = vmatpush1.bf16.msra.mxu0 %v10099
        %10780 = vmatprep.subr.bf16.mxu0 %v10108
        %10781 = vmatpush1.bf16.msra.mxu0 %v10107
        %10782 = vmatprep.mubr.bf16.mxu0 %v7554
        %10783 = vmatmul.mubr.bf16.gmra.mrb[0].mxu0 %v7553
        %v10784 = vpop.f32.mrb[0].mxu0
        %v10785 = vadd.f32 %v10744, %v10784
        %v10786 = vpop.f32.mrb[0].mxu0
        %v10787 = vadd.f32 %v10746, %v10786
        %v10788 = vpop.f32.mrb[0].mxu0
        %v10789 = vpop.f32.mrb[0].mxu0
        %10790 = vdwg.mxu0
        %10791 = vmatprep.subr.bf16.mxu0 %v9606
        %10792 = vmatpush1.bf16.msra.mxu0 %v9605
        %10793 = vmatprep.subr.bf16.mxu0 %v9614
        %10794 = vmatpush1.bf16.msra.mxu0 %v9613
        %10795 = vmatprep.subr.bf16.mxu0 %v9622
        %10796 = vmatpush1.bf16.msra.mxu0 %v9621
        %10797 = vmatprep.subr.bf16.mxu0 %v9630
        %10798 = vmatpush1.bf16.msra.mxu0 %v9629
        %10799 = vmatprep.subr.bf16.mxu0 %v9638
        %10800 = vmatpush1.bf16.msra.mxu0 %v9637
        %10801 = vmatprep.subr.bf16.mxu0 %v9646
        %10802 = vmatpush1.bf16.msra.mxu0 %v9645
        %10803 = vmatprep.subr.bf16.mxu0 %v9654
        %10804 = vmatpush1.bf16.msra.mxu0 %v9653
        %10805 = vmatprep.subr.bf16.mxu0 %v9662
        %10806 = vmatpush1.bf16.msra.mxu0 %v9661
        %10807 = vmatprep.subr.bf16.mxu0 %v9670
        %10808 = vmatpush1.bf16.msra.mxu0 %v9669
        %10809 = vmatprep.subr.bf16.mxu0 %v9678
        %10810 = vmatpush1.bf16.msra.mxu0 %v9677
        %10811 = vmatprep.subr.bf16.mxu0 %v9686
        %10812 = vmatpush1.bf16.msra.mxu0 %v9685
        %10813 = vmatprep.subr.bf16.mxu0 %v9694
        %10814 = vmatpush1.bf16.msra.mxu0 %v9693
        %10815 = vmatprep.subr.bf16.mxu0 %v9702
        %10816 = vmatpush1.bf16.msra.mxu0 %v9701
        %10817 = vmatprep.subr.bf16.mxu0 %v9710
        %10818 = vmatpush1.bf16.msra.mxu0 %v9709
        %10819 = vmatprep.subr.bf16.mxu0 %v9718
        %10820 = vmatpush1.bf16.msra.mxu0 %v9717
        %10821 = vmatprep.subr.bf16.mxu0 %v9726
        %10822 = vmatpush1.bf16.msra.mxu0 %v9725
        %10823 = vmatprep.mubr.bf16.mxu0 %v7548
        %10824 = vmatmul.mubr.bf16.gmra.mrb[0].mxu0 %v7547
        %v10825 = vpop.f32.mrb[0].mxu0
        %v10826 = vadd.f32 0.0, %v10825
        %v10827 = vpop.f32.mrb[0].mxu0
        %v10828 = vadd.f32 0.0, %v10827
        %v10829 = vpop.f32.mrb[0].mxu0
        %v10830 = vpop.f32.mrb[0].mxu0
        %10831 = vdwg.mxu0
        %10832 = vmatprep.subr.bf16.mxu0 %v9734
        %10833 = vmatpush1.bf16.msra.mxu0 %v9733
        %10834 = vmatprep.subr.bf16.mxu0 %v9742
        %10835 = vmatpush1.bf16.msra.mxu0 %v9741
        %10836 = vmatprep.subr.bf16.mxu0 %v9750
        %10837 = vmatpush1.bf16.msra.mxu0 %v9749
        %10838 = vmatprep.subr.bf16.mxu0 %v9758
        %10839 = vmatpush1.bf16.msra.mxu0 %v9757
        %10840 = vmatprep.subr.bf16.mxu0 %v9766
        %10841 = vmatpush1.bf16.msra.mxu0 %v9765
        %10842 = vmatprep.subr.bf16.mxu0 %v9774
        %10843 = vmatpush1.bf16.msra.mxu0 %v9773
        %10844 = vmatprep.subr.bf16.mxu0 %v9782
        %10845 = vmatpush1.bf16.msra.mxu0 %v9781
        %10846 = vmatprep.subr.bf16.mxu0 %v9790
        %10847 = vmatpush1.bf16.msra.mxu0 %v9789
        %10848 = vmatprep.subr.bf16.mxu0 %v9798
        %10849 = vmatpush1.bf16.msra.mxu0 %v9797
        %10850 = vmatprep.subr.bf16.mxu0 %v9806
        %10851 = vmatpush1.bf16.msra.mxu0 %v9805
        %10852 = vmatprep.subr.bf16.mxu0 %v9814
        %10853 = vmatpush1.bf16.msra.mxu0 %v9813
        %10854 = vmatprep.subr.bf16.mxu0 %v9822
        %10855 = vmatpush1.bf16.msra.mxu0 %v9821
        %10856 = vmatprep.subr.bf16.mxu0 %v9830
        %10857 = vmatpush1.bf16.msra.mxu0 %v9829
        %10858 = vmatprep.subr.bf16.mxu0 %v9838
        %10859 = vmatpush1.bf16.msra.mxu0 %v9837
        %10860 = vmatprep.subr.bf16.mxu0 %v9846
        %10861 = vmatpush1.bf16.msra.mxu0 %v9845
        %10862 = vmatprep.subr.bf16.mxu0 %v9854
        %10863 = vmatpush1.bf16.msra.mxu0 %v9853
        %10864 = vmatprep.mubr.bf16.mxu0 %v7550
        %10865 = vmatmul.mubr.bf16.gmra.mrb[0].mxu0 %v7549
        %v10866 = vpop.f32.mrb[0].mxu0
        %v10867 = vadd.f32 %v10826, %v10866
        %v10868 = vpop.f32.mrb[0].mxu0
        %v10869 = vadd.f32 %v10828, %v10868
        %v10870 = vpop.f32.mrb[0].mxu0
        %v10871 = vpop.f32.mrb[0].mxu0
        %10872 = vdwg.mxu0
        %10873 = vmatprep.subr.bf16.mxu0 %v9862
        %10874 = vmatpush1.bf16.msra.mxu0 %v9861
        %10875 = vmatprep.subr.bf16.mxu0 %v9870
        %10876 = vmatpush1.bf16.msra.mxu0 %v9869
        %10877 = vmatprep.subr.bf16.mxu0 %v9878
        %10878 = vmatpush1.bf16.msra.mxu0 %v9877
        %10879 = vmatprep.subr.bf16.mxu0 %v9886
        %10880 = vmatpush1.bf16.msra.mxu0 %v9885
        %10881 = vmatprep.subr.bf16.mxu0 %v9894
        %10882 = vmatpush1.bf16.msra.mxu0 %v9893
        %10883 = vmatprep.subr.bf16.mxu0 %v9902
        %10884 = vmatpush1.bf16.msra.mxu0 %v9901
        %10885 = vmatprep.subr.bf16.mxu0 %v9910
        %10886 = vmatpush1.bf16.msra.mxu0 %v9909
        %10887 = vmatprep.subr.bf16.mxu0 %v9918
        %10888 = vmatpush1.bf16.msra.mxu0 %v9917
        %10889 = vmatprep.subr.bf16.mxu0 %v9926
        %10890 = vmatpush1.bf16.msra.mxu0 %v9925
        %10891 = vmatprep.subr.bf16.mxu0 %v9934
        %10892 = vmatpush1.bf16.msra.mxu0 %v9933
        %10893 = vmatprep.subr.bf16.mxu0 %v9942
        %10894 = vmatpush1.bf16.msra.mxu0 %v9941
        %10895 = vmatprep.subr.bf16.mxu0 %v9950
        %10896 = vmatpush1.bf16.msra.mxu0 %v9949
        %10897 = vmatprep.subr.bf16.mxu0 %v9958
        %10898 = vmatpush1.bf16.msra.mxu0 %v9957
        %10899 = vmatprep.subr.bf16.mxu0 %v9966
        %10900 = vmatpush1.bf16.msra.mxu0 %v9965
        %10901 = vmatprep.subr.bf16.mxu0 %v9974
        %10902 = vmatpush1.bf16.msra.mxu0 %v9973
        %10903 = vmatprep.subr.bf16.mxu0 %v9982
        %10904 = vmatpush1.bf16.msra.mxu0 %v9981
        %10905 = vmatprep.mubr.bf16.mxu0 %v7552
        %10906 = vmatmul.mubr.bf16.gmra.mrb[0].mxu0 %v7551
        %v10907 = vpop.f32.mrb[0].mxu0
        %v10908 = vadd.f32 %v10867, %v10907
        %v10909 = vpop.f32.mrb[0].mxu0
        %v10910 = vadd.f32 %v10869, %v10909
        %v10911 = vpop.f32.mrb[0].mxu0
        %v10912 = vpop.f32.mrb[0].mxu0
        %10913 = vdwg.mxu0
        %10914 = vmatprep.subr.bf16.mxu0 %v9990
        %10915 = vmatpush1.bf16.msra.mxu0 %v9989
        %10916 = vmatprep.subr.bf16.mxu0 %v9998
        %10917 = vmatpush1.bf16.msra.mxu0 %v9997
        %10918 = vmatprep.subr.bf16.mxu0 %v10006
        %10919 = vmatpush1.bf16.msra.mxu0 %v10005
        %10920 = vmatprep.subr.bf16.mxu0 %v10014
        %10921 = vmatpush1.bf16.msra.mxu0 %v10013
        %10922 = vmatprep.subr.bf16.mxu0 %v10022
        %10923 = vmatpush1.bf16.msra.mxu0 %v10021
        %10924 = vmatprep.subr.bf16.mxu0 %v10030
        %10925 = vmatpush1.bf16.msra.mxu0 %v10029
        %10926 = vmatprep.subr.bf16.mxu0 %v10038
        %10927 = vmatpush1.bf16.msra.mxu0 %v10037
        %10928 = vmatprep.subr.bf16.mxu0 %v10046
        %10929 = vmatpush1.bf16.msra.mxu0 %v10045
        %10930 = vmatprep.subr.bf16.mxu0 %v10054
        %10931 = vmatpush1.bf16.msra.mxu0 %v10053
        %10932 = vmatprep.subr.bf16.mxu0 %v10062
        %10933 = vmatpush1.bf16.msra.mxu0 %v10061
        %10934 = vmatprep.subr.bf16.mxu0 %v10070
        %10935 = vmatpush1.bf16.msra.mxu0 %v10069
        %10936 = vmatprep.subr.bf16.mxu0 %v10078
        %10937 = vmatpush1.bf16.msra.mxu0 %v10077
        %10938 = vmatprep.subr.bf16.mxu0 %v10086
        %10939 = vmatpush1.bf16.msra.mxu0 %v10085
        %10940 = vmatprep.subr.bf16.mxu0 %v10094
        %10941 = vmatpush1.bf16.msra.mxu0 %v10093
        %10942 = vmatprep.subr.bf16.mxu0 %v10102
        %10943 = vmatpush1.bf16.msra.mxu0 %v10101
        %10944 = vmatprep.subr.bf16.mxu0 %v10110
        %10945 = vmatpush1.bf16.msra.mxu0 %v10109
        %10946 = vmatprep.mubr.bf16.mxu0 %v7554
        %10947 = vmatmul.mubr.bf16.gmra.mrb[0].mxu0 %v7553
        %v10948 = vpop.f32.mrb[0].mxu0
        %v10949 = vadd.f32 %v10908, %v10948
        %v10950 = vpop.f32.mrb[0].mxu0
        %v10951 = vadd.f32 %v10910, %v10950
        %v10952 = vpop.f32.mrb[0].mxu0
        %v10953 = vpop.f32.mrb[0].mxu0
        %10954 = vdwg.mxu0
        %10955 = vmatprep.subr.bf16.mxu0 %v9608
        %10956 = vmatpush1.bf16.msra.mxu0 %v9607
        %10957 = vmatprep.subr.bf16.mxu0 %v9616
        %10958 = vmatpush1.bf16.msra.mxu0 %v9615
        %10959 = vmatprep.subr.bf16.mxu0 %v9624
        %10960 = vmatpush1.bf16.msra.mxu0 %v9623
        %10961 = vmatprep.subr.bf16.mxu0 %v9632
        %10962 = vmatpush1.bf16.msra.mxu0 %v9631
        %10963 = vmatprep.subr.bf16.mxu0 %v9640
        %10964 = vmatpush1.bf16.msra.mxu0 %v9639
        %10965 = vmatprep.subr.bf16.mxu0 %v9648
        %10966 = vmatpush1.bf16.msra.mxu0 %v9647
        %10967 = vmatprep.subr.bf16.mxu0 %v9656
        %10968 = vmatpush1.bf16.msra.mxu0 %v9655
        %10969 = vmatprep.subr.bf16.mxu0 %v9664
        %10970 = vmatpush1.bf16.msra.mxu0 %v9663
        %10971 = vmatprep.subr.bf16.mxu0 %v9672
        %10972 = vmatpush1.bf16.msra.mxu0 %v9671
        %10973 = vmatprep.subr.bf16.mxu0 %v9680
        %10974 = vmatpush1.bf16.msra.mxu0 %v9679
        %10975 = vmatprep.subr.bf16.mxu0 %v9688
        %10976 = vmatpush1.bf16.msra.mxu0 %v9687
        %10977 = vmatprep.subr.bf16.mxu0 %v9696
        %10978 = vmatpush1.bf16.msra.mxu0 %v9695
        %10979 = vmatprep.subr.bf16.mxu0 %v9704
        %10980 = vmatpush1.bf16.msra.mxu0 %v9703
        %10981 = vmatprep.subr.bf16.mxu0 %v9712
        %10982 = vmatpush1.bf16.msra.mxu0 %v9711
        %10983 = vmatprep.subr.bf16.mxu0 %v9720
        %10984 = vmatpush1.bf16.msra.mxu0 %v9719
        %10985 = vmatprep.subr.bf16.mxu0 %v9728
        %10986 = vmatpush1.bf16.msra.mxu0 %v9727
        %10987 = vmatprep.mubr.bf16.mxu0 %v7548
        %10988 = vmatmul.mubr.bf16.gmra.mrb[0].mxu0 %v7547
        %v10989 = vpop.f32.mrb[0].mxu0
        %v10990 = vadd.f32 0.0, %v10989
        %v10991 = vpop.f32.mrb[0].mxu0
        %v10992 = vadd.f32 0.0, %v10991
        %v10993 = vpop.f32.mrb[0].mxu0
        %v10994 = vpop.f32.mrb[0].mxu0
        %10995 = vdwg.mxu0
        %10996 = vmatprep.subr.bf16.mxu0 %v9736
        %10997 = vmatpush1.bf16.msra.mxu0 %v9735
        %10998 = vmatprep.subr.bf16.mxu0 %v9744
        %10999 = vmatpush1.bf16.msra.mxu0 %v9743
        %11000 = vmatprep.subr.bf16.mxu0 %v9752
        %11001 = vmatpush1.bf16.msra.mxu0 %v9751
        %11002 = vmatprep.subr.bf16.mxu0 %v9760
        %11003 = vmatpush1.bf16.msra.mxu0 %v9759
        %11004 = vmatprep.subr.bf16.mxu0 %v9768
        %11005 = vmatpush1.bf16.msra.mxu0 %v9767
        %11006 = vmatprep.subr.bf16.mxu0 %v9776
        %11007 = vmatpush1.bf16.msra.mxu0 %v9775
        %11008 = vmatprep.subr.bf16.mxu0 %v9784
        %11009 = vmatpush1.bf16.msra.mxu0 %v9783
        %11010 = vmatprep.subr.bf16.mxu0 %v9792
        %11011 = vmatpush1.bf16.msra.mxu0 %v9791
        %11012 = vmatprep.subr.bf16.mxu0 %v9800
        %11013 = vmatpush1.bf16.msra.mxu0 %v9799
        %11014 = vmatprep.subr.bf16.mxu0 %v9808
        %11015 = vmatpush1.bf16.msra.mxu0 %v9807
        %11016 = vmatprep.subr.bf16.mxu0 %v9816
        %11017 = vmatpush1.bf16.msra.mxu0 %v9815
        %11018 = vmatprep.subr.bf16.mxu0 %v9824
        %11019 = vmatpush1.bf16.msra.mxu0 %v9823
        %11020 = vmatprep.subr.bf16.mxu0 %v9832
        %11021 = vmatpush1.bf16.msra.mxu0 %v9831
        %11022 = vmatprep.subr.bf16.mxu0 %v9840
        %11023 = vmatpush1.bf16.msra.mxu0 %v9839
        %11024 = vmatprep.subr.bf16.mxu0 %v9848
        %11025 = vmatpush1.bf16.msra.mxu0 %v9847
        %11026 = vmatprep.subr.bf16.mxu0 %v9856
        %11027 = vmatpush1.bf16.msra.mxu0 %v9855
        %11028 = vmatprep.mubr.bf16.mxu0 %v7550
        %11029 = vmatmul.mubr.bf16.gmra.mrb[0].mxu0 %v7549
        %v11030 = vpop.f32.mrb[0].mxu0
        %v11031 = vadd.f32 %v10990, %v11030
        %v11032 = vpop.f32.mrb[0].mxu0
        %v11033 = vadd.f32 %v10992, %v11032
        %v11034 = vpop.f32.mrb[0].mxu0
        %v11035 = vpop.f32.mrb[0].mxu0
        %11036 = vdwg.mxu0
        %11037 = vmatprep.subr.bf16.mxu0 %v9864
        %11038 = vmatpush1.bf16.msra.mxu0 %v9863
        %11039 = vmatprep.subr.bf16.mxu0 %v9872
        %11040 = vmatpush1.bf16.msra.mxu0 %v9871
        %11041 = vmatprep.subr.bf16.mxu0 %v9880
        %11042 = vmatpush1.bf16.msra.mxu0 %v9879
        %11043 = vmatprep.subr.bf16.mxu0 %v9888
        %11044 = vmatpush1.bf16.msra.mxu0 %v9887
        %11045 = vmatprep.subr.bf16.mxu0 %v9896
        %11046 = vmatpush1.bf16.msra.mxu0 %v9895
        %11047 = vmatprep.subr.bf16.mxu0 %v9904
        %11048 = vmatpush1.bf16.msra.mxu0 %v9903
        %11049 = vmatprep.subr.bf16.mxu0 %v9912
        %11050 = vmatpush1.bf16.msra.mxu0 %v9911
        %11051 = vmatprep.subr.bf16.mxu0 %v9920
        %11052 = vmatpush1.bf16.msra.mxu0 %v9919
        %11053 = vmatprep.subr.bf16.mxu0 %v9928
        %11054 = vmatpush1.bf16.msra.mxu0 %v9927
        %11055 = vmatprep.subr.bf16.mxu0 %v9936
        %11056 = vmatpush1.bf16.msra.mxu0 %v9935
        %11057 = vmatprep.subr.bf16.mxu0 %v9944
        %11058 = vmatpush1.bf16.msra.mxu0 %v9943
        %11059 = vmatprep.subr.bf16.mxu0 %v9952
        %11060 = vmatpush1.bf16.msra.mxu0 %v9951
        %11061 = vmatprep.subr.bf16.mxu0 %v9960
        %11062 = vmatpush1.bf16.msra.mxu0 %v9959
        %11063 = vmatprep.subr.bf16.mxu0 %v9968
        %11064 = vmatpush1.bf16.msra.mxu0 %v9967
        %11065 = vmatprep.subr.bf16.mxu0 %v9976
        %11066 = vmatpush1.bf16.msra.mxu0 %v9975
        %11067 = vmatprep.subr.bf16.mxu0 %v9984
        %11068 = vmatpush1.bf16.msra.mxu0 %v9983
        %11069 = vmatprep.mubr.bf16.mxu0 %v7552
        %11070 = vmatmul.mubr.bf16.gmra.mrb[0].mxu0 %v7551
        %v11071 = vpop.f32.mrb[0].mxu0
        %v11072 = vadd.f32 %v11031, %v11071
        %v11073 = vpop.f32.mrb[0].mxu0
        %v11074 = vadd.f32 %v11033, %v11073
        %v11075 = vpop.f32.mrb[0].mxu0
        %v11076 = vpop.f32.mrb[0].mxu0
        %11077 = vdwg.mxu0
        %11078 = vmatprep.subr.bf16.mxu0 %v9992
        %11079 = vmatpush1.bf16.msra.mxu0 %v9991
        %11080 = vmatprep.subr.bf16.mxu0 %v10000
        %11081 = vmatpush1.bf16.msra.mxu0 %v9999
        %11082 = vmatprep.subr.bf16.mxu0 %v10008
        %11083 = vmatpush1.bf16.msra.mxu0 %v10007
        %11084 = vmatprep.subr.bf16.mxu0 %v10016
        %11085 = vmatpush1.bf16.msra.mxu0 %v10015
        %11086 = vmatprep.subr.bf16.mxu0 %v10024
        %11087 = vmatpush1.bf16.msra.mxu0 %v10023
        %11088 = vmatprep.subr.bf16.mxu0 %v10032
        %11089 = vmatpush1.bf16.msra.mxu0 %v10031
        %11090 = vmatprep.subr.bf16.mxu0 %v10040
        %11091 = vmatpush1.bf16.msra.mxu0 %v10039
        %11092 = vmatprep.subr.bf16.mxu0 %v10048
        %11093 = vmatpush1.bf16.msra.mxu0 %v10047
        %11094 = vmatprep.subr.bf16.mxu0 %v10056
        %11095 = vmatpush1.bf16.msra.mxu0 %v10055
        %11096 = vmatprep.subr.bf16.mxu0 %v10064
        %11097 = vmatpush1.bf16.msra.mxu0 %v10063
        %11098 = vmatprep.subr.bf16.mxu0 %v10072
        %11099 = vmatpush1.bf16.msra.mxu0 %v10071
        %11100 = vmatprep.subr.bf16.mxu0 %v10080
        %11101 = vmatpush1.bf16.msra.mxu0 %v10079
        %11102 = vmatprep.subr.bf16.mxu0 %v10088
        %11103 = vmatpush1.bf16.msra.mxu0 %v10087
        %11104 = vmatprep.subr.bf16.mxu0 %v10096
        %11105 = vmatpush1.bf16.msra.mxu0 %v10095
        %11106 = vmatprep.subr.bf16.mxu0 %v10104
        %11107 = vmatpush1.bf16.msra.mxu0 %v10103
        %11108 = vmatprep.subr.bf16.mxu0 %v10112
        %11109 = vmatpush1.bf16.msra.mxu0 %v10111
        %11110 = vmatprep.mubr.bf16.mxu0 %v7554
        %11111 = vmatmul.mubr.bf16.gmra.mrb[0].mxu0 %v7553
        %v11112 = vpop.f32.mrb[0].mxu0
        %v11113 = vadd.f32 %v11072, %v11112
        %v11114 = vpop.f32.mrb[0].mxu0
        %v11115 = vadd.f32 %v11074, %v11114
        %v11116 = vpop.f32.mrb[0].mxu0
        %v11117 = vpop.f32.mrb[0].mxu0
        %11118 = vdwg.mxu0
        %11119 = vmatprep.subr.bf16.mxu0 %v9610
        %11120 = vmatpush1.bf16.msra.mxu0 %v9609
        %11121 = vmatprep.subr.bf16.mxu0 %v9618
        %11122 = vmatpush1.bf16.msra.mxu0 %v9617
        %11123 = vmatprep.subr.bf16.mxu0 %v9626
        %11124 = vmatpush1.bf16.msra.mxu0 %v9625
        %11125 = vmatprep.subr.bf16.mxu0 %v9634
        %11126 = vmatpush1.bf16.msra.mxu0 %v9633
        %11127 = vmatprep.subr.bf16.mxu0 %v9642
        %11128 = vmatpush1.bf16.msra.mxu0 %v9641
        %11129 = vmatprep.subr.bf16.mxu0 %v9650
        %11130 = vmatpush1.bf16.msra.mxu0 %v9649
        %11131 = vmatprep.subr.bf16.mxu0 %v9658
        %11132 = vmatpush1.bf16.msra.mxu0 %v9657
        %11133 = vmatprep.subr.bf16.mxu0 %v9666
        %11134 = vmatpush1.bf16.msra.mxu0 %v9665
        %11135 = vmatprep.subr.bf16.mxu0 %v9674
        %11136 = vmatpush1.bf16.msra.mxu0 %v9673
        %11137 = vmatprep.subr.bf16.mxu0 %v9682
        %11138 = vmatpush1.bf16.msra.mxu0 %v9681
        %11139 = vmatprep.subr.bf16.mxu0 %v9690
        %11140 = vmatpush1.bf16.msra.mxu0 %v9689
        %11141 = vmatprep.subr.bf16.mxu0 %v9698
        %11142 = vmatpush1.bf16.msra.mxu0 %v9697
        %11143 = vmatprep.subr.bf16.mxu0 %v9706
        %11144 = vmatpush1.bf16.msra.mxu0 %v9705
        %11145 = vmatprep.subr.bf16.mxu0 %v9714
        %11146 = vmatpush1.bf16.msra.mxu0 %v9713
        %11147 = vmatprep.subr.bf16.mxu0 %v9722
        %11148 = vmatpush1.bf16.msra.mxu0 %v9721
        %11149 = vmatprep.subr.bf16.mxu0 %v9730
        %11150 = vmatpush1.bf16.msra.mxu0 %v9729
        %11151 = vmatprep.mubr.bf16.mxu0 %v7548
        %11152 = vmatmul.mubr.bf16.gmra.mrb[0].mxu0 %v7547
        %v11153 = vpop.f32.mrb[0].mxu0
        %v11154 = vadd.f32 0.0, %v11153
        %v11155 = vpop.f32.mrb[0].mxu0
        %v11156 = vadd.f32 0.0, %v11155
        %v11157 = vpop.f32.mrb[0].mxu0
        %v11158 = vpop.f32.mrb[0].mxu0
        %11159 = vdwg.mxu0
        %11160 = vmatprep.subr.bf16.mxu0 %v9738
        %11161 = vmatpush1.bf16.msra.mxu0 %v9737
        %11162 = vmatprep.subr.bf16.mxu0 %v9746
        %11163 = vmatpush1.bf16.msra.mxu0 %v9745
        %11164 = vmatprep.subr.bf16.mxu0 %v9754
        %11165 = vmatpush1.bf16.msra.mxu0 %v9753
        %11166 = vmatprep.subr.bf16.mxu0 %v9762
        %11167 = vmatpush1.bf16.msra.mxu0 %v9761
        %11168 = vmatprep.subr.bf16.mxu0 %v9770
        %11169 = vmatpush1.bf16.msra.mxu0 %v9769
        %11170 = vmatprep.subr.bf16.mxu0 %v9778
        %11171 = vmatpush1.bf16.msra.mxu0 %v9777
        %11172 = vmatprep.subr.bf16.mxu0 %v9786
        %11173 = vmatpush1.bf16.msra.mxu0 %v9785
        %11174 = vmatprep.subr.bf16.mxu0 %v9794
        %11175 = vmatpush1.bf16.msra.mxu0 %v9793
        %11176 = vmatprep.subr.bf16.mxu0 %v9802
        %11177 = vmatpush1.bf16.msra.mxu0 %v9801
        %11178 = vmatprep.subr.bf16.mxu0 %v9810
        %11179 = vmatpush1.bf16.msra.mxu0 %v9809
        %11180 = vmatprep.subr.bf16.mxu0 %v9818
        %11181 = vmatpush1.bf16.msra.mxu0 %v9817
        %11182 = vmatprep.subr.bf16.mxu0 %v9826
        %11183 = vmatpush1.bf16.msra.mxu0 %v9825
        %11184 = vmatprep.subr.bf16.mxu0 %v9834
        %11185 = vmatpush1.bf16.msra.mxu0 %v9833
        %11186 = vmatprep.subr.bf16.mxu0 %v9842
        %11187 = vmatpush1.bf16.msra.mxu0 %v9841
        %11188 = vmatprep.subr.bf16.mxu0 %v9850
        %11189 = vmatpush1.bf16.msra.mxu0 %v9849
        %11190 = vmatprep.subr.bf16.mxu0 %v9858
        %11191 = vmatpush1.bf16.msra.mxu0 %v9857
        %11192 = vmatprep.mubr.bf16.mxu0 %v7550
        %11193 = vmatmul.mubr.bf16.gmra.mrb[0].mxu0 %v7549
        %v11194 = vpop.f32.mrb[0].mxu0
        %v11195 = vadd.f32 %v11154, %v11194
        %v11196 = vpop.f32.mrb[0].mxu0
        %v11197 = vadd.f32 %v11156, %v11196
        %v11198 = vpop.f32.mrb[0].mxu0
        %v11199 = vpop.f32.mrb[0].mxu0
        %11200 = vdwg.mxu0
        %11201 = vmatprep.subr.bf16.mxu0 %v9866
        %11202 = vmatpush1.bf16.msra.mxu0 %v9865
        %11203 = vmatprep.subr.bf16.mxu0 %v9874
        %11204 = vmatpush1.bf16.msra.mxu0 %v9873
        %11205 = vmatprep.subr.bf16.mxu0 %v9882
        %11206 = vmatpush1.bf16.msra.mxu0 %v9881
        %11207 = vmatprep.subr.bf16.mxu0 %v9890
        %11208 = vmatpush1.bf16.msra.mxu0 %v9889
        %11209 = vmatprep.subr.bf16.mxu0 %v9898
        %11210 = vmatpush1.bf16.msra.mxu0 %v9897
        %11211 = vmatprep.subr.bf16.mxu0 %v9906
        %11212 = vmatpush1.bf16.msra.mxu0 %v9905
        %11213 = vmatprep.subr.bf16.mxu0 %v9914
        %11214 = vmatpush1.bf16.msra.mxu0 %v9913
        %11215 = vmatprep.subr.bf16.mxu0 %v9922
        %11216 = vmatpush1.bf16.msra.mxu0 %v9921
        %11217 = vmatprep.subr.bf16.mxu0 %v9930
        %11218 = vmatpush1.bf16.msra.mxu0 %v9929
        %11219 = vmatprep.subr.bf16.mxu0 %v9938
        %11220 = vmatpush1.bf16.msra.mxu0 %v9937
        %11221 = vmatprep.subr.bf16.mxu0 %v9946
        %11222 = vmatpush1.bf16.msra.mxu0 %v9945
        %11223 = vmatprep.subr.bf16.mxu0 %v9954
        %11224 = vmatpush1.bf16.msra.mxu0 %v9953
        %11225 = vmatprep.subr.bf16.mxu0 %v9962
        %11226 = vmatpush1.bf16.msra.mxu0 %v9961
        %11227 = vmatprep.subr.bf16.mxu0 %v9970
        %11228 = vmatpush1.bf16.msra.mxu0 %v9969
        %11229 = vmatprep.subr.bf16.mxu0 %v9978
        %11230 = vmatpush1.bf16.msra.mxu0 %v9977
        %11231 = vmatprep.subr.bf16.mxu0 %v9986
        %11232 = vmatpush1.bf16.msra.mxu0 %v9985
        %11233 = vmatprep.mubr.bf16.mxu0 %v7552
        %11234 = vmatmul.mubr.bf16.gmra.mrb[0].mxu0 %v7551
        %v11235 = vpop.f32.mrb[0].mxu0
        %v11236 = vadd.f32 %v11195, %v11235
        %v11237 = vpop.f32.mrb[0].mxu0
        %v11238 = vadd.f32 %v11197, %v11237
        %v11239 = vpop.f32.mrb[0].mxu0
        %v11240 = vpop.f32.mrb[0].mxu0
        %11241 = vdwg.mxu0
        %11242 = vmatprep.subr.bf16.mxu0 %v9994
        %11243 = vmatpush1.bf16.msra.mxu0 %v9993
        %11244 = vmatprep.subr.bf16.mxu0 %v10002
        %11245 = vmatpush1.bf16.msra.mxu0 %v10001
        %11246 = vmatprep.subr.bf16.mxu0 %v10010
        %11247 = vmatpush1.bf16.msra.mxu0 %v10009
        %11248 = vmatprep.subr.bf16.mxu0 %v10018
        %11249 = vmatpush1.bf16.msra.mxu0 %v10017
        %11250 = vmatprep.subr.bf16.mxu0 %v10026
        %11251 = vmatpush1.bf16.msra.mxu0 %v10025
        %11252 = vmatprep.subr.bf16.mxu0 %v10034
        %11253 = vmatpush1.bf16.msra.mxu0 %v10033
        %11254 = vmatprep.subr.bf16.mxu0 %v10042
        %11255 = vmatpush1.bf16.msra.mxu0 %v10041
        %11256 = vmatprep.subr.bf16.mxu0 %v10050
        %11257 = vmatpush1.bf16.msra.mxu0 %v10049
        %11258 = vmatprep.subr.bf16.mxu0 %v10058
        %11259 = vmatpush1.bf16.msra.mxu0 %v10057
        %11260 = vmatprep.subr.bf16.mxu0 %v10066
        %11261 = vmatpush1.bf16.msra.mxu0 %v10065
        %11262 = vmatprep.subr.bf16.mxu0 %v10074
        %11263 = vmatpush1.bf16.msra.mxu0 %v10073
        %11264 = vmatprep.subr.bf16.mxu0 %v10082
        %11265 = vmatpush1.bf16.msra.mxu0 %v10081
        %11266 = vmatprep.subr.bf16.mxu0 %v10090
        %11267 = vmatpush1.bf16.msra.mxu0 %v10089
        %11268 = vmatprep.subr.bf16.mxu0 %v10098
        %11269 = vmatpush1.bf16.msra.mxu0 %v10097
        %11270 = vmatprep.subr.bf16.mxu0 %v10106
        %11271 = vmatpush1.bf16.msra.mxu0 %v10105
        %11272 = vmatprep.subr.bf16.mxu0 %v10114
        %11273 = vmatpush1.bf16.msra.mxu0 %v10113
        %11274 = vmatprep.mubr.bf16.mxu0 %v7554
        %11275 = vmatmul.mubr.bf16.gmra.mrb[0].mxu0 %v7553
        %v11276 = vpop.f32.mrb[0].mxu0
        %v11277 = vadd.f32 %v11236, %v11276
        %v11278 = vpop.f32.mrb[0].mxu0
        %v11279 = vadd.f32 %v11238, %v11278
        %v11280 = vpop.f32.mrb[0].mxu0
        %v11281 = vpop.f32.mrb[0].mxu0
        %11282 = vdwg.mxu0
        %v11291 = vcombine.low %v10785, %v10787
        %v11292 = vcombine.low %v10949, %v10951
        %v11293 = vcombine.low %v11113, %v11115
        %v11294 = vcombine.low %v11277, %v11279
        %v11299 = vadd.f32 %v7543, %v11291
        %v11300 = vadd.f32 %v7544, %v11292
        %v11301 = vadd.f32 %v7545, %v11293
        %v11302 = vadd.f32 %v7546, %v11294
        %11303 = vst [vmem:[%s7] sm:$0xff] %v11299
        %11304 = vst [vmem:[%s7 + $0x8] sm:$0xff] %v11300
        %11305 = vst [vmem:[%s7 + $0x10] sm:$0xff] %v11301
        %11306 = vst [vmem:[%s7 + $0x18] sm:$0xff] %v11302
        %p11307 = scmp.eq.s32.totalorder %s28, 1
        // Predicated region
        $region77: #{net_forward.1} parent=47 // pred_check
          %p11308 = pneg %p11307
        $region78: #{net_forward.1} parent=47 // pred_check_branch
          %11310 = sbr.rel (%p11308) target = $region80
        $region79: #{net_forward.1} parent=47 // pred_region
          %v11311 = vld [vmem:[%s7] sm:$0xff]
          %v11312 = vld [vmem:[%s7 + $0x8] sm:$0xff]
          %v11313 = vld [vmem:[%s7 + $0x10] sm:$0xff]
          %v11314 = vld [vmem:[%s7 + $0x18] sm:$0xff]
          %v11319 = vcombine.high %v11311, %v11311
          %v11320 = vcombine.high %v11312, %v11312
          %v11321 = vcombine.high %v11313, %v11313
          %v11322 = vcombine.high %v11314, %v11314
          %v11327 = vsel %vm5929, %v11311, 0.0
          %v11328 = vrot.slane %v11327, 4
          %v11329 = vadd.f32 %v11327, %v11328
          %v11330 = vrot.slane %v11329, 2
          %v11331 = vadd.f32 %v11329, %v11330
          %v11332 = vrot.slane %v11331, 1
          %v11333 = vadd.f32 %v11331, %v11332
          %v11334 = vsel %vm5929, %v11319, 0.0
          %v11335 = vrot.slane %v11334, 4
          %v11336 = vadd.f32 %v11334, %v11335
          %v11337 = vrot.slane %v11336, 2
          %v11338 = vadd.f32 %v11336, %v11337
          %v11339 = vrot.slane %v11338, 1
          %v11340 = vadd.f32 %v11338, %v11339
          %v11341 = vsel %vm5929, %v11312, 0.0
          %v11342 = vrot.slane %v11341, 4
          %v11343 = vadd.f32 %v11341, %v11342
          %v11344 = vrot.slane %v11343, 2
          %v11345 = vadd.f32 %v11343, %v11344
          %v11346 = vrot.slane %v11345, 1
          %v11347 = vadd.f32 %v11345, %v11346
          %v11348 = vsel %vm5929, %v11320, 0.0
          %v11349 = vrot.slane %v11348, 4
          %v11350 = vadd.f32 %v11348, %v11349
          %v11351 = vrot.slane %v11350, 2
          %v11352 = vadd.f32 %v11350, %v11351
          %v11353 = vrot.slane %v11352, 1
          %v11354 = vadd.f32 %v11352, %v11353
          %v11355 = vsel %vm5929, %v11313, 0.0
          %v11356 = vrot.slane %v11355, 4
          %v11357 = vadd.f32 %v11355, %v11356
          %v11358 = vrot.slane %v11357, 2
          %v11359 = vadd.f32 %v11357, %v11358
          %v11360 = vrot.slane %v11359, 1
          %v11361 = vadd.f32 %v11359, %v11360
          %v11362 = vsel %vm5929, %v11321, 0.0
          %v11363 = vrot.slane %v11362, 4
          %v11364 = vadd.f32 %v11362, %v11363
          %v11365 = vrot.slane %v11364, 2
          %v11366 = vadd.f32 %v11364, %v11365
          %v11367 = vrot.slane %v11366, 1
          %v11368 = vadd.f32 %v11366, %v11367
          %v11369 = vsel %vm5929, %v11314, 0.0
          %v11370 = vrot.slane %v11369, 4
          %v11371 = vadd.f32 %v11369, %v11370
          %v11372 = vrot.slane %v11371, 2
          %v11373 = vadd.f32 %v11371, %v11372
          %v11374 = vrot.slane %v11373, 1
          %v11375 = vadd.f32 %v11373, %v11374
          %v11376 = vsel %vm5929, %v11322, 0.0
          %v11377 = vrot.slane %v11376, 4
          %v11378 = vadd.f32 %v11376, %v11377
          %v11379 = vrot.slane %v11378, 2
          %v11380 = vadd.f32 %v11378, %v11379
          %v11381 = vrot.slane %v11380, 1
          %v11382 = vadd.f32 %v11380, %v11381
          %v11383 = vmul.f32 %v11333, %v7322
          %v11384 = vmul.f32 %v11340, %v7322
          %v11385 = vmul.f32 %v11347, %v7322
          %v11386 = vmul.f32 %v11354, %v7322
          %v11387 = vmul.f32 %v11361, %v7322
          %v11388 = vmul.f32 %v11368, %v7322
          %v11389 = vmul.f32 %v11375, %v7322
          %v11390 = vmul.f32 %v11382, %v7322
          %v11399 = vcombine.low %v11383, %v11384
          %v11400 = vcombine.low %v11385, %v11386
          %v11401 = vcombine.low %v11387, %v11388
          %v11402 = vcombine.low %v11389, %v11390
          %v11407 = vsub.f32 %v11311, %v11399
          %v11408 = vsub.f32 %v11312, %v11400
          %v11409 = vsub.f32 %v11313, %v11401
          %v11410 = vsub.f32 %v11314, %v11402
          %v11411 = vmul.f32 %v11407, %v11407
          %v11412 = vmul.f32 %v11408, %v11408
          %v11413 = vmul.f32 %v11409, %v11409
          %v11414 = vmul.f32 %v11410, %v11410
          %v11419 = vcombine.high %v11411, %v11411
          %v11420 = vcombine.high %v11412, %v11412
          %v11421 = vcombine.high %v11413, %v11413
          %v11422 = vcombine.high %v11414, %v11414
          %v11427 = vsel %vm5929, %v11411, 0.0
          %v11428 = vrot.slane %v11427, 4
          %v11429 = vadd.f32 %v11427, %v11428
          %v11430 = vrot.slane %v11429, 2
          %v11431 = vadd.f32 %v11429, %v11430
          %v11432 = vrot.slane %v11431, 1
          %v11433 = vadd.f32 %v11431, %v11432
          %v11434 = vsel %vm5929, %v11419, 0.0
          %v11435 = vrot.slane %v11434, 4
          %v11436 = vadd.f32 %v11434, %v11435
          %v11437 = vrot.slane %v11436, 2
          %v11438 = vadd.f32 %v11436, %v11437
          %v11439 = vrot.slane %v11438, 1
          %v11440 = vadd.f32 %v11438, %v11439
          %v11441 = vsel %vm5929, %v11412, 0.0
          %v11442 = vrot.slane %v11441, 4
          %v11443 = vadd.f32 %v11441, %v11442
          %v11444 = vrot.slane %v11443, 2
          %v11445 = vadd.f32 %v11443, %v11444
          %v11446 = vrot.slane %v11445, 1
          %v11447 = vadd.f32 %v11445, %v11446
          %v11448 = vsel %vm5929, %v11420, 0.0
          %v11449 = vrot.slane %v11448, 4
          %v11450 = vadd.f32 %v11448, %v11449
          %v11451 = vrot.slane %v11450, 2
          %v11452 = vadd.f32 %v11450, %v11451
          %v11453 = vrot.slane %v11452, 1
          %v11454 = vadd.f32 %v11452, %v11453
          %v11455 = vsel %vm5929, %v11413, 0.0
          %v11456 = vrot.slane %v11455, 4
          %v11457 = vadd.f32 %v11455, %v11456
          %v11458 = vrot.slane %v11457, 2
          %v11459 = vadd.f32 %v11457, %v11458
          %v11460 = vrot.slane %v11459, 1
          %v11461 = vadd.f32 %v11459, %v11460
          %v11462 = vsel %vm5929, %v11421, 0.0
          %v11463 = vrot.slane %v11462, 4
          %v11464 = vadd.f32 %v11462, %v11463
          %v11465 = vrot.slane %v11464, 2
          %v11466 = vadd.f32 %v11464, %v11465
          %v11467 = vrot.slane %v11466, 1
          %v11468 = vadd.f32 %v11466, %v11467
          %v11469 = vsel %vm5929, %v11414, 0.0
          %v11470 = vrot.slane %v11469, 4
          %v11471 = vadd.f32 %v11469, %v11470
          %v11472 = vrot.slane %v11471, 2
          %v11473 = vadd.f32 %v11471, %v11472
          %v11474 = vrot.slane %v11473, 1
          %v11475 = vadd.f32 %v11473, %v11474
          %v11476 = vsel %vm5929, %v11422, 0.0
          %v11477 = vrot.slane %v11476, 4
          %v11478 = vadd.f32 %v11476, %v11477
          %v11479 = vrot.slane %v11478, 2
          %v11480 = vadd.f32 %v11478, %v11479
          %v11481 = vrot.slane %v11480, 1
          %v11482 = vadd.f32 %v11480, %v11481
          %v11483 = vmul.f32 %v11433, %v7322
          %v11484 = vmul.f32 %v11440, %v7322
          %v11485 = vmul.f32 %v11447, %v7322
          %v11486 = vmul.f32 %v11454, %v7322
          %v11487 = vmul.f32 %v11461, %v7322
          %v11488 = vmul.f32 %v11468, %v7322
          %v11489 = vmul.f32 %v11475, %v7322
          %v11490 = vmul.f32 %v11482, %v7322
          %v11491 = vadd.f32 %v11483, 1e-05
          %v11492 = vadd.f32 %v11484, 1e-05
          %v11493 = vadd.f32 %v11485, 1e-05
          %v11494 = vadd.f32 %v11486, 1e-05
          %v11495 = vadd.f32 %v11487, 1e-05
          %v11496 = vadd.f32 %v11488, 1e-05
          %v11497 = vadd.f32 %v11489, 1e-05
          %v11498 = vadd.f32 %v11490, 1e-05
          %v11499 = vrsqrt.pop %v11491
          %v11500 = vrsqrt.pop %v11492
          %v11501 = vrsqrt.pop %v11493
          %v11502 = vrsqrt.pop %v11494
          %v11503 = vrsqrt.pop %v11495
          %v11504 = vrsqrt.pop %v11496
          %v11505 = vrsqrt.pop %v11497
          %v11506 = vrsqrt.pop %v11498
          %v11515 = vcombine.low %v11499, %v11500
          %v11516 = vcombine.low %v11501, %v11502
          %v11517 = vcombine.low %v11503, %v11504
          %v11518 = vcombine.low %v11505, %v11506
          %v11523 = vmul.f32 %v11407, %v11515
          %v11524 = vmul.f32 %v11408, %v11516
          %v11525 = vmul.f32 %v11409, %v11517
          %v11526 = vmul.f32 %v11410, %v11518
          %v11527 = vld [vmem:[#allocation9] sm:$0xff]
          %v11529 = vlaneseq
          %v11530 = vshrl.u32 %v11529, 7
          %v11531 = vsub.s32 0, %v11530
          %v11532 = vrot.slane %v11527, %v11531
          %v11533 = vlaneseq
          %v11534 = vshrl.u32 %v11533, 7
          %v11535 = vsub.s32 1, %v11534
          %v11536 = vrot.slane %v11527, %v11535
          %v11537 = vlaneseq
          %v11538 = vshrl.u32 %v11537, 7
          %v11539 = vsub.s32 2, %v11538
          %v11540 = vrot.slane %v11527, %v11539
          %v11541 = vlaneseq
          %v11542 = vshrl.u32 %v11541, 7
          %v11543 = vsub.s32 3, %v11542
          %v11544 = vrot.slane %v11527, %v11543
          %v11545 = vlaneseq
          %v11546 = vshrl.u32 %v11545, 7
          %v11547 = vsub.s32 4, %v11546
          %v11548 = vrot.slane %v11527, %v11547
          %v11549 = vlaneseq
          %v11550 = vshrl.u32 %v11549, 7
          %v11551 = vsub.s32 5, %v11550
          %v11552 = vrot.slane %v11527, %v11551
          %v11553 = vlaneseq
          %v11554 = vshrl.u32 %v11553, 7
          %v11555 = vsub.s32 6, %v11554
          %v11556 = vrot.slane %v11527, %v11555
          %v11557 = vlaneseq
          %v11558 = vshrl.u32 %v11557, 7
          %v11559 = vsub.s32 7, %v11558
          %v11560 = vrot.slane %v11527, %v11559
          %v11561 = vcombine.low %v11532, %v11536
          %v11562 = vcombine.low %v11540, %v11544
          %v11563 = vcombine.low %v11548, %v11552
          %v11564 = vcombine.low %v11556, %v11560
          %v11569 = vmul.f32 %v11523, %v11561
          %v11570 = vmul.f32 %v11524, %v11562
          %v11571 = vmul.f32 %v11525, %v11563
          %v11572 = vmul.f32 %v11526, %v11564
          %v11573 = vld [vmem:[#allocation10] sm:$0xff]
          %v11575 = vlaneseq
          %v11576 = vshrl.u32 %v11575, 7
          %v11577 = vsub.s32 0, %v11576
          %v11578 = vrot.slane %v11573, %v11577
          %v11579 = vlaneseq
          %v11580 = vshrl.u32 %v11579, 7
          %v11581 = vsub.s32 1, %v11580
          %v11582 = vrot.slane %v11573, %v11581
          %v11583 = vlaneseq
          %v11584 = vshrl.u32 %v11583, 7
          %v11585 = vsub.s32 2, %v11584
          %v11586 = vrot.slane %v11573, %v11585
          %v11587 = vlaneseq
          %v11588 = vshrl.u32 %v11587, 7
          %v11589 = vsub.s32 3, %v11588
          %v11590 = vrot.slane %v11573, %v11589
          %v11591 = vlaneseq
          %v11592 = vshrl.u32 %v11591, 7
          %v11593 = vsub.s32 4, %v11592
          %v11594 = vrot.slane %v11573, %v11593
          %v11595 = vlaneseq
          %v11596 = vshrl.u32 %v11595, 7
          %v11597 = vsub.s32 5, %v11596
          %v11598 = vrot.slane %v11573, %v11597
          %v11599 = vlaneseq
          %v11600 = vshrl.u32 %v11599, 7
          %v11601 = vsub.s32 6, %v11600
          %v11602 = vrot.slane %v11573, %v11601
          %v11603 = vlaneseq
          %v11604 = vshrl.u32 %v11603, 7
          %v11605 = vsub.s32 7, %v11604
          %v11606 = vrot.slane %v11573, %v11605
          %v11607 = vcombine.low %v11578, %v11582
          %v11608 = vcombine.low %v11586, %v11590
          %v11609 = vcombine.low %v11594, %v11598
          %v11610 = vcombine.low %v11602, %v11606
          %v11615 = vadd.f32 %v11569, %v11607
          %v11616 = vadd.f32 %v11570, %v11608
          %v11617 = vadd.f32 %v11571, %v11609
          %v11618 = vadd.f32 %v11572, %v11610
          %11619 = vst [vmem:[%s7] sm:$0xff] %v11615
          %11620 = vst [vmem:[%s7 + $0x8] sm:$0xff] %v11616
          %11621 = vst [vmem:[%s7 + $0x10] sm:$0xff] %v11617
          %11622 = vst [vmem:[%s7 + $0x18] sm:$0xff] %v11618
        $region80: #{net_forward.1} parent=47 // pred_fallthru
          _
        // Predicated region
        $region81: #{net_forward.1} parent=47 // pred_check
          %p11623 = pneg %p208
        $region82: #{net_forward.1} parent=47 // pred_check_branch
          %11625 = sbr.rel (%p11623) target = $region84
        $region83: #{net_forward.1} parent=47 // pred_region
          _
        $region84: #{net_forward.1} parent=47 // pred_fallthru
          _
        // Predicated region
        $region85: #{net_forward.1} parent=47 // pred_check
          %p11626 = pneg %p208
        $region86: #{net_forward.1} parent=47 // pred_check_branch
          %11628 = sbr.rel (%p11626) target = $region88
        $region87: #{net_forward.1} parent=47 // pred_region
          _
        $region88: #{net_forward.1} parent=47 // pred_fallthru
          _
      $region48: #{net_forward.1} parent=5 // pred_fallthru
        _
      %p11629 = scmp.le.s32.totalorder 2, %s23
      // Predicated region
      $region89: #{net_forward.1} parent=5 // pred_check
        %p11630 = pneg %p11629
      $region90: #{net_forward.1} parent=5 // pred_check_branch
        %11632 = sbr.rel (%p11630) target = $region92
      $region91: #{net_forward.1} parent=5 // pred_region
        %s11633 = ssub.s32 %s23, 2
      $region92: #{net_forward.1} parent=5 // pred_fallthru
        _
    $region6: #{net_forward.1} parent=1 // loop_footer
      %s27 = sadd.s32 1, %s23
    $region7: #{net_forward.1} parent=1 // loop_footer_branch
      %22 = sbr.rel target = $region3
    $region8: #{net_forward.1} parent=1 // loop_exit
      _
    %11634 = vsyncpa [#allocation3], 1
    %s11635 = scalar_lea.sflag [#allocation3], 1
    %11636 = vsyncpa %s11635, 1
    %11637 = vsyncpa [#allocation5], 1
    %s11638 = scalar_lea.sflag [#allocation5], 1
    %11639 = vsyncpa %s11638, 1
    %11640 = vsyncpa [#allocation8], 1
    %s11641 = scalar_lea.sflag [#allocation8], 1
    %11642 = vsyncpa %s11641, 1
    %11643 = vsyncpa [#allocation11], 1

</llo_original>
